<compile_context>
chip_gen: v7x
topology: tpu7x:2x2x1
jax: 0.10.0
libtpu: 0.0.40
codegen_flags: <defaults>
</compile_context>

<pallas_src>
import functools

import jax
import jax.numpy as jnp
from jax.experimental import pallas as pl
from jax.experimental.pallas import tpu as pltpu

_LANE = 128


def _fused_conv2_kernel(x_ref, w1_ref, s1_ref, b1_ref, w2_ref, s2_ref, b2_ref,
                        o_ref, buf1, buf2):
    # x_ref:  (1, H, W, C1p)        one batch element, channels padded to 128k
    # w*_ref: (3, 3, Cin_p, Cout_p) conv weights (HWIO), channel-padded
    # s*/b*:  (1, Cout_p)           folded BatchNorm scale / bias (+ conv bias)
    # o_ref:  (1, H, W, Cop)
    # buf1/buf2: (L + 2G, C) f32 VMEM scratch: row-flattened zero-padded images.
    _, H, W, _ = x_ref.shape
    Hp, Wp = H + 2, W + 2          # spatial zero-pad of 1 (3x3 "same" conv)
    L = Hp * Wp                    # rows of the flattened padded image
    G = Wp + 1                     # guard rows >= max |tap shift| = Wp + 1

    # ---- stage layer-1 input: zero-padded, row-flattened, in VMEM -----------
    buf1[...] = jnp.zeros_like(buf1)
    for h in range(H):             # interior rows only; borders/guards stay 0
        r = G + (h + 1) * Wp + 1
        buf1[r:r + W, :] = x_ref[0, h, :, :].astype(buf1.dtype)

    def conv_bn_relu(src_ref, w_ref, s_ref, b_ref):
        cout = w_ref.shape[3]
        acc = jnp.zeros((L, cout), jnp.float32)
        # 9 taps = 9 sublane-shifted slices of the flat buffer (no reshapes).
        for a in (-1, 0, 1):
            for b in (-1, 0, 1):
                start = G + a * Wp + b
                win = src_ref[start:start + L, :]
                acc = acc + jnp.dot(win, w_ref[a + 1, b + 1],
                                    preferred_element_type=jnp.float32)
        y = acc * s_ref[...] + b_ref[...]      # folded BN (affine) + conv bias
        return jnp.maximum(y, 0.0)             # ReLU; shape (L, cout)

    # ---- layer 1 (computed on the padded grid; border rows discarded) -------
    y1 = conv_bn_relu(buf1, w1_ref, s1_ref, b1_ref)

    # ---- intermediate stays in VMEM: copy interior rows into layer-2 buffer -
    buf2[...] = jnp.zeros_like(buf2)
    for h in range(H):
        r = G + (h + 1) * Wp + 1
        c = (h + 1) * Wp + 1
        buf2[r:r + W, :] = y1[c:c + W, :]

    # ---- layer 2 -------------------------------------------------------------
    y2 = conv_bn_relu(buf2, w2_ref, s2_ref, b2_ref)

    # ---- lane-dense output stores (Cop is a multiple of 128) -----------------
    for h in range(H):
        c = (h + 1) * Wp + 1
        o_ref[0, h, :, :] = y2[c:c + W, :].astype(o_ref.dtype)


def _round_up(x, m):
    return (x + m - 1) // m * m


def _pad_axis(x, axis, to):
    n = x.shape[axis]
    if n == to:
        return x
    pads = [(0, 0)] * x.ndim
    pads[axis] = (0, to - n)
    return jnp.pad(x, pads)


@functools.partial(jax.jit, static_argnames=("ks", "stride", "padding"))
def conv2_module_forward(x_nchw, params, *, ks=3, stride=1, padding=1):
    """Fused 2x(Conv3x3 + BN + ReLU) forward. Input/output in NCHW (PyTorch)."""
    assert ks == 3 and stride == 1 and padding == 1, (
        "fused kernel implements the module defaults: 3x3, stride 1, 'same' pad")
    assert len(params) == 2, "Conv2Module (n=2) fused kernel expects 2 layers"
    (w1, s1, b1), (w2, s2, b2) = params

    N, Cin, H, W = x_nchw.shape
    Cmid, Cout = w1.shape[3], w2.shape[3]
    C1p = _round_up(Cin, _LANE)
    Cmp = _round_up(Cmid, _LANE)
    Cop = _round_up(Cout, _LANE)

    # Single NCHW->NHWC transpose for the whole fused pipeline; pad channels to
    # a lane-dense multiple of 128 (zeros contribute nothing to the conv).
    x = jnp.transpose(x_nchw, (0, 2, 3, 1))
    x = _pad_axis(x, 3, C1p)
    w1p = _pad_axis(_pad_axis(w1, 2, C1p), 3, Cmp)
    w2p = _pad_axis(_pad_axis(w2, 2, Cmp), 3, Cop)
    s1p = _pad_axis(s1.reshape(1, -1).astype(jnp.float32), 1, Cmp)
    b1p = _pad_axis(b1.reshape(1, -1).astype(jnp.float32), 1, Cmp)
    s2p = _pad_axis(s2.reshape(1, -1).astype(jnp.float32), 1, Cop)
    b2p = _pad_axis(b2.reshape(1, -1).astype(jnp.float32), 1, Cop)

    Hp, Wp = H + 2, W + 2
    L = Hp * Wp
    G = Wp + 1

    flops = 2 * N * L * 9 * (C1p * Cmp + Cmp * Cop)
    bytes_accessed = 4 * (x.size + w1p.size + w2p.size + N * H * W * Cop)

    out = pl.pallas_call(
        _fused_conv2_kernel,
        out_shape=jax.ShapeDtypeStruct((N, H, W, Cop), x_nchw.dtype),
        grid_spec=pltpu.PrefetchScalarGridSpec(
            num_scalar_prefetch=0,
            grid=(N,),
            in_specs=[
                pl.BlockSpec((1, H, W, C1p), lambda n: (n, 0, 0, 0)),
                pl.BlockSpec((3, 3, C1p, Cmp), lambda n: (0, 0, 0, 0)),
                pl.BlockSpec((1, Cmp), lambda n: (0, 0)),
                pl.BlockSpec((1, Cmp), lambda n: (0, 0)),
                pl.BlockSpec((3, 3, Cmp, Cop), lambda n: (0, 0, 0, 0)),
                pl.BlockSpec((1, Cop), lambda n: (0, 0)),
                pl.BlockSpec((1, Cop), lambda n: (0, 0)),
            ],
            out_specs=pl.BlockSpec((1, H, W, Cop), lambda n: (n, 0, 0, 0)),
            scratch_shapes=[
                pltpu.VMEM((L + 2 * G, C1p), jnp.float32),   # flat layer-1 input
                pltpu.VMEM((L + 2 * G, Cmp), jnp.float32),   # flat intermediate
            ],
        ),
        compiler_params=pltpu.CompilerParams(
            dimension_semantics=("parallel",)),
        cost_estimate=pl.CostEstimate(
            flops=flops, transcendentals=0, bytes_accessed=bytes_accessed),
    )(x, w1p, s1p, b1p, w2p, s2p, b2p)

    out = out[..., :Cout]                       # drop lane padding
    return jnp.transpose(out, (0, 3, 1, 2))     # back to NCHW


def init_conv2_module_params(key, in_size, out_size, n=2, ks=3,
                             is_batchnorm=True):
    """Deterministic kaiming-normal init matching the PyTorch module shapes.
    BatchNorm is folded in eval mode (running mean=0, var=1 at init)."""
    params = []
    cin = in_size
    eps = 1e-5
    for _ in range(n):
        key, kw, kg, _ = jax.random.split(key, 4)
        fan_in = cin * ks * ks
        std = jnp.sqrt(2.0 / fan_in)                    # kaiming_normal_, fan_in
        w = jax.random.normal(kw, (ks, ks, cin, out_size), jnp.float32) * std  # HWIO
        conv_b = jnp.zeros((out_size,), jnp.float32)
        if is_batchnorm:
            gamma = 1.0 + 0.02 * jax.random.normal(kg, (out_size,), jnp.float32)
            beta = jnp.zeros((out_size,), jnp.float32)
            run_mean = jnp.zeros((out_size,), jnp.float32)
            run_var = jnp.ones((out_size,), jnp.float32)
            scale = gamma / jnp.sqrt(run_var + eps)
            bias = beta + scale * (conv_b - run_mean)
        else:
            scale = jnp.ones((out_size,), jnp.float32)
            bias = conv_b
        params.append((w, scale, bias))
        cin = out_size
    return params


def _reference_forward(x_nchw, params, padding=1):
    x = jnp.transpose(x_nchw, (0, 2, 3, 1))
    for w, scale, bias in params:
        y = jax.lax.conv_general_dilated(
            x, w, window_strides=(1, 1),
            padding=[(padding, padding), (padding, padding)],
            dimension_numbers=("NHWC", "HWIO", "NHWC"))
        x = jnp.maximum(y * scale + bias, 0.0)
    return jnp.transpose(x, (0, 3, 1, 2))


if __name__ == "__main__":
    key = jax.random.PRNGKey(0)
    k_x, k_p = jax.random.split(key)

    N, Cin, H, W = 2, 4, 16, 16
    Cout = 8
    x = jax.random.normal(k_x, (N, Cin, H, W), jnp.float32)

    params = init_conv2_module_params(k_p, Cin, Cout, n=2, ks=3,
                                      is_batchnorm=True)

    out = conv2_module_forward(x, params)
    out = jax.block_until_ready(out)

    ref = _reference_forward(x, params, padding=1)
    assert out.shape == (N, Cout, H, W), out.shape
    assert jnp.allclose(out, ref, atol=1e-4, rtol=1e-4), (
        float(jnp.max(jnp.abs(out - ref))))

    print("KERNEL_OK")
</pallas_src>

<mosaic_0001>
module attributes {stable_mosaic.version = 11 : i64} {
  func.func @_fused_conv2_kernel(%arg0: i32, %arg1: memref<1x16x16x128xf32, #tpu.memory_space<vmem>>, %arg2: memref<3x3x128x128xf32, #tpu.memory_space<vmem>>, %arg3: memref<1x128xf32, #tpu.memory_space<vmem>>, %arg4: memref<1x128xf32, #tpu.memory_space<vmem>>, %arg5: memref<3x3x128x128xf32, #tpu.memory_space<vmem>>, %arg6: memref<1x128xf32, #tpu.memory_space<vmem>>, %arg7: memref<1x128xf32, #tpu.memory_space<vmem>>, %arg8: memref<1x16x16x128xf32, #tpu.memory_space<vmem>>, %arg9: memref<362x128xf32, #tpu.memory_space<vmem>>, %arg10: memref<362x128xf32, #tpu.memory_space<vmem>>) attributes {dimension_semantics = [#tpu.dimension_semantics<parallel>], iteration_bounds = array<i64: 2>, scalar_prefetch = 0 : i64, scratch_operands = 2 : i64, tpu.core_type = #tpu.core_type<tc>, window_params = [{transform_indices = @transform_0, window_bounds = array<i64: 1, 16, 16, 128>}, {pipeline_mode = #tpu.pipeline_mode<synchronous>, transform_indices = @transform_1, window_bounds = array<i64: 3, 3, 128, 128>}, {pipeline_mode = #tpu.pipeline_mode<synchronous>, transform_indices = @transform_2, window_bounds = array<i64: 1, 128>}, {pipeline_mode = #tpu.pipeline_mode<synchronous>, transform_indices = @transform_3, window_bounds = array<i64: 1, 128>}, {pipeline_mode = #tpu.pipeline_mode<synchronous>, transform_indices = @transform_4, window_bounds = array<i64: 3, 3, 128, 128>}, {pipeline_mode = #tpu.pipeline_mode<synchronous>, transform_indices = @transform_5, window_bounds = array<i64: 1, 128>}, {pipeline_mode = #tpu.pipeline_mode<synchronous>, transform_indices = @transform_6, window_bounds = array<i64: 1, 128>}, {transform_indices = @transform_7, window_bounds = array<i64: 1, 16, 16, 128>}]} {
    %cst = arith.constant 0.000000e+00 : f32
    %0 = vector.broadcast %cst : f32 to vector<362x128xf32>
    %c0 = arith.constant 0 : index
    %c0_0 = arith.constant 0 : index
    %1 = vector.load %arg9[%c0, %c0_0] : memref<362x128xf32, #tpu.memory_space<vmem>>, vector<362x128xf32>
    tpu.vector_store %arg9[%c0, %c0_0], %0 {strides = array<i32>} : memref<362x128xf32, #tpu.memory_space<vmem>>, vector<362x128xf32>,
    %c0_1 = arith.constant 0 : index
    %c0_2 = arith.constant 0 : index
    %c0_3 = arith.constant 0 : index
    %c0_4 = arith.constant 0 : index
    %2 = vector.load %arg1[%c0_1, %c0_2, %c0_3, %c0_4] : memref<1x16x16x128xf32, #tpu.memory_space<vmem>>, vector<1x1x16x128xf32>
    %3 = vector.shape_cast %2 : vector<1x1x16x128xf32> to vector<16x128xf32>
    %c38 = arith.constant 38 : index
    %c0_5 = arith.constant 0 : index
    %4 = vector.load %arg9[%c38, %c0_5] : memref<362x128xf32, #tpu.memory_space<vmem>>, vector<16x128xf32>
    tpu.vector_store %arg9[%c38, %c0_5], %3 {strides = array<i32>} : memref<362x128xf32, #tpu.memory_space<vmem>>, vector<16x128xf32>,
    %c0_6 = arith.constant 0 : index
    %c1 = arith.constant 1 : index
    %c0_7 = arith.constant 0 : index
    %c0_8 = arith.constant 0 : index
    %5 = vector.load %arg1[%c0_6, %c1, %c0_7, %c0_8] : memref<1x16x16x128xf32, #tpu.memory_space<vmem>>, vector<1x1x16x128xf32>
    %6 = vector.shape_cast %5 : vector<1x1x16x128xf32> to vector<16x128xf32>
    %c56 = arith.constant 56 : index
    %c0_9 = arith.constant 0 : index
    %7 = vector.load %arg9[%c56, %c0_9] : memref<362x128xf32, #tpu.memory_space<vmem>>, vector<16x128xf32>
    tpu.vector_store %arg9[%c56, %c0_9], %6 {strides = array<i32>} : memref<362x128xf32, #tpu.memory_space<vmem>>, vector<16x128xf32>,
    %c0_10 = arith.constant 0 : index
    %c2 = arith.constant 2 : index
    %c0_11 = arith.constant 0 : index
    %c0_12 = arith.constant 0 : index
    %8 = vector.load %arg1[%c0_10, %c2, %c0_11, %c0_12] : memref<1x16x16x128xf32, #tpu.memory_space<vmem>>, vector<1x1x16x128xf32>
    %9 = vector.shape_cast %8 : vector<1x1x16x128xf32> to vector<16x128xf32>
    %c74 = arith.constant 74 : index
    %c0_13 = arith.constant 0 : index
    %10 = vector.load %arg9[%c74, %c0_13] : memref<362x128xf32, #tpu.memory_space<vmem>>, vector<16x128xf32>
    tpu.vector_store %arg9[%c74, %c0_13], %9 {strides = array<i32>} : memref<362x128xf32, #tpu.memory_space<vmem>>, vector<16x128xf32>,
    %c0_14 = arith.constant 0 : index
    %c3 = arith.constant 3 : index
    %c0_15 = arith.constant 0 : index
    %c0_16 = arith.constant 0 : index
    %11 = vector.load %arg1[%c0_14, %c3, %c0_15, %c0_16] : memref<1x16x16x128xf32, #tpu.memory_space<vmem>>, vector<1x1x16x128xf32>
    %12 = vector.shape_cast %11 : vector<1x1x16x128xf32> to vector<16x128xf32>
    %c92 = arith.constant 92 : index
    %c0_17 = arith.constant 0 : index
    %13 = vector.load %arg9[%c92, %c0_17] : memref<362x128xf32, #tpu.memory_space<vmem>>, vector<16x128xf32>
    tpu.vector_store %arg9[%c92, %c0_17], %12 {strides = array<i32>} : memref<362x128xf32, #tpu.memory_space<vmem>>, vector<16x128xf32>,
    %c0_18 = arith.constant 0 : index
    %c4 = arith.constant 4 : index
    %c0_19 = arith.constant 0 : index
    %c0_20 = arith.constant 0 : index
    %14 = vector.load %arg1[%c0_18, %c4, %c0_19, %c0_20] : memref<1x16x16x128xf32, #tpu.memory_space<vmem>>, vector<1x1x16x128xf32>
    %15 = vector.shape_cast %14 : vector<1x1x16x128xf32> to vector<16x128xf32>
    %c110 = arith.constant 110 : index
    %c0_21 = arith.constant 0 : index
    %16 = vector.load %arg9[%c110, %c0_21] : memref<362x128xf32, #tpu.memory_space<vmem>>, vector<16x128xf32>
    tpu.vector_store %arg9[%c110, %c0_21], %15 {strides = array<i32>} : memref<362x128xf32, #tpu.memory_space<vmem>>, vector<16x128xf32>,
    %c0_22 = arith.constant 0 : index
    %c5 = arith.constant 5 : index
    %c0_23 = arith.constant 0 : index
    %c0_24 = arith.constant 0 : index
    %17 = vector.load %arg1[%c0_22, %c5, %c0_23, %c0_24] : memref<1x16x16x128xf32, #tpu.memory_space<vmem>>, vector<1x1x16x128xf32>
    %18 = vector.shape_cast %17 : vector<1x1x16x128xf32> to vector<16x128xf32>
    %c128 = arith.constant 128 : index
    %c0_25 = arith.constant 0 : index
    %19 = vector.load %arg9[%c128, %c0_25] : memref<362x128xf32, #tpu.memory_space<vmem>>, vector<16x128xf32>
    tpu.vector_store %arg9[%c128, %c0_25], %18 {strides = array<i32>} : memref<362x128xf32, #tpu.memory_space<vmem>>, vector<16x128xf32>,
    %c0_26 = arith.constant 0 : index
    %c6 = arith.constant 6 : index
    %c0_27 = arith.constant 0 : index
    %c0_28 = arith.constant 0 : index
    %20 = vector.load %arg1[%c0_26, %c6, %c0_27, %c0_28] : memref<1x16x16x128xf32, #tpu.memory_space<vmem>>, vector<1x1x16x128xf32>
    %21 = vector.shape_cast %20 : vector<1x1x16x128xf32> to vector<16x128xf32>
    %c146 = arith.constant 146 : index
    %c0_29 = arith.constant 0 : index
    %22 = vector.load %arg9[%c146, %c0_29] : memref<362x128xf32, #tpu.memory_space<vmem>>, vector<16x128xf32>
    tpu.vector_store %arg9[%c146, %c0_29], %21 {strides = array<i32>} : memref<362x128xf32, #tpu.memory_space<vmem>>, vector<16x128xf32>,
    %c0_30 = arith.constant 0 : index
    %c7 = arith.constant 7 : index
    %c0_31 = arith.constant 0 : index
    %c0_32 = arith.constant 0 : index
    %23 = vector.load %arg1[%c0_30, %c7, %c0_31, %c0_32] : memref<1x16x16x128xf32, #tpu.memory_space<vmem>>, vector<1x1x16x128xf32>
    %24 = vector.shape_cast %23 : vector<1x1x16x128xf32> to vector<16x128xf32>
    %c164 = arith.constant 164 : index
    %c0_33 = arith.constant 0 : index
    %25 = vector.load %arg9[%c164, %c0_33] : memref<362x128xf32, #tpu.memory_space<vmem>>, vector<16x128xf32>
    tpu.vector_store %arg9[%c164, %c0_33], %24 {strides = array<i32>} : memref<362x128xf32, #tpu.memory_space<vmem>>, vector<16x128xf32>,
    %c0_34 = arith.constant 0 : index
    %c8 = arith.constant 8 : index
    %c0_35 = arith.constant 0 : index
    %c0_36 = arith.constant 0 : index
    %26 = vector.load %arg1[%c0_34, %c8, %c0_35, %c0_36] : memref<1x16x16x128xf32, #tpu.memory_space<vmem>>, vector<1x1x16x128xf32>
    %27 = vector.shape_cast %26 : vector<1x1x16x128xf32> to vector<16x128xf32>
    %c182 = arith.constant 182 : index
    %c0_37 = arith.constant 0 : index
    %28 = vector.load %arg9[%c182, %c0_37] : memref<362x128xf32, #tpu.memory_space<vmem>>, vector<16x128xf32>
    tpu.vector_store %arg9[%c182, %c0_37], %27 {strides = array<i32>} : memref<362x128xf32, #tpu.memory_space<vmem>>, vector<16x128xf32>,
    %c0_38 = arith.constant 0 : index
    %c9 = arith.constant 9 : index
    %c0_39 = arith.constant 0 : index
    %c0_40 = arith.constant 0 : index
    %29 = vector.load %arg1[%c0_38, %c9, %c0_39, %c0_40] : memref<1x16x16x128xf32, #tpu.memory_space<vmem>>, vector<1x1x16x128xf32>
    %30 = vector.shape_cast %29 : vector<1x1x16x128xf32> to vector<16x128xf32>
    %c200 = arith.constant 200 : index
    %c0_41 = arith.constant 0 : index
    %31 = vector.load %arg9[%c200, %c0_41] : memref<362x128xf32, #tpu.memory_space<vmem>>, vector<16x128xf32>
    tpu.vector_store %arg9[%c200, %c0_41], %30 {strides = array<i32>} : memref<362x128xf32, #tpu.memory_space<vmem>>, vector<16x128xf32>,
    %c0_42 = arith.constant 0 : index
    %c10 = arith.constant 10 : index
    %c0_43 = arith.constant 0 : index
    %c0_44 = arith.constant 0 : index
    %32 = vector.load %arg1[%c0_42, %c10, %c0_43, %c0_44] : memref<1x16x16x128xf32, #tpu.memory_space<vmem>>, vector<1x1x16x128xf32>
    %33 = vector.shape_cast %32 : vector<1x1x16x128xf32> to vector<16x128xf32>
    %c218 = arith.constant 218 : index
    %c0_45 = arith.constant 0 : index
    %34 = vector.load %arg9[%c218, %c0_45] : memref<362x128xf32, #tpu.memory_space<vmem>>, vector<16x128xf32>
    tpu.vector_store %arg9[%c218, %c0_45], %33 {strides = array<i32>} : memref<362x128xf32, #tpu.memory_space<vmem>>, vector<16x128xf32>,
    %c0_46 = arith.constant 0 : index
    %c11 = arith.constant 11 : index
    %c0_47 = arith.constant 0 : index
    %c0_48 = arith.constant 0 : index
    %35 = vector.load %arg1[%c0_46, %c11, %c0_47, %c0_48] : memref<1x16x16x128xf32, #tpu.memory_space<vmem>>, vector<1x1x16x128xf32>
    %36 = vector.shape_cast %35 : vector<1x1x16x128xf32> to vector<16x128xf32>
    %c236 = arith.constant 236 : index
    %c0_49 = arith.constant 0 : index
    %37 = vector.load %arg9[%c236, %c0_49] : memref<362x128xf32, #tpu.memory_space<vmem>>, vector<16x128xf32>
    tpu.vector_store %arg9[%c236, %c0_49], %36 {strides = array<i32>} : memref<362x128xf32, #tpu.memory_space<vmem>>, vector<16x128xf32>,
    %c0_50 = arith.constant 0 : index
    %c12 = arith.constant 12 : index
    %c0_51 = arith.constant 0 : index
    %c0_52 = arith.constant 0 : index
    %38 = vector.load %arg1[%c0_50, %c12, %c0_51, %c0_52] : memref<1x16x16x128xf32, #tpu.memory_space<vmem>>, vector<1x1x16x128xf32>
    %39 = vector.shape_cast %38 : vector<1x1x16x128xf32> to vector<16x128xf32>
    %c254 = arith.constant 254 : index
    %c0_53 = arith.constant 0 : index
    %40 = vector.load %arg9[%c254, %c0_53] : memref<362x128xf32, #tpu.memory_space<vmem>>, vector<16x128xf32>
    tpu.vector_store %arg9[%c254, %c0_53], %39 {strides = array<i32>} : memref<362x128xf32, #tpu.memory_space<vmem>>, vector<16x128xf32>,
    %c0_54 = arith.constant 0 : index
    %c13 = arith.constant 13 : index
    %c0_55 = arith.constant 0 : index
    %c0_56 = arith.constant 0 : index
    %41 = vector.load %arg1[%c0_54, %c13, %c0_55, %c0_56] : memref<1x16x16x128xf32, #tpu.memory_space<vmem>>, vector<1x1x16x128xf32>
    %42 = vector.shape_cast %41 : vector<1x1x16x128xf32> to vector<16x128xf32>
    %c272 = arith.constant 272 : index
    %c0_57 = arith.constant 0 : index
    %43 = vector.load %arg9[%c272, %c0_57] : memref<362x128xf32, #tpu.memory_space<vmem>>, vector<16x128xf32>
    tpu.vector_store %arg9[%c272, %c0_57], %42 {strides = array<i32>} : memref<362x128xf32, #tpu.memory_space<vmem>>, vector<16x128xf32>,
    %c0_58 = arith.constant 0 : index
    %c14 = arith.constant 14 : index
    %c0_59 = arith.constant 0 : index
    %c0_60 = arith.constant 0 : index
    %44 = vector.load %arg1[%c0_58, %c14, %c0_59, %c0_60] : memref<1x16x16x128xf32, #tpu.memory_space<vmem>>, vector<1x1x16x128xf32>
    %45 = vector.shape_cast %44 : vector<1x1x16x128xf32> to vector<16x128xf32>
    %c290 = arith.constant 290 : index
    %c0_61 = arith.constant 0 : index
    %46 = vector.load %arg9[%c290, %c0_61] : memref<362x128xf32, #tpu.memory_space<vmem>>, vector<16x128xf32>
    tpu.vector_store %arg9[%c290, %c0_61], %45 {strides = array<i32>} : memref<362x128xf32, #tpu.memory_space<vmem>>, vector<16x128xf32>,
    %c0_62 = arith.constant 0 : index
    %c15 = arith.constant 15 : index
    %c0_63 = arith.constant 0 : index
    %c0_64 = arith.constant 0 : index
    %47 = vector.load %arg1[%c0_62, %c15, %c0_63, %c0_64] : memref<1x16x16x128xf32, #tpu.memory_space<vmem>>, vector<1x1x16x128xf32>
    %48 = vector.shape_cast %47 : vector<1x1x16x128xf32> to vector<16x128xf32>
    %c308 = arith.constant 308 : index
    %c0_65 = arith.constant 0 : index
    %49 = vector.load %arg9[%c308, %c0_65] : memref<362x128xf32, #tpu.memory_space<vmem>>, vector<16x128xf32>
    tpu.vector_store %arg9[%c308, %c0_65], %48 {strides = array<i32>} : memref<362x128xf32, #tpu.memory_space<vmem>>, vector<16x128xf32>,
    %cst_66 = arith.constant 0.000000e+00 : f32
    %50 = vector.broadcast %cst_66 : f32 to vector<324x128xf32>
    %c0_67 = arith.constant 0 : index
    %c0_68 = arith.constant 0 : index
    %51 = vector.load %arg9[%c0_67, %c0_68] : memref<362x128xf32, #tpu.memory_space<vmem>>, vector<324x128xf32>
    %c0_69 = arith.constant 0 : index
    %c0_70 = arith.constant 0 : index
    %c0_71 = arith.constant 0 : index
    %c0_72 = arith.constant 0 : index
    %52 = vector.load %arg2[%c0_69, %c0_70, %c0_71, %c0_72] : memref<3x3x128x128xf32, #tpu.memory_space<vmem>>, vector<1x1x128x128xf32>
    %53 = vector.shape_cast %52 : vector<1x1x128x128xf32> to vector<128x128xf32>
    %cst_73 = arith.constant dense<0.000000e+00> : vector<324x128xf32>
    %54 = tpu.matmul %51, %53, %cst_73 {dimension_numbers = #tpu.dot_dimension_numbers<[1], [0], [0], [1], [0, 0, 1, 1], [], []>} : vector<324x128xf32>, vector<128x128xf32>, vector<324x128xf32> -> vector<324x128xf32>
    %55 = arith.addf %50, %54 : vector<324x128xf32>
    %c1_74 = arith.constant 1 : index
    %c0_75 = arith.constant 0 : index
    %56 = vector.load %arg9[%c1_74, %c0_75] : memref<362x128xf32, #tpu.memory_space<vmem>>, vector<324x128xf32>
    %c0_76 = arith.constant 0 : index
    %c1_77 = arith.constant 1 : index
    %c0_78 = arith.constant 0 : index
    %c0_79 = arith.constant 0 : index
    %57 = vector.load %arg2[%c0_76, %c1_77, %c0_78, %c0_79] : memref<3x3x128x128xf32, #tpu.memory_space<vmem>>, vector<1x1x128x128xf32>
    %58 = vector.shape_cast %57 : vector<1x1x128x128xf32> to vector<128x128xf32>
    %cst_80 = arith.constant dense<0.000000e+00> : vector<324x128xf32>
    %59 = tpu.matmul %56, %58, %cst_80 {dimension_numbers = #tpu.dot_dimension_numbers<[1], [0], [0], [1], [0, 0, 1, 1], [], []>} : vector<324x128xf32>, vector<128x128xf32>, vector<324x128xf32> -> vector<324x128xf32>
    %60 = arith.addf %55, %59 : vector<324x128xf32>
    %c2_81 = arith.constant 2 : index
    %c0_82 = arith.constant 0 : index
    %61 = vector.load %arg9[%c2_81, %c0_82] : memref<362x128xf32, #tpu.memory_space<vmem>>, vector<324x128xf32>
    %c0_83 = arith.constant 0 : index
    %c2_84 = arith.constant 2 : index
    %c0_85 = arith.constant 0 : index
    %c0_86 = arith.constant 0 : index
    %62 = vector.load %arg2[%c0_83, %c2_84, %c0_85, %c0_86] : memref<3x3x128x128xf32, #tpu.memory_space<vmem>>, vector<1x1x128x128xf32>
    %63 = vector.shape_cast %62 : vector<1x1x128x128xf32> to vector<128x128xf32>
    %cst_87 = arith.constant dense<0.000000e+00> : vector<324x128xf32>
    %64 = tpu.matmul %61, %63, %cst_87 {dimension_numbers = #tpu.dot_dimension_numbers<[1], [0], [0], [1], [0, 0, 1, 1], [], []>} : vector<324x128xf32>, vector<128x128xf32>, vector<324x128xf32> -> vector<324x128xf32>
    %65 = arith.addf %60, %64 : vector<324x128xf32>
    %c18 = arith.constant 18 : index
    %c0_88 = arith.constant 0 : index
    %66 = vector.load %arg9[%c18, %c0_88] : memref<362x128xf32, #tpu.memory_space<vmem>>, vector<324x128xf32>
    %c1_89 = arith.constant 1 : index
    %c0_90 = arith.constant 0 : index
    %c0_91 = arith.constant 0 : index
    %c0_92 = arith.constant 0 : index
    %67 = vector.load %arg2[%c1_89, %c0_90, %c0_91, %c0_92] : memref<3x3x128x128xf32, #tpu.memory_space<vmem>>, vector<1x1x128x128xf32>
    %68 = vector.shape_cast %67 : vector<1x1x128x128xf32> to vector<128x128xf32>
    %cst_93 = arith.constant dense<0.000000e+00> : vector<324x128xf32>
    %69 = tpu.matmul %66, %68, %cst_93 {dimension_numbers = #tpu.dot_dimension_numbers<[1], [0], [0], [1], [0, 0, 1, 1], [], []>} : vector<324x128xf32>, vector<128x128xf32>, vector<324x128xf32> -> vector<324x128xf32>
    %70 = arith.addf %65, %69 : vector<324x128xf32>
    %c19 = arith.constant 19 : index
    %c0_94 = arith.constant 0 : index
    %71 = vector.load %arg9[%c19, %c0_94] : memref<362x128xf32, #tpu.memory_space<vmem>>, vector<324x128xf32>
    %c1_95 = arith.constant 1 : index
    %c1_96 = arith.constant 1 : index
    %c0_97 = arith.constant 0 : index
    %c0_98 = arith.constant 0 : index
    %72 = vector.load %arg2[%c1_95, %c1_96, %c0_97, %c0_98] : memref<3x3x128x128xf32, #tpu.memory_space<vmem>>, vector<1x1x128x128xf32>
    %73 = vector.shape_cast %72 : vector<1x1x128x128xf32> to vector<128x128xf32>
    %cst_99 = arith.constant dense<0.000000e+00> : vector<324x128xf32>
    %74 = tpu.matmul %71, %73, %cst_99 {dimension_numbers = #tpu.dot_dimension_numbers<[1], [0], [0], [1], [0, 0, 1, 1], [], []>} : vector<324x128xf32>, vector<128x128xf32>, vector<324x128xf32> -> vector<324x128xf32>
    %75 = arith.addf %70, %74 : vector<324x128xf32>
    %c20 = arith.constant 20 : index
    %c0_100 = arith.constant 0 : index
    %76 = vector.load %arg9[%c20, %c0_100] : memref<362x128xf32, #tpu.memory_space<vmem>>, vector<324x128xf32>
    %c1_101 = arith.constant 1 : index
    %c2_102 = arith.constant 2 : index
    %c0_103 = arith.constant 0 : index
    %c0_104 = arith.constant 0 : index
    %77 = vector.load %arg2[%c1_101, %c2_102, %c0_103, %c0_104] : memref<3x3x128x128xf32, #tpu.memory_space<vmem>>, vector<1x1x128x128xf32>
    %78 = vector.shape_cast %77 : vector<1x1x128x128xf32> to vector<128x128xf32>
    %cst_105 = arith.constant dense<0.000000e+00> : vector<324x128xf32>
    %79 = tpu.matmul %76, %78, %cst_105 {dimension_numbers = #tpu.dot_dimension_numbers<[1], [0], [0], [1], [0, 0, 1, 1], [], []>} : vector<324x128xf32>, vector<128x128xf32>, vector<324x128xf32> -> vector<324x128xf32>
    %80 = arith.addf %75, %79 : vector<324x128xf32>
    %c36 = arith.constant 36 : index
    %c0_106 = arith.constant 0 : index
    %81 = vector.load %arg9[%c36, %c0_106] : memref<362x128xf32, #tpu.memory_space<vmem>>, vector<324x128xf32>
    %c2_107 = arith.constant 2 : index
    %c0_108 = arith.constant 0 : index
    %c0_109 = arith.constant 0 : index
    %c0_110 = arith.constant 0 : index
    %82 = vector.load %arg2[%c2_107, %c0_108, %c0_109, %c0_110] : memref<3x3x128x128xf32, #tpu.memory_space<vmem>>, vector<1x1x128x128xf32>
    %83 = vector.shape_cast %82 : vector<1x1x128x128xf32> to vector<128x128xf32>
    %cst_111 = arith.constant dense<0.000000e+00> : vector<324x128xf32>
    %84 = tpu.matmul %81, %83, %cst_111 {dimension_numbers = #tpu.dot_dimension_numbers<[1], [0], [0], [1], [0, 0, 1, 1], [], []>} : vector<324x128xf32>, vector<128x128xf32>, vector<324x128xf32> -> vector<324x128xf32>
    %85 = arith.addf %80, %84 : vector<324x128xf32>
    %c37 = arith.constant 37 : index
    %c0_112 = arith.constant 0 : index
    %86 = vector.load %arg9[%c37, %c0_112] : memref<362x128xf32, #tpu.memory_space<vmem>>, vector<324x128xf32>
    %c2_113 = arith.constant 2 : index
    %c1_114 = arith.constant 1 : index
    %c0_115 = arith.constant 0 : index
    %c0_116 = arith.constant 0 : index
    %87 = vector.load %arg2[%c2_113, %c1_114, %c0_115, %c0_116] : memref<3x3x128x128xf32, #tpu.memory_space<vmem>>, vector<1x1x128x128xf32>
    %88 = vector.shape_cast %87 : vector<1x1x128x128xf32> to vector<128x128xf32>
    %cst_117 = arith.constant dense<0.000000e+00> : vector<324x128xf32>
    %89 = tpu.matmul %86, %88, %cst_117 {dimension_numbers = #tpu.dot_dimension_numbers<[1], [0], [0], [1], [0, 0, 1, 1], [], []>} : vector<324x128xf32>, vector<128x128xf32>, vector<324x128xf32> -> vector<324x128xf32>
    %90 = arith.addf %85, %89 : vector<324x128xf32>
    %c38_118 = arith.constant 38 : index
    %c0_119 = arith.constant 0 : index
    %91 = vector.load %arg9[%c38_118, %c0_119] : memref<362x128xf32, #tpu.memory_space<vmem>>, vector<324x128xf32>
    %c2_120 = arith.constant 2 : index
    %c2_121 = arith.constant 2 : index
    %c0_122 = arith.constant 0 : index
    %c0_123 = arith.constant 0 : index
    %92 = vector.load %arg2[%c2_120, %c2_121, %c0_122, %c0_123] : memref<3x3x128x128xf32, #tpu.memory_space<vmem>>, vector<1x1x128x128xf32>
    %93 = vector.shape_cast %92 : vector<1x1x128x128xf32> to vector<128x128xf32>
    %cst_124 = arith.constant dense<0.000000e+00> : vector<324x128xf32>
    %94 = tpu.matmul %91, %93, %cst_124 {dimension_numbers = #tpu.dot_dimension_numbers<[1], [0], [0], [1], [0, 0, 1, 1], [], []>} : vector<324x128xf32>, vector<128x128xf32>, vector<324x128xf32> -> vector<324x128xf32>
    %95 = arith.addf %90, %94 : vector<324x128xf32>
    %c0_125 = arith.constant 0 : index
    %c0_126 = arith.constant 0 : index
    %96 = vector.load %arg3[%c0_125, %c0_126] : memref<1x128xf32, #tpu.memory_space<vmem>>, vector<1x128xf32>
    %97 = vector.broadcast %96 : vector<1x128xf32> to vector<324x128xf32>
    %98 = arith.mulf %95, %97 : vector<324x128xf32>
    %c0_127 = arith.constant 0 : index
    %c0_128 = arith.constant 0 : index
    %99 = vector.load %arg4[%c0_127, %c0_128] : memref<1x128xf32, #tpu.memory_space<vmem>>, vector<1x128xf32>
    %100 = vector.broadcast %99 : vector<1x128xf32> to vector<324x128xf32>
    %101 = arith.addf %98, %100 : vector<324x128xf32>
    %cst_129 = arith.constant 0.000000e+00 : f32
    %102 = vector.broadcast %cst_129 : f32 to vector<324x128xf32>
    %103 = arith.maximumf %101, %102 : vector<324x128xf32>
    %cst_130 = arith.constant 0.000000e+00 : f32
    %104 = vector.broadcast %cst_130 : f32 to vector<362x128xf32>
    %c0_131 = arith.constant 0 : index
    %c0_132 = arith.constant 0 : index
    %105 = vector.load %arg10[%c0_131, %c0_132] : memref<362x128xf32, #tpu.memory_space<vmem>>, vector<362x128xf32>
    tpu.vector_store %arg10[%c0_131, %c0_132], %104 {strides = array<i32>} : memref<362x128xf32, #tpu.memory_space<vmem>>, vector<362x128xf32>,
    %106 = vector.extract_strided_slice %103 {offsets = [19, 0], sizes = [16, 128], strides = [1, 1]} : vector<324x128xf32> to vector<16x128xf32>
    %c38_133 = arith.constant 38 : index
    %c0_134 = arith.constant 0 : index
    %107 = vector.load %arg10[%c38_133, %c0_134] : memref<362x128xf32, #tpu.memory_space<vmem>>, vector<16x128xf32>
    tpu.vector_store %arg10[%c38_133, %c0_134], %106 {strides = array<i32>} : memref<362x128xf32, #tpu.memory_space<vmem>>, vector<16x128xf32>,
    %108 = vector.extract_strided_slice %103 {offsets = [37, 0], sizes = [16, 128], strides = [1, 1]} : vector<324x128xf32> to vector<16x128xf32>
    %c56_135 = arith.constant 56 : index
    %c0_136 = arith.constant 0 : index
    %109 = vector.load %arg10[%c56_135, %c0_136] : memref<362x128xf32, #tpu.memory_space<vmem>>, vector<16x128xf32>
    tpu.vector_store %arg10[%c56_135, %c0_136], %108 {strides = array<i32>} : memref<362x128xf32, #tpu.memory_space<vmem>>, vector<16x128xf32>,
    %110 = vector.extract_strided_slice %103 {offsets = [55, 0], sizes = [16, 128], strides = [1, 1]} : vector<324x128xf32> to vector<16x128xf32>
    %c74_137 = arith.constant 74 : index
    %c0_138 = arith.constant 0 : index
    %111 = vector.load %arg10[%c74_137, %c0_138] : memref<362x128xf32, #tpu.memory_space<vmem>>, vector<16x128xf32>
    tpu.vector_store %arg10[%c74_137, %c0_138], %110 {strides = array<i32>} : memref<362x128xf32, #tpu.memory_space<vmem>>, vector<16x128xf32>,
    %112 = vector.extract_strided_slice %103 {offsets = [73, 0], sizes = [16, 128], strides = [1, 1]} : vector<324x128xf32> to vector<16x128xf32>
    %c92_139 = arith.constant 92 : index
    %c0_140 = arith.constant 0 : index
    %113 = vector.load %arg10[%c92_139, %c0_140] : memref<362x128xf32, #tpu.memory_space<vmem>>, vector<16x128xf32>
    tpu.vector_store %arg10[%c92_139, %c0_140], %112 {strides = array<i32>} : memref<362x128xf32, #tpu.memory_space<vmem>>, vector<16x128xf32>,
    %114 = vector.extract_strided_slice %103 {offsets = [91, 0], sizes = [16, 128], strides = [1, 1]} : vector<324x128xf32> to vector<16x128xf32>
    %c110_141 = arith.constant 110 : index
    %c0_142 = arith.constant 0 : index
    %115 = vector.load %arg10[%c110_141, %c0_142] : memref<362x128xf32, #tpu.memory_space<vmem>>, vector<16x128xf32>
    tpu.vector_store %arg10[%c110_141, %c0_142], %114 {strides = array<i32>} : memref<362x128xf32, #tpu.memory_space<vmem>>, vector<16x128xf32>,
    %116 = vector.extract_strided_slice %103 {offsets = [109, 0], sizes = [16, 128], strides = [1, 1]} : vector<324x128xf32> to vector<16x128xf32>
    %c128_143 = arith.constant 128 : index
    %c0_144 = arith.constant 0 : index
    %117 = vector.load %arg10[%c128_143, %c0_144] : memref<362x128xf32, #tpu.memory_space<vmem>>, vector<16x128xf32>
    tpu.vector_store %arg10[%c128_143, %c0_144], %116 {strides = array<i32>} : memref<362x128xf32, #tpu.memory_space<vmem>>, vector<16x128xf32>,
    %118 = vector.extract_strided_slice %103 {offsets = [127, 0], sizes = [16, 128], strides = [1, 1]} : vector<324x128xf32> to vector<16x128xf32>
    %c146_145 = arith.constant 146 : index
    %c0_146 = arith.constant 0 : index
    %119 = vector.load %arg10[%c146_145, %c0_146] : memref<362x128xf32, #tpu.memory_space<vmem>>, vector<16x128xf32>
    tpu.vector_store %arg10[%c146_145, %c0_146], %118 {strides = array<i32>} : memref<362x128xf32, #tpu.memory_space<vmem>>, vector<16x128xf32>,
    %120 = vector.extract_strided_slice %103 {offsets = [145, 0], sizes = [16, 128], strides = [1, 1]} : vector<324x128xf32> to vector<16x128xf32>
    %c164_147 = arith.constant 164 : index
    %c0_148 = arith.constant 0 : index
    %121 = vector.load %arg10[%c164_147, %c0_148] : memref<362x128xf32, #tpu.memory_space<vmem>>, vector<16x128xf32>
    tpu.vector_store %arg10[%c164_147, %c0_148], %120 {strides = array<i32>} : memref<362x128xf32, #tpu.memory_space<vmem>>, vector<16x128xf32>,
    %122 = vector.extract_strided_slice %103 {offsets = [163, 0], sizes = [16, 128], strides = [1, 1]} : vector<324x128xf32> to vector<16x128xf32>
    %c182_149 = arith.constant 182 : index
    %c0_150 = arith.constant 0 : index
    %123 = vector.load %arg10[%c182_149, %c0_150] : memref<362x128xf32, #tpu.memory_space<vmem>>, vector<16x128xf32>
    tpu.vector_store %arg10[%c182_149, %c0_150], %122 {strides = array<i32>} : memref<362x128xf32, #tpu.memory_space<vmem>>, vector<16x128xf32>,
    %124 = vector.extract_strided_slice %103 {offsets = [181, 0], sizes = [16, 128], strides = [1, 1]} : vector<324x128xf32> to vector<16x128xf32>
    %c200_151 = arith.constant 200 : index
    %c0_152 = arith.constant 0 : index
    %125 = vector.load %arg10[%c200_151, %c0_152] : memref<362x128xf32, #tpu.memory_space<vmem>>, vector<16x128xf32>
    tpu.vector_store %arg10[%c200_151, %c0_152], %124 {strides = array<i32>} : memref<362x128xf32, #tpu.memory_space<vmem>>, vector<16x128xf32>,
    %126 = vector.extract_strided_slice %103 {offsets = [199, 0], sizes = [16, 128], strides = [1, 1]} : vector<324x128xf32> to vector<16x128xf32>
    %c218_153 = arith.constant 218 : index
    %c0_154 = arith.constant 0 : index
    %127 = vector.load %arg10[%c218_153, %c0_154] : memref<362x128xf32, #tpu.memory_space<vmem>>, vector<16x128xf32>
    tpu.vector_store %arg10[%c218_153, %c0_154], %126 {strides = array<i32>} : memref<362x128xf32, #tpu.memory_space<vmem>>, vector<16x128xf32>,
    %128 = vector.extract_strided_slice %103 {offsets = [217, 0], sizes = [16, 128], strides = [1, 1]} : vector<324x128xf32> to vector<16x128xf32>
    %c236_155 = arith.constant 236 : index
    %c0_156 = arith.constant 0 : index
    %129 = vector.load %arg10[%c236_155, %c0_156] : memref<362x128xf32, #tpu.memory_space<vmem>>, vector<16x128xf32>
    tpu.vector_store %arg10[%c236_155, %c0_156], %128 {strides = array<i32>} : memref<362x128xf32, #tpu.memory_space<vmem>>, vector<16x128xf32>,
    %130 = vector.extract_strided_slice %103 {offsets = [235, 0], sizes = [16, 128], strides = [1, 1]} : vector<324x128xf32> to vector<16x128xf32>
    %c254_157 = arith.constant 254 : index
    %c0_158 = arith.constant 0 : index
    %131 = vector.load %arg10[%c254_157, %c0_158] : memref<362x128xf32, #tpu.memory_space<vmem>>, vector<16x128xf32>
    tpu.vector_store %arg10[%c254_157, %c0_158], %130 {strides = array<i32>} : memref<362x128xf32, #tpu.memory_space<vmem>>, vector<16x128xf32>,
    %132 = vector.extract_strided_slice %103 {offsets = [253, 0], sizes = [16, 128], strides = [1, 1]} : vector<324x128xf32> to vector<16x128xf32>
    %c272_159 = arith.constant 272 : index
    %c0_160 = arith.constant 0 : index
    %133 = vector.load %arg10[%c272_159, %c0_160] : memref<362x128xf32, #tpu.memory_space<vmem>>, vector<16x128xf32>
    tpu.vector_store %arg10[%c272_159, %c0_160], %132 {strides = array<i32>} : memref<362x128xf32, #tpu.memory_space<vmem>>, vector<16x128xf32>,
    %134 = vector.extract_strided_slice %103 {offsets = [271, 0], sizes = [16, 128], strides = [1, 1]} : vector<324x128xf32> to vector<16x128xf32>
    %c290_161 = arith.constant 290 : index
    %c0_162 = arith.constant 0 : index
    %135 = vector.load %arg10[%c290_161, %c0_162] : memref<362x128xf32, #tpu.memory_space<vmem>>, vector<16x128xf32>
    tpu.vector_store %arg10[%c290_161, %c0_162], %134 {strides = array<i32>} : memref<362x128xf32, #tpu.memory_space<vmem>>, vector<16x128xf32>,
    %136 = vector.extract_strided_slice %103 {offsets = [289, 0], sizes = [16, 128], strides = [1, 1]} : vector<324x128xf32> to vector<16x128xf32>
    %c308_163 = arith.constant 308 : index
    %c0_164 = arith.constant 0 : index
    %137 = vector.load %arg10[%c308_163, %c0_164] : memref<362x128xf32, #tpu.memory_space<vmem>>, vector<16x128xf32>
    tpu.vector_store %arg10[%c308_163, %c0_164], %136 {strides = array<i32>} : memref<362x128xf32, #tpu.memory_space<vmem>>, vector<16x128xf32>,
    %cst_165 = arith.constant 0.000000e+00 : f32
    %138 = vector.broadcast %cst_165 : f32 to vector<324x128xf32>
    %c0_166 = arith.constant 0 : index
    %c0_167 = arith.constant 0 : index
    %139 = vector.load %arg10[%c0_166, %c0_167] : memref<362x128xf32, #tpu.memory_space<vmem>>, vector<324x128xf32>
    %c0_168 = arith.constant 0 : index
    %c0_169 = arith.constant 0 : index
    %c0_170 = arith.constant 0 : index
    %c0_171 = arith.constant 0 : index
    %140 = vector.load %arg5[%c0_168, %c0_169, %c0_170, %c0_171] : memref<3x3x128x128xf32, #tpu.memory_space<vmem>>, vector<1x1x128x128xf32>
    %141 = vector.shape_cast %140 : vector<1x1x128x128xf32> to vector<128x128xf32>
    %cst_172 = arith.constant dense<0.000000e+00> : vector<324x128xf32>
    %142 = tpu.matmul %139, %141, %cst_172 {dimension_numbers = #tpu.dot_dimension_numbers<[1], [0], [0], [1], [0, 0, 1, 1], [], []>} : vector<324x128xf32>, vector<128x128xf32>, vector<324x128xf32> -> vector<324x128xf32>
    %143 = arith.addf %138, %142 : vector<324x128xf32>
    %c1_173 = arith.constant 1 : index
    %c0_174 = arith.constant 0 : index
    %144 = vector.load %arg10[%c1_173, %c0_174] : memref<362x128xf32, #tpu.memory_space<vmem>>, vector<324x128xf32>
    %c0_175 = arith.constant 0 : index
    %c1_176 = arith.constant 1 : index
    %c0_177 = arith.constant 0 : index
    %c0_178 = arith.constant 0 : index
    %145 = vector.load %arg5[%c0_175, %c1_176, %c0_177, %c0_178] : memref<3x3x128x128xf32, #tpu.memory_space<vmem>>, vector<1x1x128x128xf32>
    %146 = vector.shape_cast %145 : vector<1x1x128x128xf32> to vector<128x128xf32>
    %cst_179 = arith.constant dense<0.000000e+00> : vector<324x128xf32>
    %147 = tpu.matmul %144, %146, %cst_179 {dimension_numbers = #tpu.dot_dimension_numbers<[1], [0], [0], [1], [0, 0, 1, 1], [], []>} : vector<324x128xf32>, vector<128x128xf32>, vector<324x128xf32> -> vector<324x128xf32>
    %148 = arith.addf %143, %147 : vector<324x128xf32>
    %c2_180 = arith.constant 2 : index
    %c0_181 = arith.constant 0 : index
    %149 = vector.load %arg10[%c2_180, %c0_181] : memref<362x128xf32, #tpu.memory_space<vmem>>, vector<324x128xf32>
    %c0_182 = arith.constant 0 : index
    %c2_183 = arith.constant 2 : index
    %c0_184 = arith.constant 0 : index
    %c0_185 = arith.constant 0 : index
    %150 = vector.load %arg5[%c0_182, %c2_183, %c0_184, %c0_185] : memref<3x3x128x128xf32, #tpu.memory_space<vmem>>, vector<1x1x128x128xf32>
    %151 = vector.shape_cast %150 : vector<1x1x128x128xf32> to vector<128x128xf32>
    %cst_186 = arith.constant dense<0.000000e+00> : vector<324x128xf32>
    %152 = tpu.matmul %149, %151, %cst_186 {dimension_numbers = #tpu.dot_dimension_numbers<[1], [0], [0], [1], [0, 0, 1, 1], [], []>} : vector<324x128xf32>, vector<128x128xf32>, vector<324x128xf32> -> vector<324x128xf32>
    %153 = arith.addf %148, %152 : vector<324x128xf32>
    %c18_187 = arith.constant 18 : index
    %c0_188 = arith.constant 0 : index
    %154 = vector.load %arg10[%c18_187, %c0_188] : memref<362x128xf32, #tpu.memory_space<vmem>>, vector<324x128xf32>
    %c1_189 = arith.constant 1 : index
    %c0_190 = arith.constant 0 : index
    %c0_191 = arith.constant 0 : index
    %c0_192 = arith.constant 0 : index
    %155 = vector.load %arg5[%c1_189, %c0_190, %c0_191, %c0_192] : memref<3x3x128x128xf32, #tpu.memory_space<vmem>>, vector<1x1x128x128xf32>
    %156 = vector.shape_cast %155 : vector<1x1x128x128xf32> to vector<128x128xf32>
    %cst_193 = arith.constant dense<0.000000e+00> : vector<324x128xf32>
    %157 = tpu.matmul %154, %156, %cst_193 {dimension_numbers = #tpu.dot_dimension_numbers<[1], [0], [0], [1], [0, 0, 1, 1], [], []>} : vector<324x128xf32>, vector<128x128xf32>, vector<324x128xf32> -> vector<324x128xf32>
    %158 = arith.addf %153, %157 : vector<324x128xf32>
    %c19_194 = arith.constant 19 : index
    %c0_195 = arith.constant 0 : index
    %159 = vector.load %arg10[%c19_194, %c0_195] : memref<362x128xf32, #tpu.memory_space<vmem>>, vector<324x128xf32>
    %c1_196 = arith.constant 1 : index
    %c1_197 = arith.constant 1 : index
    %c0_198 = arith.constant 0 : index
    %c0_199 = arith.constant 0 : index
    %160 = vector.load %arg5[%c1_196, %c1_197, %c0_198, %c0_199] : memref<3x3x128x128xf32, #tpu.memory_space<vmem>>, vector<1x1x128x128xf32>
    %161 = vector.shape_cast %160 : vector<1x1x128x128xf32> to vector<128x128xf32>
    %cst_200 = arith.constant dense<0.000000e+00> : vector<324x128xf32>
    %162 = tpu.matmul %159, %161, %cst_200 {dimension_numbers = #tpu.dot_dimension_numbers<[1], [0], [0], [1], [0, 0, 1, 1], [], []>} : vector<324x128xf32>, vector<128x128xf32>, vector<324x128xf32> -> vector<324x128xf32>
    %163 = arith.addf %158, %162 : vector<324x128xf32>
    %c20_201 = arith.constant 20 : index
    %c0_202 = arith.constant 0 : index
    %164 = vector.load %arg10[%c20_201, %c0_202] : memref<362x128xf32, #tpu.memory_space<vmem>>, vector<324x128xf32>
    %c1_203 = arith.constant 1 : index
    %c2_204 = arith.constant 2 : index
    %c0_205 = arith.constant 0 : index
    %c0_206 = arith.constant 0 : index
    %165 = vector.load %arg5[%c1_203, %c2_204, %c0_205, %c0_206] : memref<3x3x128x128xf32, #tpu.memory_space<vmem>>, vector<1x1x128x128xf32>
    %166 = vector.shape_cast %165 : vector<1x1x128x128xf32> to vector<128x128xf32>
    %cst_207 = arith.constant dense<0.000000e+00> : vector<324x128xf32>
    %167 = tpu.matmul %164, %166, %cst_207 {dimension_numbers = #tpu.dot_dimension_numbers<[1], [0], [0], [1], [0, 0, 1, 1], [], []>} : vector<324x128xf32>, vector<128x128xf32>, vector<324x128xf32> -> vector<324x128xf32>
    %168 = arith.addf %163, %167 : vector<324x128xf32>
    %c36_208 = arith.constant 36 : index
    %c0_209 = arith.constant 0 : index
    %169 = vector.load %arg10[%c36_208, %c0_209] : memref<362x128xf32, #tpu.memory_space<vmem>>, vector<324x128xf32>
    %c2_210 = arith.constant 2 : index
    %c0_211 = arith.constant 0 : index
    %c0_212 = arith.constant 0 : index
    %c0_213 = arith.constant 0 : index
    %170 = vector.load %arg5[%c2_210, %c0_211, %c0_212, %c0_213] : memref<3x3x128x128xf32, #tpu.memory_space<vmem>>, vector<1x1x128x128xf32>
    %171 = vector.shape_cast %170 : vector<1x1x128x128xf32> to vector<128x128xf32>
    %cst_214 = arith.constant dense<0.000000e+00> : vector<324x128xf32>
    %172 = tpu.matmul %169, %171, %cst_214 {dimension_numbers = #tpu.dot_dimension_numbers<[1], [0], [0], [1], [0, 0, 1, 1], [], []>} : vector<324x128xf32>, vector<128x128xf32>, vector<324x128xf32> -> vector<324x128xf32>
    %173 = arith.addf %168, %172 : vector<324x128xf32>
    %c37_215 = arith.constant 37 : index
    %c0_216 = arith.constant 0 : index
    %174 = vector.load %arg10[%c37_215, %c0_216] : memref<362x128xf32, #tpu.memory_space<vmem>>, vector<324x128xf32>
    %c2_217 = arith.constant 2 : index
    %c1_218 = arith.constant 1 : index
    %c0_219 = arith.constant 0 : index
    %c0_220 = arith.constant 0 : index
    %175 = vector.load %arg5[%c2_217, %c1_218, %c0_219, %c0_220] : memref<3x3x128x128xf32, #tpu.memory_space<vmem>>, vector<1x1x128x128xf32>
    %176 = vector.shape_cast %175 : vector<1x1x128x128xf32> to vector<128x128xf32>
    %cst_221 = arith.constant dense<0.000000e+00> : vector<324x128xf32>
    %177 = tpu.matmul %174, %176, %cst_221 {dimension_numbers = #tpu.dot_dimension_numbers<[1], [0], [0], [1], [0, 0, 1, 1], [], []>} : vector<324x128xf32>, vector<128x128xf32>, vector<324x128xf32> -> vector<324x128xf32>
    %178 = arith.addf %173, %177 : vector<324x128xf32>
    %c38_222 = arith.constant 38 : index
    %c0_223 = arith.constant 0 : index
    %179 = vector.load %arg10[%c38_222, %c0_223] : memref<362x128xf32, #tpu.memory_space<vmem>>, vector<324x128xf32>
    %c2_224 = arith.constant 2 : index
    %c2_225 = arith.constant 2 : index
    %c0_226 = arith.constant 0 : index
    %c0_227 = arith.constant 0 : index
    %180 = vector.load %arg5[%c2_224, %c2_225, %c0_226, %c0_227] : memref<3x3x128x128xf32, #tpu.memory_space<vmem>>, vector<1x1x128x128xf32>
    %181 = vector.shape_cast %180 : vector<1x1x128x128xf32> to vector<128x128xf32>
    %cst_228 = arith.constant dense<0.000000e+00> : vector<324x128xf32>
    %182 = tpu.matmul %179, %181, %cst_228 {dimension_numbers = #tpu.dot_dimension_numbers<[1], [0], [0], [1], [0, 0, 1, 1], [], []>} : vector<324x128xf32>, vector<128x128xf32>, vector<324x128xf32> -> vector<324x128xf32>
    %183 = arith.addf %178, %182 : vector<324x128xf32>
    %c0_229 = arith.constant 0 : index
    %c0_230 = arith.constant 0 : index
    %184 = vector.load %arg6[%c0_229, %c0_230] : memref<1x128xf32, #tpu.memory_space<vmem>>, vector<1x128xf32>
    %185 = vector.broadcast %184 : vector<1x128xf32> to vector<324x128xf32>
    %186 = arith.mulf %183, %185 : vector<324x128xf32>
    %c0_231 = arith.constant 0 : index
    %c0_232 = arith.constant 0 : index
    %187 = vector.load %arg7[%c0_231, %c0_232] : memref<1x128xf32, #tpu.memory_space<vmem>>, vector<1x128xf32>
    %188 = vector.broadcast %187 : vector<1x128xf32> to vector<324x128xf32>
    %189 = arith.addf %186, %188 : vector<324x128xf32>
    %cst_233 = arith.constant 0.000000e+00 : f32
    %190 = vector.broadcast %cst_233 : f32 to vector<324x128xf32>
    %191 = arith.maximumf %189, %190 : vector<324x128xf32>
    %192 = vector.extract_strided_slice %191 {offsets = [19, 0], sizes = [16, 128], strides = [1, 1]} : vector<324x128xf32> to vector<16x128xf32>
    %c0_234 = arith.constant 0 : index
    %c0_235 = arith.constant 0 : index
    %c0_236 = arith.constant 0 : index
    %c0_237 = arith.constant 0 : index
    %193 = vector.load %arg8[%c0_234, %c0_235, %c0_236, %c0_237] : memref<1x16x16x128xf32, #tpu.memory_space<vmem>>, vector<1x1x16x128xf32>
    %194 = vector.shape_cast %193 : vector<1x1x16x128xf32> to vector<16x128xf32>
    %195 = vector.shape_cast %192 : vector<16x128xf32> to vector<1x1x16x128xf32>
    tpu.vector_store %arg8[%c0_234, %c0_235, %c0_236, %c0_237], %195 {strides = array<i32>} : memref<1x16x16x128xf32, #tpu.memory_space<vmem>>, vector<1x1x16x128xf32>,
    %196 = vector.extract_strided_slice %191 {offsets = [37, 0], sizes = [16, 128], strides = [1, 1]} : vector<324x128xf32> to vector<16x128xf32>
    %c0_238 = arith.constant 0 : index
    %c1_239 = arith.constant 1 : index
    %c0_240 = arith.constant 0 : index
    %c0_241 = arith.constant 0 : index
    %197 = vector.load %arg8[%c0_238, %c1_239, %c0_240, %c0_241] : memref<1x16x16x128xf32, #tpu.memory_space<vmem>>, vector<1x1x16x128xf32>
    %198 = vector.shape_cast %197 : vector<1x1x16x128xf32> to vector<16x128xf32>
    %199 = vector.shape_cast %196 : vector<16x128xf32> to vector<1x1x16x128xf32>
    tpu.vector_store %arg8[%c0_238, %c1_239, %c0_240, %c0_241], %199 {strides = array<i32>} : memref<1x16x16x128xf32, #tpu.memory_space<vmem>>, vector<1x1x16x128xf32>,
    %200 = vector.extract_strided_slice %191 {offsets = [55, 0], sizes = [16, 128], strides = [1, 1]} : vector<324x128xf32> to vector<16x128xf32>
    %c0_242 = arith.constant 0 : index
    %c2_243 = arith.constant 2 : index
    %c0_244 = arith.constant 0 : index
    %c0_245 = arith.constant 0 : index
    %201 = vector.load %arg8[%c0_242, %c2_243, %c0_244, %c0_245] : memref<1x16x16x128xf32, #tpu.memory_space<vmem>>, vector<1x1x16x128xf32>
    %202 = vector.shape_cast %201 : vector<1x1x16x128xf32> to vector<16x128xf32>
    %203 = vector.shape_cast %200 : vector<16x128xf32> to vector<1x1x16x128xf32>
    tpu.vector_store %arg8[%c0_242, %c2_243, %c0_244, %c0_245], %203 {strides = array<i32>} : memref<1x16x16x128xf32, #tpu.memory_space<vmem>>, vector<1x1x16x128xf32>,
    %204 = vector.extract_strided_slice %191 {offsets = [73, 0], sizes = [16, 128], strides = [1, 1]} : vector<324x128xf32> to vector<16x128xf32>
    %c0_246 = arith.constant 0 : index
    %c3_247 = arith.constant 3 : index
    %c0_248 = arith.constant 0 : index
    %c0_249 = arith.constant 0 : index
    %205 = vector.load %arg8[%c0_246, %c3_247, %c0_248, %c0_249] : memref<1x16x16x128xf32, #tpu.memory_space<vmem>>, vector<1x1x16x128xf32>
    %206 = vector.shape_cast %205 : vector<1x1x16x128xf32> to vector<16x128xf32>
    %207 = vector.shape_cast %204 : vector<16x128xf32> to vector<1x1x16x128xf32>
    tpu.vector_store %arg8[%c0_246, %c3_247, %c0_248, %c0_249], %207 {strides = array<i32>} : memref<1x16x16x128xf32, #tpu.memory_space<vmem>>, vector<1x1x16x128xf32>,
    %208 = vector.extract_strided_slice %191 {offsets = [91, 0], sizes = [16, 128], strides = [1, 1]} : vector<324x128xf32> to vector<16x128xf32>
    %c0_250 = arith.constant 0 : index
    %c4_251 = arith.constant 4 : index
    %c0_252 = arith.constant 0 : index
    %c0_253 = arith.constant 0 : index
    %209 = vector.load %arg8[%c0_250, %c4_251, %c0_252, %c0_253] : memref<1x16x16x128xf32, #tpu.memory_space<vmem>>, vector<1x1x16x128xf32>
    %210 = vector.shape_cast %209 : vector<1x1x16x128xf32> to vector<16x128xf32>
    %211 = vector.shape_cast %208 : vector<16x128xf32> to vector<1x1x16x128xf32>
    tpu.vector_store %arg8[%c0_250, %c4_251, %c0_252, %c0_253], %211 {strides = array<i32>} : memref<1x16x16x128xf32, #tpu.memory_space<vmem>>, vector<1x1x16x128xf32>,
    %212 = vector.extract_strided_slice %191 {offsets = [109, 0], sizes = [16, 128], strides = [1, 1]} : vector<324x128xf32> to vector<16x128xf32>
    %c0_254 = arith.constant 0 : index
    %c5_255 = arith.constant 5 : index
    %c0_256 = arith.constant 0 : index
    %c0_257 = arith.constant 0 : index
    %213 = vector.load %arg8[%c0_254, %c5_255, %c0_256, %c0_257] : memref<1x16x16x128xf32, #tpu.memory_space<vmem>>, vector<1x1x16x128xf32>
    %214 = vector.shape_cast %213 : vector<1x1x16x128xf32> to vector<16x128xf32>
    %215 = vector.shape_cast %212 : vector<16x128xf32> to vector<1x1x16x128xf32>
    tpu.vector_store %arg8[%c0_254, %c5_255, %c0_256, %c0_257], %215 {strides = array<i32>} : memref<1x16x16x128xf32, #tpu.memory_space<vmem>>, vector<1x1x16x128xf32>,
    %216 = vector.extract_strided_slice %191 {offsets = [127, 0], sizes = [16, 128], strides = [1, 1]} : vector<324x128xf32> to vector<16x128xf32>
    %c0_258 = arith.constant 0 : index
    %c6_259 = arith.constant 6 : index
    %c0_260 = arith.constant 0 : index
    %c0_261 = arith.constant 0 : index
    %217 = vector.load %arg8[%c0_258, %c6_259, %c0_260, %c0_261] : memref<1x16x16x128xf32, #tpu.memory_space<vmem>>, vector<1x1x16x128xf32>
    %218 = vector.shape_cast %217 : vector<1x1x16x128xf32> to vector<16x128xf32>
    %219 = vector.shape_cast %216 : vector<16x128xf32> to vector<1x1x16x128xf32>
    tpu.vector_store %arg8[%c0_258, %c6_259, %c0_260, %c0_261], %219 {strides = array<i32>} : memref<1x16x16x128xf32, #tpu.memory_space<vmem>>, vector<1x1x16x128xf32>,
    %220 = vector.extract_strided_slice %191 {offsets = [145, 0], sizes = [16, 128], strides = [1, 1]} : vector<324x128xf32> to vector<16x128xf32>
    %c0_262 = arith.constant 0 : index
    %c7_263 = arith.constant 7 : index
    %c0_264 = arith.constant 0 : index
    %c0_265 = arith.constant 0 : index
    %221 = vector.load %arg8[%c0_262, %c7_263, %c0_264, %c0_265] : memref<1x16x16x128xf32, #tpu.memory_space<vmem>>, vector<1x1x16x128xf32>
    %222 = vector.shape_cast %221 : vector<1x1x16x128xf32> to vector<16x128xf32>
    %223 = vector.shape_cast %220 : vector<16x128xf32> to vector<1x1x16x128xf32>
    tpu.vector_store %arg8[%c0_262, %c7_263, %c0_264, %c0_265], %223 {strides = array<i32>} : memref<1x16x16x128xf32, #tpu.memory_space<vmem>>, vector<1x1x16x128xf32>,
    %224 = vector.extract_strided_slice %191 {offsets = [163, 0], sizes = [16, 128], strides = [1, 1]} : vector<324x128xf32> to vector<16x128xf32>
    %c0_266 = arith.constant 0 : index
    %c8_267 = arith.constant 8 : index
    %c0_268 = arith.constant 0 : index
    %c0_269 = arith.constant 0 : index
    %225 = vector.load %arg8[%c0_266, %c8_267, %c0_268, %c0_269] : memref<1x16x16x128xf32, #tpu.memory_space<vmem>>, vector<1x1x16x128xf32>
    %226 = vector.shape_cast %225 : vector<1x1x16x128xf32> to vector<16x128xf32>
    %227 = vector.shape_cast %224 : vector<16x128xf32> to vector<1x1x16x128xf32>
    tpu.vector_store %arg8[%c0_266, %c8_267, %c0_268, %c0_269], %227 {strides = array<i32>} : memref<1x16x16x128xf32, #tpu.memory_space<vmem>>, vector<1x1x16x128xf32>,
    %228 = vector.extract_strided_slice %191 {offsets = [181, 0], sizes = [16, 128], strides = [1, 1]} : vector<324x128xf32> to vector<16x128xf32>
    %c0_270 = arith.constant 0 : index
    %c9_271 = arith.constant 9 : index
    %c0_272 = arith.constant 0 : index
    %c0_273 = arith.constant 0 : index
    %229 = vector.load %arg8[%c0_270, %c9_271, %c0_272, %c0_273] : memref<1x16x16x128xf32, #tpu.memory_space<vmem>>, vector<1x1x16x128xf32>
    %230 = vector.shape_cast %229 : vector<1x1x16x128xf32> to vector<16x128xf32>
    %231 = vector.shape_cast %228 : vector<16x128xf32> to vector<1x1x16x128xf32>
    tpu.vector_store %arg8[%c0_270, %c9_271, %c0_272, %c0_273], %231 {strides = array<i32>} : memref<1x16x16x128xf32, #tpu.memory_space<vmem>>, vector<1x1x16x128xf32>,
    %232 = vector.extract_strided_slice %191 {offsets = [199, 0], sizes = [16, 128], strides = [1, 1]} : vector<324x128xf32> to vector<16x128xf32>
    %c0_274 = arith.constant 0 : index
    %c10_275 = arith.constant 10 : index
    %c0_276 = arith.constant 0 : index
    %c0_277 = arith.constant 0 : index
    %233 = vector.load %arg8[%c0_274, %c10_275, %c0_276, %c0_277] : memref<1x16x16x128xf32, #tpu.memory_space<vmem>>, vector<1x1x16x128xf32>
    %234 = vector.shape_cast %233 : vector<1x1x16x128xf32> to vector<16x128xf32>
    %235 = vector.shape_cast %232 : vector<16x128xf32> to vector<1x1x16x128xf32>
    tpu.vector_store %arg8[%c0_274, %c10_275, %c0_276, %c0_277], %235 {strides = array<i32>} : memref<1x16x16x128xf32, #tpu.memory_space<vmem>>, vector<1x1x16x128xf32>,
    %236 = vector.extract_strided_slice %191 {offsets = [217, 0], sizes = [16, 128], strides = [1, 1]} : vector<324x128xf32> to vector<16x128xf32>
    %c0_278 = arith.constant 0 : index
    %c11_279 = arith.constant 11 : index
    %c0_280 = arith.constant 0 : index
    %c0_281 = arith.constant 0 : index
    %237 = vector.load %arg8[%c0_278, %c11_279, %c0_280, %c0_281] : memref<1x16x16x128xf32, #tpu.memory_space<vmem>>, vector<1x1x16x128xf32>
    %238 = vector.shape_cast %237 : vector<1x1x16x128xf32> to vector<16x128xf32>
    %239 = vector.shape_cast %236 : vector<16x128xf32> to vector<1x1x16x128xf32>
    tpu.vector_store %arg8[%c0_278, %c11_279, %c0_280, %c0_281], %239 {strides = array<i32>} : memref<1x16x16x128xf32, #tpu.memory_space<vmem>>, vector<1x1x16x128xf32>,
    %240 = vector.extract_strided_slice %191 {offsets = [235, 0], sizes = [16, 128], strides = [1, 1]} : vector<324x128xf32> to vector<16x128xf32>
    %c0_282 = arith.constant 0 : index
    %c12_283 = arith.constant 12 : index
    %c0_284 = arith.constant 0 : index
    %c0_285 = arith.constant 0 : index
    %241 = vector.load %arg8[%c0_282, %c12_283, %c0_284, %c0_285] : memref<1x16x16x128xf32, #tpu.memory_space<vmem>>, vector<1x1x16x128xf32>
    %242 = vector.shape_cast %241 : vector<1x1x16x128xf32> to vector<16x128xf32>
    %243 = vector.shape_cast %240 : vector<16x128xf32> to vector<1x1x16x128xf32>
    tpu.vector_store %arg8[%c0_282, %c12_283, %c0_284, %c0_285], %243 {strides = array<i32>} : memref<1x16x16x128xf32, #tpu.memory_space<vmem>>, vector<1x1x16x128xf32>,
    %244 = vector.extract_strided_slice %191 {offsets = [253, 0], sizes = [16, 128], strides = [1, 1]} : vector<324x128xf32> to vector<16x128xf32>
    %c0_286 = arith.constant 0 : index
    %c13_287 = arith.constant 13 : index
    %c0_288 = arith.constant 0 : index
    %c0_289 = arith.constant 0 : index
    %245 = vector.load %arg8[%c0_286, %c13_287, %c0_288, %c0_289] : memref<1x16x16x128xf32, #tpu.memory_space<vmem>>, vector<1x1x16x128xf32>
    %246 = vector.shape_cast %245 : vector<1x1x16x128xf32> to vector<16x128xf32>
    %247 = vector.shape_cast %244 : vector<16x128xf32> to vector<1x1x16x128xf32>
    tpu.vector_store %arg8[%c0_286, %c13_287, %c0_288, %c0_289], %247 {strides = array<i32>} : memref<1x16x16x128xf32, #tpu.memory_space<vmem>>, vector<1x1x16x128xf32>,
    %248 = vector.extract_strided_slice %191 {offsets = [271, 0], sizes = [16, 128], strides = [1, 1]} : vector<324x128xf32> to vector<16x128xf32>
    %c0_290 = arith.constant 0 : index
    %c14_291 = arith.constant 14 : index
    %c0_292 = arith.constant 0 : index
    %c0_293 = arith.constant 0 : index
    %249 = vector.load %arg8[%c0_290, %c14_291, %c0_292, %c0_293] : memref<1x16x16x128xf32, #tpu.memory_space<vmem>>, vector<1x1x16x128xf32>
    %250 = vector.shape_cast %249 : vector<1x1x16x128xf32> to vector<16x128xf32>
    %251 = vector.shape_cast %248 : vector<16x128xf32> to vector<1x1x16x128xf32>
    tpu.vector_store %arg8[%c0_290, %c14_291, %c0_292, %c0_293], %251 {strides = array<i32>} : memref<1x16x16x128xf32, #tpu.memory_space<vmem>>, vector<1x1x16x128xf32>,
    %252 = vector.extract_strided_slice %191 {offsets = [289, 0], sizes = [16, 128], strides = [1, 1]} : vector<324x128xf32> to vector<16x128xf32>
    %c0_294 = arith.constant 0 : index
    %c15_295 = arith.constant 15 : index
    %c0_296 = arith.constant 0 : index
    %c0_297 = arith.constant 0 : index
    %253 = vector.load %arg8[%c0_294, %c15_295, %c0_296, %c0_297] : memref<1x16x16x128xf32, #tpu.memory_space<vmem>>, vector<1x1x16x128xf32>
    %254 = vector.shape_cast %253 : vector<1x1x16x128xf32> to vector<16x128xf32>
    %255 = vector.shape_cast %252 : vector<16x128xf32> to vector<1x1x16x128xf32>
    tpu.vector_store %arg8[%c0_294, %c15_295, %c0_296, %c0_297], %255 {strides = array<i32>} : memref<1x16x16x128xf32, #tpu.memory_space<vmem>>, vector<1x1x16x128xf32>,
    return
  }
  func.func @transform_0(%arg0: i32) -> (i32, i32, i32, i32) {
    %c0_i32 = arith.constant 0 : i32
    %c0_i32_0 = arith.constant 0 : i32
    %c0_i32_1 = arith.constant 0 : i32
    %c0_i32_2 = arith.constant 0 : i32
    return %arg0, %c0_i32, %c0_i32_0, %c0_i32_1 : i32, i32, i32, i32
  }
  func.func @transform_1(%arg0: i32) -> (i32, i32, i32, i32) {
    %c0_i32 = arith.constant 0 : i32
    %c0_i32_0 = arith.constant 0 : i32
    %c0_i32_1 = arith.constant 0 : i32
    %c0_i32_2 = arith.constant 0 : i32
    %c0_i32_3 = arith.constant 0 : i32
    return %c0_i32, %c0_i32_0, %c0_i32_1, %c0_i32_2 : i32, i32, i32, i32
  }
  func.func @transform_2(%arg0: i32) -> (i32, i32) {
    %c0_i32 = arith.constant 0 : i32
    %c0_i32_0 = arith.constant 0 : i32
    %c0_i32_1 = arith.constant 0 : i32
    return %c0_i32, %c0_i32_0 : i32, i32
  }
  func.func @transform_3(%arg0: i32) -> (i32, i32) {
    %c0_i32 = arith.constant 0 : i32
    %c0_i32_0 = arith.constant 0 : i32
    %c0_i32_1 = arith.constant 0 : i32
    return %c0_i32, %c0_i32_0 : i32, i32
  }
  func.func @transform_4(%arg0: i32) -> (i32, i32, i32, i32) {
    %c0_i32 = arith.constant 0 : i32
    %c0_i32_0 = arith.constant 0 : i32
    %c0_i32_1 = arith.constant 0 : i32
    %c0_i32_2 = arith.constant 0 : i32
    %c0_i32_3 = arith.constant 0 : i32
    return %c0_i32, %c0_i32_0, %c0_i32_1, %c0_i32_2 : i32, i32, i32, i32
  }
  func.func @transform_5(%arg0: i32) -> (i32, i32) {
    %c0_i32 = arith.constant 0 : i32
    %c0_i32_0 = arith.constant 0 : i32
    %c0_i32_1 = arith.constant 0 : i32
    return %c0_i32, %c0_i32_0 : i32, i32
  }
  func.func @transform_6(%arg0: i32) -> (i32, i32) {
    %c0_i32 = arith.constant 0 : i32
    %c0_i32_0 = arith.constant 0 : i32
    %c0_i32_1 = arith.constant 0 : i32
    return %c0_i32, %c0_i32_0 : i32, i32
  }
  func.func @transform_7(%arg0: i32) -> (i32, i32, i32, i32) {
    %c0_i32 = arith.constant 0 : i32
    %c0_i32_0 = arith.constant 0 : i32
    %c0_i32_1 = arith.constant 0 : i32
    %c0_i32_2 = arith.constant 0 : i32
    return %arg0, %c0_i32, %c0_i32_0, %c0_i32_1 : i32, i32, i32, i32
  }
}

</mosaic_0001>

<llo_original>
// kernel: conv2_module_forward.1
$region0: #{conv2_module_forward.1}
  #allocation0 [shape = 'u32[]', space=smem, size = 0x4, offset = 0x4, fixed_abs, tag = 'smem constant byte address 0x4 - core index']
  #allocation1 [shape = 'u32[144,128]{1,0:T(1,128)}', space=vmem, size = 0x12000, scoped, tag = 'internal scratch']
  #allocation2 [shape = 'f32[362,128]{1,0:T(8,128)}', space=vmem, size = 0x2e000, scoped, tag = 'scratch operand']
  #allocation3 [shape = 'f32[362,128]{1,0:T(8,128)}', space=vmem, size = 0x2e000, scoped, tag = 'scratch operand']
  %s0 = inlined_call_operand.vmem [shape: f32[2,16,16,128], index: 0, kind: input, shape index: {}]
  %s1 = inlined_call_operand.vmem [shape: f32[3,3,128,128], index: 1, kind: input, shape index: {}]
  %s2 = inlined_call_operand.vmem [shape: f32[1,128], index: 2, kind: input, shape index: {}]
  %s3 = inlined_call_operand.vmem [shape: f32[1,128], index: 3, kind: input, shape index: {}]
  %s4 = inlined_call_operand.vmem [shape: f32[3,3,128,128], index: 4, kind: input, shape index: {}]
  %s5 = inlined_call_operand.vmem [shape: f32[1,128], index: 5, kind: input, shape index: {}]
  %s6 = inlined_call_operand.vmem [shape: f32[1,128], index: 6, kind: input, shape index: {}]
  %s7 = inlined_call_operand.vmem [shape: f32[2,16,16,128], index: 7, kind: output, shape index: {}]
  %s8 = sld [smem:[#allocation0]]
  $region61: #{conv2_module_forward.1} parent=0
    _
  %s10 = ssub.s32 1, %s8
  %s11 = scalar_select 0, %s10, %s8
  loop: start=0, step=1, limit=4
  $region2: #{conv2_module_forward.1} parent=0 // loop_pre_header
    _
  $region3: #{conv2_module_forward.1} parent=0 // loop_header
    %s13 = sphi 0, %s17
    %p14 = scmp.ge.s32.totalorder %s13, 4
    %s23 = sphi 0, %s25
    %s26 = sphi 0, %s23
    %s27 = sphi 0, %s26
    %s43 = sphi 0, %s27
    %s47 = sphi 0, %s47
    %s49 = sphi 0, %s47
    %s50 = sphi 0, %s49
    %s64 = sphi 0, %s50
    %s68 = sphi 0, %s68
    %s70 = sphi 0, %s68
    %s71 = sphi 0, %s70
    %s85 = sphi 0, %s71
    %s89 = sphi 0, %s89
    %s91 = sphi 0, %s89
    %s92 = sphi 0, %s91
    %s106 = sphi 0, %s92
    %s110 = sphi 0, %s110
    %s112 = sphi 0, %s110
    %s113 = sphi 0, %s112
    %s127 = sphi 0, %s113
    %s131 = sphi 0, %s131
    %s133 = sphi 0, %s131
    %s134 = sphi 0, %s133
    %s148 = sphi 0, %s134
    %s152 = sphi 0, %s152
    %s154 = sphi 0, %s152
    %s155 = sphi 0, %s154
    %s169 = sphi 0, %s155
    %s175 = sphi 0, %s177
    %s178 = sphi 0, %s175
    %s179 = sphi 0, %s178
    %s195 = sphi 0, %s179
  $region4: #{conv2_module_forward.1} parent=0 // loop_header_branch
    %16 = sbr.rel (%p14) target = $region8
  $region5: #{conv2_module_forward.1} parent=0 // loop_body
    %s18 = ssub.s32 %s13, 1
    %s19 = ssub.s32 %s13, 2
    %s20 = sadd.s32 %s13, 1
    %s21 = ssub.s32 %s13, %s20
    %p22 = scmp.eq.s32.totalorder %s21, 0
    %s24 = sadd.s32 %s23, 1
    %s25 = scalar_select %p22, %s23, %s24
    %p28 = pneg %p22
    %p29 = scmp.eq.s32.totalorder %s13, 1
    %p30 = por %p28, %p29
    %p31 = scmp.ne.s32.totalorder %s23, %s26
    %p32 = scmp.eq.s32.totalorder %s13, 0
    %p33 = por %p31, %p32
    %p34 = scmp.ne.s32.totalorder %s23, %s26
    %p35 = scmp.eq.s32.totalorder %s18, 1
    %p36 = por %p34, %p35
    %p37 = scmp.ne.s32.totalorder %s26, %s27
    %p38 = scmp.eq.s32.totalorder %s18, 0
    %p39 = por %p37, %p38
    %p40 = scmp.ne.s32.totalorder %s26, %s27
    %p41 = scmp.eq.s32.totalorder %s19, 1
    %p42 = por %p40, %p41
    %p44 = scmp.ne.s32.totalorder %s27, %s43
    %p45 = scmp.eq.s32.totalorder %s19, 0
    %p46 = por %p44, %p45
    %s48 = sadd.s32 %s47, 1
    %p51 = scmp.eq.s32.totalorder %s13, 1
    %p52 = scmp.ne.s32.totalorder %s47, %s49
    %p53 = scmp.eq.s32.totalorder %s13, 0
    %p54 = por %p52, %p53
    %p55 = scmp.ne.s32.totalorder %s47, %s49
    %p56 = scmp.eq.s32.totalorder %s18, 1
    %p57 = por %p55, %p56
    %p58 = scmp.ne.s32.totalorder %s49, %s50
    %p59 = scmp.eq.s32.totalorder %s18, 0
    %p60 = por %p58, %p59
    %p61 = scmp.ne.s32.totalorder %s49, %s50
    %p62 = scmp.eq.s32.totalorder %s19, 1
    %p63 = por %p61, %p62
    %p65 = scmp.ne.s32.totalorder %s50, %s64
    %p66 = scmp.eq.s32.totalorder %s19, 0
    %p67 = por %p65, %p66
    %s69 = sadd.s32 %s68, 1
    %p72 = scmp.eq.s32.totalorder %s13, 1
    %p73 = scmp.ne.s32.totalorder %s68, %s70
    %p74 = scmp.eq.s32.totalorder %s13, 0
    %p75 = por %p73, %p74
    %p76 = scmp.ne.s32.totalorder %s68, %s70
    %p77 = scmp.eq.s32.totalorder %s18, 1
    %p78 = por %p76, %p77
    %p79 = scmp.ne.s32.totalorder %s70, %s71
    %p80 = scmp.eq.s32.totalorder %s18, 0
    %p81 = por %p79, %p80
    %p82 = scmp.ne.s32.totalorder %s70, %s71
    %p83 = scmp.eq.s32.totalorder %s19, 1
    %p84 = por %p82, %p83
    %p86 = scmp.ne.s32.totalorder %s71, %s85
    %p87 = scmp.eq.s32.totalorder %s19, 0
    %p88 = por %p86, %p87
    %s90 = sadd.s32 %s89, 1
    %p93 = scmp.eq.s32.totalorder %s13, 1
    %p94 = scmp.ne.s32.totalorder %s89, %s91
    %p95 = scmp.eq.s32.totalorder %s13, 0
    %p96 = por %p94, %p95
    %p97 = scmp.ne.s32.totalorder %s89, %s91
    %p98 = scmp.eq.s32.totalorder %s18, 1
    %p99 = por %p97, %p98
    %p100 = scmp.ne.s32.totalorder %s91, %s92
    %p101 = scmp.eq.s32.totalorder %s18, 0
    %p102 = por %p100, %p101
    %p103 = scmp.ne.s32.totalorder %s91, %s92
    %p104 = scmp.eq.s32.totalorder %s19, 1
    %p105 = por %p103, %p104
    %p107 = scmp.ne.s32.totalorder %s92, %s106
    %p108 = scmp.eq.s32.totalorder %s19, 0
    %p109 = por %p107, %p108
    %s111 = sadd.s32 %s110, 1
    %p114 = scmp.eq.s32.totalorder %s13, 1
    %p115 = scmp.ne.s32.totalorder %s110, %s112
    %p116 = scmp.eq.s32.totalorder %s13, 0
    %p117 = por %p115, %p116
    %p118 = scmp.ne.s32.totalorder %s110, %s112
    %p119 = scmp.eq.s32.totalorder %s18, 1
    %p120 = por %p118, %p119
    %p121 = scmp.ne.s32.totalorder %s112, %s113
    %p122 = scmp.eq.s32.totalorder %s18, 0
    %p123 = por %p121, %p122
    %p124 = scmp.ne.s32.totalorder %s112, %s113
    %p125 = scmp.eq.s32.totalorder %s19, 1
    %p126 = por %p124, %p125
    %p128 = scmp.ne.s32.totalorder %s113, %s127
    %p129 = scmp.eq.s32.totalorder %s19, 0
    %p130 = por %p128, %p129
    %s132 = sadd.s32 %s131, 1
    %p135 = scmp.eq.s32.totalorder %s13, 1
    %p136 = scmp.ne.s32.totalorder %s131, %s133
    %p137 = scmp.eq.s32.totalorder %s13, 0
    %p138 = por %p136, %p137
    %p139 = scmp.ne.s32.totalorder %s131, %s133
    %p140 = scmp.eq.s32.totalorder %s18, 1
    %p141 = por %p139, %p140
    %p142 = scmp.ne.s32.totalorder %s133, %s134
    %p143 = scmp.eq.s32.totalorder %s18, 0
    %p144 = por %p142, %p143
    %p145 = scmp.ne.s32.totalorder %s133, %s134
    %p146 = scmp.eq.s32.totalorder %s19, 1
    %p147 = por %p145, %p146
    %p149 = scmp.ne.s32.totalorder %s134, %s148
    %p150 = scmp.eq.s32.totalorder %s19, 0
    %p151 = por %p149, %p150
    %s153 = sadd.s32 %s152, 1
    %p156 = scmp.eq.s32.totalorder %s13, 1
    %p157 = scmp.ne.s32.totalorder %s152, %s154
    %p158 = scmp.eq.s32.totalorder %s13, 0
    %p159 = por %p157, %p158
    %p160 = scmp.ne.s32.totalorder %s152, %s154
    %p161 = scmp.eq.s32.totalorder %s18, 1
    %p162 = por %p160, %p161
    %p163 = scmp.ne.s32.totalorder %s154, %s155
    %p164 = scmp.eq.s32.totalorder %s18, 0
    %p165 = por %p163, %p164
    %p166 = scmp.ne.s32.totalorder %s154, %s155
    %p167 = scmp.eq.s32.totalorder %s19, 1
    %p168 = por %p166, %p167
    %p170 = scmp.ne.s32.totalorder %s155, %s169
    %p171 = scmp.eq.s32.totalorder %s19, 0
    %p172 = por %p170, %p171
    %s173 = ssub.s32 %s13, %s20
    %p174 = scmp.eq.s32.totalorder %s173, 0
    %s176 = sadd.s32 %s175, 1
    %s177 = scalar_select %p174, %s175, %s176
    %p180 = pneg %p174
    %p181 = scmp.eq.s32.totalorder %s13, 1
    %p182 = por %p180, %p181
    %p183 = scmp.ne.s32.totalorder %s175, %s178
    %p184 = scmp.eq.s32.totalorder %s13, 0
    %p185 = por %p183, %p184
    %p186 = scmp.ne.s32.totalorder %s175, %s178
    %p187 = scmp.eq.s32.totalorder %s18, 1
    %p188 = por %p186, %p187
    %p189 = scmp.ne.s32.totalorder %s178, %s179
    %p190 = scmp.eq.s32.totalorder %s18, 0
    %p191 = por %p189, %p190
    %p192 = scmp.ne.s32.totalorder %s178, %s179
    %p193 = scmp.eq.s32.totalorder %s19, 1
    %p194 = por %p192, %p193
    %p196 = scmp.ne.s32.totalorder %s179, %s195
    %p197 = scmp.eq.s32.totalorder %s19, 0
    %p198 = por %p196, %p197
    %p199 = scmp.le.s32.totalorder 1, %s13
    %p200 = scmp.lt.s32.totalorder %s13, 3
    %p201 = pnand %p199, %p200
    %p202 = pneg %p201
    // Predicated region
    $region9: #{conv2_module_forward.1} parent=5 // pred_check
      _
    $region10: #{conv2_module_forward.1} parent=5 // pred_check_branch
      %204 = sbr.rel (%p201) target = $region12
    $region11: #{conv2_module_forward.1} parent=5 // pred_region
      %s205 = ssub.s32 %s13, 1
      // Predicated region
      $region13: #{conv2_module_forward.1} parent=11 // pred_check
        %p206 = pneg %p60
      $region14: #{conv2_module_forward.1} parent=11 // pred_check_branch
        %208 = sbr.rel (%p206) target = $region16
      $region15: #{conv2_module_forward.1} parent=11 // pred_region
        _
      $region16: #{conv2_module_forward.1} parent=11 // pred_fallthru
        _
      // Predicated region
      $region17: #{conv2_module_forward.1} parent=11 // pred_check
        %p209 = pneg %p81
      $region18: #{conv2_module_forward.1} parent=11 // pred_check_branch
        %211 = sbr.rel (%p209) target = $region20
      $region19: #{conv2_module_forward.1} parent=11 // pred_region
        _
      $region20: #{conv2_module_forward.1} parent=11 // pred_fallthru
        _
      // Predicated region
      $region21: #{conv2_module_forward.1} parent=11 // pred_check
        %p212 = pneg %p102
      $region22: #{conv2_module_forward.1} parent=11 // pred_check_branch
        %214 = sbr.rel (%p212) target = $region24
      $region23: #{conv2_module_forward.1} parent=11 // pred_region
        _
      $region24: #{conv2_module_forward.1} parent=11 // pred_fallthru
        _
      // Predicated region
      $region25: #{conv2_module_forward.1} parent=11 // pred_check
        %p215 = pneg %p123
      $region26: #{conv2_module_forward.1} parent=11 // pred_check_branch
        %217 = sbr.rel (%p215) target = $region28
      $region27: #{conv2_module_forward.1} parent=11 // pred_region
        _
      $region28: #{conv2_module_forward.1} parent=11 // pred_fallthru
        _
      // Predicated region
      $region29: #{conv2_module_forward.1} parent=11 // pred_check
        %p218 = pneg %p144
      $region30: #{conv2_module_forward.1} parent=11 // pred_check_branch
        %220 = sbr.rel (%p218) target = $region32
      $region31: #{conv2_module_forward.1} parent=11 // pred_region
        _
      $region32: #{conv2_module_forward.1} parent=11 // pred_fallthru
        _
      // Predicated region
      $region33: #{conv2_module_forward.1} parent=11 // pred_check
        %p221 = pneg %p165
      $region34: #{conv2_module_forward.1} parent=11 // pred_check_branch
        %223 = sbr.rel (%p221) target = $region36
      $region35: #{conv2_module_forward.1} parent=11 // pred_region
        _
      $region36: #{conv2_module_forward.1} parent=11 // pred_fallthru
        _
    $region12: #{conv2_module_forward.1} parent=5 // pred_fallthru
      _
    %p224 = scmp.lt.s32.totalorder %s13, 2
    // Predicated region
    $region37: #{conv2_module_forward.1} parent=5 // pred_check
      %p225 = pneg %p224
    $region38: #{conv2_module_forward.1} parent=5 // pred_check_branch
      %227 = sbr.rel (%p225) target = $region40
    $region39: #{conv2_module_forward.1} parent=5 // pred_region
      // Predicated region
      $region41: #{conv2_module_forward.1} parent=39 // pred_check
        %p228 = pneg %p33
      $region42: #{conv2_module_forward.1} parent=39 // pred_check_branch
        %230 = sbr.rel (%p228) target = $region44
      $region43: #{conv2_module_forward.1} parent=39 // pred_region
        %p231 = scmp.lt.s32.totalorder %s13, 1
        %s232 = scalar_select %p231, %s13, 1
        %s233 = smul.addr %s232, 32
        %s234 = smul.addr %s233, 8
        %s235 = scalar_lea.vmem %s0, %s234
      $region44: #{conv2_module_forward.1} parent=39 // pred_fallthru
        _
    $region40: #{conv2_module_forward.1} parent=5 // pred_fallthru
      _
    %p236 = scmp.le.s32.totalorder 1, %s13
    %p237 = scmp.lt.s32.totalorder %s13, 3
    %p238 = pnand %p236, %p237
    %p239 = pneg %p238
    // Predicated region
    $region45: #{conv2_module_forward.1} parent=5 // pred_check
      _
    $region46: #{conv2_module_forward.1} parent=5 // pred_check_branch
      %241 = sbr.rel (%p238) target = $region48
    $region47: #{conv2_module_forward.1} parent=5 // pred_region
      %s242 = ssub.s32 %s13, 1
      %p243 = scmp.lt.s32.totalorder %s18, 1
      %s244 = scalar_select %p243, %s18, 1
      %s245 = smul.addr %s244, 32
      %s246 = smul.addr %s245, 8
      %s247 = scalar_lea.vmem %s0, %s246
      %p248 = pneg %p39
      %p249 = pneg %p36
      %p250 = pneg %p60
      %p251 = pneg %p57
      %p252 = pneg %p81
      %p253 = pneg %p78
      %p254 = pneg %p102
      %p255 = pneg %p99
      %p256 = pneg %p123
      %p257 = pneg %p120
      %p258 = pneg %p144
      %p259 = pneg %p141
      %p260 = pneg %p165
      %p261 = pneg %p162
      %p262 = pneg %p191
      %p263 = pneg %p188
      %p264 = scmp.lt.s32.totalorder %s18, 1
      %s265 = scalar_select %p264, %s18, 1
      %s266 = smul.addr %s265, 32
      %s267 = smul.addr %s266, 8
      %s268 = scalar_lea.vmem %s7, %s267
      %p269 = scmp.lt.s32.totalorder %s18, 1
      %s270 = scalar_select %p269, %s18, 1
      %s271 = smul.addr %s270, 32
      %s272 = smul.addr %s271, 8
      %s273 = scalar_lea.vmem %s0, %s272
      %p274 = scmp.lt.s32.totalorder %s18, 1
      %s275 = scalar_select %p274, %s18, 1
      %s276 = smul.addr %s275, 32
      %s277 = smul.addr %s276, 8
      %s278 = scalar_lea.vmem %s7, %s277
      %279 = vst [vmem:[#allocation2] sm:$0xff] 0.0
      %280 = vst [vmem:[#allocation2 + $0x8] sm:$0xff] 0.0
      %281 = vst [vmem:[#allocation2 + $0x10] sm:$0xff] 0.0
      %282 = vst [vmem:[#allocation2 + $0x18] sm:$0xff] 0.0
      %283 = vst [vmem:[#allocation2 + $0x20] sm:$0xff] 0.0
      %284 = vst [vmem:[#allocation2 + $0x28] sm:$0xff] 0.0
      %285 = vst [vmem:[#allocation2 + $0x30] sm:$0xff] 0.0
      %286 = vst [vmem:[#allocation2 + $0x38] sm:$0xff] 0.0
      %287 = vst [vmem:[#allocation2 + $0x40] sm:$0xff] 0.0
      %288 = vst [vmem:[#allocation2 + $0x48] sm:$0xff] 0.0
      %289 = vst [vmem:[#allocation2 + $0x50] sm:$0xff] 0.0
      %290 = vst [vmem:[#allocation2 + $0x58] sm:$0xff] 0.0
      %291 = vst [vmem:[#allocation2 + $0x60] sm:$0xff] 0.0
      %292 = vst [vmem:[#allocation2 + $0x68] sm:$0xff] 0.0
      %293 = vst [vmem:[#allocation2 + $0x70] sm:$0xff] 0.0
      %294 = vst [vmem:[#allocation2 + $0x78] sm:$0xff] 0.0
      %295 = vst [vmem:[#allocation2 + $0x80] sm:$0xff] 0.0
      %296 = vst [vmem:[#allocation2 + $0x88] sm:$0xff] 0.0
      %297 = vst [vmem:[#allocation2 + $0x90] sm:$0xff] 0.0
      %298 = vst [vmem:[#allocation2 + $0x98] sm:$0xff] 0.0
      %299 = vst [vmem:[#allocation2 + $0xa0] sm:$0xff] 0.0
      %300 = vst [vmem:[#allocation2 + $0xa8] sm:$0xff] 0.0
      %301 = vst [vmem:[#allocation2 + $0xb0] sm:$0xff] 0.0
      %302 = vst [vmem:[#allocation2 + $0xb8] sm:$0xff] 0.0
      %303 = vst [vmem:[#allocation2 + $0xc0] sm:$0xff] 0.0
      %304 = vst [vmem:[#allocation2 + $0xc8] sm:$0xff] 0.0
      %305 = vst [vmem:[#allocation2 + $0xd0] sm:$0xff] 0.0
      %306 = vst [vmem:[#allocation2 + $0xd8] sm:$0xff] 0.0
      %307 = vst [vmem:[#allocation2 + $0xe0] sm:$0xff] 0.0
      %308 = vst [vmem:[#allocation2 + $0xe8] sm:$0xff] 0.0
      %309 = vst [vmem:[#allocation2 + $0xf0] sm:$0xff] 0.0
      %310 = vst [vmem:[#allocation2 + $0xf8] sm:$0xff] 0.0
      %311 = vst [vmem:[#allocation2 + $0x100] sm:$0xff] 0.0
      %312 = vst [vmem:[#allocation2 + $0x108] sm:$0xff] 0.0
      %313 = vst [vmem:[#allocation2 + $0x110] sm:$0xff] 0.0
      %314 = vst [vmem:[#allocation2 + $0x118] sm:$0xff] 0.0
      %315 = vst [vmem:[#allocation2 + $0x120] sm:$0xff] 0.0
      %316 = vst [vmem:[#allocation2 + $0x128] sm:$0xff] 0.0
      %317 = vst [vmem:[#allocation2 + $0x130] sm:$0xff] 0.0
      %318 = vst [vmem:[#allocation2 + $0x138] sm:$0xff] 0.0
      %319 = vst [vmem:[#allocation2 + $0x140] sm:$0xff] 0.0
      %320 = vst [vmem:[#allocation2 + $0x148] sm:$0xff] 0.0
      %321 = vst [vmem:[#allocation2 + $0x150] sm:$0xff] 0.0
      %322 = vst [vmem:[#allocation2 + $0x158] sm:$0xff] 0.0
      %323 = vst [vmem:[#allocation2 + $0x160] sm:$0xff] 0.0
      %324 = vst [vmem:[#allocation2 + $0x168] sm:$0x3] 0.0
      %v325 = vld [vmem:[%s273] sm:$0xff]
      %v326 = vld [vmem:[%s273 + $0x8] sm:$0xff]
      %327 = vst [vmem:[#allocation2 + $0x26] sm:$0xff] %v325
      %328 = vst [vmem:[#allocation2 + $0x2e] sm:$0xff] %v326
      %s329 = scalar_lea.vmem %s273, 16
      %v330 = vld [vmem:[%s329] sm:$0xff]
      %v331 = vld [vmem:[%s329 + $0x8] sm:$0xff]
      %332 = vst [vmem:[#allocation2 + $0x38] sm:$0xff] %v330
      %333 = vst [vmem:[#allocation2 + $0x40] sm:$0xff] %v331
      %s334 = scalar_lea.vmem %s273, 32
      %v335 = vld [vmem:[%s334] sm:$0xff]
      %v336 = vld [vmem:[%s334 + $0x8] sm:$0xff]
      %337 = vst [vmem:[#allocation2 + $0x4a] sm:$0xff] %v335
      %338 = vst [vmem:[#allocation2 + $0x52] sm:$0xff] %v336
      %s339 = scalar_lea.vmem %s273, 48
      %v340 = vld [vmem:[%s339] sm:$0xff]
      %v341 = vld [vmem:[%s339 + $0x8] sm:$0xff]
      %342 = vst [vmem:[#allocation2 + $0x5c] sm:$0xff] %v340
      %343 = vst [vmem:[#allocation2 + $0x64] sm:$0xff] %v341
      %s344 = scalar_lea.vmem %s273, 64
      %v345 = vld [vmem:[%s344] sm:$0xff]
      %v346 = vld [vmem:[%s344 + $0x8] sm:$0xff]
      %347 = vst [vmem:[#allocation2 + $0x6e] sm:$0xff] %v345
      %348 = vst [vmem:[#allocation2 + $0x76] sm:$0xff] %v346
      %s349 = scalar_lea.vmem %s273, 80
      %v350 = vld [vmem:[%s349] sm:$0xff]
      %v351 = vld [vmem:[%s349 + $0x8] sm:$0xff]
      %352 = vst [vmem:[#allocation2 + $0x80] sm:$0xff] %v350
      %353 = vst [vmem:[#allocation2 + $0x88] sm:$0xff] %v351
      %s354 = scalar_lea.vmem %s273, 96
      %v355 = vld [vmem:[%s354] sm:$0xff]
      %v356 = vld [vmem:[%s354 + $0x8] sm:$0xff]
      %357 = vst [vmem:[#allocation2 + $0x92] sm:$0xff] %v355
      %358 = vst [vmem:[#allocation2 + $0x9a] sm:$0xff] %v356
      %s359 = scalar_lea.vmem %s273, 112
      %v360 = vld [vmem:[%s359] sm:$0xff]
      %v361 = vld [vmem:[%s359 + $0x8] sm:$0xff]
      %362 = vst [vmem:[#allocation2 + $0xa4] sm:$0xff] %v360
      %363 = vst [vmem:[#allocation2 + $0xac] sm:$0xff] %v361
      %s364 = scalar_lea.vmem %s273, 128
      %v365 = vld [vmem:[%s364] sm:$0xff]
      %v366 = vld [vmem:[%s364 + $0x8] sm:$0xff]
      %367 = vst [vmem:[#allocation2 + $0xb6] sm:$0xff] %v365
      %368 = vst [vmem:[#allocation2 + $0xbe] sm:$0xff] %v366
      %s369 = scalar_lea.vmem %s273, 144
      %v370 = vld [vmem:[%s369] sm:$0xff]
      %v371 = vld [vmem:[%s369 + $0x8] sm:$0xff]
      %372 = vst [vmem:[#allocation2 + $0xc8] sm:$0xff] %v370
      %373 = vst [vmem:[#allocation2 + $0xd0] sm:$0xff] %v371
      %s374 = scalar_lea.vmem %s273, 160
      %v375 = vld [vmem:[%s374] sm:$0xff]
      %v376 = vld [vmem:[%s374 + $0x8] sm:$0xff]
      %377 = vst [vmem:[#allocation2 + $0xda] sm:$0xff] %v375
      %378 = vst [vmem:[#allocation2 + $0xe2] sm:$0xff] %v376
      %s379 = scalar_lea.vmem %s273, 176
      %v380 = vld [vmem:[%s379] sm:$0xff]
      %v381 = vld [vmem:[%s379 + $0x8] sm:$0xff]
      %382 = vst [vmem:[#allocation2 + $0xec] sm:$0xff] %v380
      %383 = vst [vmem:[#allocation2 + $0xf4] sm:$0xff] %v381
      %s384 = scalar_lea.vmem %s273, 192
      %v385 = vld [vmem:[%s384] sm:$0xff]
      %v386 = vld [vmem:[%s384 + $0x8] sm:$0xff]
      %387 = vst [vmem:[#allocation2 + $0xfe] sm:$0xff] %v385
      %388 = vst [vmem:[#allocation2 + $0x106] sm:$0xff] %v386
      %s389 = scalar_lea.vmem %s273, 208
      %v390 = vld [vmem:[%s389] sm:$0xff]
      %v391 = vld [vmem:[%s389 + $0x8] sm:$0xff]
      %392 = vst [vmem:[#allocation2 + $0x110] sm:$0xff] %v390
      %393 = vst [vmem:[#allocation2 + $0x118] sm:$0xff] %v391
      %s394 = scalar_lea.vmem %s273, 224
      %v395 = vld [vmem:[%s394] sm:$0xff]
      %v396 = vld [vmem:[%s394 + $0x8] sm:$0xff]
      %397 = vst [vmem:[#allocation2 + $0x122] sm:$0xff] %v395
      %398 = vst [vmem:[#allocation2 + $0x12a] sm:$0xff] %v396
      %s399 = scalar_lea.vmem %s273, 240
      %v400 = vld [vmem:[%s399] sm:$0xff]
      %v401 = vld [vmem:[%s399 + $0x8] sm:$0xff]
      %402 = vst [vmem:[#allocation2 + $0x134] sm:$0xff] %v400
      %403 = vst [vmem:[#allocation2 + $0x13c] sm:$0xff] %v401
      %v404 = vld [vmem:[#allocation2] sm:$0xff]
      %v405 = vld [vmem:[#allocation2 + $0x8] sm:$0xff]
      %v406 = vld [vmem:[#allocation2 + $0x10] sm:$0xff]
      %v407 = vld [vmem:[#allocation2 + $0x18] sm:$0xff]
      %v408 = vld [vmem:[#allocation2 + $0x20] sm:$0xff]
      %v409 = vld [vmem:[#allocation2 + $0x28] sm:$0xff]
      %v410 = vld [vmem:[#allocation2 + $0x30] sm:$0xff]
      %v411 = vld [vmem:[#allocation2 + $0x38] sm:$0xff]
      %v412 = vld [vmem:[#allocation2 + $0x40] sm:$0xff]
      %v413 = vld [vmem:[#allocation2 + $0x48] sm:$0xff]
      %v414 = vld [vmem:[#allocation2 + $0x50] sm:$0xff]
      %v415 = vld [vmem:[#allocation2 + $0x58] sm:$0xff]
      %v416 = vld [vmem:[#allocation2 + $0x60] sm:$0xff]
      %v417 = vld [vmem:[#allocation2 + $0x68] sm:$0xff]
      %v418 = vld [vmem:[#allocation2 + $0x70] sm:$0xff]
      %v419 = vld [vmem:[#allocation2 + $0x78] sm:$0xff]
      %v420 = vld [vmem:[#allocation2 + $0x80] sm:$0xff]
      %v421 = vld [vmem:[#allocation2 + $0x88] sm:$0xff]
      %v422 = vld [vmem:[#allocation2 + $0x90] sm:$0xff]
      %v423 = vld [vmem:[#allocation2 + $0x98] sm:$0xff]
      %v424 = vld [vmem:[#allocation2 + $0xa0] sm:$0xff]
      %v425 = vld [vmem:[#allocation2 + $0xa8] sm:$0xff]
      %v426 = vld [vmem:[#allocation2 + $0xb0] sm:$0xff]
      %v427 = vld [vmem:[#allocation2 + $0xb8] sm:$0xff]
      %v428 = vld [vmem:[#allocation2 + $0xc0] sm:$0xff]
      %v429 = vld [vmem:[#allocation2 + $0xc8] sm:$0xff]
      %v430 = vld [vmem:[#allocation2 + $0xd0] sm:$0xff]
      %v431 = vld [vmem:[#allocation2 + $0xd8] sm:$0xff]
      %v432 = vld [vmem:[#allocation2 + $0xe0] sm:$0xff]
      %v433 = vld [vmem:[#allocation2 + $0xe8] sm:$0xff]
      %v434 = vld [vmem:[#allocation2 + $0xf0] sm:$0xff]
      %v435 = vld [vmem:[#allocation2 + $0xf8] sm:$0xff]
      %v436 = vld [vmem:[#allocation2 + $0x100] sm:$0xff]
      %v437 = vld [vmem:[#allocation2 + $0x108] sm:$0xff]
      %v438 = vld [vmem:[#allocation2 + $0x110] sm:$0xff]
      %v439 = vld [vmem:[#allocation2 + $0x118] sm:$0xff]
      %v440 = vld [vmem:[#allocation2 + $0x120] sm:$0xff]
      %v441 = vld [vmem:[#allocation2 + $0x128] sm:$0xff]
      %v442 = vld [vmem:[#allocation2 + $0x130] sm:$0xff]
      %v443 = vld [vmem:[#allocation2 + $0x138] sm:$0xff]
      %v444 = vld [vmem:[#allocation2 + $0x140] sm:$0xf]
      %v445 = vld [vmem:[%s1] sm:$0xff]
      %v446 = vld [vmem:[%s1 + $0x8] sm:$0xff]
      %v447 = vld [vmem:[%s1 + $0x10] sm:$0xff]
      %v448 = vld [vmem:[%s1 + $0x18] sm:$0xff]
      %v449 = vld [vmem:[%s1 + $0x20] sm:$0xff]
      %v450 = vld [vmem:[%s1 + $0x28] sm:$0xff]
      %v451 = vld [vmem:[%s1 + $0x30] sm:$0xff]
      %v452 = vld [vmem:[%s1 + $0x38] sm:$0xff]
      %v453 = vld [vmem:[%s1 + $0x40] sm:$0xff]
      %v454 = vld [vmem:[%s1 + $0x48] sm:$0xff]
      %v455 = vld [vmem:[%s1 + $0x50] sm:$0xff]
      %v456 = vld [vmem:[%s1 + $0x58] sm:$0xff]
      %v457 = vld [vmem:[%s1 + $0x60] sm:$0xff]
      %v458 = vld [vmem:[%s1 + $0x68] sm:$0xff]
      %v459 = vld [vmem:[%s1 + $0x70] sm:$0xff]
      %v460 = vld [vmem:[%s1 + $0x78] sm:$0xff]
      %v461 = vld [vmem:[#allocation2 + $0x1] sm:$0xff]
      %v462 = vld [vmem:[#allocation2 + $0x9] sm:$0xff]
      %v463 = vld [vmem:[#allocation2 + $0x11] sm:$0xff]
      %v464 = vld [vmem:[#allocation2 + $0x19] sm:$0xff]
      %v465 = vld [vmem:[#allocation2 + $0x21] sm:$0xff]
      %v466 = vld [vmem:[#allocation2 + $0x29] sm:$0xff]
      %v467 = vld [vmem:[#allocation2 + $0x31] sm:$0xff]
      %v468 = vld [vmem:[#allocation2 + $0x39] sm:$0xff]
      %v469 = vld [vmem:[#allocation2 + $0x41] sm:$0xff]
      %v470 = vld [vmem:[#allocation2 + $0x49] sm:$0xff]
      %v471 = vld [vmem:[#allocation2 + $0x51] sm:$0xff]
      %v472 = vld [vmem:[#allocation2 + $0x59] sm:$0xff]
      %v473 = vld [vmem:[#allocation2 + $0x61] sm:$0xff]
      %v474 = vld [vmem:[#allocation2 + $0x69] sm:$0xff]
      %v475 = vld [vmem:[#allocation2 + $0x71] sm:$0xff]
      %v476 = vld [vmem:[#allocation2 + $0x79] sm:$0xff]
      %v477 = vld [vmem:[#allocation2 + $0x81] sm:$0xff]
      %v478 = vld [vmem:[#allocation2 + $0x89] sm:$0xff]
      %v479 = vld [vmem:[#allocation2 + $0x91] sm:$0xff]
      %v480 = vld [vmem:[#allocation2 + $0x99] sm:$0xff]
      %v481 = vld [vmem:[#allocation2 + $0xa1] sm:$0xff]
      %v482 = vld [vmem:[#allocation2 + $0xa9] sm:$0xff]
      %v483 = vld [vmem:[#allocation2 + $0xb1] sm:$0xff]
      %v484 = vld [vmem:[#allocation2 + $0xb9] sm:$0xff]
      %v485 = vld [vmem:[#allocation2 + $0xc1] sm:$0xff]
      %v486 = vld [vmem:[#allocation2 + $0xc9] sm:$0xff]
      %v487 = vld [vmem:[#allocation2 + $0xd1] sm:$0xff]
      %v488 = vld [vmem:[#allocation2 + $0xd9] sm:$0xff]
      %v489 = vld [vmem:[#allocation2 + $0xe1] sm:$0xff]
      %v490 = vld [vmem:[#allocation2 + $0xe9] sm:$0xff]
      %v491 = vld [vmem:[#allocation2 + $0xf1] sm:$0xff]
      %v492 = vld [vmem:[#allocation2 + $0xf9] sm:$0xff]
      %v493 = vld [vmem:[#allocation2 + $0x101] sm:$0xff]
      %v494 = vld [vmem:[#allocation2 + $0x109] sm:$0xff]
      %v495 = vld [vmem:[#allocation2 + $0x111] sm:$0xff]
      %v496 = vld [vmem:[#allocation2 + $0x119] sm:$0xff]
      %v497 = vld [vmem:[#allocation2 + $0x121] sm:$0xff]
      %v498 = vld [vmem:[#allocation2 + $0x129] sm:$0xff]
      %v499 = vld [vmem:[#allocation2 + $0x131] sm:$0xff]
      %v500 = vld [vmem:[#allocation2 + $0x139] sm:$0xff]
      %v501 = vld [vmem:[#allocation2 + $0x141] sm:$0xf]
      %s502 = scalar_lea.vmem %s1, 128
      %v503 = vld [vmem:[%s502] sm:$0xff]
      %v504 = vld [vmem:[%s502 + $0x8] sm:$0xff]
      %v505 = vld [vmem:[%s502 + $0x10] sm:$0xff]
      %v506 = vld [vmem:[%s502 + $0x18] sm:$0xff]
      %v507 = vld [vmem:[%s502 + $0x20] sm:$0xff]
      %v508 = vld [vmem:[%s502 + $0x28] sm:$0xff]
      %v509 = vld [vmem:[%s502 + $0x30] sm:$0xff]
      %v510 = vld [vmem:[%s502 + $0x38] sm:$0xff]
      %v511 = vld [vmem:[%s502 + $0x40] sm:$0xff]
      %v512 = vld [vmem:[%s502 + $0x48] sm:$0xff]
      %v513 = vld [vmem:[%s502 + $0x50] sm:$0xff]
      %v514 = vld [vmem:[%s502 + $0x58] sm:$0xff]
      %v515 = vld [vmem:[%s502 + $0x60] sm:$0xff]
      %v516 = vld [vmem:[%s502 + $0x68] sm:$0xff]
      %v517 = vld [vmem:[%s502 + $0x70] sm:$0xff]
      %v518 = vld [vmem:[%s502 + $0x78] sm:$0xff]
      %519 = vmatprep.subr.mxu0 0.0
      %520 = vmatpush1.msra.mxu0 %v503
      %521 = vmatprep.subr.mxu0 0.0
      %522 = vmatpush1.msra.mxu0 %v504
      %523 = vmatprep.subr.mxu0 0.0
      %524 = vmatpush1.msra.mxu0 %v505
      %525 = vmatprep.subr.mxu0 0.0
      %526 = vmatpush1.msra.mxu0 %v506
      %527 = vmatprep.subr.mxu0 0.0
      %528 = vmatpush1.msra.mxu0 %v507
      %529 = vmatprep.subr.mxu0 0.0
      %530 = vmatpush1.msra.mxu0 %v508
      %531 = vmatprep.subr.mxu0 0.0
      %532 = vmatpush1.msra.mxu0 %v509
      %533 = vmatprep.subr.mxu0 0.0
      %534 = vmatpush1.msra.mxu0 %v510
      %535 = vmatprep.subr.mxu0 0.0
      %536 = vmatpush1.msra.mxu0 %v511
      %537 = vmatprep.subr.mxu0 0.0
      %538 = vmatpush1.msra.mxu0 %v512
      %539 = vmatprep.subr.mxu0 0.0
      %540 = vmatpush1.msra.mxu0 %v513
      %541 = vmatprep.subr.mxu0 0.0
      %542 = vmatpush1.msra.mxu0 %v514
      %543 = vmatprep.subr.mxu0 0.0
      %544 = vmatpush1.msra.mxu0 %v515
      %545 = vmatprep.subr.mxu0 0.0
      %546 = vmatpush1.msra.mxu0 %v516
      %547 = vmatprep.subr.mxu0 0.0
      %548 = vmatpush1.msra.mxu0 %v517
      %549 = vmatprep.subr.mxu0 0.0
      %550 = vmatpush1.msra.mxu0 %v518
      %551 = vmatprep.subr.mxu0 0.0
      %552 = vmatpush1.msra.mxu0 0.0
      %553 = vmatprep.subr.mxu0 0.0
      %554 = vmatpush1.msra.mxu0 0.0
      %555 = vmatprep.subr.mxu0 0.0
      %556 = vmatpush1.msra.mxu0 0.0
      %557 = vmatprep.subr.mxu0 0.0
      %558 = vmatpush1.msra.mxu0 0.0
      %559 = vmatprep.subr.mxu0 0.0
      %560 = vmatpush1.msra.mxu0 0.0
      %561 = vmatprep.subr.mxu0 0.0
      %562 = vmatpush1.msra.mxu0 0.0
      %563 = vmatprep.subr.mxu0 0.0
      %564 = vmatpush1.msra.mxu0 0.0
      %565 = vmatprep.subr.mxu0 0.0
      %566 = vmatpush1.msra.mxu0 0.0
      %567 = vmatprep.subr.mxu0 0.0
      %568 = vmatpush1.msra.mxu0 0.0
      %569 = vmatprep.subr.mxu0 0.0
      %570 = vmatpush1.msra.mxu0 0.0
      %571 = vmatprep.subr.mxu0 0.0
      %572 = vmatpush1.msra.mxu0 0.0
      %573 = vmatprep.subr.mxu0 0.0
      %574 = vmatpush1.msra.mxu0 0.0
      %575 = vmatprep.subr.mxu0 0.0
      %576 = vmatpush1.msra.mxu0 0.0
      %577 = vmatprep.subr.mxu0 0.0
      %578 = vmatpush1.msra.mxu0 0.0
      %579 = vmatprep.subr.mxu0 0.0
      %580 = vmatpush1.msra.mxu0 0.0
      %581 = vmatprep.subr.mxu0 0.0
      %582 = vmatpush1.msra.mxu0 0.0
      %583 = vmatprep.mubr.f32.mxu0 0.0
      %584 = vmatmul.mubr.f32.gmra.mrb[0].mxu0 %v461
      %v585 = vpop.f32.mrb[0].mxu0
      %v586 = vpop.f32.mrb[0].mxu0
      %587 = vmatprep.mubr.f32.mxu0 0.0
      %588 = vmatmul.mubr.f32.gmra.mrb[0].mxu0 %v462
      %v589 = vpop.f32.mrb[0].mxu0
      %v590 = vpop.f32.mrb[0].mxu0
      %591 = vmatprep.mubr.f32.mxu0 0.0
      %592 = vmatmul.mubr.f32.gmra.mrb[0].mxu0 %v463
      %v593 = vpop.f32.mrb[0].mxu0
      %v594 = vadd.f32 0.0, %v593
      %v595 = vpop.f32.mrb[0].mxu0
      %596 = vmatprep.mubr.f32.mxu0 0.0
      %597 = vmatmul.mubr.f32.gmra.mrb[0].mxu0 %v464
      %v598 = vpop.f32.mrb[0].mxu0
      %v599 = vadd.f32 0.0, %v598
      %v600 = vpop.f32.mrb[0].mxu0
      %601 = vmatprep.mubr.f32.mxu0 0.0
      %602 = vmatmul.mubr.f32.gmra.mrb[0].mxu0 %v465
      %v603 = vpop.f32.mrb[0].mxu0
      %v604 = vadd.f32 0.0, %v603
      %v605 = vpop.f32.mrb[0].mxu0
      %606 = vmatprep.mubr.f32.mxu0 0.0
      %607 = vmatmul.mubr.f32.gmra.mrb[0].mxu0 %v466
      %v608 = vpop.f32.mrb[0].mxu0
      %v609 = vadd.f32 0.0, %v608
      %v610 = vpop.f32.mrb[0].mxu0
      %611 = vmatprep.mubr.f32.mxu0 0.0
      %612 = vmatmul.mubr.f32.gmra.mrb[0].mxu0 %v467
      %v613 = vpop.f32.mrb[0].mxu0
      %v614 = vadd.f32 0.0, %v613
      %v615 = vpop.f32.mrb[0].mxu0
      %616 = vmatprep.mubr.f32.mxu0 0.0
      %617 = vmatmul.mubr.f32.gmra.mrb[0].mxu0 %v468
      %v618 = vpop.f32.mrb[0].mxu0
      %v619 = vadd.f32 0.0, %v618
      %v620 = vpop.f32.mrb[0].mxu0
      %621 = vmatprep.mubr.f32.mxu0 0.0
      %622 = vmatmul.mubr.f32.gmra.mrb[0].mxu0 %v469
      %v623 = vpop.f32.mrb[0].mxu0
      %v624 = vadd.f32 0.0, %v623
      %v625 = vpop.f32.mrb[0].mxu0
      %626 = vmatprep.mubr.f32.mxu0 0.0
      %627 = vmatmul.mubr.f32.gmra.mrb[0].mxu0 %v470
      %v628 = vpop.f32.mrb[0].mxu0
      %v629 = vadd.f32 0.0, %v628
      %v630 = vpop.f32.mrb[0].mxu0
      %631 = vmatprep.mubr.f32.mxu0 0.0
      %632 = vmatmul.mubr.f32.gmra.mrb[0].mxu0 %v471
      %v633 = vpop.f32.mrb[0].mxu0
      %v634 = vadd.f32 0.0, %v633
      %v635 = vpop.f32.mrb[0].mxu0
      %636 = vmatprep.mubr.f32.mxu0 0.0
      %637 = vmatmul.mubr.f32.gmra.mrb[0].mxu0 %v472
      %v638 = vpop.f32.mrb[0].mxu0
      %v639 = vadd.f32 0.0, %v638
      %v640 = vpop.f32.mrb[0].mxu0
      %641 = vmatprep.mubr.f32.mxu0 0.0
      %642 = vmatmul.mubr.f32.gmra.mrb[0].mxu0 %v473
      %v643 = vpop.f32.mrb[0].mxu0
      %v644 = vadd.f32 0.0, %v643
      %v645 = vpop.f32.mrb[0].mxu0
      %646 = vmatprep.mubr.f32.mxu0 0.0
      %647 = vmatmul.mubr.f32.gmra.mrb[0].mxu0 %v474
      %v648 = vpop.f32.mrb[0].mxu0
      %v649 = vadd.f32 0.0, %v648
      %v650 = vpop.f32.mrb[0].mxu0
      %651 = vmatprep.mubr.f32.mxu0 0.0
      %652 = vmatmul.mubr.f32.gmra.mrb[0].mxu0 %v475
      %v653 = vpop.f32.mrb[0].mxu0
      %v654 = vadd.f32 0.0, %v653
      %v655 = vpop.f32.mrb[0].mxu0
      %656 = vmatprep.mubr.f32.mxu0 0.0
      %657 = vmatmul.mubr.f32.gmra.mrb[0].mxu0 %v476
      %v658 = vpop.f32.mrb[0].mxu0
      %v659 = vadd.f32 0.0, %v658
      %v660 = vpop.f32.mrb[0].mxu0
      %661 = vmatprep.mubr.f32.mxu0 0.0
      %662 = vmatmul.mubr.f32.gmra.mrb[0].mxu0 %v477
      %v663 = vpop.f32.mrb[0].mxu0
      %v664 = vadd.f32 0.0, %v663
      %v665 = vpop.f32.mrb[0].mxu0
      %666 = vmatprep.mubr.f32.mxu0 0.0
      %667 = vmatmul.mubr.f32.gmra.mrb[0].mxu0 %v478
      %v668 = vpop.f32.mrb[0].mxu0
      %v669 = vadd.f32 0.0, %v668
      %v670 = vpop.f32.mrb[0].mxu0
      %671 = vmatprep.mubr.f32.mxu0 0.0
      %672 = vmatmul.mubr.f32.gmra.mrb[0].mxu0 %v479
      %v673 = vpop.f32.mrb[0].mxu0
      %v674 = vadd.f32 0.0, %v673
      %v675 = vpop.f32.mrb[0].mxu0
      %676 = vmatprep.mubr.f32.mxu0 0.0
      %677 = vmatmul.mubr.f32.gmra.mrb[0].mxu0 %v480
      %v678 = vpop.f32.mrb[0].mxu0
      %v679 = vadd.f32 0.0, %v678
      %v680 = vpop.f32.mrb[0].mxu0
      %681 = vmatprep.mubr.f32.mxu0 0.0
      %682 = vmatmul.mubr.f32.gmra.mrb[0].mxu0 %v481
      %v683 = vpop.f32.mrb[0].mxu0
      %v684 = vadd.f32 0.0, %v683
      %v685 = vpop.f32.mrb[0].mxu0
      %686 = vmatprep.mubr.f32.mxu0 0.0
      %687 = vmatmul.mubr.f32.gmra.mrb[0].mxu0 %v482
      %v688 = vpop.f32.mrb[0].mxu0
      %v689 = vadd.f32 0.0, %v688
      %v690 = vpop.f32.mrb[0].mxu0
      %691 = vmatprep.mubr.f32.mxu0 0.0
      %692 = vmatmul.mubr.f32.gmra.mrb[0].mxu0 %v483
      %v693 = vpop.f32.mrb[0].mxu0
      %v694 = vadd.f32 0.0, %v693
      %v695 = vpop.f32.mrb[0].mxu0
      %696 = vmatprep.mubr.f32.mxu0 0.0
      %697 = vmatmul.mubr.f32.gmra.mrb[0].mxu0 %v484
      %v698 = vpop.f32.mrb[0].mxu0
      %v699 = vadd.f32 0.0, %v698
      %v700 = vpop.f32.mrb[0].mxu0
      %701 = vmatprep.mubr.f32.mxu0 0.0
      %702 = vmatmul.mubr.f32.gmra.mrb[0].mxu0 %v485
      %v703 = vpop.f32.mrb[0].mxu0
      %v704 = vadd.f32 0.0, %v703
      %v705 = vpop.f32.mrb[0].mxu0
      %706 = vmatprep.mubr.f32.mxu0 0.0
      %707 = vmatmul.mubr.f32.gmra.mrb[0].mxu0 %v486
      %v708 = vpop.f32.mrb[0].mxu0
      %v709 = vadd.f32 0.0, %v708
      %v710 = vpop.f32.mrb[0].mxu0
      %711 = vmatprep.mubr.f32.mxu0 0.0
      %712 = vmatmul.mubr.f32.gmra.mrb[0].mxu0 %v487
      %v713 = vpop.f32.mrb[0].mxu0
      %v714 = vadd.f32 0.0, %v713
      %v715 = vpop.f32.mrb[0].mxu0
      %716 = vmatprep.mubr.f32.mxu0 0.0
      %717 = vmatmul.mubr.f32.gmra.mrb[0].mxu0 %v488
      %v718 = vpop.f32.mrb[0].mxu0
      %v719 = vadd.f32 0.0, %v718
      %v720 = vpop.f32.mrb[0].mxu0
      %721 = vmatprep.mubr.f32.mxu0 0.0
      %722 = vmatmul.mubr.f32.gmra.mrb[0].mxu0 %v489
      %v723 = vpop.f32.mrb[0].mxu0
      %v724 = vadd.f32 0.0, %v723
      %v725 = vpop.f32.mrb[0].mxu0
      %726 = vmatprep.mubr.f32.mxu0 0.0
      %727 = vmatmul.mubr.f32.gmra.mrb[0].mxu0 %v490
      %v728 = vpop.f32.mrb[0].mxu0
      %v729 = vadd.f32 0.0, %v728
      %v730 = vpop.f32.mrb[0].mxu0
      %731 = vmatprep.mubr.f32.mxu0 0.0
      %732 = vmatmul.mubr.f32.gmra.mrb[0].mxu0 %v491
      %v733 = vpop.f32.mrb[0].mxu0
      %v734 = vadd.f32 0.0, %v733
      %v735 = vpop.f32.mrb[0].mxu0
      %736 = vmatprep.mubr.f32.mxu0 0.0
      %737 = vmatmul.mubr.f32.gmra.mrb[0].mxu0 %v492
      %v738 = vpop.f32.mrb[0].mxu0
      %v739 = vadd.f32 0.0, %v738
      %v740 = vpop.f32.mrb[0].mxu0
      %741 = vmatprep.mubr.f32.mxu0 0.0
      %742 = vmatmul.mubr.f32.gmra.mrb[0].mxu0 %v493
      %v743 = vpop.f32.mrb[0].mxu0
      %v744 = vadd.f32 0.0, %v743
      %v745 = vpop.f32.mrb[0].mxu0
      %746 = vmatprep.mubr.f32.mxu0 0.0
      %747 = vmatmul.mubr.f32.gmra.mrb[0].mxu0 %v494
      %v748 = vpop.f32.mrb[0].mxu0
      %v749 = vadd.f32 0.0, %v748
      %v750 = vpop.f32.mrb[0].mxu0
      %751 = vmatprep.mubr.f32.mxu0 0.0
      %752 = vmatmul.mubr.f32.gmra.mrb[0].mxu0 %v495
      %v753 = vpop.f32.mrb[0].mxu0
      %v754 = vadd.f32 0.0, %v753
      %v755 = vpop.f32.mrb[0].mxu0
      %756 = vmatprep.mubr.f32.mxu0 0.0
      %757 = vmatmul.mubr.f32.gmra.mrb[0].mxu0 %v496
      %v758 = vpop.f32.mrb[0].mxu0
      %v759 = vadd.f32 0.0, %v758
      %v760 = vpop.f32.mrb[0].mxu0
      %761 = vmatprep.mubr.f32.mxu0 0.0
      %762 = vmatmul.mubr.f32.gmra.mrb[0].mxu0 %v497
      %v763 = vpop.f32.mrb[0].mxu0
      %v764 = vadd.f32 0.0, %v763
      %v765 = vpop.f32.mrb[0].mxu0
      %766 = vmatprep.mubr.f32.mxu0 0.0
      %767 = vmatmul.mubr.f32.gmra.mrb[0].mxu0 %v498
      %v768 = vpop.f32.mrb[0].mxu0
      %v769 = vadd.f32 0.0, %v768
      %v770 = vpop.f32.mrb[0].mxu0
      %771 = vmatprep.mubr.f32.mxu0 0.0
      %772 = vmatmul.mubr.f32.gmra.mrb[0].mxu0 %v499
      %v773 = vpop.f32.mrb[0].mxu0
      %v774 = vadd.f32 0.0, %v773
      %v775 = vpop.f32.mrb[0].mxu0
      %776 = vmatprep.mubr.f32.mxu0 0.0
      %777 = vmatmul.mubr.f32.gmra.mrb[0].mxu0 %v500
      %v778 = vpop.f32.mrb[0].mxu0
      %v779 = vpop.f32.mrb[0].mxu0
      %780 = vmatprep.mubr.f32.mxu0 0.0
      %781 = vmatmul.mubr.f32.gmra.mrb[0].mxu0 %v501
      %v782 = vpop.f32.mrb[0].mxu0
      %v783 = vpop.f32.mrb[0].mxu0
      %784 = vdwg.mxu0
      %785 = vmatprep.subr.mxu0 0.0
      %786 = vmatpush1.msra.mxu0 %v445
      %787 = vmatprep.subr.mxu0 0.0
      %788 = vmatpush1.msra.mxu0 %v446
      %789 = vmatprep.subr.mxu0 0.0
      %790 = vmatpush1.msra.mxu0 %v447
      %791 = vmatprep.subr.mxu0 0.0
      %792 = vmatpush1.msra.mxu0 %v448
      %793 = vmatprep.subr.mxu0 0.0
      %794 = vmatpush1.msra.mxu0 %v449
      %795 = vmatprep.subr.mxu0 0.0
      %796 = vmatpush1.msra.mxu0 %v450
      %797 = vmatprep.subr.mxu0 0.0
      %798 = vmatpush1.msra.mxu0 %v451
      %799 = vmatprep.subr.mxu0 0.0
      %800 = vmatpush1.msra.mxu0 %v452
      %801 = vmatprep.subr.mxu0 0.0
      %802 = vmatpush1.msra.mxu0 %v453
      %803 = vmatprep.subr.mxu0 0.0
      %804 = vmatpush1.msra.mxu0 %v454
      %805 = vmatprep.subr.mxu0 0.0
      %806 = vmatpush1.msra.mxu0 %v455
      %807 = vmatprep.subr.mxu0 0.0
      %808 = vmatpush1.msra.mxu0 %v456
      %809 = vmatprep.subr.mxu0 0.0
      %810 = vmatpush1.msra.mxu0 %v457
      %811 = vmatprep.subr.mxu0 0.0
      %812 = vmatpush1.msra.mxu0 %v458
      %813 = vmatprep.subr.mxu0 0.0
      %814 = vmatpush1.msra.mxu0 %v459
      %815 = vmatprep.subr.mxu0 0.0
      %816 = vmatpush1.msra.mxu0 %v460
      %817 = vmatprep.subr.mxu0 0.0
      %818 = vmatpush1.msra.mxu0 0.0
      %819 = vmatprep.subr.mxu0 0.0
      %820 = vmatpush1.msra.mxu0 0.0
      %821 = vmatprep.subr.mxu0 0.0
      %822 = vmatpush1.msra.mxu0 0.0
      %823 = vmatprep.subr.mxu0 0.0
      %824 = vmatpush1.msra.mxu0 0.0
      %825 = vmatprep.subr.mxu0 0.0
      %826 = vmatpush1.msra.mxu0 0.0
      %827 = vmatprep.subr.mxu0 0.0
      %828 = vmatpush1.msra.mxu0 0.0
      %829 = vmatprep.subr.mxu0 0.0
      %830 = vmatpush1.msra.mxu0 0.0
      %831 = vmatprep.subr.mxu0 0.0
      %832 = vmatpush1.msra.mxu0 0.0
      %833 = vmatprep.subr.mxu0 0.0
      %834 = vmatpush1.msra.mxu0 0.0
      %835 = vmatprep.subr.mxu0 0.0
      %836 = vmatpush1.msra.mxu0 0.0
      %837 = vmatprep.subr.mxu0 0.0
      %838 = vmatpush1.msra.mxu0 0.0
      %839 = vmatprep.subr.mxu0 0.0
      %840 = vmatpush1.msra.mxu0 0.0
      %841 = vmatprep.subr.mxu0 0.0
      %842 = vmatpush1.msra.mxu0 0.0
      %843 = vmatprep.subr.mxu0 0.0
      %844 = vmatpush1.msra.mxu0 0.0
      %845 = vmatprep.subr.mxu0 0.0
      %846 = vmatpush1.msra.mxu0 0.0
      %847 = vmatprep.subr.mxu0 0.0
      %848 = vmatpush1.msra.mxu0 0.0
      %849 = vmatprep.mubr.f32.mxu0 0.0
      %850 = vmatmul.mubr.f32.gmra.mrb[0].mxu0 %v404
      %v851 = vpop.f32.mrb[0].mxu0
      %v852 = vpop.f32.mrb[0].mxu0
      %853 = vmatprep.mubr.f32.mxu0 0.0
      %854 = vmatmul.mubr.f32.gmra.mrb[0].mxu0 %v405
      %v855 = vpop.f32.mrb[0].mxu0
      %v856 = vpop.f32.mrb[0].mxu0
      %857 = vmatprep.mubr.f32.mxu0 0.0
      %858 = vmatmul.mubr.f32.gmra.mrb[0].mxu0 %v406
      %v859 = vpop.f32.mrb[0].mxu0
      %v860 = vadd.f32 %v594, %v859
      %v861 = vpop.f32.mrb[0].mxu0
      %862 = vmatprep.mubr.f32.mxu0 0.0
      %863 = vmatmul.mubr.f32.gmra.mrb[0].mxu0 %v407
      %v864 = vpop.f32.mrb[0].mxu0
      %v865 = vadd.f32 %v599, %v864
      %v866 = vpop.f32.mrb[0].mxu0
      %867 = vmatprep.mubr.f32.mxu0 0.0
      %868 = vmatmul.mubr.f32.gmra.mrb[0].mxu0 %v408
      %v869 = vpop.f32.mrb[0].mxu0
      %v870 = vadd.f32 %v604, %v869
      %v871 = vpop.f32.mrb[0].mxu0
      %872 = vmatprep.mubr.f32.mxu0 0.0
      %873 = vmatmul.mubr.f32.gmra.mrb[0].mxu0 %v409
      %v874 = vpop.f32.mrb[0].mxu0
      %v875 = vadd.f32 %v609, %v874
      %v876 = vpop.f32.mrb[0].mxu0
      %877 = vmatprep.mubr.f32.mxu0 0.0
      %878 = vmatmul.mubr.f32.gmra.mrb[0].mxu0 %v410
      %v879 = vpop.f32.mrb[0].mxu0
      %v880 = vadd.f32 %v614, %v879
      %v881 = vpop.f32.mrb[0].mxu0
      %882 = vmatprep.mubr.f32.mxu0 0.0
      %883 = vmatmul.mubr.f32.gmra.mrb[0].mxu0 %v411
      %v884 = vpop.f32.mrb[0].mxu0
      %v885 = vadd.f32 %v619, %v884
      %v886 = vpop.f32.mrb[0].mxu0
      %887 = vmatprep.mubr.f32.mxu0 0.0
      %888 = vmatmul.mubr.f32.gmra.mrb[0].mxu0 %v412
      %v889 = vpop.f32.mrb[0].mxu0
      %v890 = vadd.f32 %v624, %v889
      %v891 = vpop.f32.mrb[0].mxu0
      %892 = vmatprep.mubr.f32.mxu0 0.0
      %893 = vmatmul.mubr.f32.gmra.mrb[0].mxu0 %v413
      %v894 = vpop.f32.mrb[0].mxu0
      %v895 = vadd.f32 %v629, %v894
      %v896 = vpop.f32.mrb[0].mxu0
      %897 = vmatprep.mubr.f32.mxu0 0.0
      %898 = vmatmul.mubr.f32.gmra.mrb[0].mxu0 %v414
      %v899 = vpop.f32.mrb[0].mxu0
      %v900 = vadd.f32 %v634, %v899
      %v901 = vpop.f32.mrb[0].mxu0
      %902 = vmatprep.mubr.f32.mxu0 0.0
      %903 = vmatmul.mubr.f32.gmra.mrb[0].mxu0 %v415
      %v904 = vpop.f32.mrb[0].mxu0
      %v905 = vadd.f32 %v639, %v904
      %v906 = vpop.f32.mrb[0].mxu0
      %907 = vmatprep.mubr.f32.mxu0 0.0
      %908 = vmatmul.mubr.f32.gmra.mrb[0].mxu0 %v416
      %v909 = vpop.f32.mrb[0].mxu0
      %v910 = vadd.f32 %v644, %v909
      %v911 = vpop.f32.mrb[0].mxu0
      %912 = vmatprep.mubr.f32.mxu0 0.0
      %913 = vmatmul.mubr.f32.gmra.mrb[0].mxu0 %v417
      %v914 = vpop.f32.mrb[0].mxu0
      %v915 = vadd.f32 %v649, %v914
      %v916 = vpop.f32.mrb[0].mxu0
      %917 = vmatprep.mubr.f32.mxu0 0.0
      %918 = vmatmul.mubr.f32.gmra.mrb[0].mxu0 %v418
      %v919 = vpop.f32.mrb[0].mxu0
      %v920 = vadd.f32 %v654, %v919
      %v921 = vpop.f32.mrb[0].mxu0
      %922 = vmatprep.mubr.f32.mxu0 0.0
      %923 = vmatmul.mubr.f32.gmra.mrb[0].mxu0 %v419
      %v924 = vpop.f32.mrb[0].mxu0
      %v925 = vadd.f32 %v659, %v924
      %v926 = vpop.f32.mrb[0].mxu0
      %927 = vmatprep.mubr.f32.mxu0 0.0
      %928 = vmatmul.mubr.f32.gmra.mrb[0].mxu0 %v420
      %v929 = vpop.f32.mrb[0].mxu0
      %v930 = vadd.f32 %v664, %v929
      %v931 = vpop.f32.mrb[0].mxu0
      %932 = vmatprep.mubr.f32.mxu0 0.0
      %933 = vmatmul.mubr.f32.gmra.mrb[0].mxu0 %v421
      %v934 = vpop.f32.mrb[0].mxu0
      %v935 = vadd.f32 %v669, %v934
      %v936 = vpop.f32.mrb[0].mxu0
      %937 = vmatprep.mubr.f32.mxu0 0.0
      %938 = vmatmul.mubr.f32.gmra.mrb[0].mxu0 %v422
      %v939 = vpop.f32.mrb[0].mxu0
      %v940 = vadd.f32 %v674, %v939
      %v941 = vpop.f32.mrb[0].mxu0
      %942 = vmatprep.mubr.f32.mxu0 0.0
      %943 = vmatmul.mubr.f32.gmra.mrb[0].mxu0 %v423
      %v944 = vpop.f32.mrb[0].mxu0
      %v945 = vadd.f32 %v679, %v944
      %v946 = vpop.f32.mrb[0].mxu0
      %947 = vmatprep.mubr.f32.mxu0 0.0
      %948 = vmatmul.mubr.f32.gmra.mrb[0].mxu0 %v424
      %v949 = vpop.f32.mrb[0].mxu0
      %v950 = vadd.f32 %v684, %v949
      %v951 = vpop.f32.mrb[0].mxu0
      %952 = vmatprep.mubr.f32.mxu0 0.0
      %953 = vmatmul.mubr.f32.gmra.mrb[0].mxu0 %v425
      %v954 = vpop.f32.mrb[0].mxu0
      %v955 = vadd.f32 %v689, %v954
      %v956 = vpop.f32.mrb[0].mxu0
      %957 = vmatprep.mubr.f32.mxu0 0.0
      %958 = vmatmul.mubr.f32.gmra.mrb[0].mxu0 %v426
      %v959 = vpop.f32.mrb[0].mxu0
      %v960 = vadd.f32 %v694, %v959
      %v961 = vpop.f32.mrb[0].mxu0
      %962 = vmatprep.mubr.f32.mxu0 0.0
      %963 = vmatmul.mubr.f32.gmra.mrb[0].mxu0 %v427
      %v964 = vpop.f32.mrb[0].mxu0
      %v965 = vadd.f32 %v699, %v964
      %v966 = vpop.f32.mrb[0].mxu0
      %967 = vmatprep.mubr.f32.mxu0 0.0
      %968 = vmatmul.mubr.f32.gmra.mrb[0].mxu0 %v428
      %v969 = vpop.f32.mrb[0].mxu0
      %v970 = vadd.f32 %v704, %v969
      %v971 = vpop.f32.mrb[0].mxu0
      %972 = vmatprep.mubr.f32.mxu0 0.0
      %973 = vmatmul.mubr.f32.gmra.mrb[0].mxu0 %v429
      %v974 = vpop.f32.mrb[0].mxu0
      %v975 = vadd.f32 %v709, %v974
      %v976 = vpop.f32.mrb[0].mxu0
      %977 = vmatprep.mubr.f32.mxu0 0.0
      %978 = vmatmul.mubr.f32.gmra.mrb[0].mxu0 %v430
      %v979 = vpop.f32.mrb[0].mxu0
      %v980 = vadd.f32 %v714, %v979
      %v981 = vpop.f32.mrb[0].mxu0
      %982 = vmatprep.mubr.f32.mxu0 0.0
      %983 = vmatmul.mubr.f32.gmra.mrb[0].mxu0 %v431
      %v984 = vpop.f32.mrb[0].mxu0
      %v985 = vadd.f32 %v719, %v984
      %v986 = vpop.f32.mrb[0].mxu0
      %987 = vmatprep.mubr.f32.mxu0 0.0
      %988 = vmatmul.mubr.f32.gmra.mrb[0].mxu0 %v432
      %v989 = vpop.f32.mrb[0].mxu0
      %v990 = vadd.f32 %v724, %v989
      %v991 = vpop.f32.mrb[0].mxu0
      %992 = vmatprep.mubr.f32.mxu0 0.0
      %993 = vmatmul.mubr.f32.gmra.mrb[0].mxu0 %v433
      %v994 = vpop.f32.mrb[0].mxu0
      %v995 = vadd.f32 %v729, %v994
      %v996 = vpop.f32.mrb[0].mxu0
      %997 = vmatprep.mubr.f32.mxu0 0.0
      %998 = vmatmul.mubr.f32.gmra.mrb[0].mxu0 %v434
      %v999 = vpop.f32.mrb[0].mxu0
      %v1000 = vadd.f32 %v734, %v999
      %v1001 = vpop.f32.mrb[0].mxu0
      %1002 = vmatprep.mubr.f32.mxu0 0.0
      %1003 = vmatmul.mubr.f32.gmra.mrb[0].mxu0 %v435
      %v1004 = vpop.f32.mrb[0].mxu0
      %v1005 = vadd.f32 %v739, %v1004
      %v1006 = vpop.f32.mrb[0].mxu0
      %1007 = vmatprep.mubr.f32.mxu0 0.0
      %1008 = vmatmul.mubr.f32.gmra.mrb[0].mxu0 %v436
      %v1009 = vpop.f32.mrb[0].mxu0
      %v1010 = vadd.f32 %v744, %v1009
      %v1011 = vpop.f32.mrb[0].mxu0
      %1012 = vmatprep.mubr.f32.mxu0 0.0
      %1013 = vmatmul.mubr.f32.gmra.mrb[0].mxu0 %v437
      %v1014 = vpop.f32.mrb[0].mxu0
      %v1015 = vadd.f32 %v749, %v1014
      %v1016 = vpop.f32.mrb[0].mxu0
      %1017 = vmatprep.mubr.f32.mxu0 0.0
      %1018 = vmatmul.mubr.f32.gmra.mrb[0].mxu0 %v438
      %v1019 = vpop.f32.mrb[0].mxu0
      %v1020 = vadd.f32 %v754, %v1019
      %v1021 = vpop.f32.mrb[0].mxu0
      %1022 = vmatprep.mubr.f32.mxu0 0.0
      %1023 = vmatmul.mubr.f32.gmra.mrb[0].mxu0 %v439
      %v1024 = vpop.f32.mrb[0].mxu0
      %v1025 = vadd.f32 %v759, %v1024
      %v1026 = vpop.f32.mrb[0].mxu0
      %1027 = vmatprep.mubr.f32.mxu0 0.0
      %1028 = vmatmul.mubr.f32.gmra.mrb[0].mxu0 %v440
      %v1029 = vpop.f32.mrb[0].mxu0
      %v1030 = vadd.f32 %v764, %v1029
      %v1031 = vpop.f32.mrb[0].mxu0
      %1032 = vmatprep.mubr.f32.mxu0 0.0
      %1033 = vmatmul.mubr.f32.gmra.mrb[0].mxu0 %v441
      %v1034 = vpop.f32.mrb[0].mxu0
      %v1035 = vadd.f32 %v769, %v1034
      %v1036 = vpop.f32.mrb[0].mxu0
      %1037 = vmatprep.mubr.f32.mxu0 0.0
      %1038 = vmatmul.mubr.f32.gmra.mrb[0].mxu0 %v442
      %v1039 = vpop.f32.mrb[0].mxu0
      %v1040 = vadd.f32 %v774, %v1039
      %v1041 = vpop.f32.mrb[0].mxu0
      %1042 = vmatprep.mubr.f32.mxu0 0.0
      %1043 = vmatmul.mubr.f32.gmra.mrb[0].mxu0 %v443
      %v1044 = vpop.f32.mrb[0].mxu0
      %v1045 = vpop.f32.mrb[0].mxu0
      %1046 = vmatprep.mubr.f32.mxu0 0.0
      %1047 = vmatmul.mubr.f32.gmra.mrb[0].mxu0 %v444
      %v1048 = vpop.f32.mrb[0].mxu0
      %v1049 = vpop.f32.mrb[0].mxu0
      %1050 = vdwg.mxu0
      %v1051 = vld [vmem:[#allocation2 + $0x2] sm:$0xff]
      %v1052 = vld [vmem:[#allocation2 + $0xa] sm:$0xff]
      %v1053 = vld [vmem:[#allocation2 + $0x12] sm:$0xff]
      %v1054 = vld [vmem:[#allocation2 + $0x1a] sm:$0xff]
      %v1055 = vld [vmem:[#allocation2 + $0x22] sm:$0xff]
      %v1056 = vld [vmem:[#allocation2 + $0x2a] sm:$0xff]
      %v1057 = vld [vmem:[#allocation2 + $0x32] sm:$0xff]
      %v1058 = vld [vmem:[#allocation2 + $0x3a] sm:$0xff]
      %v1059 = vld [vmem:[#allocation2 + $0x42] sm:$0xff]
      %v1060 = vld [vmem:[#allocation2 + $0x4a] sm:$0xff]
      %v1061 = vld [vmem:[#allocation2 + $0x52] sm:$0xff]
      %v1062 = vld [vmem:[#allocation2 + $0x5a] sm:$0xff]
      %v1063 = vld [vmem:[#allocation2 + $0x62] sm:$0xff]
      %v1064 = vld [vmem:[#allocation2 + $0x6a] sm:$0xff]
      %v1065 = vld [vmem:[#allocation2 + $0x72] sm:$0xff]
      %v1066 = vld [vmem:[#allocation2 + $0x7a] sm:$0xff]
      %v1067 = vld [vmem:[#allocation2 + $0x82] sm:$0xff]
      %v1068 = vld [vmem:[#allocation2 + $0x8a] sm:$0xff]
      %v1069 = vld [vmem:[#allocation2 + $0x92] sm:$0xff]
      %v1070 = vld [vmem:[#allocation2 + $0x9a] sm:$0xff]
      %v1071 = vld [vmem:[#allocation2 + $0xa2] sm:$0xff]
      %v1072 = vld [vmem:[#allocation2 + $0xaa] sm:$0xff]
      %v1073 = vld [vmem:[#allocation2 + $0xb2] sm:$0xff]
      %v1074 = vld [vmem:[#allocation2 + $0xba] sm:$0xff]
      %v1075 = vld [vmem:[#allocation2 + $0xc2] sm:$0xff]
      %v1076 = vld [vmem:[#allocation2 + $0xca] sm:$0xff]
      %v1077 = vld [vmem:[#allocation2 + $0xd2] sm:$0xff]
      %v1078 = vld [vmem:[#allocation2 + $0xda] sm:$0xff]
      %v1079 = vld [vmem:[#allocation2 + $0xe2] sm:$0xff]
      %v1080 = vld [vmem:[#allocation2 + $0xea] sm:$0xff]
      %v1081 = vld [vmem:[#allocation2 + $0xf2] sm:$0xff]
      %v1082 = vld [vmem:[#allocation2 + $0xfa] sm:$0xff]
      %v1083 = vld [vmem:[#allocation2 + $0x102] sm:$0xff]
      %v1084 = vld [vmem:[#allocation2 + $0x10a] sm:$0xff]
      %v1085 = vld [vmem:[#allocation2 + $0x112] sm:$0xff]
      %v1086 = vld [vmem:[#allocation2 + $0x11a] sm:$0xff]
      %v1087 = vld [vmem:[#allocation2 + $0x122] sm:$0xff]
      %v1088 = vld [vmem:[#allocation2 + $0x12a] sm:$0xff]
      %v1089 = vld [vmem:[#allocation2 + $0x132] sm:$0xff]
      %v1090 = vld [vmem:[#allocation2 + $0x13a] sm:$0xff]
      %v1091 = vld [vmem:[#allocation2 + $0x142] sm:$0xf]
      %s1092 = scalar_lea.vmem %s1, 256
      %v1093 = vld [vmem:[%s1092] sm:$0xff]
      %v1094 = vld [vmem:[%s1092 + $0x8] sm:$0xff]
      %v1095 = vld [vmem:[%s1092 + $0x10] sm:$0xff]
      %v1096 = vld [vmem:[%s1092 + $0x18] sm:$0xff]
      %v1097 = vld [vmem:[%s1092 + $0x20] sm:$0xff]
      %v1098 = vld [vmem:[%s1092 + $0x28] sm:$0xff]
      %v1099 = vld [vmem:[%s1092 + $0x30] sm:$0xff]
      %v1100 = vld [vmem:[%s1092 + $0x38] sm:$0xff]
      %v1101 = vld [vmem:[%s1092 + $0x40] sm:$0xff]
      %v1102 = vld [vmem:[%s1092 + $0x48] sm:$0xff]
      %v1103 = vld [vmem:[%s1092 + $0x50] sm:$0xff]
      %v1104 = vld [vmem:[%s1092 + $0x58] sm:$0xff]
      %v1105 = vld [vmem:[%s1092 + $0x60] sm:$0xff]
      %v1106 = vld [vmem:[%s1092 + $0x68] sm:$0xff]
      %v1107 = vld [vmem:[%s1092 + $0x70] sm:$0xff]
      %v1108 = vld [vmem:[%s1092 + $0x78] sm:$0xff]
      %1109 = vmatprep.subr.mxu0 0.0
      %1110 = vmatpush1.msra.mxu0 %v1093
      %1111 = vmatprep.subr.mxu0 0.0
      %1112 = vmatpush1.msra.mxu0 %v1094
      %1113 = vmatprep.subr.mxu0 0.0
      %1114 = vmatpush1.msra.mxu0 %v1095
      %1115 = vmatprep.subr.mxu0 0.0
      %1116 = vmatpush1.msra.mxu0 %v1096
      %1117 = vmatprep.subr.mxu0 0.0
      %1118 = vmatpush1.msra.mxu0 %v1097
      %1119 = vmatprep.subr.mxu0 0.0
      %1120 = vmatpush1.msra.mxu0 %v1098
      %1121 = vmatprep.subr.mxu0 0.0
      %1122 = vmatpush1.msra.mxu0 %v1099
      %1123 = vmatprep.subr.mxu0 0.0
      %1124 = vmatpush1.msra.mxu0 %v1100
      %1125 = vmatprep.subr.mxu0 0.0
      %1126 = vmatpush1.msra.mxu0 %v1101
      %1127 = vmatprep.subr.mxu0 0.0
      %1128 = vmatpush1.msra.mxu0 %v1102
      %1129 = vmatprep.subr.mxu0 0.0
      %1130 = vmatpush1.msra.mxu0 %v1103
      %1131 = vmatprep.subr.mxu0 0.0
      %1132 = vmatpush1.msra.mxu0 %v1104
      %1133 = vmatprep.subr.mxu0 0.0
      %1134 = vmatpush1.msra.mxu0 %v1105
      %1135 = vmatprep.subr.mxu0 0.0
      %1136 = vmatpush1.msra.mxu0 %v1106
      %1137 = vmatprep.subr.mxu0 0.0
      %1138 = vmatpush1.msra.mxu0 %v1107
      %1139 = vmatprep.subr.mxu0 0.0
      %1140 = vmatpush1.msra.mxu0 %v1108
      %1141 = vmatprep.subr.mxu0 0.0
      %1142 = vmatpush1.msra.mxu0 0.0
      %1143 = vmatprep.subr.mxu0 0.0
      %1144 = vmatpush1.msra.mxu0 0.0
      %1145 = vmatprep.subr.mxu0 0.0
      %1146 = vmatpush1.msra.mxu0 0.0
      %1147 = vmatprep.subr.mxu0 0.0
      %1148 = vmatpush1.msra.mxu0 0.0
      %1149 = vmatprep.subr.mxu0 0.0
      %1150 = vmatpush1.msra.mxu0 0.0
      %1151 = vmatprep.subr.mxu0 0.0
      %1152 = vmatpush1.msra.mxu0 0.0
      %1153 = vmatprep.subr.mxu0 0.0
      %1154 = vmatpush1.msra.mxu0 0.0
      %1155 = vmatprep.subr.mxu0 0.0
      %1156 = vmatpush1.msra.mxu0 0.0
      %1157 = vmatprep.subr.mxu0 0.0
      %1158 = vmatpush1.msra.mxu0 0.0
      %1159 = vmatprep.subr.mxu0 0.0
      %1160 = vmatpush1.msra.mxu0 0.0
      %1161 = vmatprep.subr.mxu0 0.0
      %1162 = vmatpush1.msra.mxu0 0.0
      %1163 = vmatprep.subr.mxu0 0.0
      %1164 = vmatpush1.msra.mxu0 0.0
      %1165 = vmatprep.subr.mxu0 0.0
      %1166 = vmatpush1.msra.mxu0 0.0
      %1167 = vmatprep.subr.mxu0 0.0
      %1168 = vmatpush1.msra.mxu0 0.0
      %1169 = vmatprep.subr.mxu0 0.0
      %1170 = vmatpush1.msra.mxu0 0.0
      %1171 = vmatprep.subr.mxu0 0.0
      %1172 = vmatpush1.msra.mxu0 0.0
      %1173 = vmatprep.mubr.f32.mxu0 0.0
      %1174 = vmatmul.mubr.f32.gmra.mrb[0].mxu0 %v1051
      %v1175 = vpop.f32.mrb[0].mxu0
      %v1176 = vpop.f32.mrb[0].mxu0
      %1177 = vmatprep.mubr.f32.mxu0 0.0
      %1178 = vmatmul.mubr.f32.gmra.mrb[0].mxu0 %v1052
      %v1179 = vpop.f32.mrb[0].mxu0
      %v1180 = vpop.f32.mrb[0].mxu0
      %1181 = vmatprep.mubr.f32.mxu0 0.0
      %1182 = vmatmul.mubr.f32.gmra.mrb[0].mxu0 %v1053
      %v1183 = vpop.f32.mrb[0].mxu0
      %v1184 = vadd.f32 0.0, %v1183
      %v1185 = vpop.f32.mrb[0].mxu0
      %1186 = vmatprep.mubr.f32.mxu0 0.0
      %1187 = vmatmul.mubr.f32.gmra.mrb[0].mxu0 %v1054
      %v1188 = vpop.f32.mrb[0].mxu0
      %v1189 = vadd.f32 0.0, %v1188
      %v1190 = vpop.f32.mrb[0].mxu0
      %1191 = vmatprep.mubr.f32.mxu0 0.0
      %1192 = vmatmul.mubr.f32.gmra.mrb[0].mxu0 %v1055
      %v1193 = vpop.f32.mrb[0].mxu0
      %v1194 = vadd.f32 0.0, %v1193
      %v1195 = vpop.f32.mrb[0].mxu0
      %1196 = vmatprep.mubr.f32.mxu0 0.0
      %1197 = vmatmul.mubr.f32.gmra.mrb[0].mxu0 %v1056
      %v1198 = vpop.f32.mrb[0].mxu0
      %v1199 = vadd.f32 0.0, %v1198
      %v1200 = vpop.f32.mrb[0].mxu0
      %1201 = vmatprep.mubr.f32.mxu0 0.0
      %1202 = vmatmul.mubr.f32.gmra.mrb[0].mxu0 %v1057
      %v1203 = vpop.f32.mrb[0].mxu0
      %v1204 = vadd.f32 0.0, %v1203
      %v1205 = vpop.f32.mrb[0].mxu0
      %1206 = vmatprep.mubr.f32.mxu0 0.0
      %1207 = vmatmul.mubr.f32.gmra.mrb[0].mxu0 %v1058
      %v1208 = vpop.f32.mrb[0].mxu0
      %v1209 = vadd.f32 0.0, %v1208
      %v1210 = vpop.f32.mrb[0].mxu0
      %1211 = vmatprep.mubr.f32.mxu0 0.0
      %1212 = vmatmul.mubr.f32.gmra.mrb[0].mxu0 %v1059
      %v1213 = vpop.f32.mrb[0].mxu0
      %v1214 = vadd.f32 0.0, %v1213
      %v1215 = vpop.f32.mrb[0].mxu0
      %1216 = vmatprep.mubr.f32.mxu0 0.0
      %1217 = vmatmul.mubr.f32.gmra.mrb[0].mxu0 %v1060
      %v1218 = vpop.f32.mrb[0].mxu0
      %v1219 = vadd.f32 0.0, %v1218
      %v1220 = vpop.f32.mrb[0].mxu0
      %1221 = vmatprep.mubr.f32.mxu0 0.0
      %1222 = vmatmul.mubr.f32.gmra.mrb[0].mxu0 %v1061
      %v1223 = vpop.f32.mrb[0].mxu0
      %v1224 = vadd.f32 0.0, %v1223
      %v1225 = vpop.f32.mrb[0].mxu0
      %1226 = vmatprep.mubr.f32.mxu0 0.0
      %1227 = vmatmul.mubr.f32.gmra.mrb[0].mxu0 %v1062
      %v1228 = vpop.f32.mrb[0].mxu0
      %v1229 = vadd.f32 0.0, %v1228
      %v1230 = vpop.f32.mrb[0].mxu0
      %1231 = vmatprep.mubr.f32.mxu0 0.0
      %1232 = vmatmul.mubr.f32.gmra.mrb[0].mxu0 %v1063
      %v1233 = vpop.f32.mrb[0].mxu0
      %v1234 = vadd.f32 0.0, %v1233
      %v1235 = vpop.f32.mrb[0].mxu0
      %1236 = vmatprep.mubr.f32.mxu0 0.0
      %1237 = vmatmul.mubr.f32.gmra.mrb[0].mxu0 %v1064
      %v1238 = vpop.f32.mrb[0].mxu0
      %v1239 = vadd.f32 0.0, %v1238
      %v1240 = vpop.f32.mrb[0].mxu0
      %1241 = vmatprep.mubr.f32.mxu0 0.0
      %1242 = vmatmul.mubr.f32.gmra.mrb[0].mxu0 %v1065
      %v1243 = vpop.f32.mrb[0].mxu0
      %v1244 = vadd.f32 0.0, %v1243
      %v1245 = vpop.f32.mrb[0].mxu0
      %1246 = vmatprep.mubr.f32.mxu0 0.0
      %1247 = vmatmul.mubr.f32.gmra.mrb[0].mxu0 %v1066
      %v1248 = vpop.f32.mrb[0].mxu0
      %v1249 = vadd.f32 0.0, %v1248
      %v1250 = vpop.f32.mrb[0].mxu0
      %1251 = vmatprep.mubr.f32.mxu0 0.0
      %1252 = vmatmul.mubr.f32.gmra.mrb[0].mxu0 %v1067
      %v1253 = vpop.f32.mrb[0].mxu0
      %v1254 = vadd.f32 0.0, %v1253
      %v1255 = vpop.f32.mrb[0].mxu0
      %1256 = vmatprep.mubr.f32.mxu0 0.0
      %1257 = vmatmul.mubr.f32.gmra.mrb[0].mxu0 %v1068
      %v1258 = vpop.f32.mrb[0].mxu0
      %v1259 = vadd.f32 0.0, %v1258
      %v1260 = vpop.f32.mrb[0].mxu0
      %1261 = vmatprep.mubr.f32.mxu0 0.0
      %1262 = vmatmul.mubr.f32.gmra.mrb[0].mxu0 %v1069
      %v1263 = vpop.f32.mrb[0].mxu0
      %v1264 = vadd.f32 0.0, %v1263
      %v1265 = vpop.f32.mrb[0].mxu0
      %1266 = vmatprep.mubr.f32.mxu0 0.0
      %1267 = vmatmul.mubr.f32.gmra.mrb[0].mxu0 %v1070
      %v1268 = vpop.f32.mrb[0].mxu0
      %v1269 = vadd.f32 0.0, %v1268
      %v1270 = vpop.f32.mrb[0].mxu0
      %1271 = vmatprep.mubr.f32.mxu0 0.0
      %1272 = vmatmul.mubr.f32.gmra.mrb[0].mxu0 %v1071
      %v1273 = vpop.f32.mrb[0].mxu0
      %v1274 = vadd.f32 0.0, %v1273
      %v1275 = vpop.f32.mrb[0].mxu0
      %1276 = vmatprep.mubr.f32.mxu0 0.0
      %1277 = vmatmul.mubr.f32.gmra.mrb[0].mxu0 %v1072
      %v1278 = vpop.f32.mrb[0].mxu0
      %v1279 = vadd.f32 0.0, %v1278
      %v1280 = vpop.f32.mrb[0].mxu0
      %1281 = vmatprep.mubr.f32.mxu0 0.0
      %1282 = vmatmul.mubr.f32.gmra.mrb[0].mxu0 %v1073
      %v1283 = vpop.f32.mrb[0].mxu0
      %v1284 = vadd.f32 0.0, %v1283
      %v1285 = vpop.f32.mrb[0].mxu0
      %1286 = vmatprep.mubr.f32.mxu0 0.0
      %1287 = vmatmul.mubr.f32.gmra.mrb[0].mxu0 %v1074
      %v1288 = vpop.f32.mrb[0].mxu0
      %v1289 = vadd.f32 0.0, %v1288
      %v1290 = vpop.f32.mrb[0].mxu0
      %1291 = vmatprep.mubr.f32.mxu0 0.0
      %1292 = vmatmul.mubr.f32.gmra.mrb[0].mxu0 %v1075
      %v1293 = vpop.f32.mrb[0].mxu0
      %v1294 = vadd.f32 0.0, %v1293
      %v1295 = vpop.f32.mrb[0].mxu0
      %1296 = vmatprep.mubr.f32.mxu0 0.0
      %1297 = vmatmul.mubr.f32.gmra.mrb[0].mxu0 %v1076
      %v1298 = vpop.f32.mrb[0].mxu0
      %v1299 = vadd.f32 0.0, %v1298
      %v1300 = vpop.f32.mrb[0].mxu0
      %1301 = vmatprep.mubr.f32.mxu0 0.0
      %1302 = vmatmul.mubr.f32.gmra.mrb[0].mxu0 %v1077
      %v1303 = vpop.f32.mrb[0].mxu0
      %v1304 = vadd.f32 0.0, %v1303
      %v1305 = vpop.f32.mrb[0].mxu0
      %1306 = vmatprep.mubr.f32.mxu0 0.0
      %1307 = vmatmul.mubr.f32.gmra.mrb[0].mxu0 %v1078
      %v1308 = vpop.f32.mrb[0].mxu0
      %v1309 = vadd.f32 0.0, %v1308
      %v1310 = vpop.f32.mrb[0].mxu0
      %1311 = vmatprep.mubr.f32.mxu0 0.0
      %1312 = vmatmul.mubr.f32.gmra.mrb[0].mxu0 %v1079
      %v1313 = vpop.f32.mrb[0].mxu0
      %v1314 = vadd.f32 0.0, %v1313
      %v1315 = vpop.f32.mrb[0].mxu0
      %1316 = vmatprep.mubr.f32.mxu0 0.0
      %1317 = vmatmul.mubr.f32.gmra.mrb[0].mxu0 %v1080
      %v1318 = vpop.f32.mrb[0].mxu0
      %v1319 = vadd.f32 0.0, %v1318
      %v1320 = vpop.f32.mrb[0].mxu0
      %1321 = vmatprep.mubr.f32.mxu0 0.0
      %1322 = vmatmul.mubr.f32.gmra.mrb[0].mxu0 %v1081
      %v1323 = vpop.f32.mrb[0].mxu0
      %v1324 = vadd.f32 0.0, %v1323
      %v1325 = vpop.f32.mrb[0].mxu0
      %1326 = vmatprep.mubr.f32.mxu0 0.0
      %1327 = vmatmul.mubr.f32.gmra.mrb[0].mxu0 %v1082
      %v1328 = vpop.f32.mrb[0].mxu0
      %v1329 = vadd.f32 0.0, %v1328
      %v1330 = vpop.f32.mrb[0].mxu0
      %1331 = vmatprep.mubr.f32.mxu0 0.0
      %1332 = vmatmul.mubr.f32.gmra.mrb[0].mxu0 %v1083
      %v1333 = vpop.f32.mrb[0].mxu0
      %v1334 = vadd.f32 0.0, %v1333
      %v1335 = vpop.f32.mrb[0].mxu0
      %1336 = vmatprep.mubr.f32.mxu0 0.0
      %1337 = vmatmul.mubr.f32.gmra.mrb[0].mxu0 %v1084
      %v1338 = vpop.f32.mrb[0].mxu0
      %v1339 = vadd.f32 0.0, %v1338
      %v1340 = vpop.f32.mrb[0].mxu0
      %1341 = vmatprep.mubr.f32.mxu0 0.0
      %1342 = vmatmul.mubr.f32.gmra.mrb[0].mxu0 %v1085
      %v1343 = vpop.f32.mrb[0].mxu0
      %v1344 = vadd.f32 0.0, %v1343
      %v1345 = vpop.f32.mrb[0].mxu0
      %1346 = vmatprep.mubr.f32.mxu0 0.0
      %1347 = vmatmul.mubr.f32.gmra.mrb[0].mxu0 %v1086
      %v1348 = vpop.f32.mrb[0].mxu0
      %v1349 = vadd.f32 0.0, %v1348
      %v1350 = vpop.f32.mrb[0].mxu0
      %1351 = vmatprep.mubr.f32.mxu0 0.0
      %1352 = vmatmul.mubr.f32.gmra.mrb[0].mxu0 %v1087
      %v1353 = vpop.f32.mrb[0].mxu0
      %v1354 = vadd.f32 0.0, %v1353
      %v1355 = vpop.f32.mrb[0].mxu0
      %1356 = vmatprep.mubr.f32.mxu0 0.0
      %1357 = vmatmul.mubr.f32.gmra.mrb[0].mxu0 %v1088
      %v1358 = vpop.f32.mrb[0].mxu0
      %v1359 = vadd.f32 0.0, %v1358
      %v1360 = vpop.f32.mrb[0].mxu0
      %1361 = vmatprep.mubr.f32.mxu0 0.0
      %1362 = vmatmul.mubr.f32.gmra.mrb[0].mxu0 %v1089
      %v1363 = vpop.f32.mrb[0].mxu0
      %v1364 = vadd.f32 0.0, %v1363
      %v1365 = vpop.f32.mrb[0].mxu0
      %1366 = vmatprep.mubr.f32.mxu0 0.0
      %1367 = vmatmul.mubr.f32.gmra.mrb[0].mxu0 %v1090
      %v1368 = vpop.f32.mrb[0].mxu0
      %v1369 = vpop.f32.mrb[0].mxu0
      %1370 = vmatprep.mubr.f32.mxu0 0.0
      %1371 = vmatmul.mubr.f32.gmra.mrb[0].mxu0 %v1091
      %v1372 = vpop.f32.mrb[0].mxu0
      %v1373 = vpop.f32.mrb[0].mxu0
      %1374 = vdwg.mxu0
      %v1375 = vadd.f32 %v860, %v1184
      %v1376 = vadd.f32 %v865, %v1189
      %v1377 = vadd.f32 %v870, %v1194
      %v1378 = vadd.f32 %v875, %v1199
      %v1379 = vadd.f32 %v880, %v1204
      %v1380 = vadd.f32 %v885, %v1209
      %v1381 = vadd.f32 %v890, %v1214
      %v1382 = vadd.f32 %v895, %v1219
      %v1383 = vadd.f32 %v900, %v1224
      %v1384 = vadd.f32 %v905, %v1229
      %v1385 = vadd.f32 %v910, %v1234
      %v1386 = vadd.f32 %v915, %v1239
      %v1387 = vadd.f32 %v920, %v1244
      %v1388 = vadd.f32 %v925, %v1249
      %v1389 = vadd.f32 %v930, %v1254
      %v1390 = vadd.f32 %v935, %v1259
      %v1391 = vadd.f32 %v940, %v1264
      %v1392 = vadd.f32 %v945, %v1269
      %v1393 = vadd.f32 %v950, %v1274
      %v1394 = vadd.f32 %v955, %v1279
      %v1395 = vadd.f32 %v960, %v1284
      %v1396 = vadd.f32 %v965, %v1289
      %v1397 = vadd.f32 %v970, %v1294
      %v1398 = vadd.f32 %v975, %v1299
      %v1399 = vadd.f32 %v980, %v1304
      %v1400 = vadd.f32 %v985, %v1309
      %v1401 = vadd.f32 %v990, %v1314
      %v1402 = vadd.f32 %v995, %v1319
      %v1403 = vadd.f32 %v1000, %v1324
      %v1404 = vadd.f32 %v1005, %v1329
      %v1405 = vadd.f32 %v1010, %v1334
      %v1406 = vadd.f32 %v1015, %v1339
      %v1407 = vadd.f32 %v1020, %v1344
      %v1408 = vadd.f32 %v1025, %v1349
      %v1409 = vadd.f32 %v1030, %v1354
      %v1410 = vadd.f32 %v1035, %v1359
      %v1411 = vadd.f32 %v1040, %v1364
      %v1412 = vld [vmem:[#allocation2 + $0x12] sm:$0xff]
      %v1413 = vld [vmem:[#allocation2 + $0x1a] sm:$0xff]
      %v1414 = vld [vmem:[#allocation2 + $0x22] sm:$0xff]
      %v1415 = vld [vmem:[#allocation2 + $0x2a] sm:$0xff]
      %v1416 = vld [vmem:[#allocation2 + $0x32] sm:$0xff]
      %v1417 = vld [vmem:[#allocation2 + $0x3a] sm:$0xff]
      %v1418 = vld [vmem:[#allocation2 + $0x42] sm:$0xff]
      %v1419 = vld [vmem:[#allocation2 + $0x4a] sm:$0xff]
      %v1420 = vld [vmem:[#allocation2 + $0x52] sm:$0xff]
      %v1421 = vld [vmem:[#allocation2 + $0x5a] sm:$0xff]
      %v1422 = vld [vmem:[#allocation2 + $0x62] sm:$0xff]
      %v1423 = vld [vmem:[#allocation2 + $0x6a] sm:$0xff]
      %v1424 = vld [vmem:[#allocation2 + $0x72] sm:$0xff]
      %v1425 = vld [vmem:[#allocation2 + $0x7a] sm:$0xff]
      %v1426 = vld [vmem:[#allocation2 + $0x82] sm:$0xff]
      %v1427 = vld [vmem:[#allocation2 + $0x8a] sm:$0xff]
      %v1428 = vld [vmem:[#allocation2 + $0x92] sm:$0xff]
      %v1429 = vld [vmem:[#allocation2 + $0x9a] sm:$0xff]
      %v1430 = vld [vmem:[#allocation2 + $0xa2] sm:$0xff]
      %v1431 = vld [vmem:[#allocation2 + $0xaa] sm:$0xff]
      %v1432 = vld [vmem:[#allocation2 + $0xb2] sm:$0xff]
      %v1433 = vld [vmem:[#allocation2 + $0xba] sm:$0xff]
      %v1434 = vld [vmem:[#allocation2 + $0xc2] sm:$0xff]
      %v1435 = vld [vmem:[#allocation2 + $0xca] sm:$0xff]
      %v1436 = vld [vmem:[#allocation2 + $0xd2] sm:$0xff]
      %v1437 = vld [vmem:[#allocation2 + $0xda] sm:$0xff]
      %v1438 = vld [vmem:[#allocation2 + $0xe2] sm:$0xff]
      %v1439 = vld [vmem:[#allocation2 + $0xea] sm:$0xff]
      %v1440 = vld [vmem:[#allocation2 + $0xf2] sm:$0xff]
      %v1441 = vld [vmem:[#allocation2 + $0xfa] sm:$0xff]
      %v1442 = vld [vmem:[#allocation2 + $0x102] sm:$0xff]
      %v1443 = vld [vmem:[#allocation2 + $0x10a] sm:$0xff]
      %v1444 = vld [vmem:[#allocation2 + $0x112] sm:$0xff]
      %v1445 = vld [vmem:[#allocation2 + $0x11a] sm:$0xff]
      %v1446 = vld [vmem:[#allocation2 + $0x122] sm:$0xff]
      %v1447 = vld [vmem:[#allocation2 + $0x12a] sm:$0xff]
      %v1448 = vld [vmem:[#allocation2 + $0x132] sm:$0xff]
      %v1449 = vld [vmem:[#allocation2 + $0x13a] sm:$0xff]
      %v1450 = vld [vmem:[#allocation2 + $0x142] sm:$0xff]
      %v1451 = vld [vmem:[#allocation2 + $0x14a] sm:$0xff]
      %v1452 = vld [vmem:[#allocation2 + $0x152] sm:$0xf]
      %s1453 = scalar_lea.vmem %s1, 384
      %v1454 = vld [vmem:[%s1453] sm:$0xff]
      %v1455 = vld [vmem:[%s1453 + $0x8] sm:$0xff]
      %v1456 = vld [vmem:[%s1453 + $0x10] sm:$0xff]
      %v1457 = vld [vmem:[%s1453 + $0x18] sm:$0xff]
      %v1458 = vld [vmem:[%s1453 + $0x20] sm:$0xff]
      %v1459 = vld [vmem:[%s1453 + $0x28] sm:$0xff]
      %v1460 = vld [vmem:[%s1453 + $0x30] sm:$0xff]
      %v1461 = vld [vmem:[%s1453 + $0x38] sm:$0xff]
      %v1462 = vld [vmem:[%s1453 + $0x40] sm:$0xff]
      %v1463 = vld [vmem:[%s1453 + $0x48] sm:$0xff]
      %v1464 = vld [vmem:[%s1453 + $0x50] sm:$0xff]
      %v1465 = vld [vmem:[%s1453 + $0x58] sm:$0xff]
      %v1466 = vld [vmem:[%s1453 + $0x60] sm:$0xff]
      %v1467 = vld [vmem:[%s1453 + $0x68] sm:$0xff]
      %v1468 = vld [vmem:[%s1453 + $0x70] sm:$0xff]
      %v1469 = vld [vmem:[%s1453 + $0x78] sm:$0xff]
      %1470 = vmatprep.subr.mxu0 0.0
      %1471 = vmatpush1.msra.mxu0 %v1454
      %1472 = vmatprep.subr.mxu0 0.0
      %1473 = vmatpush1.msra.mxu0 %v1455
      %1474 = vmatprep.subr.mxu0 0.0
      %1475 = vmatpush1.msra.mxu0 %v1456
      %1476 = vmatprep.subr.mxu0 0.0
      %1477 = vmatpush1.msra.mxu0 %v1457
      %1478 = vmatprep.subr.mxu0 0.0
      %1479 = vmatpush1.msra.mxu0 %v1458
      %1480 = vmatprep.subr.mxu0 0.0
      %1481 = vmatpush1.msra.mxu0 %v1459
      %1482 = vmatprep.subr.mxu0 0.0
      %1483 = vmatpush1.msra.mxu0 %v1460
      %1484 = vmatprep.subr.mxu0 0.0
      %1485 = vmatpush1.msra.mxu0 %v1461
      %1486 = vmatprep.subr.mxu0 0.0
      %1487 = vmatpush1.msra.mxu0 %v1462
      %1488 = vmatprep.subr.mxu0 0.0
      %1489 = vmatpush1.msra.mxu0 %v1463
      %1490 = vmatprep.subr.mxu0 0.0
      %1491 = vmatpush1.msra.mxu0 %v1464
      %1492 = vmatprep.subr.mxu0 0.0
      %1493 = vmatpush1.msra.mxu0 %v1465
      %1494 = vmatprep.subr.mxu0 0.0
      %1495 = vmatpush1.msra.mxu0 %v1466
      %1496 = vmatprep.subr.mxu0 0.0
      %1497 = vmatpush1.msra.mxu0 %v1467
      %1498 = vmatprep.subr.mxu0 0.0
      %1499 = vmatpush1.msra.mxu0 %v1468
      %1500 = vmatprep.subr.mxu0 0.0
      %1501 = vmatpush1.msra.mxu0 %v1469
      %1502 = vmatprep.subr.mxu0 0.0
      %1503 = vmatpush1.msra.mxu0 0.0
      %1504 = vmatprep.subr.mxu0 0.0
      %1505 = vmatpush1.msra.mxu0 0.0
      %1506 = vmatprep.subr.mxu0 0.0
      %1507 = vmatpush1.msra.mxu0 0.0
      %1508 = vmatprep.subr.mxu0 0.0
      %1509 = vmatpush1.msra.mxu0 0.0
      %1510 = vmatprep.subr.mxu0 0.0
      %1511 = vmatpush1.msra.mxu0 0.0
      %1512 = vmatprep.subr.mxu0 0.0
      %1513 = vmatpush1.msra.mxu0 0.0
      %1514 = vmatprep.subr.mxu0 0.0
      %1515 = vmatpush1.msra.mxu0 0.0
      %1516 = vmatprep.subr.mxu0 0.0
      %1517 = vmatpush1.msra.mxu0 0.0
      %1518 = vmatprep.subr.mxu0 0.0
      %1519 = vmatpush1.msra.mxu0 0.0
      %1520 = vmatprep.subr.mxu0 0.0
      %1521 = vmatpush1.msra.mxu0 0.0
      %1522 = vmatprep.subr.mxu0 0.0
      %1523 = vmatpush1.msra.mxu0 0.0
      %1524 = vmatprep.subr.mxu0 0.0
      %1525 = vmatpush1.msra.mxu0 0.0
      %1526 = vmatprep.subr.mxu0 0.0
      %1527 = vmatpush1.msra.mxu0 0.0
      %1528 = vmatprep.subr.mxu0 0.0
      %1529 = vmatpush1.msra.mxu0 0.0
      %1530 = vmatprep.subr.mxu0 0.0
      %1531 = vmatpush1.msra.mxu0 0.0
      %1532 = vmatprep.subr.mxu0 0.0
      %1533 = vmatpush1.msra.mxu0 0.0
      %1534 = vmatprep.mubr.f32.mxu0 0.0
      %1535 = vmatmul.mubr.f32.gmra.mrb[0].mxu0 %v1412
      %v1536 = vpop.f32.mrb[0].mxu0
      %v1537 = vpop.f32.mrb[0].mxu0
      %1538 = vmatprep.mubr.f32.mxu0 0.0
      %1539 = vmatmul.mubr.f32.gmra.mrb[0].mxu0 %v1413
      %v1540 = vpop.f32.mrb[0].mxu0
      %v1541 = vpop.f32.mrb[0].mxu0
      %1542 = vmatprep.mubr.f32.mxu0 0.0
      %1543 = vmatmul.mubr.f32.gmra.mrb[0].mxu0 %v1414
      %v1544 = vpop.f32.mrb[0].mxu0
      %v1545 = vadd.f32 0.0, %v1544
      %v1546 = vpop.f32.mrb[0].mxu0
      %1547 = vmatprep.mubr.f32.mxu0 0.0
      %1548 = vmatmul.mubr.f32.gmra.mrb[0].mxu0 %v1415
      %v1549 = vpop.f32.mrb[0].mxu0
      %v1550 = vadd.f32 0.0, %v1549
      %v1551 = vpop.f32.mrb[0].mxu0
      %1552 = vmatprep.mubr.f32.mxu0 0.0
      %1553 = vmatmul.mubr.f32.gmra.mrb[0].mxu0 %v1416
      %v1554 = vpop.f32.mrb[0].mxu0
      %v1555 = vadd.f32 0.0, %v1554
      %v1556 = vpop.f32.mrb[0].mxu0
      %1557 = vmatprep.mubr.f32.mxu0 0.0
      %1558 = vmatmul.mubr.f32.gmra.mrb[0].mxu0 %v1417
      %v1559 = vpop.f32.mrb[0].mxu0
      %v1560 = vadd.f32 0.0, %v1559
      %v1561 = vpop.f32.mrb[0].mxu0
      %1562 = vmatprep.mubr.f32.mxu0 0.0
      %1563 = vmatmul.mubr.f32.gmra.mrb[0].mxu0 %v1418
      %v1564 = vpop.f32.mrb[0].mxu0
      %v1565 = vadd.f32 0.0, %v1564
      %v1566 = vpop.f32.mrb[0].mxu0
      %1567 = vmatprep.mubr.f32.mxu0 0.0
      %1568 = vmatmul.mubr.f32.gmra.mrb[0].mxu0 %v1419
      %v1569 = vpop.f32.mrb[0].mxu0
      %v1570 = vadd.f32 0.0, %v1569
      %v1571 = vpop.f32.mrb[0].mxu0
      %1572 = vmatprep.mubr.f32.mxu0 0.0
      %1573 = vmatmul.mubr.f32.gmra.mrb[0].mxu0 %v1420
      %v1574 = vpop.f32.mrb[0].mxu0
      %v1575 = vadd.f32 0.0, %v1574
      %v1576 = vpop.f32.mrb[0].mxu0
      %1577 = vmatprep.mubr.f32.mxu0 0.0
      %1578 = vmatmul.mubr.f32.gmra.mrb[0].mxu0 %v1421
      %v1579 = vpop.f32.mrb[0].mxu0
      %v1580 = vadd.f32 0.0, %v1579
      %v1581 = vpop.f32.mrb[0].mxu0
      %1582 = vmatprep.mubr.f32.mxu0 0.0
      %1583 = vmatmul.mubr.f32.gmra.mrb[0].mxu0 %v1422
      %v1584 = vpop.f32.mrb[0].mxu0
      %v1585 = vadd.f32 0.0, %v1584
      %v1586 = vpop.f32.mrb[0].mxu0
      %1587 = vmatprep.mubr.f32.mxu0 0.0
      %1588 = vmatmul.mubr.f32.gmra.mrb[0].mxu0 %v1423
      %v1589 = vpop.f32.mrb[0].mxu0
      %v1590 = vadd.f32 0.0, %v1589
      %v1591 = vpop.f32.mrb[0].mxu0
      %1592 = vmatprep.mubr.f32.mxu0 0.0
      %1593 = vmatmul.mubr.f32.gmra.mrb[0].mxu0 %v1424
      %v1594 = vpop.f32.mrb[0].mxu0
      %v1595 = vadd.f32 0.0, %v1594
      %v1596 = vpop.f32.mrb[0].mxu0
      %1597 = vmatprep.mubr.f32.mxu0 0.0
      %1598 = vmatmul.mubr.f32.gmra.mrb[0].mxu0 %v1425
      %v1599 = vpop.f32.mrb[0].mxu0
      %v1600 = vadd.f32 0.0, %v1599
      %v1601 = vpop.f32.mrb[0].mxu0
      %1602 = vmatprep.mubr.f32.mxu0 0.0
      %1603 = vmatmul.mubr.f32.gmra.mrb[0].mxu0 %v1426
      %v1604 = vpop.f32.mrb[0].mxu0
      %v1605 = vadd.f32 0.0, %v1604
      %v1606 = vpop.f32.mrb[0].mxu0
      %1607 = vmatprep.mubr.f32.mxu0 0.0
      %1608 = vmatmul.mubr.f32.gmra.mrb[0].mxu0 %v1427
      %v1609 = vpop.f32.mrb[0].mxu0
      %v1610 = vadd.f32 0.0, %v1609
      %v1611 = vpop.f32.mrb[0].mxu0
      %1612 = vmatprep.mubr.f32.mxu0 0.0
      %1613 = vmatmul.mubr.f32.gmra.mrb[0].mxu0 %v1428
      %v1614 = vpop.f32.mrb[0].mxu0
      %v1615 = vadd.f32 0.0, %v1614
      %v1616 = vpop.f32.mrb[0].mxu0
      %1617 = vmatprep.mubr.f32.mxu0 0.0
      %1618 = vmatmul.mubr.f32.gmra.mrb[0].mxu0 %v1429
      %v1619 = vpop.f32.mrb[0].mxu0
      %v1620 = vadd.f32 0.0, %v1619
      %v1621 = vpop.f32.mrb[0].mxu0
      %1622 = vmatprep.mubr.f32.mxu0 0.0
      %1623 = vmatmul.mubr.f32.gmra.mrb[0].mxu0 %v1430
      %v1624 = vpop.f32.mrb[0].mxu0
      %v1625 = vadd.f32 0.0, %v1624
      %v1626 = vpop.f32.mrb[0].mxu0
      %1627 = vmatprep.mubr.f32.mxu0 0.0
      %1628 = vmatmul.mubr.f32.gmra.mrb[0].mxu0 %v1431
      %v1629 = vpop.f32.mrb[0].mxu0
      %v1630 = vadd.f32 0.0, %v1629
      %v1631 = vpop.f32.mrb[0].mxu0
      %1632 = vmatprep.mubr.f32.mxu0 0.0
      %1633 = vmatmul.mubr.f32.gmra.mrb[0].mxu0 %v1432
      %v1634 = vpop.f32.mrb[0].mxu0
      %v1635 = vadd.f32 0.0, %v1634
      %v1636 = vpop.f32.mrb[0].mxu0
      %1637 = vmatprep.mubr.f32.mxu0 0.0
      %1638 = vmatmul.mubr.f32.gmra.mrb[0].mxu0 %v1433
      %v1639 = vpop.f32.mrb[0].mxu0
      %v1640 = vadd.f32 0.0, %v1639
      %v1641 = vpop.f32.mrb[0].mxu0
      %1642 = vmatprep.mubr.f32.mxu0 0.0
      %1643 = vmatmul.mubr.f32.gmra.mrb[0].mxu0 %v1434
      %v1644 = vpop.f32.mrb[0].mxu0
      %v1645 = vadd.f32 0.0, %v1644
      %v1646 = vpop.f32.mrb[0].mxu0
      %1647 = vmatprep.mubr.f32.mxu0 0.0
      %1648 = vmatmul.mubr.f32.gmra.mrb[0].mxu0 %v1435
      %v1649 = vpop.f32.mrb[0].mxu0
      %v1650 = vadd.f32 0.0, %v1649
      %v1651 = vpop.f32.mrb[0].mxu0
      %1652 = vmatprep.mubr.f32.mxu0 0.0
      %1653 = vmatmul.mubr.f32.gmra.mrb[0].mxu0 %v1436
      %v1654 = vpop.f32.mrb[0].mxu0
      %v1655 = vadd.f32 0.0, %v1654
      %v1656 = vpop.f32.mrb[0].mxu0
      %1657 = vmatprep.mubr.f32.mxu0 0.0
      %1658 = vmatmul.mubr.f32.gmra.mrb[0].mxu0 %v1437
      %v1659 = vpop.f32.mrb[0].mxu0
      %v1660 = vadd.f32 0.0, %v1659
      %v1661 = vpop.f32.mrb[0].mxu0
      %1662 = vmatprep.mubr.f32.mxu0 0.0
      %1663 = vmatmul.mubr.f32.gmra.mrb[0].mxu0 %v1438
      %v1664 = vpop.f32.mrb[0].mxu0
      %v1665 = vadd.f32 0.0, %v1664
      %v1666 = vpop.f32.mrb[0].mxu0
      %1667 = vmatprep.mubr.f32.mxu0 0.0
      %1668 = vmatmul.mubr.f32.gmra.mrb[0].mxu0 %v1439
      %v1669 = vpop.f32.mrb[0].mxu0
      %v1670 = vadd.f32 0.0, %v1669
      %v1671 = vpop.f32.mrb[0].mxu0
      %1672 = vmatprep.mubr.f32.mxu0 0.0
      %1673 = vmatmul.mubr.f32.gmra.mrb[0].mxu0 %v1440
      %v1674 = vpop.f32.mrb[0].mxu0
      %v1675 = vadd.f32 0.0, %v1674
      %v1676 = vpop.f32.mrb[0].mxu0
      %1677 = vmatprep.mubr.f32.mxu0 0.0
      %1678 = vmatmul.mubr.f32.gmra.mrb[0].mxu0 %v1441
      %v1679 = vpop.f32.mrb[0].mxu0
      %v1680 = vadd.f32 0.0, %v1679
      %v1681 = vpop.f32.mrb[0].mxu0
      %1682 = vmatprep.mubr.f32.mxu0 0.0
      %1683 = vmatmul.mubr.f32.gmra.mrb[0].mxu0 %v1442
      %v1684 = vpop.f32.mrb[0].mxu0
      %v1685 = vadd.f32 0.0, %v1684
      %v1686 = vpop.f32.mrb[0].mxu0
      %1687 = vmatprep.mubr.f32.mxu0 0.0
      %1688 = vmatmul.mubr.f32.gmra.mrb[0].mxu0 %v1443
      %v1689 = vpop.f32.mrb[0].mxu0
      %v1690 = vadd.f32 0.0, %v1689
      %v1691 = vpop.f32.mrb[0].mxu0
      %1692 = vmatprep.mubr.f32.mxu0 0.0
      %1693 = vmatmul.mubr.f32.gmra.mrb[0].mxu0 %v1444
      %v1694 = vpop.f32.mrb[0].mxu0
      %v1695 = vadd.f32 0.0, %v1694
      %v1696 = vpop.f32.mrb[0].mxu0
      %1697 = vmatprep.mubr.f32.mxu0 0.0
      %1698 = vmatmul.mubr.f32.gmra.mrb[0].mxu0 %v1445
      %v1699 = vpop.f32.mrb[0].mxu0
      %v1700 = vadd.f32 0.0, %v1699
      %v1701 = vpop.f32.mrb[0].mxu0
      %1702 = vmatprep.mubr.f32.mxu0 0.0
      %1703 = vmatmul.mubr.f32.gmra.mrb[0].mxu0 %v1446
      %v1704 = vpop.f32.mrb[0].mxu0
      %v1705 = vadd.f32 0.0, %v1704
      %v1706 = vpop.f32.mrb[0].mxu0
      %1707 = vmatprep.mubr.f32.mxu0 0.0
      %1708 = vmatmul.mubr.f32.gmra.mrb[0].mxu0 %v1447
      %v1709 = vpop.f32.mrb[0].mxu0
      %v1710 = vadd.f32 0.0, %v1709
      %v1711 = vpop.f32.mrb[0].mxu0
      %1712 = vmatprep.mubr.f32.mxu0 0.0
      %1713 = vmatmul.mubr.f32.gmra.mrb[0].mxu0 %v1448
      %v1714 = vpop.f32.mrb[0].mxu0
      %v1715 = vadd.f32 0.0, %v1714
      %v1716 = vpop.f32.mrb[0].mxu0
      %1717 = vmatprep.mubr.f32.mxu0 0.0
      %1718 = vmatmul.mubr.f32.gmra.mrb[0].mxu0 %v1449
      %v1719 = vpop.f32.mrb[0].mxu0
      %v1720 = vadd.f32 0.0, %v1719
      %v1721 = vpop.f32.mrb[0].mxu0
      %1722 = vmatprep.mubr.f32.mxu0 0.0
      %1723 = vmatmul.mubr.f32.gmra.mrb[0].mxu0 %v1450
      %v1724 = vpop.f32.mrb[0].mxu0
      %v1725 = vadd.f32 0.0, %v1724
      %v1726 = vpop.f32.mrb[0].mxu0
      %1727 = vmatprep.mubr.f32.mxu0 0.0
      %1728 = vmatmul.mubr.f32.gmra.mrb[0].mxu0 %v1451
      %v1729 = vpop.f32.mrb[0].mxu0
      %v1730 = vpop.f32.mrb[0].mxu0
      %1731 = vmatprep.mubr.f32.mxu0 0.0
      %1732 = vmatmul.mubr.f32.gmra.mrb[0].mxu0 %v1452
      %v1733 = vpop.f32.mrb[0].mxu0
      %v1734 = vpop.f32.mrb[0].mxu0
      %1735 = vdwg.mxu0
      %v1736 = vadd.f32 %v1375, %v1545
      %v1737 = vadd.f32 %v1376, %v1550
      %v1738 = vadd.f32 %v1377, %v1555
      %v1739 = vadd.f32 %v1378, %v1560
      %v1740 = vadd.f32 %v1379, %v1565
      %v1741 = vadd.f32 %v1380, %v1570
      %v1742 = vadd.f32 %v1381, %v1575
      %v1743 = vadd.f32 %v1382, %v1580
      %v1744 = vadd.f32 %v1383, %v1585
      %v1745 = vadd.f32 %v1384, %v1590
      %v1746 = vadd.f32 %v1385, %v1595
      %v1747 = vadd.f32 %v1386, %v1600
      %v1748 = vadd.f32 %v1387, %v1605
      %v1749 = vadd.f32 %v1388, %v1610
      %v1750 = vadd.f32 %v1389, %v1615
      %v1751 = vadd.f32 %v1390, %v1620
      %v1752 = vadd.f32 %v1391, %v1625
      %v1753 = vadd.f32 %v1392, %v1630
      %v1754 = vadd.f32 %v1393, %v1635
      %v1755 = vadd.f32 %v1394, %v1640
      %v1756 = vadd.f32 %v1395, %v1645
      %v1757 = vadd.f32 %v1396, %v1650
      %v1758 = vadd.f32 %v1397, %v1655
      %v1759 = vadd.f32 %v1398, %v1660
      %v1760 = vadd.f32 %v1399, %v1665
      %v1761 = vadd.f32 %v1400, %v1670
      %v1762 = vadd.f32 %v1401, %v1675
      %v1763 = vadd.f32 %v1402, %v1680
      %v1764 = vadd.f32 %v1403, %v1685
      %v1765 = vadd.f32 %v1404, %v1690
      %v1766 = vadd.f32 %v1405, %v1695
      %v1767 = vadd.f32 %v1406, %v1700
      %v1768 = vadd.f32 %v1407, %v1705
      %v1769 = vadd.f32 %v1408, %v1710
      %v1770 = vadd.f32 %v1409, %v1715
      %v1771 = vadd.f32 %v1410, %v1720
      %v1772 = vadd.f32 %v1411, %v1725
      %v1773 = vld [vmem:[#allocation2 + $0x13] sm:$0xff]
      %v1774 = vld [vmem:[#allocation2 + $0x1b] sm:$0xff]
      %v1775 = vld [vmem:[#allocation2 + $0x23] sm:$0xff]
      %v1776 = vld [vmem:[#allocation2 + $0x2b] sm:$0xff]
      %v1777 = vld [vmem:[#allocation2 + $0x33] sm:$0xff]
      %v1778 = vld [vmem:[#allocation2 + $0x3b] sm:$0xff]
      %v1779 = vld [vmem:[#allocation2 + $0x43] sm:$0xff]
      %v1780 = vld [vmem:[#allocation2 + $0x4b] sm:$0xff]
      %v1781 = vld [vmem:[#allocation2 + $0x53] sm:$0xff]
      %v1782 = vld [vmem:[#allocation2 + $0x5b] sm:$0xff]
      %v1783 = vld [vmem:[#allocation2 + $0x63] sm:$0xff]
      %v1784 = vld [vmem:[#allocation2 + $0x6b] sm:$0xff]
      %v1785 = vld [vmem:[#allocation2 + $0x73] sm:$0xff]
      %v1786 = vld [vmem:[#allocation2 + $0x7b] sm:$0xff]
      %v1787 = vld [vmem:[#allocation2 + $0x83] sm:$0xff]
      %v1788 = vld [vmem:[#allocation2 + $0x8b] sm:$0xff]
      %v1789 = vld [vmem:[#allocation2 + $0x93] sm:$0xff]
      %v1790 = vld [vmem:[#allocation2 + $0x9b] sm:$0xff]
      %v1791 = vld [vmem:[#allocation2 + $0xa3] sm:$0xff]
      %v1792 = vld [vmem:[#allocation2 + $0xab] sm:$0xff]
      %v1793 = vld [vmem:[#allocation2 + $0xb3] sm:$0xff]
      %v1794 = vld [vmem:[#allocation2 + $0xbb] sm:$0xff]
      %v1795 = vld [vmem:[#allocation2 + $0xc3] sm:$0xff]
      %v1796 = vld [vmem:[#allocation2 + $0xcb] sm:$0xff]
      %v1797 = vld [vmem:[#allocation2 + $0xd3] sm:$0xff]
      %v1798 = vld [vmem:[#allocation2 + $0xdb] sm:$0xff]
      %v1799 = vld [vmem:[#allocation2 + $0xe3] sm:$0xff]
      %v1800 = vld [vmem:[#allocation2 + $0xeb] sm:$0xff]
      %v1801 = vld [vmem:[#allocation2 + $0xf3] sm:$0xff]
      %v1802 = vld [vmem:[#allocation2 + $0xfb] sm:$0xff]
      %v1803 = vld [vmem:[#allocation2 + $0x103] sm:$0xff]
      %v1804 = vld [vmem:[#allocation2 + $0x10b] sm:$0xff]
      %v1805 = vld [vmem:[#allocation2 + $0x113] sm:$0xff]
      %v1806 = vld [vmem:[#allocation2 + $0x11b] sm:$0xff]
      %v1807 = vld [vmem:[#allocation2 + $0x123] sm:$0xff]
      %v1808 = vld [vmem:[#allocation2 + $0x12b] sm:$0xff]
      %v1809 = vld [vmem:[#allocation2 + $0x133] sm:$0xff]
      %v1810 = vld [vmem:[#allocation2 + $0x13b] sm:$0xff]
      %v1811 = vld [vmem:[#allocation2 + $0x143] sm:$0xff]
      %v1812 = vld [vmem:[#allocation2 + $0x14b] sm:$0xff]
      %v1813 = vld [vmem:[#allocation2 + $0x153] sm:$0xf]
      %s1814 = scalar_lea.vmem %s1, 512
      %v1815 = vld [vmem:[%s1814] sm:$0xff]
      %v1816 = vld [vmem:[%s1814 + $0x8] sm:$0xff]
      %v1817 = vld [vmem:[%s1814 + $0x10] sm:$0xff]
      %v1818 = vld [vmem:[%s1814 + $0x18] sm:$0xff]
      %v1819 = vld [vmem:[%s1814 + $0x20] sm:$0xff]
      %v1820 = vld [vmem:[%s1814 + $0x28] sm:$0xff]
      %v1821 = vld [vmem:[%s1814 + $0x30] sm:$0xff]
      %v1822 = vld [vmem:[%s1814 + $0x38] sm:$0xff]
      %v1823 = vld [vmem:[%s1814 + $0x40] sm:$0xff]
      %v1824 = vld [vmem:[%s1814 + $0x48] sm:$0xff]
      %v1825 = vld [vmem:[%s1814 + $0x50] sm:$0xff]
      %v1826 = vld [vmem:[%s1814 + $0x58] sm:$0xff]
      %v1827 = vld [vmem:[%s1814 + $0x60] sm:$0xff]
      %v1828 = vld [vmem:[%s1814 + $0x68] sm:$0xff]
      %v1829 = vld [vmem:[%s1814 + $0x70] sm:$0xff]
      %v1830 = vld [vmem:[%s1814 + $0x78] sm:$0xff]
      %1831 = vmatprep.subr.mxu0 0.0
      %1832 = vmatpush1.msra.mxu0 %v1815
      %1833 = vmatprep.subr.mxu0 0.0
      %1834 = vmatpush1.msra.mxu0 %v1816
      %1835 = vmatprep.subr.mxu0 0.0
      %1836 = vmatpush1.msra.mxu0 %v1817
      %1837 = vmatprep.subr.mxu0 0.0
      %1838 = vmatpush1.msra.mxu0 %v1818
      %1839 = vmatprep.subr.mxu0 0.0
      %1840 = vmatpush1.msra.mxu0 %v1819
      %1841 = vmatprep.subr.mxu0 0.0
      %1842 = vmatpush1.msra.mxu0 %v1820
      %1843 = vmatprep.subr.mxu0 0.0
      %1844 = vmatpush1.msra.mxu0 %v1821
      %1845 = vmatprep.subr.mxu0 0.0
      %1846 = vmatpush1.msra.mxu0 %v1822
      %1847 = vmatprep.subr.mxu0 0.0
      %1848 = vmatpush1.msra.mxu0 %v1823
      %1849 = vmatprep.subr.mxu0 0.0
      %1850 = vmatpush1.msra.mxu0 %v1824
      %1851 = vmatprep.subr.mxu0 0.0
      %1852 = vmatpush1.msra.mxu0 %v1825
      %1853 = vmatprep.subr.mxu0 0.0
      %1854 = vmatpush1.msra.mxu0 %v1826
      %1855 = vmatprep.subr.mxu0 0.0
      %1856 = vmatpush1.msra.mxu0 %v1827
      %1857 = vmatprep.subr.mxu0 0.0
      %1858 = vmatpush1.msra.mxu0 %v1828
      %1859 = vmatprep.subr.mxu0 0.0
      %1860 = vmatpush1.msra.mxu0 %v1829
      %1861 = vmatprep.subr.mxu0 0.0
      %1862 = vmatpush1.msra.mxu0 %v1830
      %1863 = vmatprep.subr.mxu0 0.0
      %1864 = vmatpush1.msra.mxu0 0.0
      %1865 = vmatprep.subr.mxu0 0.0
      %1866 = vmatpush1.msra.mxu0 0.0
      %1867 = vmatprep.subr.mxu0 0.0
      %1868 = vmatpush1.msra.mxu0 0.0
      %1869 = vmatprep.subr.mxu0 0.0
      %1870 = vmatpush1.msra.mxu0 0.0
      %1871 = vmatprep.subr.mxu0 0.0
      %1872 = vmatpush1.msra.mxu0 0.0
      %1873 = vmatprep.subr.mxu0 0.0
      %1874 = vmatpush1.msra.mxu0 0.0
      %1875 = vmatprep.subr.mxu0 0.0
      %1876 = vmatpush1.msra.mxu0 0.0
      %1877 = vmatprep.subr.mxu0 0.0
      %1878 = vmatpush1.msra.mxu0 0.0
      %1879 = vmatprep.subr.mxu0 0.0
      %1880 = vmatpush1.msra.mxu0 0.0
      %1881 = vmatprep.subr.mxu0 0.0
      %1882 = vmatpush1.msra.mxu0 0.0
      %1883 = vmatprep.subr.mxu0 0.0
      %1884 = vmatpush1.msra.mxu0 0.0
      %1885 = vmatprep.subr.mxu0 0.0
      %1886 = vmatpush1.msra.mxu0 0.0
      %1887 = vmatprep.subr.mxu0 0.0
      %1888 = vmatpush1.msra.mxu0 0.0
      %1889 = vmatprep.subr.mxu0 0.0
      %1890 = vmatpush1.msra.mxu0 0.0
      %1891 = vmatprep.subr.mxu0 0.0
      %1892 = vmatpush1.msra.mxu0 0.0
      %1893 = vmatprep.subr.mxu0 0.0
      %1894 = vmatpush1.msra.mxu0 0.0
      %1895 = vmatprep.mubr.f32.mxu0 0.0
      %1896 = vmatmul.mubr.f32.gmra.mrb[0].mxu0 %v1773
      %v1897 = vpop.f32.mrb[0].mxu0
      %v1898 = vpop.f32.mrb[0].mxu0
      %1899 = vmatprep.mubr.f32.mxu0 0.0
      %1900 = vmatmul.mubr.f32.gmra.mrb[0].mxu0 %v1774
      %v1901 = vpop.f32.mrb[0].mxu0
      %v1902 = vpop.f32.mrb[0].mxu0
      %1903 = vmatprep.mubr.f32.mxu0 0.0
      %1904 = vmatmul.mubr.f32.gmra.mrb[0].mxu0 %v1775
      %v1905 = vpop.f32.mrb[0].mxu0
      %v1906 = vadd.f32 0.0, %v1905
      %v1907 = vpop.f32.mrb[0].mxu0
      %1908 = vmatprep.mubr.f32.mxu0 0.0
      %1909 = vmatmul.mubr.f32.gmra.mrb[0].mxu0 %v1776
      %v1910 = vpop.f32.mrb[0].mxu0
      %v1911 = vadd.f32 0.0, %v1910
      %v1912 = vpop.f32.mrb[0].mxu0
      %1913 = vmatprep.mubr.f32.mxu0 0.0
      %1914 = vmatmul.mubr.f32.gmra.mrb[0].mxu0 %v1777
      %v1915 = vpop.f32.mrb[0].mxu0
      %v1916 = vadd.f32 0.0, %v1915
      %v1917 = vpop.f32.mrb[0].mxu0
      %1918 = vmatprep.mubr.f32.mxu0 0.0
      %1919 = vmatmul.mubr.f32.gmra.mrb[0].mxu0 %v1778
      %v1920 = vpop.f32.mrb[0].mxu0
      %v1921 = vadd.f32 0.0, %v1920
      %v1922 = vpop.f32.mrb[0].mxu0
      %1923 = vmatprep.mubr.f32.mxu0 0.0
      %1924 = vmatmul.mubr.f32.gmra.mrb[0].mxu0 %v1779
      %v1925 = vpop.f32.mrb[0].mxu0
      %v1926 = vadd.f32 0.0, %v1925
      %v1927 = vpop.f32.mrb[0].mxu0
      %1928 = vmatprep.mubr.f32.mxu0 0.0
      %1929 = vmatmul.mubr.f32.gmra.mrb[0].mxu0 %v1780
      %v1930 = vpop.f32.mrb[0].mxu0
      %v1931 = vadd.f32 0.0, %v1930
      %v1932 = vpop.f32.mrb[0].mxu0
      %1933 = vmatprep.mubr.f32.mxu0 0.0
      %1934 = vmatmul.mubr.f32.gmra.mrb[0].mxu0 %v1781
      %v1935 = vpop.f32.mrb[0].mxu0
      %v1936 = vadd.f32 0.0, %v1935
      %v1937 = vpop.f32.mrb[0].mxu0
      %1938 = vmatprep.mubr.f32.mxu0 0.0
      %1939 = vmatmul.mubr.f32.gmra.mrb[0].mxu0 %v1782
      %v1940 = vpop.f32.mrb[0].mxu0
      %v1941 = vadd.f32 0.0, %v1940
      %v1942 = vpop.f32.mrb[0].mxu0
      %1943 = vmatprep.mubr.f32.mxu0 0.0
      %1944 = vmatmul.mubr.f32.gmra.mrb[0].mxu0 %v1783
      %v1945 = vpop.f32.mrb[0].mxu0
      %v1946 = vadd.f32 0.0, %v1945
      %v1947 = vpop.f32.mrb[0].mxu0
      %1948 = vmatprep.mubr.f32.mxu0 0.0
      %1949 = vmatmul.mubr.f32.gmra.mrb[0].mxu0 %v1784
      %v1950 = vpop.f32.mrb[0].mxu0
      %v1951 = vadd.f32 0.0, %v1950
      %v1952 = vpop.f32.mrb[0].mxu0
      %1953 = vmatprep.mubr.f32.mxu0 0.0
      %1954 = vmatmul.mubr.f32.gmra.mrb[0].mxu0 %v1785
      %v1955 = vpop.f32.mrb[0].mxu0
      %v1956 = vadd.f32 0.0, %v1955
      %v1957 = vpop.f32.mrb[0].mxu0
      %1958 = vmatprep.mubr.f32.mxu0 0.0
      %1959 = vmatmul.mubr.f32.gmra.mrb[0].mxu0 %v1786
      %v1960 = vpop.f32.mrb[0].mxu0
      %v1961 = vadd.f32 0.0, %v1960
      %v1962 = vpop.f32.mrb[0].mxu0
      %1963 = vmatprep.mubr.f32.mxu0 0.0
      %1964 = vmatmul.mubr.f32.gmra.mrb[0].mxu0 %v1787
      %v1965 = vpop.f32.mrb[0].mxu0
      %v1966 = vadd.f32 0.0, %v1965
      %v1967 = vpop.f32.mrb[0].mxu0
      %1968 = vmatprep.mubr.f32.mxu0 0.0
      %1969 = vmatmul.mubr.f32.gmra.mrb[0].mxu0 %v1788
      %v1970 = vpop.f32.mrb[0].mxu0
      %v1971 = vadd.f32 0.0, %v1970
      %v1972 = vpop.f32.mrb[0].mxu0
      %1973 = vmatprep.mubr.f32.mxu0 0.0
      %1974 = vmatmul.mubr.f32.gmra.mrb[0].mxu0 %v1789
      %v1975 = vpop.f32.mrb[0].mxu0
      %v1976 = vadd.f32 0.0, %v1975
      %v1977 = vpop.f32.mrb[0].mxu0
      %1978 = vmatprep.mubr.f32.mxu0 0.0
      %1979 = vmatmul.mubr.f32.gmra.mrb[0].mxu0 %v1790
      %v1980 = vpop.f32.mrb[0].mxu0
      %v1981 = vadd.f32 0.0, %v1980
      %v1982 = vpop.f32.mrb[0].mxu0
      %1983 = vmatprep.mubr.f32.mxu0 0.0
      %1984 = vmatmul.mubr.f32.gmra.mrb[0].mxu0 %v1791
      %v1985 = vpop.f32.mrb[0].mxu0
      %v1986 = vadd.f32 0.0, %v1985
      %v1987 = vpop.f32.mrb[0].mxu0
      %1988 = vmatprep.mubr.f32.mxu0 0.0
      %1989 = vmatmul.mubr.f32.gmra.mrb[0].mxu0 %v1792
      %v1990 = vpop.f32.mrb[0].mxu0
      %v1991 = vadd.f32 0.0, %v1990
      %v1992 = vpop.f32.mrb[0].mxu0
      %1993 = vmatprep.mubr.f32.mxu0 0.0
      %1994 = vmatmul.mubr.f32.gmra.mrb[0].mxu0 %v1793
      %v1995 = vpop.f32.mrb[0].mxu0
      %v1996 = vadd.f32 0.0, %v1995
      %v1997 = vpop.f32.mrb[0].mxu0
      %1998 = vmatprep.mubr.f32.mxu0 0.0
      %1999 = vmatmul.mubr.f32.gmra.mrb[0].mxu0 %v1794
      %v2000 = vpop.f32.mrb[0].mxu0
      %v2001 = vadd.f32 0.0, %v2000
      %v2002 = vpop.f32.mrb[0].mxu0
      %2003 = vmatprep.mubr.f32.mxu0 0.0
      %2004 = vmatmul.mubr.f32.gmra.mrb[0].mxu0 %v1795
      %v2005 = vpop.f32.mrb[0].mxu0
      %v2006 = vadd.f32 0.0, %v2005
      %v2007 = vpop.f32.mrb[0].mxu0
      %2008 = vmatprep.mubr.f32.mxu0 0.0
      %2009 = vmatmul.mubr.f32.gmra.mrb[0].mxu0 %v1796
      %v2010 = vpop.f32.mrb[0].mxu0
      %v2011 = vadd.f32 0.0, %v2010
      %v2012 = vpop.f32.mrb[0].mxu0
      %2013 = vmatprep.mubr.f32.mxu0 0.0
      %2014 = vmatmul.mubr.f32.gmra.mrb[0].mxu0 %v1797
      %v2015 = vpop.f32.mrb[0].mxu0
      %v2016 = vadd.f32 0.0, %v2015
      %v2017 = vpop.f32.mrb[0].mxu0
      %2018 = vmatprep.mubr.f32.mxu0 0.0
      %2019 = vmatmul.mubr.f32.gmra.mrb[0].mxu0 %v1798
      %v2020 = vpop.f32.mrb[0].mxu0
      %v2021 = vadd.f32 0.0, %v2020
      %v2022 = vpop.f32.mrb[0].mxu0
      %2023 = vmatprep.mubr.f32.mxu0 0.0
      %2024 = vmatmul.mubr.f32.gmra.mrb[0].mxu0 %v1799
      %v2025 = vpop.f32.mrb[0].mxu0
      %v2026 = vadd.f32 0.0, %v2025
      %v2027 = vpop.f32.mrb[0].mxu0
      %2028 = vmatprep.mubr.f32.mxu0 0.0
      %2029 = vmatmul.mubr.f32.gmra.mrb[0].mxu0 %v1800
      %v2030 = vpop.f32.mrb[0].mxu0
      %v2031 = vadd.f32 0.0, %v2030
      %v2032 = vpop.f32.mrb[0].mxu0
      %2033 = vmatprep.mubr.f32.mxu0 0.0
      %2034 = vmatmul.mubr.f32.gmra.mrb[0].mxu0 %v1801
      %v2035 = vpop.f32.mrb[0].mxu0
      %v2036 = vadd.f32 0.0, %v2035
      %v2037 = vpop.f32.mrb[0].mxu0
      %2038 = vmatprep.mubr.f32.mxu0 0.0
      %2039 = vmatmul.mubr.f32.gmra.mrb[0].mxu0 %v1802
      %v2040 = vpop.f32.mrb[0].mxu0
      %v2041 = vadd.f32 0.0, %v2040
      %v2042 = vpop.f32.mrb[0].mxu0
      %2043 = vmatprep.mubr.f32.mxu0 0.0
      %2044 = vmatmul.mubr.f32.gmra.mrb[0].mxu0 %v1803
      %v2045 = vpop.f32.mrb[0].mxu0
      %v2046 = vadd.f32 0.0, %v2045
      %v2047 = vpop.f32.mrb[0].mxu0
      %2048 = vmatprep.mubr.f32.mxu0 0.0
      %2049 = vmatmul.mubr.f32.gmra.mrb[0].mxu0 %v1804
      %v2050 = vpop.f32.mrb[0].mxu0
      %v2051 = vadd.f32 0.0, %v2050
      %v2052 = vpop.f32.mrb[0].mxu0
      %2053 = vmatprep.mubr.f32.mxu0 0.0
      %2054 = vmatmul.mubr.f32.gmra.mrb[0].mxu0 %v1805
      %v2055 = vpop.f32.mrb[0].mxu0
      %v2056 = vadd.f32 0.0, %v2055
      %v2057 = vpop.f32.mrb[0].mxu0
      %2058 = vmatprep.mubr.f32.mxu0 0.0
      %2059 = vmatmul.mubr.f32.gmra.mrb[0].mxu0 %v1806
      %v2060 = vpop.f32.mrb[0].mxu0
      %v2061 = vadd.f32 0.0, %v2060
      %v2062 = vpop.f32.mrb[0].mxu0
      %2063 = vmatprep.mubr.f32.mxu0 0.0
      %2064 = vmatmul.mubr.f32.gmra.mrb[0].mxu0 %v1807
      %v2065 = vpop.f32.mrb[0].mxu0
      %v2066 = vadd.f32 0.0, %v2065
      %v2067 = vpop.f32.mrb[0].mxu0
      %2068 = vmatprep.mubr.f32.mxu0 0.0
      %2069 = vmatmul.mubr.f32.gmra.mrb[0].mxu0 %v1808
      %v2070 = vpop.f32.mrb[0].mxu0
      %v2071 = vadd.f32 0.0, %v2070
      %v2072 = vpop.f32.mrb[0].mxu0
      %2073 = vmatprep.mubr.f32.mxu0 0.0
      %2074 = vmatmul.mubr.f32.gmra.mrb[0].mxu0 %v1809
      %v2075 = vpop.f32.mrb[0].mxu0
      %v2076 = vadd.f32 0.0, %v2075
      %v2077 = vpop.f32.mrb[0].mxu0
      %2078 = vmatprep.mubr.f32.mxu0 0.0
      %2079 = vmatmul.mubr.f32.gmra.mrb[0].mxu0 %v1810
      %v2080 = vpop.f32.mrb[0].mxu0
      %v2081 = vadd.f32 0.0, %v2080
      %v2082 = vpop.f32.mrb[0].mxu0
      %2083 = vmatprep.mubr.f32.mxu0 0.0
      %2084 = vmatmul.mubr.f32.gmra.mrb[0].mxu0 %v1811
      %v2085 = vpop.f32.mrb[0].mxu0
      %v2086 = vadd.f32 0.0, %v2085
      %v2087 = vpop.f32.mrb[0].mxu0
      %2088 = vmatprep.mubr.f32.mxu0 0.0
      %2089 = vmatmul.mubr.f32.gmra.mrb[0].mxu0 %v1812
      %v2090 = vpop.f32.mrb[0].mxu0
      %v2091 = vpop.f32.mrb[0].mxu0
      %2092 = vmatprep.mubr.f32.mxu0 0.0
      %2093 = vmatmul.mubr.f32.gmra.mrb[0].mxu0 %v1813
      %v2094 = vpop.f32.mrb[0].mxu0
      %v2095 = vpop.f32.mrb[0].mxu0
      %2096 = vdwg.mxu0
      %v2097 = vadd.f32 %v1736, %v1906
      %v2098 = vadd.f32 %v1737, %v1911
      %v2099 = vadd.f32 %v1738, %v1916
      %v2100 = vadd.f32 %v1739, %v1921
      %v2101 = vadd.f32 %v1740, %v1926
      %v2102 = vadd.f32 %v1741, %v1931
      %v2103 = vadd.f32 %v1742, %v1936
      %v2104 = vadd.f32 %v1743, %v1941
      %v2105 = vadd.f32 %v1744, %v1946
      %v2106 = vadd.f32 %v1745, %v1951
      %v2107 = vadd.f32 %v1746, %v1956
      %v2108 = vadd.f32 %v1747, %v1961
      %v2109 = vadd.f32 %v1748, %v1966
      %v2110 = vadd.f32 %v1749, %v1971
      %v2111 = vadd.f32 %v1750, %v1976
      %v2112 = vadd.f32 %v1751, %v1981
      %v2113 = vadd.f32 %v1752, %v1986
      %v2114 = vadd.f32 %v1753, %v1991
      %v2115 = vadd.f32 %v1754, %v1996
      %v2116 = vadd.f32 %v1755, %v2001
      %v2117 = vadd.f32 %v1756, %v2006
      %v2118 = vadd.f32 %v1757, %v2011
      %v2119 = vadd.f32 %v1758, %v2016
      %v2120 = vadd.f32 %v1759, %v2021
      %v2121 = vadd.f32 %v1760, %v2026
      %v2122 = vadd.f32 %v1761, %v2031
      %v2123 = vadd.f32 %v1762, %v2036
      %v2124 = vadd.f32 %v1763, %v2041
      %v2125 = vadd.f32 %v1764, %v2046
      %v2126 = vadd.f32 %v1765, %v2051
      %v2127 = vadd.f32 %v1766, %v2056
      %v2128 = vadd.f32 %v1767, %v2061
      %v2129 = vadd.f32 %v1768, %v2066
      %v2130 = vadd.f32 %v1769, %v2071
      %v2131 = vadd.f32 %v1770, %v2076
      %v2132 = vadd.f32 %v1771, %v2081
      %v2133 = vadd.f32 %v1772, %v2086
      %v2134 = vld [vmem:[#allocation2 + $0x14] sm:$0xff]
      %v2135 = vld [vmem:[#allocation2 + $0x1c] sm:$0xff]
      %v2136 = vld [vmem:[#allocation2 + $0x24] sm:$0xff]
      %v2137 = vld [vmem:[#allocation2 + $0x2c] sm:$0xff]
      %v2138 = vld [vmem:[#allocation2 + $0x34] sm:$0xff]
      %v2139 = vld [vmem:[#allocation2 + $0x3c] sm:$0xff]
      %v2140 = vld [vmem:[#allocation2 + $0x44] sm:$0xff]
      %v2141 = vld [vmem:[#allocation2 + $0x4c] sm:$0xff]
      %v2142 = vld [vmem:[#allocation2 + $0x54] sm:$0xff]
      %v2143 = vld [vmem:[#allocation2 + $0x5c] sm:$0xff]
      %v2144 = vld [vmem:[#allocation2 + $0x64] sm:$0xff]
      %v2145 = vld [vmem:[#allocation2 + $0x6c] sm:$0xff]
      %v2146 = vld [vmem:[#allocation2 + $0x74] sm:$0xff]
      %v2147 = vld [vmem:[#allocation2 + $0x7c] sm:$0xff]
      %v2148 = vld [vmem:[#allocation2 + $0x84] sm:$0xff]
      %v2149 = vld [vmem:[#allocation2 + $0x8c] sm:$0xff]
      %v2150 = vld [vmem:[#allocation2 + $0x94] sm:$0xff]
      %v2151 = vld [vmem:[#allocation2 + $0x9c] sm:$0xff]
      %v2152 = vld [vmem:[#allocation2 + $0xa4] sm:$0xff]
      %v2153 = vld [vmem:[#allocation2 + $0xac] sm:$0xff]
      %v2154 = vld [vmem:[#allocation2 + $0xb4] sm:$0xff]
      %v2155 = vld [vmem:[#allocation2 + $0xbc] sm:$0xff]
      %v2156 = vld [vmem:[#allocation2 + $0xc4] sm:$0xff]
      %v2157 = vld [vmem:[#allocation2 + $0xcc] sm:$0xff]
      %v2158 = vld [vmem:[#allocation2 + $0xd4] sm:$0xff]
      %v2159 = vld [vmem:[#allocation2 + $0xdc] sm:$0xff]
      %v2160 = vld [vmem:[#allocation2 + $0xe4] sm:$0xff]
      %v2161 = vld [vmem:[#allocation2 + $0xec] sm:$0xff]
      %v2162 = vld [vmem:[#allocation2 + $0xf4] sm:$0xff]
      %v2163 = vld [vmem:[#allocation2 + $0xfc] sm:$0xff]
      %v2164 = vld [vmem:[#allocation2 + $0x104] sm:$0xff]
      %v2165 = vld [vmem:[#allocation2 + $0x10c] sm:$0xff]
      %v2166 = vld [vmem:[#allocation2 + $0x114] sm:$0xff]
      %v2167 = vld [vmem:[#allocation2 + $0x11c] sm:$0xff]
      %v2168 = vld [vmem:[#allocation2 + $0x124] sm:$0xff]
      %v2169 = vld [vmem:[#allocation2 + $0x12c] sm:$0xff]
      %v2170 = vld [vmem:[#allocation2 + $0x134] sm:$0xff]
      %v2171 = vld [vmem:[#allocation2 + $0x13c] sm:$0xff]
      %v2172 = vld [vmem:[#allocation2 + $0x144] sm:$0xff]
      %v2173 = vld [vmem:[#allocation2 + $0x14c] sm:$0xff]
      %v2174 = vld [vmem:[#allocation2 + $0x154] sm:$0xf]
      %s2175 = scalar_lea.vmem %s1, 640
      %v2176 = vld [vmem:[%s2175] sm:$0xff]
      %v2177 = vld [vmem:[%s2175 + $0x8] sm:$0xff]
      %v2178 = vld [vmem:[%s2175 + $0x10] sm:$0xff]
      %v2179 = vld [vmem:[%s2175 + $0x18] sm:$0xff]
      %v2180 = vld [vmem:[%s2175 + $0x20] sm:$0xff]
      %v2181 = vld [vmem:[%s2175 + $0x28] sm:$0xff]
      %v2182 = vld [vmem:[%s2175 + $0x30] sm:$0xff]
      %v2183 = vld [vmem:[%s2175 + $0x38] sm:$0xff]
      %v2184 = vld [vmem:[%s2175 + $0x40] sm:$0xff]
      %v2185 = vld [vmem:[%s2175 + $0x48] sm:$0xff]
      %v2186 = vld [vmem:[%s2175 + $0x50] sm:$0xff]
      %v2187 = vld [vmem:[%s2175 + $0x58] sm:$0xff]
      %v2188 = vld [vmem:[%s2175 + $0x60] sm:$0xff]
      %v2189 = vld [vmem:[%s2175 + $0x68] sm:$0xff]
      %v2190 = vld [vmem:[%s2175 + $0x70] sm:$0xff]
      %v2191 = vld [vmem:[%s2175 + $0x78] sm:$0xff]
      %2192 = vmatprep.subr.mxu0 0.0
      %2193 = vmatpush1.msra.mxu0 %v2176
      %2194 = vmatprep.subr.mxu0 0.0
      %2195 = vmatpush1.msra.mxu0 %v2177
      %2196 = vmatprep.subr.mxu0 0.0
      %2197 = vmatpush1.msra.mxu0 %v2178
      %2198 = vmatprep.subr.mxu0 0.0
      %2199 = vmatpush1.msra.mxu0 %v2179
      %2200 = vmatprep.subr.mxu0 0.0
      %2201 = vmatpush1.msra.mxu0 %v2180
      %2202 = vmatprep.subr.mxu0 0.0
      %2203 = vmatpush1.msra.mxu0 %v2181
      %2204 = vmatprep.subr.mxu0 0.0
      %2205 = vmatpush1.msra.mxu0 %v2182
      %2206 = vmatprep.subr.mxu0 0.0
      %2207 = vmatpush1.msra.mxu0 %v2183
      %2208 = vmatprep.subr.mxu0 0.0
      %2209 = vmatpush1.msra.mxu0 %v2184
      %2210 = vmatprep.subr.mxu0 0.0
      %2211 = vmatpush1.msra.mxu0 %v2185
      %2212 = vmatprep.subr.mxu0 0.0
      %2213 = vmatpush1.msra.mxu0 %v2186
      %2214 = vmatprep.subr.mxu0 0.0
      %2215 = vmatpush1.msra.mxu0 %v2187
      %2216 = vmatprep.subr.mxu0 0.0
      %2217 = vmatpush1.msra.mxu0 %v2188
      %2218 = vmatprep.subr.mxu0 0.0
      %2219 = vmatpush1.msra.mxu0 %v2189
      %2220 = vmatprep.subr.mxu0 0.0
      %2221 = vmatpush1.msra.mxu0 %v2190
      %2222 = vmatprep.subr.mxu0 0.0
      %2223 = vmatpush1.msra.mxu0 %v2191
      %2224 = vmatprep.subr.mxu0 0.0
      %2225 = vmatpush1.msra.mxu0 0.0
      %2226 = vmatprep.subr.mxu0 0.0
      %2227 = vmatpush1.msra.mxu0 0.0
      %2228 = vmatprep.subr.mxu0 0.0
      %2229 = vmatpush1.msra.mxu0 0.0
      %2230 = vmatprep.subr.mxu0 0.0
      %2231 = vmatpush1.msra.mxu0 0.0
      %2232 = vmatprep.subr.mxu0 0.0
      %2233 = vmatpush1.msra.mxu0 0.0
      %2234 = vmatprep.subr.mxu0 0.0
      %2235 = vmatpush1.msra.mxu0 0.0
      %2236 = vmatprep.subr.mxu0 0.0
      %2237 = vmatpush1.msra.mxu0 0.0
      %2238 = vmatprep.subr.mxu0 0.0
      %2239 = vmatpush1.msra.mxu0 0.0
      %2240 = vmatprep.subr.mxu0 0.0
      %2241 = vmatpush1.msra.mxu0 0.0
      %2242 = vmatprep.subr.mxu0 0.0
      %2243 = vmatpush1.msra.mxu0 0.0
      %2244 = vmatprep.subr.mxu0 0.0
      %2245 = vmatpush1.msra.mxu0 0.0
      %2246 = vmatprep.subr.mxu0 0.0
      %2247 = vmatpush1.msra.mxu0 0.0
      %2248 = vmatprep.subr.mxu0 0.0
      %2249 = vmatpush1.msra.mxu0 0.0
      %2250 = vmatprep.subr.mxu0 0.0
      %2251 = vmatpush1.msra.mxu0 0.0
      %2252 = vmatprep.subr.mxu0 0.0
      %2253 = vmatpush1.msra.mxu0 0.0
      %2254 = vmatprep.subr.mxu0 0.0
      %2255 = vmatpush1.msra.mxu0 0.0
      %2256 = vmatprep.mubr.f32.mxu0 0.0
      %2257 = vmatmul.mubr.f32.gmra.mrb[0].mxu0 %v2134
      %v2258 = vpop.f32.mrb[0].mxu0
      %v2259 = vpop.f32.mrb[0].mxu0
      %2260 = vmatprep.mubr.f32.mxu0 0.0
      %2261 = vmatmul.mubr.f32.gmra.mrb[0].mxu0 %v2135
      %v2262 = vpop.f32.mrb[0].mxu0
      %v2263 = vpop.f32.mrb[0].mxu0
      %2264 = vmatprep.mubr.f32.mxu0 0.0
      %2265 = vmatmul.mubr.f32.gmra.mrb[0].mxu0 %v2136
      %v2266 = vpop.f32.mrb[0].mxu0
      %v2267 = vadd.f32 0.0, %v2266
      %v2268 = vpop.f32.mrb[0].mxu0
      %2269 = vmatprep.mubr.f32.mxu0 0.0
      %2270 = vmatmul.mubr.f32.gmra.mrb[0].mxu0 %v2137
      %v2271 = vpop.f32.mrb[0].mxu0
      %v2272 = vadd.f32 0.0, %v2271
      %v2273 = vpop.f32.mrb[0].mxu0
      %2274 = vmatprep.mubr.f32.mxu0 0.0
      %2275 = vmatmul.mubr.f32.gmra.mrb[0].mxu0 %v2138
      %v2276 = vpop.f32.mrb[0].mxu0
      %v2277 = vadd.f32 0.0, %v2276
      %v2278 = vpop.f32.mrb[0].mxu0
      %2279 = vmatprep.mubr.f32.mxu0 0.0
      %2280 = vmatmul.mubr.f32.gmra.mrb[0].mxu0 %v2139
      %v2281 = vpop.f32.mrb[0].mxu0
      %v2282 = vadd.f32 0.0, %v2281
      %v2283 = vpop.f32.mrb[0].mxu0
      %2284 = vmatprep.mubr.f32.mxu0 0.0
      %2285 = vmatmul.mubr.f32.gmra.mrb[0].mxu0 %v2140
      %v2286 = vpop.f32.mrb[0].mxu0
      %v2287 = vadd.f32 0.0, %v2286
      %v2288 = vpop.f32.mrb[0].mxu0
      %2289 = vmatprep.mubr.f32.mxu0 0.0
      %2290 = vmatmul.mubr.f32.gmra.mrb[0].mxu0 %v2141
      %v2291 = vpop.f32.mrb[0].mxu0
      %v2292 = vadd.f32 0.0, %v2291
      %v2293 = vpop.f32.mrb[0].mxu0
      %2294 = vmatprep.mubr.f32.mxu0 0.0
      %2295 = vmatmul.mubr.f32.gmra.mrb[0].mxu0 %v2142
      %v2296 = vpop.f32.mrb[0].mxu0
      %v2297 = vadd.f32 0.0, %v2296
      %v2298 = vpop.f32.mrb[0].mxu0
      %2299 = vmatprep.mubr.f32.mxu0 0.0
      %2300 = vmatmul.mubr.f32.gmra.mrb[0].mxu0 %v2143
      %v2301 = vpop.f32.mrb[0].mxu0
      %v2302 = vadd.f32 0.0, %v2301
      %v2303 = vpop.f32.mrb[0].mxu0
      %2304 = vmatprep.mubr.f32.mxu0 0.0
      %2305 = vmatmul.mubr.f32.gmra.mrb[0].mxu0 %v2144
      %v2306 = vpop.f32.mrb[0].mxu0
      %v2307 = vadd.f32 0.0, %v2306
      %v2308 = vpop.f32.mrb[0].mxu0
      %2309 = vmatprep.mubr.f32.mxu0 0.0
      %2310 = vmatmul.mubr.f32.gmra.mrb[0].mxu0 %v2145
      %v2311 = vpop.f32.mrb[0].mxu0
      %v2312 = vadd.f32 0.0, %v2311
      %v2313 = vpop.f32.mrb[0].mxu0
      %2314 = vmatprep.mubr.f32.mxu0 0.0
      %2315 = vmatmul.mubr.f32.gmra.mrb[0].mxu0 %v2146
      %v2316 = vpop.f32.mrb[0].mxu0
      %v2317 = vadd.f32 0.0, %v2316
      %v2318 = vpop.f32.mrb[0].mxu0
      %2319 = vmatprep.mubr.f32.mxu0 0.0
      %2320 = vmatmul.mubr.f32.gmra.mrb[0].mxu0 %v2147
      %v2321 = vpop.f32.mrb[0].mxu0
      %v2322 = vadd.f32 0.0, %v2321
      %v2323 = vpop.f32.mrb[0].mxu0
      %2324 = vmatprep.mubr.f32.mxu0 0.0
      %2325 = vmatmul.mubr.f32.gmra.mrb[0].mxu0 %v2148
      %v2326 = vpop.f32.mrb[0].mxu0
      %v2327 = vadd.f32 0.0, %v2326
      %v2328 = vpop.f32.mrb[0].mxu0
      %2329 = vmatprep.mubr.f32.mxu0 0.0
      %2330 = vmatmul.mubr.f32.gmra.mrb[0].mxu0 %v2149
      %v2331 = vpop.f32.mrb[0].mxu0
      %v2332 = vadd.f32 0.0, %v2331
      %v2333 = vpop.f32.mrb[0].mxu0
      %2334 = vmatprep.mubr.f32.mxu0 0.0
      %2335 = vmatmul.mubr.f32.gmra.mrb[0].mxu0 %v2150
      %v2336 = vpop.f32.mrb[0].mxu0
      %v2337 = vadd.f32 0.0, %v2336
      %v2338 = vpop.f32.mrb[0].mxu0
      %2339 = vmatprep.mubr.f32.mxu0 0.0
      %2340 = vmatmul.mubr.f32.gmra.mrb[0].mxu0 %v2151
      %v2341 = vpop.f32.mrb[0].mxu0
      %v2342 = vadd.f32 0.0, %v2341
      %v2343 = vpop.f32.mrb[0].mxu0
      %2344 = vmatprep.mubr.f32.mxu0 0.0
      %2345 = vmatmul.mubr.f32.gmra.mrb[0].mxu0 %v2152
      %v2346 = vpop.f32.mrb[0].mxu0
      %v2347 = vadd.f32 0.0, %v2346
      %v2348 = vpop.f32.mrb[0].mxu0
      %2349 = vmatprep.mubr.f32.mxu0 0.0
      %2350 = vmatmul.mubr.f32.gmra.mrb[0].mxu0 %v2153
      %v2351 = vpop.f32.mrb[0].mxu0
      %v2352 = vadd.f32 0.0, %v2351
      %v2353 = vpop.f32.mrb[0].mxu0
      %2354 = vmatprep.mubr.f32.mxu0 0.0
      %2355 = vmatmul.mubr.f32.gmra.mrb[0].mxu0 %v2154
      %v2356 = vpop.f32.mrb[0].mxu0
      %v2357 = vadd.f32 0.0, %v2356
      %v2358 = vpop.f32.mrb[0].mxu0
      %2359 = vmatprep.mubr.f32.mxu0 0.0
      %2360 = vmatmul.mubr.f32.gmra.mrb[0].mxu0 %v2155
      %v2361 = vpop.f32.mrb[0].mxu0
      %v2362 = vadd.f32 0.0, %v2361
      %v2363 = vpop.f32.mrb[0].mxu0
      %2364 = vmatprep.mubr.f32.mxu0 0.0
      %2365 = vmatmul.mubr.f32.gmra.mrb[0].mxu0 %v2156
      %v2366 = vpop.f32.mrb[0].mxu0
      %v2367 = vadd.f32 0.0, %v2366
      %v2368 = vpop.f32.mrb[0].mxu0
      %2369 = vmatprep.mubr.f32.mxu0 0.0
      %2370 = vmatmul.mubr.f32.gmra.mrb[0].mxu0 %v2157
      %v2371 = vpop.f32.mrb[0].mxu0
      %v2372 = vadd.f32 0.0, %v2371
      %v2373 = vpop.f32.mrb[0].mxu0
      %2374 = vmatprep.mubr.f32.mxu0 0.0
      %2375 = vmatmul.mubr.f32.gmra.mrb[0].mxu0 %v2158
      %v2376 = vpop.f32.mrb[0].mxu0
      %v2377 = vadd.f32 0.0, %v2376
      %v2378 = vpop.f32.mrb[0].mxu0
      %2379 = vmatprep.mubr.f32.mxu0 0.0
      %2380 = vmatmul.mubr.f32.gmra.mrb[0].mxu0 %v2159
      %v2381 = vpop.f32.mrb[0].mxu0
      %v2382 = vadd.f32 0.0, %v2381
      %v2383 = vpop.f32.mrb[0].mxu0
      %2384 = vmatprep.mubr.f32.mxu0 0.0
      %2385 = vmatmul.mubr.f32.gmra.mrb[0].mxu0 %v2160
      %v2386 = vpop.f32.mrb[0].mxu0
      %v2387 = vadd.f32 0.0, %v2386
      %v2388 = vpop.f32.mrb[0].mxu0
      %2389 = vmatprep.mubr.f32.mxu0 0.0
      %2390 = vmatmul.mubr.f32.gmra.mrb[0].mxu0 %v2161
      %v2391 = vpop.f32.mrb[0].mxu0
      %v2392 = vadd.f32 0.0, %v2391
      %v2393 = vpop.f32.mrb[0].mxu0
      %2394 = vmatprep.mubr.f32.mxu0 0.0
      %2395 = vmatmul.mubr.f32.gmra.mrb[0].mxu0 %v2162
      %v2396 = vpop.f32.mrb[0].mxu0
      %v2397 = vadd.f32 0.0, %v2396
      %v2398 = vpop.f32.mrb[0].mxu0
      %2399 = vmatprep.mubr.f32.mxu0 0.0
      %2400 = vmatmul.mubr.f32.gmra.mrb[0].mxu0 %v2163
      %v2401 = vpop.f32.mrb[0].mxu0
      %v2402 = vadd.f32 0.0, %v2401
      %v2403 = vpop.f32.mrb[0].mxu0
      %2404 = vmatprep.mubr.f32.mxu0 0.0
      %2405 = vmatmul.mubr.f32.gmra.mrb[0].mxu0 %v2164
      %v2406 = vpop.f32.mrb[0].mxu0
      %v2407 = vadd.f32 0.0, %v2406
      %v2408 = vpop.f32.mrb[0].mxu0
      %2409 = vmatprep.mubr.f32.mxu0 0.0
      %2410 = vmatmul.mubr.f32.gmra.mrb[0].mxu0 %v2165
      %v2411 = vpop.f32.mrb[0].mxu0
      %v2412 = vadd.f32 0.0, %v2411
      %v2413 = vpop.f32.mrb[0].mxu0
      %2414 = vmatprep.mubr.f32.mxu0 0.0
      %2415 = vmatmul.mubr.f32.gmra.mrb[0].mxu0 %v2166
      %v2416 = vpop.f32.mrb[0].mxu0
      %v2417 = vadd.f32 0.0, %v2416
      %v2418 = vpop.f32.mrb[0].mxu0
      %2419 = vmatprep.mubr.f32.mxu0 0.0
      %2420 = vmatmul.mubr.f32.gmra.mrb[0].mxu0 %v2167
      %v2421 = vpop.f32.mrb[0].mxu0
      %v2422 = vadd.f32 0.0, %v2421
      %v2423 = vpop.f32.mrb[0].mxu0
      %2424 = vmatprep.mubr.f32.mxu0 0.0
      %2425 = vmatmul.mubr.f32.gmra.mrb[0].mxu0 %v2168
      %v2426 = vpop.f32.mrb[0].mxu0
      %v2427 = vadd.f32 0.0, %v2426
      %v2428 = vpop.f32.mrb[0].mxu0
      %2429 = vmatprep.mubr.f32.mxu0 0.0
      %2430 = vmatmul.mubr.f32.gmra.mrb[0].mxu0 %v2169
      %v2431 = vpop.f32.mrb[0].mxu0
      %v2432 = vadd.f32 0.0, %v2431
      %v2433 = vpop.f32.mrb[0].mxu0
      %2434 = vmatprep.mubr.f32.mxu0 0.0
      %2435 = vmatmul.mubr.f32.gmra.mrb[0].mxu0 %v2170
      %v2436 = vpop.f32.mrb[0].mxu0
      %v2437 = vadd.f32 0.0, %v2436
      %v2438 = vpop.f32.mrb[0].mxu0
      %2439 = vmatprep.mubr.f32.mxu0 0.0
      %2440 = vmatmul.mubr.f32.gmra.mrb[0].mxu0 %v2171
      %v2441 = vpop.f32.mrb[0].mxu0
      %v2442 = vadd.f32 0.0, %v2441
      %v2443 = vpop.f32.mrb[0].mxu0
      %2444 = vmatprep.mubr.f32.mxu0 0.0
      %2445 = vmatmul.mubr.f32.gmra.mrb[0].mxu0 %v2172
      %v2446 = vpop.f32.mrb[0].mxu0
      %v2447 = vadd.f32 0.0, %v2446
      %v2448 = vpop.f32.mrb[0].mxu0
      %2449 = vmatprep.mubr.f32.mxu0 0.0
      %2450 = vmatmul.mubr.f32.gmra.mrb[0].mxu0 %v2173
      %v2451 = vpop.f32.mrb[0].mxu0
      %v2452 = vpop.f32.mrb[0].mxu0
      %2453 = vmatprep.mubr.f32.mxu0 0.0
      %2454 = vmatmul.mubr.f32.gmra.mrb[0].mxu0 %v2174
      %v2455 = vpop.f32.mrb[0].mxu0
      %v2456 = vpop.f32.mrb[0].mxu0
      %2457 = vdwg.mxu0
      %v2458 = vadd.f32 %v2097, %v2267
      %v2459 = vadd.f32 %v2098, %v2272
      %v2460 = vadd.f32 %v2099, %v2277
      %v2461 = vadd.f32 %v2100, %v2282
      %v2462 = vadd.f32 %v2101, %v2287
      %v2463 = vadd.f32 %v2102, %v2292
      %v2464 = vadd.f32 %v2103, %v2297
      %v2465 = vadd.f32 %v2104, %v2302
      %v2466 = vadd.f32 %v2105, %v2307
      %v2467 = vadd.f32 %v2106, %v2312
      %v2468 = vadd.f32 %v2107, %v2317
      %v2469 = vadd.f32 %v2108, %v2322
      %v2470 = vadd.f32 %v2109, %v2327
      %v2471 = vadd.f32 %v2110, %v2332
      %v2472 = vadd.f32 %v2111, %v2337
      %v2473 = vadd.f32 %v2112, %v2342
      %v2474 = vadd.f32 %v2113, %v2347
      %v2475 = vadd.f32 %v2114, %v2352
      %v2476 = vadd.f32 %v2115, %v2357
      %v2477 = vadd.f32 %v2116, %v2362
      %v2478 = vadd.f32 %v2117, %v2367
      %v2479 = vadd.f32 %v2118, %v2372
      %v2480 = vadd.f32 %v2119, %v2377
      %v2481 = vadd.f32 %v2120, %v2382
      %v2482 = vadd.f32 %v2121, %v2387
      %v2483 = vadd.f32 %v2122, %v2392
      %v2484 = vadd.f32 %v2123, %v2397
      %v2485 = vadd.f32 %v2124, %v2402
      %v2486 = vadd.f32 %v2125, %v2407
      %v2487 = vadd.f32 %v2126, %v2412
      %v2488 = vadd.f32 %v2127, %v2417
      %v2489 = vadd.f32 %v2128, %v2422
      %v2490 = vadd.f32 %v2129, %v2427
      %v2491 = vadd.f32 %v2130, %v2432
      %v2492 = vadd.f32 %v2131, %v2437
      %v2493 = vadd.f32 %v2132, %v2442
      %v2494 = vadd.f32 %v2133, %v2447
      %v2495 = vld [vmem:[#allocation2 + $0x24] sm:$0xff]
      %v2496 = vld [vmem:[#allocation2 + $0x2c] sm:$0xff]
      %v2497 = vld [vmem:[#allocation2 + $0x34] sm:$0xff]
      %v2498 = vld [vmem:[#allocation2 + $0x3c] sm:$0xff]
      %v2499 = vld [vmem:[#allocation2 + $0x44] sm:$0xff]
      %v2500 = vld [vmem:[#allocation2 + $0x4c] sm:$0xff]
      %v2501 = vld [vmem:[#allocation2 + $0x54] sm:$0xff]
      %v2502 = vld [vmem:[#allocation2 + $0x5c] sm:$0xff]
      %v2503 = vld [vmem:[#allocation2 + $0x64] sm:$0xff]
      %v2504 = vld [vmem:[#allocation2 + $0x6c] sm:$0xff]
      %v2505 = vld [vmem:[#allocation2 + $0x74] sm:$0xff]
      %v2506 = vld [vmem:[#allocation2 + $0x7c] sm:$0xff]
      %v2507 = vld [vmem:[#allocation2 + $0x84] sm:$0xff]
      %v2508 = vld [vmem:[#allocation2 + $0x8c] sm:$0xff]
      %v2509 = vld [vmem:[#allocation2 + $0x94] sm:$0xff]
      %v2510 = vld [vmem:[#allocation2 + $0x9c] sm:$0xff]
      %v2511 = vld [vmem:[#allocation2 + $0xa4] sm:$0xff]
      %v2512 = vld [vmem:[#allocation2 + $0xac] sm:$0xff]
      %v2513 = vld [vmem:[#allocation2 + $0xb4] sm:$0xff]
      %v2514 = vld [vmem:[#allocation2 + $0xbc] sm:$0xff]
      %v2515 = vld [vmem:[#allocation2 + $0xc4] sm:$0xff]
      %v2516 = vld [vmem:[#allocation2 + $0xcc] sm:$0xff]
      %v2517 = vld [vmem:[#allocation2 + $0xd4] sm:$0xff]
      %v2518 = vld [vmem:[#allocation2 + $0xdc] sm:$0xff]
      %v2519 = vld [vmem:[#allocation2 + $0xe4] sm:$0xff]
      %v2520 = vld [vmem:[#allocation2 + $0xec] sm:$0xff]
      %v2521 = vld [vmem:[#allocation2 + $0xf4] sm:$0xff]
      %v2522 = vld [vmem:[#allocation2 + $0xfc] sm:$0xff]
      %v2523 = vld [vmem:[#allocation2 + $0x104] sm:$0xff]
      %v2524 = vld [vmem:[#allocation2 + $0x10c] sm:$0xff]
      %v2525 = vld [vmem:[#allocation2 + $0x114] sm:$0xff]
      %v2526 = vld [vmem:[#allocation2 + $0x11c] sm:$0xff]
      %v2527 = vld [vmem:[#allocation2 + $0x124] sm:$0xff]
      %v2528 = vld [vmem:[#allocation2 + $0x12c] sm:$0xff]
      %v2529 = vld [vmem:[#allocation2 + $0x134] sm:$0xff]
      %v2530 = vld [vmem:[#allocation2 + $0x13c] sm:$0xff]
      %v2531 = vld [vmem:[#allocation2 + $0x144] sm:$0xff]
      %v2532 = vld [vmem:[#allocation2 + $0x14c] sm:$0xff]
      %v2533 = vld [vmem:[#allocation2 + $0x154] sm:$0xff]
      %v2534 = vld [vmem:[#allocation2 + $0x15c] sm:$0xff]
      %v2535 = vld [vmem:[#allocation2 + $0x164] sm:$0xf]
      %s2536 = scalar_lea.vmem %s1, 768
      %v2537 = vld [vmem:[%s2536] sm:$0xff]
      %v2538 = vld [vmem:[%s2536 + $0x8] sm:$0xff]
      %v2539 = vld [vmem:[%s2536 + $0x10] sm:$0xff]
      %v2540 = vld [vmem:[%s2536 + $0x18] sm:$0xff]
      %v2541 = vld [vmem:[%s2536 + $0x20] sm:$0xff]
      %v2542 = vld [vmem:[%s2536 + $0x28] sm:$0xff]
      %v2543 = vld [vmem:[%s2536 + $0x30] sm:$0xff]
      %v2544 = vld [vmem:[%s2536 + $0x38] sm:$0xff]
      %v2545 = vld [vmem:[%s2536 + $0x40] sm:$0xff]
      %v2546 = vld [vmem:[%s2536 + $0x48] sm:$0xff]
      %v2547 = vld [vmem:[%s2536 + $0x50] sm:$0xff]
      %v2548 = vld [vmem:[%s2536 + $0x58] sm:$0xff]
      %v2549 = vld [vmem:[%s2536 + $0x60] sm:$0xff]
      %v2550 = vld [vmem:[%s2536 + $0x68] sm:$0xff]
      %v2551 = vld [vmem:[%s2536 + $0x70] sm:$0xff]
      %v2552 = vld [vmem:[%s2536 + $0x78] sm:$0xff]
      %2553 = vmatprep.subr.mxu0 0.0
      %2554 = vmatpush1.msra.mxu0 %v2537
      %2555 = vmatprep.subr.mxu0 0.0
      %2556 = vmatpush1.msra.mxu0 %v2538
      %2557 = vmatprep.subr.mxu0 0.0
      %2558 = vmatpush1.msra.mxu0 %v2539
      %2559 = vmatprep.subr.mxu0 0.0
      %2560 = vmatpush1.msra.mxu0 %v2540
      %2561 = vmatprep.subr.mxu0 0.0
      %2562 = vmatpush1.msra.mxu0 %v2541
      %2563 = vmatprep.subr.mxu0 0.0
      %2564 = vmatpush1.msra.mxu0 %v2542
      %2565 = vmatprep.subr.mxu0 0.0
      %2566 = vmatpush1.msra.mxu0 %v2543
      %2567 = vmatprep.subr.mxu0 0.0
      %2568 = vmatpush1.msra.mxu0 %v2544
      %2569 = vmatprep.subr.mxu0 0.0
      %2570 = vmatpush1.msra.mxu0 %v2545
      %2571 = vmatprep.subr.mxu0 0.0
      %2572 = vmatpush1.msra.mxu0 %v2546
      %2573 = vmatprep.subr.mxu0 0.0
      %2574 = vmatpush1.msra.mxu0 %v2547
      %2575 = vmatprep.subr.mxu0 0.0
      %2576 = vmatpush1.msra.mxu0 %v2548
      %2577 = vmatprep.subr.mxu0 0.0
      %2578 = vmatpush1.msra.mxu0 %v2549
      %2579 = vmatprep.subr.mxu0 0.0
      %2580 = vmatpush1.msra.mxu0 %v2550
      %2581 = vmatprep.subr.mxu0 0.0
      %2582 = vmatpush1.msra.mxu0 %v2551
      %2583 = vmatprep.subr.mxu0 0.0
      %2584 = vmatpush1.msra.mxu0 %v2552
      %2585 = vmatprep.subr.mxu0 0.0
      %2586 = vmatpush1.msra.mxu0 0.0
      %2587 = vmatprep.subr.mxu0 0.0
      %2588 = vmatpush1.msra.mxu0 0.0
      %2589 = vmatprep.subr.mxu0 0.0
      %2590 = vmatpush1.msra.mxu0 0.0
      %2591 = vmatprep.subr.mxu0 0.0
      %2592 = vmatpush1.msra.mxu0 0.0
      %2593 = vmatprep.subr.mxu0 0.0
      %2594 = vmatpush1.msra.mxu0 0.0
      %2595 = vmatprep.subr.mxu0 0.0
      %2596 = vmatpush1.msra.mxu0 0.0
      %2597 = vmatprep.subr.mxu0 0.0
      %2598 = vmatpush1.msra.mxu0 0.0
      %2599 = vmatprep.subr.mxu0 0.0
      %2600 = vmatpush1.msra.mxu0 0.0
      %2601 = vmatprep.subr.mxu0 0.0
      %2602 = vmatpush1.msra.mxu0 0.0
      %2603 = vmatprep.subr.mxu0 0.0
      %2604 = vmatpush1.msra.mxu0 0.0
      %2605 = vmatprep.subr.mxu0 0.0
      %2606 = vmatpush1.msra.mxu0 0.0
      %2607 = vmatprep.subr.mxu0 0.0
      %2608 = vmatpush1.msra.mxu0 0.0
      %2609 = vmatprep.subr.mxu0 0.0
      %2610 = vmatpush1.msra.mxu0 0.0
      %2611 = vmatprep.subr.mxu0 0.0
      %2612 = vmatpush1.msra.mxu0 0.0
      %2613 = vmatprep.subr.mxu0 0.0
      %2614 = vmatpush1.msra.mxu0 0.0
      %2615 = vmatprep.subr.mxu0 0.0
      %2616 = vmatpush1.msra.mxu0 0.0
      %2617 = vmatprep.mubr.f32.mxu0 0.0
      %2618 = vmatmul.mubr.f32.gmra.mrb[0].mxu0 %v2495
      %v2619 = vpop.f32.mrb[0].mxu0
      %v2620 = vpop.f32.mrb[0].mxu0
      %2621 = vmatprep.mubr.f32.mxu0 0.0
      %2622 = vmatmul.mubr.f32.gmra.mrb[0].mxu0 %v2496
      %v2623 = vpop.f32.mrb[0].mxu0
      %v2624 = vpop.f32.mrb[0].mxu0
      %2625 = vmatprep.mubr.f32.mxu0 0.0
      %2626 = vmatmul.mubr.f32.gmra.mrb[0].mxu0 %v2497
      %v2627 = vpop.f32.mrb[0].mxu0
      %v2628 = vadd.f32 0.0, %v2627
      %v2629 = vpop.f32.mrb[0].mxu0
      %2630 = vmatprep.mubr.f32.mxu0 0.0
      %2631 = vmatmul.mubr.f32.gmra.mrb[0].mxu0 %v2498
      %v2632 = vpop.f32.mrb[0].mxu0
      %v2633 = vadd.f32 0.0, %v2632
      %v2634 = vpop.f32.mrb[0].mxu0
      %2635 = vmatprep.mubr.f32.mxu0 0.0
      %2636 = vmatmul.mubr.f32.gmra.mrb[0].mxu0 %v2499
      %v2637 = vpop.f32.mrb[0].mxu0
      %v2638 = vadd.f32 0.0, %v2637
      %v2639 = vpop.f32.mrb[0].mxu0
      %2640 = vmatprep.mubr.f32.mxu0 0.0
      %2641 = vmatmul.mubr.f32.gmra.mrb[0].mxu0 %v2500
      %v2642 = vpop.f32.mrb[0].mxu0
      %v2643 = vadd.f32 0.0, %v2642
      %v2644 = vpop.f32.mrb[0].mxu0
      %2645 = vmatprep.mubr.f32.mxu0 0.0
      %2646 = vmatmul.mubr.f32.gmra.mrb[0].mxu0 %v2501
      %v2647 = vpop.f32.mrb[0].mxu0
      %v2648 = vadd.f32 0.0, %v2647
      %v2649 = vpop.f32.mrb[0].mxu0
      %2650 = vmatprep.mubr.f32.mxu0 0.0
      %2651 = vmatmul.mubr.f32.gmra.mrb[0].mxu0 %v2502
      %v2652 = vpop.f32.mrb[0].mxu0
      %v2653 = vadd.f32 0.0, %v2652
      %v2654 = vpop.f32.mrb[0].mxu0
      %2655 = vmatprep.mubr.f32.mxu0 0.0
      %2656 = vmatmul.mubr.f32.gmra.mrb[0].mxu0 %v2503
      %v2657 = vpop.f32.mrb[0].mxu0
      %v2658 = vadd.f32 0.0, %v2657
      %v2659 = vpop.f32.mrb[0].mxu0
      %2660 = vmatprep.mubr.f32.mxu0 0.0
      %2661 = vmatmul.mubr.f32.gmra.mrb[0].mxu0 %v2504
      %v2662 = vpop.f32.mrb[0].mxu0
      %v2663 = vadd.f32 0.0, %v2662
      %v2664 = vpop.f32.mrb[0].mxu0
      %2665 = vmatprep.mubr.f32.mxu0 0.0
      %2666 = vmatmul.mubr.f32.gmra.mrb[0].mxu0 %v2505
      %v2667 = vpop.f32.mrb[0].mxu0
      %v2668 = vadd.f32 0.0, %v2667
      %v2669 = vpop.f32.mrb[0].mxu0
      %2670 = vmatprep.mubr.f32.mxu0 0.0
      %2671 = vmatmul.mubr.f32.gmra.mrb[0].mxu0 %v2506
      %v2672 = vpop.f32.mrb[0].mxu0
      %v2673 = vadd.f32 0.0, %v2672
      %v2674 = vpop.f32.mrb[0].mxu0
      %2675 = vmatprep.mubr.f32.mxu0 0.0
      %2676 = vmatmul.mubr.f32.gmra.mrb[0].mxu0 %v2507
      %v2677 = vpop.f32.mrb[0].mxu0
      %v2678 = vadd.f32 0.0, %v2677
      %v2679 = vpop.f32.mrb[0].mxu0
      %2680 = vmatprep.mubr.f32.mxu0 0.0
      %2681 = vmatmul.mubr.f32.gmra.mrb[0].mxu0 %v2508
      %v2682 = vpop.f32.mrb[0].mxu0
      %v2683 = vadd.f32 0.0, %v2682
      %v2684 = vpop.f32.mrb[0].mxu0
      %2685 = vmatprep.mubr.f32.mxu0 0.0
      %2686 = vmatmul.mubr.f32.gmra.mrb[0].mxu0 %v2509
      %v2687 = vpop.f32.mrb[0].mxu0
      %v2688 = vadd.f32 0.0, %v2687
      %v2689 = vpop.f32.mrb[0].mxu0
      %2690 = vmatprep.mubr.f32.mxu0 0.0
      %2691 = vmatmul.mubr.f32.gmra.mrb[0].mxu0 %v2510
      %v2692 = vpop.f32.mrb[0].mxu0
      %v2693 = vadd.f32 0.0, %v2692
      %v2694 = vpop.f32.mrb[0].mxu0
      %2695 = vmatprep.mubr.f32.mxu0 0.0
      %2696 = vmatmul.mubr.f32.gmra.mrb[0].mxu0 %v2511
      %v2697 = vpop.f32.mrb[0].mxu0
      %v2698 = vadd.f32 0.0, %v2697
      %v2699 = vpop.f32.mrb[0].mxu0
      %2700 = vmatprep.mubr.f32.mxu0 0.0
      %2701 = vmatmul.mubr.f32.gmra.mrb[0].mxu0 %v2512
      %v2702 = vpop.f32.mrb[0].mxu0
      %v2703 = vadd.f32 0.0, %v2702
      %v2704 = vpop.f32.mrb[0].mxu0
      %2705 = vmatprep.mubr.f32.mxu0 0.0
      %2706 = vmatmul.mubr.f32.gmra.mrb[0].mxu0 %v2513
      %v2707 = vpop.f32.mrb[0].mxu0
      %v2708 = vadd.f32 0.0, %v2707
      %v2709 = vpop.f32.mrb[0].mxu0
      %2710 = vmatprep.mubr.f32.mxu0 0.0
      %2711 = vmatmul.mubr.f32.gmra.mrb[0].mxu0 %v2514
      %v2712 = vpop.f32.mrb[0].mxu0
      %v2713 = vadd.f32 0.0, %v2712
      %v2714 = vpop.f32.mrb[0].mxu0
      %2715 = vmatprep.mubr.f32.mxu0 0.0
      %2716 = vmatmul.mubr.f32.gmra.mrb[0].mxu0 %v2515
      %v2717 = vpop.f32.mrb[0].mxu0
      %v2718 = vadd.f32 0.0, %v2717
      %v2719 = vpop.f32.mrb[0].mxu0
      %2720 = vmatprep.mubr.f32.mxu0 0.0
      %2721 = vmatmul.mubr.f32.gmra.mrb[0].mxu0 %v2516
      %v2722 = vpop.f32.mrb[0].mxu0
      %v2723 = vadd.f32 0.0, %v2722
      %v2724 = vpop.f32.mrb[0].mxu0
      %2725 = vmatprep.mubr.f32.mxu0 0.0
      %2726 = vmatmul.mubr.f32.gmra.mrb[0].mxu0 %v2517
      %v2727 = vpop.f32.mrb[0].mxu0
      %v2728 = vadd.f32 0.0, %v2727
      %v2729 = vpop.f32.mrb[0].mxu0
      %2730 = vmatprep.mubr.f32.mxu0 0.0
      %2731 = vmatmul.mubr.f32.gmra.mrb[0].mxu0 %v2518
      %v2732 = vpop.f32.mrb[0].mxu0
      %v2733 = vadd.f32 0.0, %v2732
      %v2734 = vpop.f32.mrb[0].mxu0
      %2735 = vmatprep.mubr.f32.mxu0 0.0
      %2736 = vmatmul.mubr.f32.gmra.mrb[0].mxu0 %v2519
      %v2737 = vpop.f32.mrb[0].mxu0
      %v2738 = vadd.f32 0.0, %v2737
      %v2739 = vpop.f32.mrb[0].mxu0
      %2740 = vmatprep.mubr.f32.mxu0 0.0
      %2741 = vmatmul.mubr.f32.gmra.mrb[0].mxu0 %v2520
      %v2742 = vpop.f32.mrb[0].mxu0
      %v2743 = vadd.f32 0.0, %v2742
      %v2744 = vpop.f32.mrb[0].mxu0
      %2745 = vmatprep.mubr.f32.mxu0 0.0
      %2746 = vmatmul.mubr.f32.gmra.mrb[0].mxu0 %v2521
      %v2747 = vpop.f32.mrb[0].mxu0
      %v2748 = vadd.f32 0.0, %v2747
      %v2749 = vpop.f32.mrb[0].mxu0
      %2750 = vmatprep.mubr.f32.mxu0 0.0
      %2751 = vmatmul.mubr.f32.gmra.mrb[0].mxu0 %v2522
      %v2752 = vpop.f32.mrb[0].mxu0
      %v2753 = vadd.f32 0.0, %v2752
      %v2754 = vpop.f32.mrb[0].mxu0
      %2755 = vmatprep.mubr.f32.mxu0 0.0
      %2756 = vmatmul.mubr.f32.gmra.mrb[0].mxu0 %v2523
      %v2757 = vpop.f32.mrb[0].mxu0
      %v2758 = vadd.f32 0.0, %v2757
      %v2759 = vpop.f32.mrb[0].mxu0
      %2760 = vmatprep.mubr.f32.mxu0 0.0
      %2761 = vmatmul.mubr.f32.gmra.mrb[0].mxu0 %v2524
      %v2762 = vpop.f32.mrb[0].mxu0
      %v2763 = vadd.f32 0.0, %v2762
      %v2764 = vpop.f32.mrb[0].mxu0
      %2765 = vmatprep.mubr.f32.mxu0 0.0
      %2766 = vmatmul.mubr.f32.gmra.mrb[0].mxu0 %v2525
      %v2767 = vpop.f32.mrb[0].mxu0
      %v2768 = vadd.f32 0.0, %v2767
      %v2769 = vpop.f32.mrb[0].mxu0
      %2770 = vmatprep.mubr.f32.mxu0 0.0
      %2771 = vmatmul.mubr.f32.gmra.mrb[0].mxu0 %v2526
      %v2772 = vpop.f32.mrb[0].mxu0
      %v2773 = vadd.f32 0.0, %v2772
      %v2774 = vpop.f32.mrb[0].mxu0
      %2775 = vmatprep.mubr.f32.mxu0 0.0
      %2776 = vmatmul.mubr.f32.gmra.mrb[0].mxu0 %v2527
      %v2777 = vpop.f32.mrb[0].mxu0
      %v2778 = vadd.f32 0.0, %v2777
      %v2779 = vpop.f32.mrb[0].mxu0
      %2780 = vmatprep.mubr.f32.mxu0 0.0
      %2781 = vmatmul.mubr.f32.gmra.mrb[0].mxu0 %v2528
      %v2782 = vpop.f32.mrb[0].mxu0
      %v2783 = vadd.f32 0.0, %v2782
      %v2784 = vpop.f32.mrb[0].mxu0
      %2785 = vmatprep.mubr.f32.mxu0 0.0
      %2786 = vmatmul.mubr.f32.gmra.mrb[0].mxu0 %v2529
      %v2787 = vpop.f32.mrb[0].mxu0
      %v2788 = vadd.f32 0.0, %v2787
      %v2789 = vpop.f32.mrb[0].mxu0
      %2790 = vmatprep.mubr.f32.mxu0 0.0
      %2791 = vmatmul.mubr.f32.gmra.mrb[0].mxu0 %v2530
      %v2792 = vpop.f32.mrb[0].mxu0
      %v2793 = vadd.f32 0.0, %v2792
      %v2794 = vpop.f32.mrb[0].mxu0
      %2795 = vmatprep.mubr.f32.mxu0 0.0
      %2796 = vmatmul.mubr.f32.gmra.mrb[0].mxu0 %v2531
      %v2797 = vpop.f32.mrb[0].mxu0
      %v2798 = vadd.f32 0.0, %v2797
      %v2799 = vpop.f32.mrb[0].mxu0
      %2800 = vmatprep.mubr.f32.mxu0 0.0
      %2801 = vmatmul.mubr.f32.gmra.mrb[0].mxu0 %v2532
      %v2802 = vpop.f32.mrb[0].mxu0
      %v2803 = vadd.f32 0.0, %v2802
      %v2804 = vpop.f32.mrb[0].mxu0
      %2805 = vmatprep.mubr.f32.mxu0 0.0
      %2806 = vmatmul.mubr.f32.gmra.mrb[0].mxu0 %v2533
      %v2807 = vpop.f32.mrb[0].mxu0
      %v2808 = vadd.f32 0.0, %v2807
      %v2809 = vpop.f32.mrb[0].mxu0
      %2810 = vmatprep.mubr.f32.mxu0 0.0
      %2811 = vmatmul.mubr.f32.gmra.mrb[0].mxu0 %v2534
      %v2812 = vpop.f32.mrb[0].mxu0
      %v2813 = vpop.f32.mrb[0].mxu0
      %2814 = vmatprep.mubr.f32.mxu0 0.0
      %2815 = vmatmul.mubr.f32.gmra.mrb[0].mxu0 %v2535
      %v2816 = vpop.f32.mrb[0].mxu0
      %v2817 = vpop.f32.mrb[0].mxu0
      %2818 = vdwg.mxu0
      %v2819 = vadd.f32 %v2458, %v2628
      %v2820 = vadd.f32 %v2459, %v2633
      %v2821 = vadd.f32 %v2460, %v2638
      %v2822 = vadd.f32 %v2461, %v2643
      %v2823 = vadd.f32 %v2462, %v2648
      %v2824 = vadd.f32 %v2463, %v2653
      %v2825 = vadd.f32 %v2464, %v2658
      %v2826 = vadd.f32 %v2465, %v2663
      %v2827 = vadd.f32 %v2466, %v2668
      %v2828 = vadd.f32 %v2467, %v2673
      %v2829 = vadd.f32 %v2468, %v2678
      %v2830 = vadd.f32 %v2469, %v2683
      %v2831 = vadd.f32 %v2470, %v2688
      %v2832 = vadd.f32 %v2471, %v2693
      %v2833 = vadd.f32 %v2472, %v2698
      %v2834 = vadd.f32 %v2473, %v2703
      %v2835 = vadd.f32 %v2474, %v2708
      %v2836 = vadd.f32 %v2475, %v2713
      %v2837 = vadd.f32 %v2476, %v2718
      %v2838 = vadd.f32 %v2477, %v2723
      %v2839 = vadd.f32 %v2478, %v2728
      %v2840 = vadd.f32 %v2479, %v2733
      %v2841 = vadd.f32 %v2480, %v2738
      %v2842 = vadd.f32 %v2481, %v2743
      %v2843 = vadd.f32 %v2482, %v2748
      %v2844 = vadd.f32 %v2483, %v2753
      %v2845 = vadd.f32 %v2484, %v2758
      %v2846 = vadd.f32 %v2485, %v2763
      %v2847 = vadd.f32 %v2486, %v2768
      %v2848 = vadd.f32 %v2487, %v2773
      %v2849 = vadd.f32 %v2488, %v2778
      %v2850 = vadd.f32 %v2489, %v2783
      %v2851 = vadd.f32 %v2490, %v2788
      %v2852 = vadd.f32 %v2491, %v2793
      %v2853 = vadd.f32 %v2492, %v2798
      %v2854 = vadd.f32 %v2493, %v2803
      %v2855 = vadd.f32 %v2494, %v2808
      %v2856 = vld [vmem:[#allocation2 + $0x25] sm:$0xff]
      %v2857 = vld [vmem:[#allocation2 + $0x2d] sm:$0xff]
      %v2858 = vld [vmem:[#allocation2 + $0x35] sm:$0xff]
      %v2859 = vld [vmem:[#allocation2 + $0x3d] sm:$0xff]
      %v2860 = vld [vmem:[#allocation2 + $0x45] sm:$0xff]
      %v2861 = vld [vmem:[#allocation2 + $0x4d] sm:$0xff]
      %v2862 = vld [vmem:[#allocation2 + $0x55] sm:$0xff]
      %v2863 = vld [vmem:[#allocation2 + $0x5d] sm:$0xff]
      %v2864 = vld [vmem:[#allocation2 + $0x65] sm:$0xff]
      %v2865 = vld [vmem:[#allocation2 + $0x6d] sm:$0xff]
      %v2866 = vld [vmem:[#allocation2 + $0x75] sm:$0xff]
      %v2867 = vld [vmem:[#allocation2 + $0x7d] sm:$0xff]
      %v2868 = vld [vmem:[#allocation2 + $0x85] sm:$0xff]
      %v2869 = vld [vmem:[#allocation2 + $0x8d] sm:$0xff]
      %v2870 = vld [vmem:[#allocation2 + $0x95] sm:$0xff]
      %v2871 = vld [vmem:[#allocation2 + $0x9d] sm:$0xff]
      %v2872 = vld [vmem:[#allocation2 + $0xa5] sm:$0xff]
      %v2873 = vld [vmem:[#allocation2 + $0xad] sm:$0xff]
      %v2874 = vld [vmem:[#allocation2 + $0xb5] sm:$0xff]
      %v2875 = vld [vmem:[#allocation2 + $0xbd] sm:$0xff]
      %v2876 = vld [vmem:[#allocation2 + $0xc5] sm:$0xff]
      %v2877 = vld [vmem:[#allocation2 + $0xcd] sm:$0xff]
      %v2878 = vld [vmem:[#allocation2 + $0xd5] sm:$0xff]
      %v2879 = vld [vmem:[#allocation2 + $0xdd] sm:$0xff]
      %v2880 = vld [vmem:[#allocation2 + $0xe5] sm:$0xff]
      %v2881 = vld [vmem:[#allocation2 + $0xed] sm:$0xff]
      %v2882 = vld [vmem:[#allocation2 + $0xf5] sm:$0xff]
      %v2883 = vld [vmem:[#allocation2 + $0xfd] sm:$0xff]
      %v2884 = vld [vmem:[#allocation2 + $0x105] sm:$0xff]
      %v2885 = vld [vmem:[#allocation2 + $0x10d] sm:$0xff]
      %v2886 = vld [vmem:[#allocation2 + $0x115] sm:$0xff]
      %v2887 = vld [vmem:[#allocation2 + $0x11d] sm:$0xff]
      %v2888 = vld [vmem:[#allocation2 + $0x125] sm:$0xff]
      %v2889 = vld [vmem:[#allocation2 + $0x12d] sm:$0xff]
      %v2890 = vld [vmem:[#allocation2 + $0x135] sm:$0xff]
      %v2891 = vld [vmem:[#allocation2 + $0x13d] sm:$0xff]
      %v2892 = vld [vmem:[#allocation2 + $0x145] sm:$0xff]
      %v2893 = vld [vmem:[#allocation2 + $0x14d] sm:$0xff]
      %v2894 = vld [vmem:[#allocation2 + $0x155] sm:$0xff]
      %v2895 = vld [vmem:[#allocation2 + $0x15d] sm:$0xff]
      %v2896 = vld [vmem:[#allocation2 + $0x165] sm:$0xf]
      %s2897 = scalar_lea.vmem %s1, 896
      %v2898 = vld [vmem:[%s2897] sm:$0xff]
      %v2899 = vld [vmem:[%s2897 + $0x8] sm:$0xff]
      %v2900 = vld [vmem:[%s2897 + $0x10] sm:$0xff]
      %v2901 = vld [vmem:[%s2897 + $0x18] sm:$0xff]
      %v2902 = vld [vmem:[%s2897 + $0x20] sm:$0xff]
      %v2903 = vld [vmem:[%s2897 + $0x28] sm:$0xff]
      %v2904 = vld [vmem:[%s2897 + $0x30] sm:$0xff]
      %v2905 = vld [vmem:[%s2897 + $0x38] sm:$0xff]
      %v2906 = vld [vmem:[%s2897 + $0x40] sm:$0xff]
      %v2907 = vld [vmem:[%s2897 + $0x48] sm:$0xff]
      %v2908 = vld [vmem:[%s2897 + $0x50] sm:$0xff]
      %v2909 = vld [vmem:[%s2897 + $0x58] sm:$0xff]
      %v2910 = vld [vmem:[%s2897 + $0x60] sm:$0xff]
      %v2911 = vld [vmem:[%s2897 + $0x68] sm:$0xff]
      %v2912 = vld [vmem:[%s2897 + $0x70] sm:$0xff]
      %v2913 = vld [vmem:[%s2897 + $0x78] sm:$0xff]
      %2914 = vmatprep.subr.mxu0 0.0
      %2915 = vmatpush1.msra.mxu0 %v2898
      %2916 = vmatprep.subr.mxu0 0.0
      %2917 = vmatpush1.msra.mxu0 %v2899
      %2918 = vmatprep.subr.mxu0 0.0
      %2919 = vmatpush1.msra.mxu0 %v2900
      %2920 = vmatprep.subr.mxu0 0.0
      %2921 = vmatpush1.msra.mxu0 %v2901
      %2922 = vmatprep.subr.mxu0 0.0
      %2923 = vmatpush1.msra.mxu0 %v2902
      %2924 = vmatprep.subr.mxu0 0.0
      %2925 = vmatpush1.msra.mxu0 %v2903
      %2926 = vmatprep.subr.mxu0 0.0
      %2927 = vmatpush1.msra.mxu0 %v2904
      %2928 = vmatprep.subr.mxu0 0.0
      %2929 = vmatpush1.msra.mxu0 %v2905
      %2930 = vmatprep.subr.mxu0 0.0
      %2931 = vmatpush1.msra.mxu0 %v2906
      %2932 = vmatprep.subr.mxu0 0.0
      %2933 = vmatpush1.msra.mxu0 %v2907
      %2934 = vmatprep.subr.mxu0 0.0
      %2935 = vmatpush1.msra.mxu0 %v2908
      %2936 = vmatprep.subr.mxu0 0.0
      %2937 = vmatpush1.msra.mxu0 %v2909
      %2938 = vmatprep.subr.mxu0 0.0
      %2939 = vmatpush1.msra.mxu0 %v2910
      %2940 = vmatprep.subr.mxu0 0.0
      %2941 = vmatpush1.msra.mxu0 %v2911
      %2942 = vmatprep.subr.mxu0 0.0
      %2943 = vmatpush1.msra.mxu0 %v2912
      %2944 = vmatprep.subr.mxu0 0.0
      %2945 = vmatpush1.msra.mxu0 %v2913
      %2946 = vmatprep.subr.mxu0 0.0
      %2947 = vmatpush1.msra.mxu0 0.0
      %2948 = vmatprep.subr.mxu0 0.0
      %2949 = vmatpush1.msra.mxu0 0.0
      %2950 = vmatprep.subr.mxu0 0.0
      %2951 = vmatpush1.msra.mxu0 0.0
      %2952 = vmatprep.subr.mxu0 0.0
      %2953 = vmatpush1.msra.mxu0 0.0
      %2954 = vmatprep.subr.mxu0 0.0
      %2955 = vmatpush1.msra.mxu0 0.0
      %2956 = vmatprep.subr.mxu0 0.0
      %2957 = vmatpush1.msra.mxu0 0.0
      %2958 = vmatprep.subr.mxu0 0.0
      %2959 = vmatpush1.msra.mxu0 0.0
      %2960 = vmatprep.subr.mxu0 0.0
      %2961 = vmatpush1.msra.mxu0 0.0
      %2962 = vmatprep.subr.mxu0 0.0
      %2963 = vmatpush1.msra.mxu0 0.0
      %2964 = vmatprep.subr.mxu0 0.0
      %2965 = vmatpush1.msra.mxu0 0.0
      %2966 = vmatprep.subr.mxu0 0.0
      %2967 = vmatpush1.msra.mxu0 0.0
      %2968 = vmatprep.subr.mxu0 0.0
      %2969 = vmatpush1.msra.mxu0 0.0
      %2970 = vmatprep.subr.mxu0 0.0
      %2971 = vmatpush1.msra.mxu0 0.0
      %2972 = vmatprep.subr.mxu0 0.0
      %2973 = vmatpush1.msra.mxu0 0.0
      %2974 = vmatprep.subr.mxu0 0.0
      %2975 = vmatpush1.msra.mxu0 0.0
      %2976 = vmatprep.subr.mxu0 0.0
      %2977 = vmatpush1.msra.mxu0 0.0
      %2978 = vmatprep.mubr.f32.mxu0 0.0
      %2979 = vmatmul.mubr.f32.gmra.mrb[0].mxu0 %v2856
      %v2980 = vpop.f32.mrb[0].mxu0
      %v2981 = vpop.f32.mrb[0].mxu0
      %2982 = vmatprep.mubr.f32.mxu0 0.0
      %2983 = vmatmul.mubr.f32.gmra.mrb[0].mxu0 %v2857
      %v2984 = vpop.f32.mrb[0].mxu0
      %v2985 = vpop.f32.mrb[0].mxu0
      %2986 = vmatprep.mubr.f32.mxu0 0.0
      %2987 = vmatmul.mubr.f32.gmra.mrb[0].mxu0 %v2858
      %v2988 = vpop.f32.mrb[0].mxu0
      %v2989 = vadd.f32 0.0, %v2988
      %v2990 = vpop.f32.mrb[0].mxu0
      %2991 = vmatprep.mubr.f32.mxu0 0.0
      %2992 = vmatmul.mubr.f32.gmra.mrb[0].mxu0 %v2859
      %v2993 = vpop.f32.mrb[0].mxu0
      %v2994 = vadd.f32 0.0, %v2993
      %v2995 = vpop.f32.mrb[0].mxu0
      %2996 = vmatprep.mubr.f32.mxu0 0.0
      %2997 = vmatmul.mubr.f32.gmra.mrb[0].mxu0 %v2860
      %v2998 = vpop.f32.mrb[0].mxu0
      %v2999 = vadd.f32 0.0, %v2998
      %v3000 = vpop.f32.mrb[0].mxu0
      %3001 = vmatprep.mubr.f32.mxu0 0.0
      %3002 = vmatmul.mubr.f32.gmra.mrb[0].mxu0 %v2861
      %v3003 = vpop.f32.mrb[0].mxu0
      %v3004 = vadd.f32 0.0, %v3003
      %v3005 = vpop.f32.mrb[0].mxu0
      %3006 = vmatprep.mubr.f32.mxu0 0.0
      %3007 = vmatmul.mubr.f32.gmra.mrb[0].mxu0 %v2862
      %v3008 = vpop.f32.mrb[0].mxu0
      %v3009 = vadd.f32 0.0, %v3008
      %v3010 = vpop.f32.mrb[0].mxu0
      %3011 = vmatprep.mubr.f32.mxu0 0.0
      %3012 = vmatmul.mubr.f32.gmra.mrb[0].mxu0 %v2863
      %v3013 = vpop.f32.mrb[0].mxu0
      %v3014 = vadd.f32 0.0, %v3013
      %v3015 = vpop.f32.mrb[0].mxu0
      %3016 = vmatprep.mubr.f32.mxu0 0.0
      %3017 = vmatmul.mubr.f32.gmra.mrb[0].mxu0 %v2864
      %v3018 = vpop.f32.mrb[0].mxu0
      %v3019 = vadd.f32 0.0, %v3018
      %v3020 = vpop.f32.mrb[0].mxu0
      %3021 = vmatprep.mubr.f32.mxu0 0.0
      %3022 = vmatmul.mubr.f32.gmra.mrb[0].mxu0 %v2865
      %v3023 = vpop.f32.mrb[0].mxu0
      %v3024 = vadd.f32 0.0, %v3023
      %v3025 = vpop.f32.mrb[0].mxu0
      %3026 = vmatprep.mubr.f32.mxu0 0.0
      %3027 = vmatmul.mubr.f32.gmra.mrb[0].mxu0 %v2866
      %v3028 = vpop.f32.mrb[0].mxu0
      %v3029 = vadd.f32 0.0, %v3028
      %v3030 = vpop.f32.mrb[0].mxu0
      %3031 = vmatprep.mubr.f32.mxu0 0.0
      %3032 = vmatmul.mubr.f32.gmra.mrb[0].mxu0 %v2867
      %v3033 = vpop.f32.mrb[0].mxu0
      %v3034 = vadd.f32 0.0, %v3033
      %v3035 = vpop.f32.mrb[0].mxu0
      %3036 = vmatprep.mubr.f32.mxu0 0.0
      %3037 = vmatmul.mubr.f32.gmra.mrb[0].mxu0 %v2868
      %v3038 = vpop.f32.mrb[0].mxu0
      %v3039 = vadd.f32 0.0, %v3038
      %v3040 = vpop.f32.mrb[0].mxu0
      %3041 = vmatprep.mubr.f32.mxu0 0.0
      %3042 = vmatmul.mubr.f32.gmra.mrb[0].mxu0 %v2869
      %v3043 = vpop.f32.mrb[0].mxu0
      %v3044 = vadd.f32 0.0, %v3043
      %v3045 = vpop.f32.mrb[0].mxu0
      %3046 = vmatprep.mubr.f32.mxu0 0.0
      %3047 = vmatmul.mubr.f32.gmra.mrb[0].mxu0 %v2870
      %v3048 = vpop.f32.mrb[0].mxu0
      %v3049 = vadd.f32 0.0, %v3048
      %v3050 = vpop.f32.mrb[0].mxu0
      %3051 = vmatprep.mubr.f32.mxu0 0.0
      %3052 = vmatmul.mubr.f32.gmra.mrb[0].mxu0 %v2871
      %v3053 = vpop.f32.mrb[0].mxu0
      %v3054 = vadd.f32 0.0, %v3053
      %v3055 = vpop.f32.mrb[0].mxu0
      %3056 = vmatprep.mubr.f32.mxu0 0.0
      %3057 = vmatmul.mubr.f32.gmra.mrb[0].mxu0 %v2872
      %v3058 = vpop.f32.mrb[0].mxu0
      %v3059 = vadd.f32 0.0, %v3058
      %v3060 = vpop.f32.mrb[0].mxu0
      %3061 = vmatprep.mubr.f32.mxu0 0.0
      %3062 = vmatmul.mubr.f32.gmra.mrb[0].mxu0 %v2873
      %v3063 = vpop.f32.mrb[0].mxu0
      %v3064 = vadd.f32 0.0, %v3063
      %v3065 = vpop.f32.mrb[0].mxu0
      %3066 = vmatprep.mubr.f32.mxu0 0.0
      %3067 = vmatmul.mubr.f32.gmra.mrb[0].mxu0 %v2874
      %v3068 = vpop.f32.mrb[0].mxu0
      %v3069 = vadd.f32 0.0, %v3068
      %v3070 = vpop.f32.mrb[0].mxu0
      %3071 = vmatprep.mubr.f32.mxu0 0.0
      %3072 = vmatmul.mubr.f32.gmra.mrb[0].mxu0 %v2875
      %v3073 = vpop.f32.mrb[0].mxu0
      %v3074 = vadd.f32 0.0, %v3073
      %v3075 = vpop.f32.mrb[0].mxu0
      %3076 = vmatprep.mubr.f32.mxu0 0.0
      %3077 = vmatmul.mubr.f32.gmra.mrb[0].mxu0 %v2876
      %v3078 = vpop.f32.mrb[0].mxu0
      %v3079 = vadd.f32 0.0, %v3078
      %v3080 = vpop.f32.mrb[0].mxu0
      %3081 = vmatprep.mubr.f32.mxu0 0.0
      %3082 = vmatmul.mubr.f32.gmra.mrb[0].mxu0 %v2877
      %v3083 = vpop.f32.mrb[0].mxu0
      %v3084 = vadd.f32 0.0, %v3083
      %v3085 = vpop.f32.mrb[0].mxu0
      %3086 = vmatprep.mubr.f32.mxu0 0.0
      %3087 = vmatmul.mubr.f32.gmra.mrb[0].mxu0 %v2878
      %v3088 = vpop.f32.mrb[0].mxu0
      %v3089 = vadd.f32 0.0, %v3088
      %v3090 = vpop.f32.mrb[0].mxu0
      %3091 = vmatprep.mubr.f32.mxu0 0.0
      %3092 = vmatmul.mubr.f32.gmra.mrb[0].mxu0 %v2879
      %v3093 = vpop.f32.mrb[0].mxu0
      %v3094 = vadd.f32 0.0, %v3093
      %v3095 = vpop.f32.mrb[0].mxu0
      %3096 = vmatprep.mubr.f32.mxu0 0.0
      %3097 = vmatmul.mubr.f32.gmra.mrb[0].mxu0 %v2880
      %v3098 = vpop.f32.mrb[0].mxu0
      %v3099 = vadd.f32 0.0, %v3098
      %v3100 = vpop.f32.mrb[0].mxu0
      %3101 = vmatprep.mubr.f32.mxu0 0.0
      %3102 = vmatmul.mubr.f32.gmra.mrb[0].mxu0 %v2881
      %v3103 = vpop.f32.mrb[0].mxu0
      %v3104 = vadd.f32 0.0, %v3103
      %v3105 = vpop.f32.mrb[0].mxu0
      %3106 = vmatprep.mubr.f32.mxu0 0.0
      %3107 = vmatmul.mubr.f32.gmra.mrb[0].mxu0 %v2882
      %v3108 = vpop.f32.mrb[0].mxu0
      %v3109 = vadd.f32 0.0, %v3108
      %v3110 = vpop.f32.mrb[0].mxu0
      %3111 = vmatprep.mubr.f32.mxu0 0.0
      %3112 = vmatmul.mubr.f32.gmra.mrb[0].mxu0 %v2883
      %v3113 = vpop.f32.mrb[0].mxu0
      %v3114 = vadd.f32 0.0, %v3113
      %v3115 = vpop.f32.mrb[0].mxu0
      %3116 = vmatprep.mubr.f32.mxu0 0.0
      %3117 = vmatmul.mubr.f32.gmra.mrb[0].mxu0 %v2884
      %v3118 = vpop.f32.mrb[0].mxu0
      %v3119 = vadd.f32 0.0, %v3118
      %v3120 = vpop.f32.mrb[0].mxu0
      %3121 = vmatprep.mubr.f32.mxu0 0.0
      %3122 = vmatmul.mubr.f32.gmra.mrb[0].mxu0 %v2885
      %v3123 = vpop.f32.mrb[0].mxu0
      %v3124 = vadd.f32 0.0, %v3123
      %v3125 = vpop.f32.mrb[0].mxu0
      %3126 = vmatprep.mubr.f32.mxu0 0.0
      %3127 = vmatmul.mubr.f32.gmra.mrb[0].mxu0 %v2886
      %v3128 = vpop.f32.mrb[0].mxu0
      %v3129 = vadd.f32 0.0, %v3128
      %v3130 = vpop.f32.mrb[0].mxu0
      %3131 = vmatprep.mubr.f32.mxu0 0.0
      %3132 = vmatmul.mubr.f32.gmra.mrb[0].mxu0 %v2887
      %v3133 = vpop.f32.mrb[0].mxu0
      %v3134 = vadd.f32 0.0, %v3133
      %v3135 = vpop.f32.mrb[0].mxu0
      %3136 = vmatprep.mubr.f32.mxu0 0.0
      %3137 = vmatmul.mubr.f32.gmra.mrb[0].mxu0 %v2888
      %v3138 = vpop.f32.mrb[0].mxu0
      %v3139 = vadd.f32 0.0, %v3138
      %v3140 = vpop.f32.mrb[0].mxu0
      %3141 = vmatprep.mubr.f32.mxu0 0.0
      %3142 = vmatmul.mubr.f32.gmra.mrb[0].mxu0 %v2889
      %v3143 = vpop.f32.mrb[0].mxu0
      %v3144 = vadd.f32 0.0, %v3143
      %v3145 = vpop.f32.mrb[0].mxu0
      %3146 = vmatprep.mubr.f32.mxu0 0.0
      %3147 = vmatmul.mubr.f32.gmra.mrb[0].mxu0 %v2890
      %v3148 = vpop.f32.mrb[0].mxu0
      %v3149 = vadd.f32 0.0, %v3148
      %v3150 = vpop.f32.mrb[0].mxu0
      %3151 = vmatprep.mubr.f32.mxu0 0.0
      %3152 = vmatmul.mubr.f32.gmra.mrb[0].mxu0 %v2891
      %v3153 = vpop.f32.mrb[0].mxu0
      %v3154 = vadd.f32 0.0, %v3153
      %v3155 = vpop.f32.mrb[0].mxu0
      %3156 = vmatprep.mubr.f32.mxu0 0.0
      %3157 = vmatmul.mubr.f32.gmra.mrb[0].mxu0 %v2892
      %v3158 = vpop.f32.mrb[0].mxu0
      %v3159 = vadd.f32 0.0, %v3158
      %v3160 = vpop.f32.mrb[0].mxu0
      %3161 = vmatprep.mubr.f32.mxu0 0.0
      %3162 = vmatmul.mubr.f32.gmra.mrb[0].mxu0 %v2893
      %v3163 = vpop.f32.mrb[0].mxu0
      %v3164 = vadd.f32 0.0, %v3163
      %v3165 = vpop.f32.mrb[0].mxu0
      %3166 = vmatprep.mubr.f32.mxu0 0.0
      %3167 = vmatmul.mubr.f32.gmra.mrb[0].mxu0 %v2894
      %v3168 = vpop.f32.mrb[0].mxu0
      %v3169 = vadd.f32 0.0, %v3168
      %v3170 = vpop.f32.mrb[0].mxu0
      %3171 = vmatprep.mubr.f32.mxu0 0.0
      %3172 = vmatmul.mubr.f32.gmra.mrb[0].mxu0 %v2895
      %v3173 = vpop.f32.mrb[0].mxu0
      %v3174 = vpop.f32.mrb[0].mxu0
      %3175 = vmatprep.mubr.f32.mxu0 0.0
      %3176 = vmatmul.mubr.f32.gmra.mrb[0].mxu0 %v2896
      %v3177 = vpop.f32.mrb[0].mxu0
      %v3178 = vpop.f32.mrb[0].mxu0
      %3179 = vdwg.mxu0
      %v3180 = vadd.f32 %v2819, %v2989
      %v3181 = vadd.f32 %v2820, %v2994
      %v3182 = vadd.f32 %v2821, %v2999
      %v3183 = vadd.f32 %v2822, %v3004
      %v3184 = vadd.f32 %v2823, %v3009
      %v3185 = vadd.f32 %v2824, %v3014
      %v3186 = vadd.f32 %v2825, %v3019
      %v3187 = vadd.f32 %v2826, %v3024
      %v3188 = vadd.f32 %v2827, %v3029
      %v3189 = vadd.f32 %v2828, %v3034
      %v3190 = vadd.f32 %v2829, %v3039
      %v3191 = vadd.f32 %v2830, %v3044
      %v3192 = vadd.f32 %v2831, %v3049
      %v3193 = vadd.f32 %v2832, %v3054
      %v3194 = vadd.f32 %v2833, %v3059
      %v3195 = vadd.f32 %v2834, %v3064
      %v3196 = vadd.f32 %v2835, %v3069
      %v3197 = vadd.f32 %v2836, %v3074
      %v3198 = vadd.f32 %v2837, %v3079
      %v3199 = vadd.f32 %v2838, %v3084
      %v3200 = vadd.f32 %v2839, %v3089
      %v3201 = vadd.f32 %v2840, %v3094
      %v3202 = vadd.f32 %v2841, %v3099
      %v3203 = vadd.f32 %v2842, %v3104
      %v3204 = vadd.f32 %v2843, %v3109
      %v3205 = vadd.f32 %v2844, %v3114
      %v3206 = vadd.f32 %v2845, %v3119
      %v3207 = vadd.f32 %v2846, %v3124
      %v3208 = vadd.f32 %v2847, %v3129
      %v3209 = vadd.f32 %v2848, %v3134
      %v3210 = vadd.f32 %v2849, %v3139
      %v3211 = vadd.f32 %v2850, %v3144
      %v3212 = vadd.f32 %v2851, %v3149
      %v3213 = vadd.f32 %v2852, %v3154
      %v3214 = vadd.f32 %v2853, %v3159
      %v3215 = vadd.f32 %v2854, %v3164
      %v3216 = vadd.f32 %v2855, %v3169
      %v3217 = vld [vmem:[#allocation2 + $0x26] sm:$0xff]
      %v3218 = vld [vmem:[#allocation2 + $0x2e] sm:$0xff]
      %v3219 = vld [vmem:[#allocation2 + $0x36] sm:$0xff]
      %v3220 = vld [vmem:[#allocation2 + $0x3e] sm:$0xff]
      %v3221 = vld [vmem:[#allocation2 + $0x46] sm:$0xff]
      %v3222 = vld [vmem:[#allocation2 + $0x4e] sm:$0xff]
      %v3223 = vld [vmem:[#allocation2 + $0x56] sm:$0xff]
      %v3224 = vld [vmem:[#allocation2 + $0x5e] sm:$0xff]
      %v3225 = vld [vmem:[#allocation2 + $0x66] sm:$0xff]
      %v3226 = vld [vmem:[#allocation2 + $0x6e] sm:$0xff]
      %v3227 = vld [vmem:[#allocation2 + $0x76] sm:$0xff]
      %v3228 = vld [vmem:[#allocation2 + $0x7e] sm:$0xff]
      %v3229 = vld [vmem:[#allocation2 + $0x86] sm:$0xff]
      %v3230 = vld [vmem:[#allocation2 + $0x8e] sm:$0xff]
      %v3231 = vld [vmem:[#allocation2 + $0x96] sm:$0xff]
      %v3232 = vld [vmem:[#allocation2 + $0x9e] sm:$0xff]
      %v3233 = vld [vmem:[#allocation2 + $0xa6] sm:$0xff]
      %v3234 = vld [vmem:[#allocation2 + $0xae] sm:$0xff]
      %v3235 = vld [vmem:[#allocation2 + $0xb6] sm:$0xff]
      %v3236 = vld [vmem:[#allocation2 + $0xbe] sm:$0xff]
      %v3237 = vld [vmem:[#allocation2 + $0xc6] sm:$0xff]
      %v3238 = vld [vmem:[#allocation2 + $0xce] sm:$0xff]
      %v3239 = vld [vmem:[#allocation2 + $0xd6] sm:$0xff]
      %v3240 = vld [vmem:[#allocation2 + $0xde] sm:$0xff]
      %v3241 = vld [vmem:[#allocation2 + $0xe6] sm:$0xff]
      %v3242 = vld [vmem:[#allocation2 + $0xee] sm:$0xff]
      %v3243 = vld [vmem:[#allocation2 + $0xf6] sm:$0xff]
      %v3244 = vld [vmem:[#allocation2 + $0xfe] sm:$0xff]
      %v3245 = vld [vmem:[#allocation2 + $0x106] sm:$0xff]
      %v3246 = vld [vmem:[#allocation2 + $0x10e] sm:$0xff]
      %v3247 = vld [vmem:[#allocation2 + $0x116] sm:$0xff]
      %v3248 = vld [vmem:[#allocation2 + $0x11e] sm:$0xff]
      %v3249 = vld [vmem:[#allocation2 + $0x126] sm:$0xff]
      %v3250 = vld [vmem:[#allocation2 + $0x12e] sm:$0xff]
      %v3251 = vld [vmem:[#allocation2 + $0x136] sm:$0xff]
      %v3252 = vld [vmem:[#allocation2 + $0x13e] sm:$0xff]
      %v3253 = vld [vmem:[#allocation2 + $0x146] sm:$0xff]
      %v3254 = vld [vmem:[#allocation2 + $0x14e] sm:$0xff]
      %v3255 = vld [vmem:[#allocation2 + $0x156] sm:$0xff]
      %v3256 = vld [vmem:[#allocation2 + $0x15e] sm:$0xff]
      %v3257 = vld [vmem:[#allocation2 + $0x166] sm:$0xf]
      %s3258 = scalar_lea.vmem %s1, 1024
      %v3259 = vld [vmem:[%s3258] sm:$0xff]
      %v3260 = vld [vmem:[%s3258 + $0x8] sm:$0xff]
      %v3261 = vld [vmem:[%s3258 + $0x10] sm:$0xff]
      %v3262 = vld [vmem:[%s3258 + $0x18] sm:$0xff]
      %v3263 = vld [vmem:[%s3258 + $0x20] sm:$0xff]
      %v3264 = vld [vmem:[%s3258 + $0x28] sm:$0xff]
      %v3265 = vld [vmem:[%s3258 + $0x30] sm:$0xff]
      %v3266 = vld [vmem:[%s3258 + $0x38] sm:$0xff]
      %v3267 = vld [vmem:[%s3258 + $0x40] sm:$0xff]
      %v3268 = vld [vmem:[%s3258 + $0x48] sm:$0xff]
      %v3269 = vld [vmem:[%s3258 + $0x50] sm:$0xff]
      %v3270 = vld [vmem:[%s3258 + $0x58] sm:$0xff]
      %v3271 = vld [vmem:[%s3258 + $0x60] sm:$0xff]
      %v3272 = vld [vmem:[%s3258 + $0x68] sm:$0xff]
      %v3273 = vld [vmem:[%s3258 + $0x70] sm:$0xff]
      %v3274 = vld [vmem:[%s3258 + $0x78] sm:$0xff]
      %3275 = vmatprep.subr.mxu0 0.0
      %3276 = vmatpush1.msra.mxu0 %v3259
      %3277 = vmatprep.subr.mxu0 0.0
      %3278 = vmatpush1.msra.mxu0 %v3260
      %3279 = vmatprep.subr.mxu0 0.0
      %3280 = vmatpush1.msra.mxu0 %v3261
      %3281 = vmatprep.subr.mxu0 0.0
      %3282 = vmatpush1.msra.mxu0 %v3262
      %3283 = vmatprep.subr.mxu0 0.0
      %3284 = vmatpush1.msra.mxu0 %v3263
      %3285 = vmatprep.subr.mxu0 0.0
      %3286 = vmatpush1.msra.mxu0 %v3264
      %3287 = vmatprep.subr.mxu0 0.0
      %3288 = vmatpush1.msra.mxu0 %v3265
      %3289 = vmatprep.subr.mxu0 0.0
      %3290 = vmatpush1.msra.mxu0 %v3266
      %3291 = vmatprep.subr.mxu0 0.0
      %3292 = vmatpush1.msra.mxu0 %v3267
      %3293 = vmatprep.subr.mxu0 0.0
      %3294 = vmatpush1.msra.mxu0 %v3268
      %3295 = vmatprep.subr.mxu0 0.0
      %3296 = vmatpush1.msra.mxu0 %v3269
      %3297 = vmatprep.subr.mxu0 0.0
      %3298 = vmatpush1.msra.mxu0 %v3270
      %3299 = vmatprep.subr.mxu0 0.0
      %3300 = vmatpush1.msra.mxu0 %v3271
      %3301 = vmatprep.subr.mxu0 0.0
      %3302 = vmatpush1.msra.mxu0 %v3272
      %3303 = vmatprep.subr.mxu0 0.0
      %3304 = vmatpush1.msra.mxu0 %v3273
      %3305 = vmatprep.subr.mxu0 0.0
      %3306 = vmatpush1.msra.mxu0 %v3274
      %3307 = vmatprep.subr.mxu0 0.0
      %3308 = vmatpush1.msra.mxu0 0.0
      %3309 = vmatprep.subr.mxu0 0.0
      %3310 = vmatpush1.msra.mxu0 0.0
      %3311 = vmatprep.subr.mxu0 0.0
      %3312 = vmatpush1.msra.mxu0 0.0
      %3313 = vmatprep.subr.mxu0 0.0
      %3314 = vmatpush1.msra.mxu0 0.0
      %3315 = vmatprep.subr.mxu0 0.0
      %3316 = vmatpush1.msra.mxu0 0.0
      %3317 = vmatprep.subr.mxu0 0.0
      %3318 = vmatpush1.msra.mxu0 0.0
      %3319 = vmatprep.subr.mxu0 0.0
      %3320 = vmatpush1.msra.mxu0 0.0
      %3321 = vmatprep.subr.mxu0 0.0
      %3322 = vmatpush1.msra.mxu0 0.0
      %3323 = vmatprep.subr.mxu0 0.0
      %3324 = vmatpush1.msra.mxu0 0.0
      %3325 = vmatprep.subr.mxu0 0.0
      %3326 = vmatpush1.msra.mxu0 0.0
      %3327 = vmatprep.subr.mxu0 0.0
      %3328 = vmatpush1.msra.mxu0 0.0
      %3329 = vmatprep.subr.mxu0 0.0
      %3330 = vmatpush1.msra.mxu0 0.0
      %3331 = vmatprep.subr.mxu0 0.0
      %3332 = vmatpush1.msra.mxu0 0.0
      %3333 = vmatprep.subr.mxu0 0.0
      %3334 = vmatpush1.msra.mxu0 0.0
      %3335 = vmatprep.subr.mxu0 0.0
      %3336 = vmatpush1.msra.mxu0 0.0
      %3337 = vmatprep.subr.mxu0 0.0
      %3338 = vmatpush1.msra.mxu0 0.0
      %3339 = vmatprep.mubr.f32.mxu0 0.0
      %3340 = vmatmul.mubr.f32.gmra.mrb[0].mxu0 %v3217
      %v3341 = vpop.f32.mrb[0].mxu0
      %v3342 = vpop.f32.mrb[0].mxu0
      %3343 = vmatprep.mubr.f32.mxu0 0.0
      %3344 = vmatmul.mubr.f32.gmra.mrb[0].mxu0 %v3218
      %v3345 = vpop.f32.mrb[0].mxu0
      %v3346 = vpop.f32.mrb[0].mxu0
      %3347 = vmatprep.mubr.f32.mxu0 0.0
      %3348 = vmatmul.mubr.f32.gmra.mrb[0].mxu0 %v3219
      %v3349 = vpop.f32.mrb[0].mxu0
      %v3350 = vadd.f32 0.0, %v3349
      %v3351 = vpop.f32.mrb[0].mxu0
      %3352 = vmatprep.mubr.f32.mxu0 0.0
      %3353 = vmatmul.mubr.f32.gmra.mrb[0].mxu0 %v3220
      %v3354 = vpop.f32.mrb[0].mxu0
      %v3355 = vadd.f32 0.0, %v3354
      %v3356 = vpop.f32.mrb[0].mxu0
      %3357 = vmatprep.mubr.f32.mxu0 0.0
      %3358 = vmatmul.mubr.f32.gmra.mrb[0].mxu0 %v3221
      %v3359 = vpop.f32.mrb[0].mxu0
      %v3360 = vadd.f32 0.0, %v3359
      %v3361 = vpop.f32.mrb[0].mxu0
      %3362 = vmatprep.mubr.f32.mxu0 0.0
      %3363 = vmatmul.mubr.f32.gmra.mrb[0].mxu0 %v3222
      %v3364 = vpop.f32.mrb[0].mxu0
      %v3365 = vadd.f32 0.0, %v3364
      %v3366 = vpop.f32.mrb[0].mxu0
      %3367 = vmatprep.mubr.f32.mxu0 0.0
      %3368 = vmatmul.mubr.f32.gmra.mrb[0].mxu0 %v3223
      %v3369 = vpop.f32.mrb[0].mxu0
      %v3370 = vadd.f32 0.0, %v3369
      %v3371 = vpop.f32.mrb[0].mxu0
      %3372 = vmatprep.mubr.f32.mxu0 0.0
      %3373 = vmatmul.mubr.f32.gmra.mrb[0].mxu0 %v3224
      %v3374 = vpop.f32.mrb[0].mxu0
      %v3375 = vadd.f32 0.0, %v3374
      %v3376 = vpop.f32.mrb[0].mxu0
      %3377 = vmatprep.mubr.f32.mxu0 0.0
      %3378 = vmatmul.mubr.f32.gmra.mrb[0].mxu0 %v3225
      %v3379 = vpop.f32.mrb[0].mxu0
      %v3380 = vadd.f32 0.0, %v3379
      %v3381 = vpop.f32.mrb[0].mxu0
      %3382 = vmatprep.mubr.f32.mxu0 0.0
      %3383 = vmatmul.mubr.f32.gmra.mrb[0].mxu0 %v3226
      %v3384 = vpop.f32.mrb[0].mxu0
      %v3385 = vadd.f32 0.0, %v3384
      %v3386 = vpop.f32.mrb[0].mxu0
      %3387 = vmatprep.mubr.f32.mxu0 0.0
      %3388 = vmatmul.mubr.f32.gmra.mrb[0].mxu0 %v3227
      %v3389 = vpop.f32.mrb[0].mxu0
      %v3390 = vadd.f32 0.0, %v3389
      %v3391 = vpop.f32.mrb[0].mxu0
      %3392 = vmatprep.mubr.f32.mxu0 0.0
      %3393 = vmatmul.mubr.f32.gmra.mrb[0].mxu0 %v3228
      %v3394 = vpop.f32.mrb[0].mxu0
      %v3395 = vadd.f32 0.0, %v3394
      %v3396 = vpop.f32.mrb[0].mxu0
      %3397 = vmatprep.mubr.f32.mxu0 0.0
      %3398 = vmatmul.mubr.f32.gmra.mrb[0].mxu0 %v3229
      %v3399 = vpop.f32.mrb[0].mxu0
      %v3400 = vadd.f32 0.0, %v3399
      %v3401 = vpop.f32.mrb[0].mxu0
      %3402 = vmatprep.mubr.f32.mxu0 0.0
      %3403 = vmatmul.mubr.f32.gmra.mrb[0].mxu0 %v3230
      %v3404 = vpop.f32.mrb[0].mxu0
      %v3405 = vadd.f32 0.0, %v3404
      %v3406 = vpop.f32.mrb[0].mxu0
      %3407 = vmatprep.mubr.f32.mxu0 0.0
      %3408 = vmatmul.mubr.f32.gmra.mrb[0].mxu0 %v3231
      %v3409 = vpop.f32.mrb[0].mxu0
      %v3410 = vadd.f32 0.0, %v3409
      %v3411 = vpop.f32.mrb[0].mxu0
      %3412 = vmatprep.mubr.f32.mxu0 0.0
      %3413 = vmatmul.mubr.f32.gmra.mrb[0].mxu0 %v3232
      %v3414 = vpop.f32.mrb[0].mxu0
      %v3415 = vadd.f32 0.0, %v3414
      %v3416 = vpop.f32.mrb[0].mxu0
      %3417 = vmatprep.mubr.f32.mxu0 0.0
      %3418 = vmatmul.mubr.f32.gmra.mrb[0].mxu0 %v3233
      %v3419 = vpop.f32.mrb[0].mxu0
      %v3420 = vadd.f32 0.0, %v3419
      %v3421 = vpop.f32.mrb[0].mxu0
      %3422 = vmatprep.mubr.f32.mxu0 0.0
      %3423 = vmatmul.mubr.f32.gmra.mrb[0].mxu0 %v3234
      %v3424 = vpop.f32.mrb[0].mxu0
      %v3425 = vadd.f32 0.0, %v3424
      %v3426 = vpop.f32.mrb[0].mxu0
      %3427 = vmatprep.mubr.f32.mxu0 0.0
      %3428 = vmatmul.mubr.f32.gmra.mrb[0].mxu0 %v3235
      %v3429 = vpop.f32.mrb[0].mxu0
      %v3430 = vadd.f32 0.0, %v3429
      %v3431 = vpop.f32.mrb[0].mxu0
      %3432 = vmatprep.mubr.f32.mxu0 0.0
      %3433 = vmatmul.mubr.f32.gmra.mrb[0].mxu0 %v3236
      %v3434 = vpop.f32.mrb[0].mxu0
      %v3435 = vadd.f32 0.0, %v3434
      %v3436 = vpop.f32.mrb[0].mxu0
      %3437 = vmatprep.mubr.f32.mxu0 0.0
      %3438 = vmatmul.mubr.f32.gmra.mrb[0].mxu0 %v3237
      %v3439 = vpop.f32.mrb[0].mxu0
      %v3440 = vadd.f32 0.0, %v3439
      %v3441 = vpop.f32.mrb[0].mxu0
      %3442 = vmatprep.mubr.f32.mxu0 0.0
      %3443 = vmatmul.mubr.f32.gmra.mrb[0].mxu0 %v3238
      %v3444 = vpop.f32.mrb[0].mxu0
      %v3445 = vadd.f32 0.0, %v3444
      %v3446 = vpop.f32.mrb[0].mxu0
      %3447 = vmatprep.mubr.f32.mxu0 0.0
      %3448 = vmatmul.mubr.f32.gmra.mrb[0].mxu0 %v3239
      %v3449 = vpop.f32.mrb[0].mxu0
      %v3450 = vadd.f32 0.0, %v3449
      %v3451 = vpop.f32.mrb[0].mxu0
      %3452 = vmatprep.mubr.f32.mxu0 0.0
      %3453 = vmatmul.mubr.f32.gmra.mrb[0].mxu0 %v3240
      %v3454 = vpop.f32.mrb[0].mxu0
      %v3455 = vadd.f32 0.0, %v3454
      %v3456 = vpop.f32.mrb[0].mxu0
      %3457 = vmatprep.mubr.f32.mxu0 0.0
      %3458 = vmatmul.mubr.f32.gmra.mrb[0].mxu0 %v3241
      %v3459 = vpop.f32.mrb[0].mxu0
      %v3460 = vadd.f32 0.0, %v3459
      %v3461 = vpop.f32.mrb[0].mxu0
      %3462 = vmatprep.mubr.f32.mxu0 0.0
      %3463 = vmatmul.mubr.f32.gmra.mrb[0].mxu0 %v3242
      %v3464 = vpop.f32.mrb[0].mxu0
      %v3465 = vadd.f32 0.0, %v3464
      %v3466 = vpop.f32.mrb[0].mxu0
      %3467 = vmatprep.mubr.f32.mxu0 0.0
      %3468 = vmatmul.mubr.f32.gmra.mrb[0].mxu0 %v3243
      %v3469 = vpop.f32.mrb[0].mxu0
      %v3470 = vadd.f32 0.0, %v3469
      %v3471 = vpop.f32.mrb[0].mxu0
      %3472 = vmatprep.mubr.f32.mxu0 0.0
      %3473 = vmatmul.mubr.f32.gmra.mrb[0].mxu0 %v3244
      %v3474 = vpop.f32.mrb[0].mxu0
      %v3475 = vadd.f32 0.0, %v3474
      %v3476 = vpop.f32.mrb[0].mxu0
      %3477 = vmatprep.mubr.f32.mxu0 0.0
      %3478 = vmatmul.mubr.f32.gmra.mrb[0].mxu0 %v3245
      %v3479 = vpop.f32.mrb[0].mxu0
      %v3480 = vadd.f32 0.0, %v3479
      %v3481 = vpop.f32.mrb[0].mxu0
      %3482 = vmatprep.mubr.f32.mxu0 0.0
      %3483 = vmatmul.mubr.f32.gmra.mrb[0].mxu0 %v3246
      %v3484 = vpop.f32.mrb[0].mxu0
      %v3485 = vadd.f32 0.0, %v3484
      %v3486 = vpop.f32.mrb[0].mxu0
      %3487 = vmatprep.mubr.f32.mxu0 0.0
      %3488 = vmatmul.mubr.f32.gmra.mrb[0].mxu0 %v3247
      %v3489 = vpop.f32.mrb[0].mxu0
      %v3490 = vadd.f32 0.0, %v3489
      %v3491 = vpop.f32.mrb[0].mxu0
      %3492 = vmatprep.mubr.f32.mxu0 0.0
      %3493 = vmatmul.mubr.f32.gmra.mrb[0].mxu0 %v3248
      %v3494 = vpop.f32.mrb[0].mxu0
      %v3495 = vadd.f32 0.0, %v3494
      %v3496 = vpop.f32.mrb[0].mxu0
      %3497 = vmatprep.mubr.f32.mxu0 0.0
      %3498 = vmatmul.mubr.f32.gmra.mrb[0].mxu0 %v3249
      %v3499 = vpop.f32.mrb[0].mxu0
      %v3500 = vadd.f32 0.0, %v3499
      %v3501 = vpop.f32.mrb[0].mxu0
      %3502 = vmatprep.mubr.f32.mxu0 0.0
      %3503 = vmatmul.mubr.f32.gmra.mrb[0].mxu0 %v3250
      %v3504 = vpop.f32.mrb[0].mxu0
      %v3505 = vadd.f32 0.0, %v3504
      %v3506 = vpop.f32.mrb[0].mxu0
      %3507 = vmatprep.mubr.f32.mxu0 0.0
      %3508 = vmatmul.mubr.f32.gmra.mrb[0].mxu0 %v3251
      %v3509 = vpop.f32.mrb[0].mxu0
      %v3510 = vadd.f32 0.0, %v3509
      %v3511 = vpop.f32.mrb[0].mxu0
      %3512 = vmatprep.mubr.f32.mxu0 0.0
      %3513 = vmatmul.mubr.f32.gmra.mrb[0].mxu0 %v3252
      %v3514 = vpop.f32.mrb[0].mxu0
      %v3515 = vadd.f32 0.0, %v3514
      %v3516 = vpop.f32.mrb[0].mxu0
      %3517 = vmatprep.mubr.f32.mxu0 0.0
      %3518 = vmatmul.mubr.f32.gmra.mrb[0].mxu0 %v3253
      %v3519 = vpop.f32.mrb[0].mxu0
      %v3520 = vadd.f32 0.0, %v3519
      %v3521 = vpop.f32.mrb[0].mxu0
      %3522 = vmatprep.mubr.f32.mxu0 0.0
      %3523 = vmatmul.mubr.f32.gmra.mrb[0].mxu0 %v3254
      %v3524 = vpop.f32.mrb[0].mxu0
      %v3525 = vadd.f32 0.0, %v3524
      %v3526 = vpop.f32.mrb[0].mxu0
      %3527 = vmatprep.mubr.f32.mxu0 0.0
      %3528 = vmatmul.mubr.f32.gmra.mrb[0].mxu0 %v3255
      %v3529 = vpop.f32.mrb[0].mxu0
      %v3530 = vadd.f32 0.0, %v3529
      %v3531 = vpop.f32.mrb[0].mxu0
      %3532 = vmatprep.mubr.f32.mxu0 0.0
      %3533 = vmatmul.mubr.f32.gmra.mrb[0].mxu0 %v3256
      %v3534 = vpop.f32.mrb[0].mxu0
      %v3535 = vpop.f32.mrb[0].mxu0
      %3536 = vmatprep.mubr.f32.mxu0 0.0
      %3537 = vmatmul.mubr.f32.gmra.mrb[0].mxu0 %v3257
      %v3538 = vpop.f32.mrb[0].mxu0
      %v3539 = vpop.f32.mrb[0].mxu0
      %3540 = vdwg.mxu0
      %v3541 = vadd.f32 %v3180, %v3350
      %v3542 = vadd.f32 %v3181, %v3355
      %v3543 = vadd.f32 %v3182, %v3360
      %v3544 = vadd.f32 %v3183, %v3365
      %v3545 = vadd.f32 %v3184, %v3370
      %v3546 = vadd.f32 %v3185, %v3375
      %v3547 = vadd.f32 %v3186, %v3380
      %v3548 = vadd.f32 %v3187, %v3385
      %v3549 = vadd.f32 %v3188, %v3390
      %v3550 = vadd.f32 %v3189, %v3395
      %v3551 = vadd.f32 %v3190, %v3400
      %v3552 = vadd.f32 %v3191, %v3405
      %v3553 = vadd.f32 %v3192, %v3410
      %v3554 = vadd.f32 %v3193, %v3415
      %v3555 = vadd.f32 %v3194, %v3420
      %v3556 = vadd.f32 %v3195, %v3425
      %v3557 = vadd.f32 %v3196, %v3430
      %v3558 = vadd.f32 %v3197, %v3435
      %v3559 = vadd.f32 %v3198, %v3440
      %v3560 = vadd.f32 %v3199, %v3445
      %v3561 = vadd.f32 %v3200, %v3450
      %v3562 = vadd.f32 %v3201, %v3455
      %v3563 = vadd.f32 %v3202, %v3460
      %v3564 = vadd.f32 %v3203, %v3465
      %v3565 = vadd.f32 %v3204, %v3470
      %v3566 = vadd.f32 %v3205, %v3475
      %v3567 = vadd.f32 %v3206, %v3480
      %v3568 = vadd.f32 %v3207, %v3485
      %v3569 = vadd.f32 %v3208, %v3490
      %v3570 = vadd.f32 %v3209, %v3495
      %v3571 = vadd.f32 %v3210, %v3500
      %v3572 = vadd.f32 %v3211, %v3505
      %v3573 = vadd.f32 %v3212, %v3510
      %v3574 = vadd.f32 %v3213, %v3515
      %v3575 = vadd.f32 %v3214, %v3520
      %v3576 = vadd.f32 %v3215, %v3525
      %v3577 = vadd.f32 %v3216, %v3530
      %v3578 = vld [vmem:[%s2] sm:$0x1]
      %v3580 = vlaneseq
      %v3581 = vshrl.u32 %v3580, 7
      %v3582 = vsub.s32 0, %v3581
      %v3583 = vrot.slane %v3578, %v3582
      %v3585 = vmul.f32 %v3541, %v3583
      %v3586 = vmul.f32 %v3542, %v3583
      %v3587 = vmul.f32 %v3543, %v3583
      %v3588 = vmul.f32 %v3544, %v3583
      %v3589 = vmul.f32 %v3545, %v3583
      %v3590 = vmul.f32 %v3546, %v3583
      %v3591 = vmul.f32 %v3547, %v3583
      %v3592 = vmul.f32 %v3548, %v3583
      %v3593 = vmul.f32 %v3549, %v3583
      %v3594 = vmul.f32 %v3550, %v3583
      %v3595 = vmul.f32 %v3551, %v3583
      %v3596 = vmul.f32 %v3552, %v3583
      %v3597 = vmul.f32 %v3553, %v3583
      %v3598 = vmul.f32 %v3554, %v3583
      %v3599 = vmul.f32 %v3555, %v3583
      %v3600 = vmul.f32 %v3556, %v3583
      %v3601 = vmul.f32 %v3557, %v3583
      %v3602 = vmul.f32 %v3558, %v3583
      %v3603 = vmul.f32 %v3559, %v3583
      %v3604 = vmul.f32 %v3560, %v3583
      %v3605 = vmul.f32 %v3561, %v3583
      %v3606 = vmul.f32 %v3562, %v3583
      %v3607 = vmul.f32 %v3563, %v3583
      %v3608 = vmul.f32 %v3564, %v3583
      %v3609 = vmul.f32 %v3565, %v3583
      %v3610 = vmul.f32 %v3566, %v3583
      %v3611 = vmul.f32 %v3567, %v3583
      %v3612 = vmul.f32 %v3568, %v3583
      %v3613 = vmul.f32 %v3569, %v3583
      %v3614 = vmul.f32 %v3570, %v3583
      %v3615 = vmul.f32 %v3571, %v3583
      %v3616 = vmul.f32 %v3572, %v3583
      %v3617 = vmul.f32 %v3573, %v3583
      %v3618 = vmul.f32 %v3574, %v3583
      %v3619 = vmul.f32 %v3575, %v3583
      %v3620 = vmul.f32 %v3576, %v3583
      %v3621 = vmul.f32 %v3577, %v3583
      %v3622 = vld [vmem:[%s3] sm:$0x1]
      %v3624 = vlaneseq
      %v3625 = vshrl.u32 %v3624, 7
      %v3626 = vsub.s32 0, %v3625
      %v3627 = vrot.slane %v3622, %v3626
      %v3629 = vadd.f32 %v3585, %v3627
      %v3630 = vadd.f32 %v3586, %v3627
      %v3631 = vadd.f32 %v3587, %v3627
      %v3632 = vadd.f32 %v3588, %v3627
      %v3633 = vadd.f32 %v3589, %v3627
      %v3634 = vadd.f32 %v3590, %v3627
      %v3635 = vadd.f32 %v3591, %v3627
      %v3636 = vadd.f32 %v3592, %v3627
      %v3637 = vadd.f32 %v3593, %v3627
      %v3638 = vadd.f32 %v3594, %v3627
      %v3639 = vadd.f32 %v3595, %v3627
      %v3640 = vadd.f32 %v3596, %v3627
      %v3641 = vadd.f32 %v3597, %v3627
      %v3642 = vadd.f32 %v3598, %v3627
      %v3643 = vadd.f32 %v3599, %v3627
      %v3644 = vadd.f32 %v3600, %v3627
      %v3645 = vadd.f32 %v3601, %v3627
      %v3646 = vadd.f32 %v3602, %v3627
      %v3647 = vadd.f32 %v3603, %v3627
      %v3648 = vadd.f32 %v3604, %v3627
      %v3649 = vadd.f32 %v3605, %v3627
      %v3650 = vadd.f32 %v3606, %v3627
      %v3651 = vadd.f32 %v3607, %v3627
      %v3652 = vadd.f32 %v3608, %v3627
      %v3653 = vadd.f32 %v3609, %v3627
      %v3654 = vadd.f32 %v3610, %v3627
      %v3655 = vadd.f32 %v3611, %v3627
      %v3656 = vadd.f32 %v3612, %v3627
      %v3657 = vadd.f32 %v3613, %v3627
      %v3658 = vadd.f32 %v3614, %v3627
      %v3659 = vadd.f32 %v3615, %v3627
      %v3660 = vadd.f32 %v3616, %v3627
      %v3661 = vadd.f32 %v3617, %v3627
      %v3662 = vadd.f32 %v3618, %v3627
      %v3663 = vadd.f32 %v3619, %v3627
      %v3664 = vadd.f32 %v3620, %v3627
      %v3665 = vadd.f32 %v3621, %v3627
      %v3666 = vmax.f32 %v3629, 0.0
      %v3667 = vmax.f32 %v3630, 0.0
      %v3668 = vmax.f32 %v3631, 0.0
      %v3669 = vmax.f32 %v3632, 0.0
      %v3670 = vmax.f32 %v3633, 0.0
      %v3671 = vmax.f32 %v3634, 0.0
      %v3672 = vmax.f32 %v3635, 0.0
      %v3673 = vmax.f32 %v3636, 0.0
      %v3674 = vmax.f32 %v3637, 0.0
      %v3675 = vmax.f32 %v3638, 0.0
      %v3676 = vmax.f32 %v3639, 0.0
      %v3677 = vmax.f32 %v3640, 0.0
      %v3678 = vmax.f32 %v3641, 0.0
      %v3679 = vmax.f32 %v3642, 0.0
      %v3680 = vmax.f32 %v3643, 0.0
      %v3681 = vmax.f32 %v3644, 0.0
      %v3682 = vmax.f32 %v3645, 0.0
      %v3683 = vmax.f32 %v3646, 0.0
      %v3684 = vmax.f32 %v3647, 0.0
      %v3685 = vmax.f32 %v3648, 0.0
      %v3686 = vmax.f32 %v3649, 0.0
      %v3687 = vmax.f32 %v3650, 0.0
      %v3688 = vmax.f32 %v3651, 0.0
      %v3689 = vmax.f32 %v3652, 0.0
      %v3690 = vmax.f32 %v3653, 0.0
      %v3691 = vmax.f32 %v3654, 0.0
      %v3692 = vmax.f32 %v3655, 0.0
      %v3693 = vmax.f32 %v3656, 0.0
      %v3694 = vmax.f32 %v3657, 0.0
      %v3695 = vmax.f32 %v3658, 0.0
      %v3696 = vmax.f32 %v3659, 0.0
      %v3697 = vmax.f32 %v3660, 0.0
      %v3698 = vmax.f32 %v3661, 0.0
      %v3699 = vmax.f32 %v3662, 0.0
      %v3700 = vmax.f32 %v3663, 0.0
      %v3701 = vmax.f32 %v3664, 0.0
      %v3702 = vmax.f32 %v3665, 0.0
      %3703 = vst [vmem:[#allocation3] sm:$0xff] 0.0
      %3704 = vst [vmem:[#allocation3 + $0x8] sm:$0xff] 0.0
      %3705 = vst [vmem:[#allocation3 + $0x10] sm:$0xff] 0.0
      %3706 = vst [vmem:[#allocation3 + $0x18] sm:$0xff] 0.0
      %3707 = vst [vmem:[#allocation3 + $0x20] sm:$0xff] 0.0
      %3708 = vst [vmem:[#allocation3 + $0x28] sm:$0xff] 0.0
      %3709 = vst [vmem:[#allocation3 + $0x30] sm:$0xff] 0.0
      %3710 = vst [vmem:[#allocation3 + $0x38] sm:$0xff] 0.0
      %3711 = vst [vmem:[#allocation3 + $0x40] sm:$0xff] 0.0
      %3712 = vst [vmem:[#allocation3 + $0x48] sm:$0xff] 0.0
      %3713 = vst [vmem:[#allocation3 + $0x50] sm:$0xff] 0.0
      %3714 = vst [vmem:[#allocation3 + $0x58] sm:$0xff] 0.0
      %3715 = vst [vmem:[#allocation3 + $0x60] sm:$0xff] 0.0
      %3716 = vst [vmem:[#allocation3 + $0x68] sm:$0xff] 0.0
      %3717 = vst [vmem:[#allocation3 + $0x70] sm:$0xff] 0.0
      %3718 = vst [vmem:[#allocation3 + $0x78] sm:$0xff] 0.0
      %3719 = vst [vmem:[#allocation3 + $0x80] sm:$0xff] 0.0
      %3720 = vst [vmem:[#allocation3 + $0x88] sm:$0xff] 0.0
      %3721 = vst [vmem:[#allocation3 + $0x90] sm:$0xff] 0.0
      %3722 = vst [vmem:[#allocation3 + $0x98] sm:$0xff] 0.0
      %3723 = vst [vmem:[#allocation3 + $0xa0] sm:$0xff] 0.0
      %3724 = vst [vmem:[#allocation3 + $0xa8] sm:$0xff] 0.0
      %3725 = vst [vmem:[#allocation3 + $0xb0] sm:$0xff] 0.0
      %3726 = vst [vmem:[#allocation3 + $0xb8] sm:$0xff] 0.0
      %3727 = vst [vmem:[#allocation3 + $0xc0] sm:$0xff] 0.0
      %3728 = vst [vmem:[#allocation3 + $0xc8] sm:$0xff] 0.0
      %3729 = vst [vmem:[#allocation3 + $0xd0] sm:$0xff] 0.0
      %3730 = vst [vmem:[#allocation3 + $0xd8] sm:$0xff] 0.0
      %3731 = vst [vmem:[#allocation3 + $0xe0] sm:$0xff] 0.0
      %3732 = vst [vmem:[#allocation3 + $0xe8] sm:$0xff] 0.0
      %3733 = vst [vmem:[#allocation3 + $0xf0] sm:$0xff] 0.0
      %3734 = vst [vmem:[#allocation3 + $0xf8] sm:$0xff] 0.0
      %3735 = vst [vmem:[#allocation3 + $0x100] sm:$0xff] 0.0
      %3736 = vst [vmem:[#allocation3 + $0x108] sm:$0xff] 0.0
      %3737 = vst [vmem:[#allocation3 + $0x110] sm:$0xff] 0.0
      %3738 = vst [vmem:[#allocation3 + $0x118] sm:$0xff] 0.0
      %3739 = vst [vmem:[#allocation3 + $0x120] sm:$0xff] 0.0
      %3740 = vst [vmem:[#allocation3 + $0x128] sm:$0xff] 0.0
      %3741 = vst [vmem:[#allocation3 + $0x130] sm:$0xff] 0.0
      %3742 = vst [vmem:[#allocation3 + $0x138] sm:$0xff] 0.0
      %3743 = vst [vmem:[#allocation3 + $0x140] sm:$0xff] 0.0
      %3744 = vst [vmem:[#allocation3 + $0x148] sm:$0xff] 0.0
      %3745 = vst [vmem:[#allocation3 + $0x150] sm:$0xff] 0.0
      %3746 = vst [vmem:[#allocation3 + $0x158] sm:$0xff] 0.0
      %3747 = vst [vmem:[#allocation3 + $0x160] sm:$0xff] 0.0
      %3748 = vst [vmem:[#allocation3 + $0x168] sm:$0x3] 0.0
      %3749 = vst [vmem:[#allocation3 + $0x23] sm:$0xf8] %v3666
      %3750 = vst [vmem:[#allocation3 + $0x2b] sm:$0xff] %v3667
      %3751 = vst [vmem:[#allocation3 + $0x33] sm:$0x7] %v3668
      %3752 = vst [vmem:[#allocation3 + $0x33] sm:$0xe0] %v3668
      %3753 = vst [vmem:[#allocation3 + $0x3b] sm:$0xff] %v3669
      %3754 = vst [vmem:[#allocation3 + $0x43] sm:$0x1f] %v3670
      %3755 = vst [vmem:[#allocation3 + $0x43] sm:$0x80] %v3670
      %3756 = vst [vmem:[#allocation3 + $0x4b] sm:$0xff] %v3671
      %3757 = vst [vmem:[#allocation3 + $0x53] sm:$0x7f] %v3672
      %3758 = vst [vmem:[#allocation3 + $0x5b] sm:$0xfe] %v3673
      %3759 = vst [vmem:[#allocation3 + $0x63] sm:$0xff] %v3674
      %3760 = vst [vmem:[#allocation3 + $0x6b] sm:$0x1] %v3675
      %3761 = vst [vmem:[#allocation3 + $0x6b] sm:$0xf8] %v3675
      %3762 = vst [vmem:[#allocation3 + $0x73] sm:$0xff] %v3676
      %3763 = vst [vmem:[#allocation3 + $0x7b] sm:$0x7] %v3677
      %3764 = vst [vmem:[#allocation3 + $0x7b] sm:$0xe0] %v3677
      %3765 = vst [vmem:[#allocation3 + $0x83] sm:$0xff] %v3678
      %3766 = vst [vmem:[#allocation3 + $0x8b] sm:$0x1f] %v3679
      %3767 = vst [vmem:[#allocation3 + $0x8b] sm:$0x80] %v3679
      %3768 = vst [vmem:[#allocation3 + $0x93] sm:$0xff] %v3680
      %3769 = vst [vmem:[#allocation3 + $0x9b] sm:$0x7f] %v3681
      %3770 = vst [vmem:[#allocation3 + $0xa3] sm:$0xfe] %v3682
      %3771 = vst [vmem:[#allocation3 + $0xab] sm:$0xff] %v3683
      %3772 = vst [vmem:[#allocation3 + $0xb3] sm:$0x1] %v3684
      %3773 = vst [vmem:[#allocation3 + $0xb3] sm:$0xf8] %v3684
      %3774 = vst [vmem:[#allocation3 + $0xbb] sm:$0xff] %v3685
      %3775 = vst [vmem:[#allocation3 + $0xc3] sm:$0x7] %v3686
      %3776 = vst [vmem:[#allocation3 + $0xc3] sm:$0xe0] %v3686
      %3777 = vst [vmem:[#allocation3 + $0xcb] sm:$0xff] %v3687
      %3778 = vst [vmem:[#allocation3 + $0xd3] sm:$0x1f] %v3688
      %3779 = vst [vmem:[#allocation3 + $0xd3] sm:$0x80] %v3688
      %3780 = vst [vmem:[#allocation3 + $0xdb] sm:$0xff] %v3689
      %3781 = vst [vmem:[#allocation3 + $0xe3] sm:$0x7f] %v3690
      %3782 = vst [vmem:[#allocation3 + $0xeb] sm:$0xfe] %v3691
      %3783 = vst [vmem:[#allocation3 + $0xf3] sm:$0xff] %v3692
      %3784 = vst [vmem:[#allocation3 + $0xfb] sm:$0x1] %v3693
      %3785 = vst [vmem:[#allocation3 + $0xfb] sm:$0xf8] %v3693
      %3786 = vst [vmem:[#allocation3 + $0x103] sm:$0xff] %v3694
      %3787 = vst [vmem:[#allocation3 + $0x10b] sm:$0x7] %v3695
      %3788 = vst [vmem:[#allocation3 + $0x10b] sm:$0xe0] %v3695
      %3789 = vst [vmem:[#allocation3 + $0x113] sm:$0xff] %v3696
      %3790 = vst [vmem:[#allocation3 + $0x11b] sm:$0x1f] %v3697
      %3791 = vst [vmem:[#allocation3 + $0x11b] sm:$0x80] %v3697
      %3792 = vst [vmem:[#allocation3 + $0x123] sm:$0xff] %v3698
      %3793 = vst [vmem:[#allocation3 + $0x12b] sm:$0x7f] %v3699
      %3794 = vst [vmem:[#allocation3 + $0x133] sm:$0xfe] %v3700
      %3795 = vst [vmem:[#allocation3 + $0x13b] sm:$0xff] %v3701
      %3796 = vst [vmem:[#allocation3 + $0x143] sm:$0x1] %v3702
      %v3797 = vld [vmem:[#allocation3] sm:$0xff]
      %v3798 = vld [vmem:[#allocation3 + $0x8] sm:$0xff]
      %v3799 = vld [vmem:[#allocation3 + $0x10] sm:$0xff]
      %v3800 = vld [vmem:[#allocation3 + $0x18] sm:$0xff]
      %v3801 = vld [vmem:[#allocation3 + $0x20] sm:$0xff]
      %v3802 = vld [vmem:[#allocation3 + $0x28] sm:$0xff]
      %v3803 = vld [vmem:[#allocation3 + $0x30] sm:$0xff]
      %v3804 = vld [vmem:[#allocation3 + $0x38] sm:$0xff]
      %v3805 = vld [vmem:[#allocation3 + $0x40] sm:$0xff]
      %v3806 = vld [vmem:[#allocation3 + $0x48] sm:$0xff]
      %v3807 = vld [vmem:[#allocation3 + $0x50] sm:$0xff]
      %v3808 = vld [vmem:[#allocation3 + $0x58] sm:$0xff]
      %v3809 = vld [vmem:[#allocation3 + $0x60] sm:$0xff]
      %v3810 = vld [vmem:[#allocation3 + $0x68] sm:$0xff]
      %v3811 = vld [vmem:[#allocation3 + $0x70] sm:$0xff]
      %v3812 = vld [vmem:[#allocation3 + $0x78] sm:$0xff]
      %v3813 = vld [vmem:[#allocation3 + $0x80] sm:$0xff]
      %v3814 = vld [vmem:[#allocation3 + $0x88] sm:$0xff]
      %v3815 = vld [vmem:[#allocation3 + $0x90] sm:$0xff]
      %v3816 = vld [vmem:[#allocation3 + $0x98] sm:$0xff]
      %v3817 = vld [vmem:[#allocation3 + $0xa0] sm:$0xff]
      %v3818 = vld [vmem:[#allocation3 + $0xa8] sm:$0xff]
      %v3819 = vld [vmem:[#allocation3 + $0xb0] sm:$0xff]
      %v3820 = vld [vmem:[#allocation3 + $0xb8] sm:$0xff]
      %v3821 = vld [vmem:[#allocation3 + $0xc0] sm:$0xff]
      %v3822 = vld [vmem:[#allocation3 + $0xc8] sm:$0xff]
      %v3823 = vld [vmem:[#allocation3 + $0xd0] sm:$0xff]
      %v3824 = vld [vmem:[#allocation3 + $0xd8] sm:$0xff]
      %v3825 = vld [vmem:[#allocation3 + $0xe0] sm:$0xff]
      %v3826 = vld [vmem:[#allocation3 + $0xe8] sm:$0xff]
      %v3827 = vld [vmem:[#allocation3 + $0xf0] sm:$0xff]
      %v3828 = vld [vmem:[#allocation3 + $0xf8] sm:$0xff]
      %v3829 = vld [vmem:[#allocation3 + $0x100] sm:$0xff]
      %v3830 = vld [vmem:[#allocation3 + $0x108] sm:$0xff]
      %v3831 = vld [vmem:[#allocation3 + $0x110] sm:$0xff]
      %v3832 = vld [vmem:[#allocation3 + $0x118] sm:$0xff]
      %v3833 = vld [vmem:[#allocation3 + $0x120] sm:$0xff]
      %v3834 = vld [vmem:[#allocation3 + $0x128] sm:$0xff]
      %v3835 = vld [vmem:[#allocation3 + $0x130] sm:$0xff]
      %v3836 = vld [vmem:[#allocation3 + $0x138] sm:$0xff]
      %v3837 = vld [vmem:[#allocation3 + $0x140] sm:$0xf]
      %v3838 = vld [vmem:[%s4] sm:$0xff]
      %v3839 = vld [vmem:[%s4 + $0x8] sm:$0xff]
      %v3840 = vld [vmem:[%s4 + $0x10] sm:$0xff]
      %v3841 = vld [vmem:[%s4 + $0x18] sm:$0xff]
      %v3842 = vld [vmem:[%s4 + $0x20] sm:$0xff]
      %v3843 = vld [vmem:[%s4 + $0x28] sm:$0xff]
      %v3844 = vld [vmem:[%s4 + $0x30] sm:$0xff]
      %v3845 = vld [vmem:[%s4 + $0x38] sm:$0xff]
      %v3846 = vld [vmem:[%s4 + $0x40] sm:$0xff]
      %v3847 = vld [vmem:[%s4 + $0x48] sm:$0xff]
      %v3848 = vld [vmem:[%s4 + $0x50] sm:$0xff]
      %v3849 = vld [vmem:[%s4 + $0x58] sm:$0xff]
      %v3850 = vld [vmem:[%s4 + $0x60] sm:$0xff]
      %v3851 = vld [vmem:[%s4 + $0x68] sm:$0xff]
      %v3852 = vld [vmem:[%s4 + $0x70] sm:$0xff]
      %v3853 = vld [vmem:[%s4 + $0x78] sm:$0xff]
      %v3854 = vld [vmem:[#allocation3 + $0x1] sm:$0xff]
      %v3855 = vld [vmem:[#allocation3 + $0x9] sm:$0xff]
      %v3856 = vld [vmem:[#allocation3 + $0x11] sm:$0xff]
      %v3857 = vld [vmem:[#allocation3 + $0x19] sm:$0xff]
      %v3858 = vld [vmem:[#allocation3 + $0x21] sm:$0xff]
      %v3859 = vld [vmem:[#allocation3 + $0x29] sm:$0xff]
      %v3860 = vld [vmem:[#allocation3 + $0x31] sm:$0xff]
      %v3861 = vld [vmem:[#allocation3 + $0x39] sm:$0xff]
      %v3862 = vld [vmem:[#allocation3 + $0x41] sm:$0xff]
      %v3863 = vld [vmem:[#allocation3 + $0x49] sm:$0xff]
      %v3864 = vld [vmem:[#allocation3 + $0x51] sm:$0xff]
      %v3865 = vld [vmem:[#allocation3 + $0x59] sm:$0xff]
      %v3866 = vld [vmem:[#allocation3 + $0x61] sm:$0xff]
      %v3867 = vld [vmem:[#allocation3 + $0x69] sm:$0xff]
      %v3868 = vld [vmem:[#allocation3 + $0x71] sm:$0xff]
      %v3869 = vld [vmem:[#allocation3 + $0x79] sm:$0xff]
      %v3870 = vld [vmem:[#allocation3 + $0x81] sm:$0xff]
      %v3871 = vld [vmem:[#allocation3 + $0x89] sm:$0xff]
      %v3872 = vld [vmem:[#allocation3 + $0x91] sm:$0xff]
      %v3873 = vld [vmem:[#allocation3 + $0x99] sm:$0xff]
      %v3874 = vld [vmem:[#allocation3 + $0xa1] sm:$0xff]
      %v3875 = vld [vmem:[#allocation3 + $0xa9] sm:$0xff]
      %v3876 = vld [vmem:[#allocation3 + $0xb1] sm:$0xff]
      %v3877 = vld [vmem:[#allocation3 + $0xb9] sm:$0xff]
      %v3878 = vld [vmem:[#allocation3 + $0xc1] sm:$0xff]
      %v3879 = vld [vmem:[#allocation3 + $0xc9] sm:$0xff]
      %v3880 = vld [vmem:[#allocation3 + $0xd1] sm:$0xff]
      %v3881 = vld [vmem:[#allocation3 + $0xd9] sm:$0xff]
      %v3882 = vld [vmem:[#allocation3 + $0xe1] sm:$0xff]
      %v3883 = vld [vmem:[#allocation3 + $0xe9] sm:$0xff]
      %v3884 = vld [vmem:[#allocation3 + $0xf1] sm:$0xff]
      %v3885 = vld [vmem:[#allocation3 + $0xf9] sm:$0xff]
      %v3886 = vld [vmem:[#allocation3 + $0x101] sm:$0xff]
      %v3887 = vld [vmem:[#allocation3 + $0x109] sm:$0xff]
      %v3888 = vld [vmem:[#allocation3 + $0x111] sm:$0xff]
      %v3889 = vld [vmem:[#allocation3 + $0x119] sm:$0xff]
      %v3890 = vld [vmem:[#allocation3 + $0x121] sm:$0xff]
      %v3891 = vld [vmem:[#allocation3 + $0x129] sm:$0xff]
      %v3892 = vld [vmem:[#allocation3 + $0x131] sm:$0xff]
      %v3893 = vld [vmem:[#allocation3 + $0x139] sm:$0xff]
      %v3894 = vld [vmem:[#allocation3 + $0x141] sm:$0xf]
      %s3895 = scalar_lea.vmem %s4, 128
      %v3896 = vld [vmem:[%s3895] sm:$0xff]
      %v3897 = vld [vmem:[%s3895 + $0x8] sm:$0xff]
      %v3898 = vld [vmem:[%s3895 + $0x10] sm:$0xff]
      %v3899 = vld [vmem:[%s3895 + $0x18] sm:$0xff]
      %v3900 = vld [vmem:[%s3895 + $0x20] sm:$0xff]
      %v3901 = vld [vmem:[%s3895 + $0x28] sm:$0xff]
      %v3902 = vld [vmem:[%s3895 + $0x30] sm:$0xff]
      %v3903 = vld [vmem:[%s3895 + $0x38] sm:$0xff]
      %v3904 = vld [vmem:[%s3895 + $0x40] sm:$0xff]
      %v3905 = vld [vmem:[%s3895 + $0x48] sm:$0xff]
      %v3906 = vld [vmem:[%s3895 + $0x50] sm:$0xff]
      %v3907 = vld [vmem:[%s3895 + $0x58] sm:$0xff]
      %v3908 = vld [vmem:[%s3895 + $0x60] sm:$0xff]
      %v3909 = vld [vmem:[%s3895 + $0x68] sm:$0xff]
      %v3910 = vld [vmem:[%s3895 + $0x70] sm:$0xff]
      %v3911 = vld [vmem:[%s3895 + $0x78] sm:$0xff]
      %3912 = vmatprep.subr.mxu0 0.0
      %3913 = vmatpush1.msra.mxu0 %v3896
      %3914 = vmatprep.subr.mxu0 0.0
      %3915 = vmatpush1.msra.mxu0 %v3897
      %3916 = vmatprep.subr.mxu0 0.0
      %3917 = vmatpush1.msra.mxu0 %v3898
      %3918 = vmatprep.subr.mxu0 0.0
      %3919 = vmatpush1.msra.mxu0 %v3899
      %3920 = vmatprep.subr.mxu0 0.0
      %3921 = vmatpush1.msra.mxu0 %v3900
      %3922 = vmatprep.subr.mxu0 0.0
      %3923 = vmatpush1.msra.mxu0 %v3901
      %3924 = vmatprep.subr.mxu0 0.0
      %3925 = vmatpush1.msra.mxu0 %v3902
      %3926 = vmatprep.subr.mxu0 0.0
      %3927 = vmatpush1.msra.mxu0 %v3903
      %3928 = vmatprep.subr.mxu0 0.0
      %3929 = vmatpush1.msra.mxu0 %v3904
      %3930 = vmatprep.subr.mxu0 0.0
      %3931 = vmatpush1.msra.mxu0 %v3905
      %3932 = vmatprep.subr.mxu0 0.0
      %3933 = vmatpush1.msra.mxu0 %v3906
      %3934 = vmatprep.subr.mxu0 0.0
      %3935 = vmatpush1.msra.mxu0 %v3907
      %3936 = vmatprep.subr.mxu0 0.0
      %3937 = vmatpush1.msra.mxu0 %v3908
      %3938 = vmatprep.subr.mxu0 0.0
      %3939 = vmatpush1.msra.mxu0 %v3909
      %3940 = vmatprep.subr.mxu0 0.0
      %3941 = vmatpush1.msra.mxu0 %v3910
      %3942 = vmatprep.subr.mxu0 0.0
      %3943 = vmatpush1.msra.mxu0 %v3911
      %3944 = vmatprep.subr.mxu0 0.0
      %3945 = vmatpush1.msra.mxu0 0.0
      %3946 = vmatprep.subr.mxu0 0.0
      %3947 = vmatpush1.msra.mxu0 0.0
      %3948 = vmatprep.subr.mxu0 0.0
      %3949 = vmatpush1.msra.mxu0 0.0
      %3950 = vmatprep.subr.mxu0 0.0
      %3951 = vmatpush1.msra.mxu0 0.0
      %3952 = vmatprep.subr.mxu0 0.0
      %3953 = vmatpush1.msra.mxu0 0.0
      %3954 = vmatprep.subr.mxu0 0.0
      %3955 = vmatpush1.msra.mxu0 0.0
      %3956 = vmatprep.subr.mxu0 0.0
      %3957 = vmatpush1.msra.mxu0 0.0
      %3958 = vmatprep.subr.mxu0 0.0
      %3959 = vmatpush1.msra.mxu0 0.0
      %3960 = vmatprep.subr.mxu0 0.0
      %3961 = vmatpush1.msra.mxu0 0.0
      %3962 = vmatprep.subr.mxu0 0.0
      %3963 = vmatpush1.msra.mxu0 0.0
      %3964 = vmatprep.subr.mxu0 0.0
      %3965 = vmatpush1.msra.mxu0 0.0
      %3966 = vmatprep.subr.mxu0 0.0
      %3967 = vmatpush1.msra.mxu0 0.0
      %3968 = vmatprep.subr.mxu0 0.0
      %3969 = vmatpush1.msra.mxu0 0.0
      %3970 = vmatprep.subr.mxu0 0.0
      %3971 = vmatpush1.msra.mxu0 0.0
      %3972 = vmatprep.subr.mxu0 0.0
      %3973 = vmatpush1.msra.mxu0 0.0
      %3974 = vmatprep.subr.mxu0 0.0
      %3975 = vmatpush1.msra.mxu0 0.0
      %3976 = vmatprep.mubr.f32.mxu0 0.0
      %3977 = vmatmul.mubr.f32.gmra.mrb[0].mxu0 %v3854
      %v3978 = vpop.f32.mrb[0].mxu0
      %v3979 = vpop.f32.mrb[0].mxu0
      %3980 = vmatprep.mubr.f32.mxu0 0.0
      %3981 = vmatmul.mubr.f32.gmra.mrb[0].mxu0 %v3855
      %v3982 = vpop.f32.mrb[0].mxu0
      %v3983 = vpop.f32.mrb[0].mxu0
      %3984 = vmatprep.mubr.f32.mxu0 0.0
      %3985 = vmatmul.mubr.f32.gmra.mrb[0].mxu0 %v3856
      %v3986 = vpop.f32.mrb[0].mxu0
      %v3987 = vadd.f32 0.0, %v3986
      %v3988 = vpop.f32.mrb[0].mxu0
      %3989 = vmatprep.mubr.f32.mxu0 0.0
      %3990 = vmatmul.mubr.f32.gmra.mrb[0].mxu0 %v3857
      %v3991 = vpop.f32.mrb[0].mxu0
      %v3992 = vadd.f32 0.0, %v3991
      %v3993 = vpop.f32.mrb[0].mxu0
      %3994 = vmatprep.mubr.f32.mxu0 0.0
      %3995 = vmatmul.mubr.f32.gmra.mrb[0].mxu0 %v3858
      %v3996 = vpop.f32.mrb[0].mxu0
      %v3997 = vadd.f32 0.0, %v3996
      %v3998 = vpop.f32.mrb[0].mxu0
      %3999 = vmatprep.mubr.f32.mxu0 0.0
      %4000 = vmatmul.mubr.f32.gmra.mrb[0].mxu0 %v3859
      %v4001 = vpop.f32.mrb[0].mxu0
      %v4002 = vadd.f32 0.0, %v4001
      %v4003 = vpop.f32.mrb[0].mxu0
      %4004 = vmatprep.mubr.f32.mxu0 0.0
      %4005 = vmatmul.mubr.f32.gmra.mrb[0].mxu0 %v3860
      %v4006 = vpop.f32.mrb[0].mxu0
      %v4007 = vadd.f32 0.0, %v4006
      %v4008 = vpop.f32.mrb[0].mxu0
      %4009 = vmatprep.mubr.f32.mxu0 0.0
      %4010 = vmatmul.mubr.f32.gmra.mrb[0].mxu0 %v3861
      %v4011 = vpop.f32.mrb[0].mxu0
      %v4012 = vadd.f32 0.0, %v4011
      %v4013 = vpop.f32.mrb[0].mxu0
      %4014 = vmatprep.mubr.f32.mxu0 0.0
      %4015 = vmatmul.mubr.f32.gmra.mrb[0].mxu0 %v3862
      %v4016 = vpop.f32.mrb[0].mxu0
      %v4017 = vadd.f32 0.0, %v4016
      %v4018 = vpop.f32.mrb[0].mxu0
      %4019 = vmatprep.mubr.f32.mxu0 0.0
      %4020 = vmatmul.mubr.f32.gmra.mrb[0].mxu0 %v3863
      %v4021 = vpop.f32.mrb[0].mxu0
      %v4022 = vadd.f32 0.0, %v4021
      %v4023 = vpop.f32.mrb[0].mxu0
      %4024 = vmatprep.mubr.f32.mxu0 0.0
      %4025 = vmatmul.mubr.f32.gmra.mrb[0].mxu0 %v3864
      %v4026 = vpop.f32.mrb[0].mxu0
      %v4027 = vadd.f32 0.0, %v4026
      %v4028 = vpop.f32.mrb[0].mxu0
      %4029 = vmatprep.mubr.f32.mxu0 0.0
      %4030 = vmatmul.mubr.f32.gmra.mrb[0].mxu0 %v3865
      %v4031 = vpop.f32.mrb[0].mxu0
      %v4032 = vadd.f32 0.0, %v4031
      %v4033 = vpop.f32.mrb[0].mxu0
      %4034 = vmatprep.mubr.f32.mxu0 0.0
      %4035 = vmatmul.mubr.f32.gmra.mrb[0].mxu0 %v3866
      %v4036 = vpop.f32.mrb[0].mxu0
      %v4037 = vadd.f32 0.0, %v4036
      %v4038 = vpop.f32.mrb[0].mxu0
      %4039 = vmatprep.mubr.f32.mxu0 0.0
      %4040 = vmatmul.mubr.f32.gmra.mrb[0].mxu0 %v3867
      %v4041 = vpop.f32.mrb[0].mxu0
      %v4042 = vadd.f32 0.0, %v4041
      %v4043 = vpop.f32.mrb[0].mxu0
      %4044 = vmatprep.mubr.f32.mxu0 0.0
      %4045 = vmatmul.mubr.f32.gmra.mrb[0].mxu0 %v3868
      %v4046 = vpop.f32.mrb[0].mxu0
      %v4047 = vadd.f32 0.0, %v4046
      %v4048 = vpop.f32.mrb[0].mxu0
      %4049 = vmatprep.mubr.f32.mxu0 0.0
      %4050 = vmatmul.mubr.f32.gmra.mrb[0].mxu0 %v3869
      %v4051 = vpop.f32.mrb[0].mxu0
      %v4052 = vadd.f32 0.0, %v4051
      %v4053 = vpop.f32.mrb[0].mxu0
      %4054 = vmatprep.mubr.f32.mxu0 0.0
      %4055 = vmatmul.mubr.f32.gmra.mrb[0].mxu0 %v3870
      %v4056 = vpop.f32.mrb[0].mxu0
      %v4057 = vadd.f32 0.0, %v4056
      %v4058 = vpop.f32.mrb[0].mxu0
      %4059 = vmatprep.mubr.f32.mxu0 0.0
      %4060 = vmatmul.mubr.f32.gmra.mrb[0].mxu0 %v3871
      %v4061 = vpop.f32.mrb[0].mxu0
      %v4062 = vadd.f32 0.0, %v4061
      %v4063 = vpop.f32.mrb[0].mxu0
      %4064 = vmatprep.mubr.f32.mxu0 0.0
      %4065 = vmatmul.mubr.f32.gmra.mrb[0].mxu0 %v3872
      %v4066 = vpop.f32.mrb[0].mxu0
      %v4067 = vadd.f32 0.0, %v4066
      %v4068 = vpop.f32.mrb[0].mxu0
      %4069 = vmatprep.mubr.f32.mxu0 0.0
      %4070 = vmatmul.mubr.f32.gmra.mrb[0].mxu0 %v3873
      %v4071 = vpop.f32.mrb[0].mxu0
      %v4072 = vadd.f32 0.0, %v4071
      %v4073 = vpop.f32.mrb[0].mxu0
      %4074 = vmatprep.mubr.f32.mxu0 0.0
      %4075 = vmatmul.mubr.f32.gmra.mrb[0].mxu0 %v3874
      %v4076 = vpop.f32.mrb[0].mxu0
      %v4077 = vadd.f32 0.0, %v4076
      %v4078 = vpop.f32.mrb[0].mxu0
      %4079 = vmatprep.mubr.f32.mxu0 0.0
      %4080 = vmatmul.mubr.f32.gmra.mrb[0].mxu0 %v3875
      %v4081 = vpop.f32.mrb[0].mxu0
      %v4082 = vadd.f32 0.0, %v4081
      %v4083 = vpop.f32.mrb[0].mxu0
      %4084 = vmatprep.mubr.f32.mxu0 0.0
      %4085 = vmatmul.mubr.f32.gmra.mrb[0].mxu0 %v3876
      %v4086 = vpop.f32.mrb[0].mxu0
      %v4087 = vadd.f32 0.0, %v4086
      %v4088 = vpop.f32.mrb[0].mxu0
      %4089 = vmatprep.mubr.f32.mxu0 0.0
      %4090 = vmatmul.mubr.f32.gmra.mrb[0].mxu0 %v3877
      %v4091 = vpop.f32.mrb[0].mxu0
      %v4092 = vadd.f32 0.0, %v4091
      %v4093 = vpop.f32.mrb[0].mxu0
      %4094 = vmatprep.mubr.f32.mxu0 0.0
      %4095 = vmatmul.mubr.f32.gmra.mrb[0].mxu0 %v3878
      %v4096 = vpop.f32.mrb[0].mxu0
      %v4097 = vadd.f32 0.0, %v4096
      %v4098 = vpop.f32.mrb[0].mxu0
      %4099 = vmatprep.mubr.f32.mxu0 0.0
      %4100 = vmatmul.mubr.f32.gmra.mrb[0].mxu0 %v3879
      %v4101 = vpop.f32.mrb[0].mxu0
      %v4102 = vadd.f32 0.0, %v4101
      %v4103 = vpop.f32.mrb[0].mxu0
      %4104 = vmatprep.mubr.f32.mxu0 0.0
      %4105 = vmatmul.mubr.f32.gmra.mrb[0].mxu0 %v3880
      %v4106 = vpop.f32.mrb[0].mxu0
      %v4107 = vadd.f32 0.0, %v4106
      %v4108 = vpop.f32.mrb[0].mxu0
      %4109 = vmatprep.mubr.f32.mxu0 0.0
      %4110 = vmatmul.mubr.f32.gmra.mrb[0].mxu0 %v3881
      %v4111 = vpop.f32.mrb[0].mxu0
      %v4112 = vadd.f32 0.0, %v4111
      %v4113 = vpop.f32.mrb[0].mxu0
      %4114 = vmatprep.mubr.f32.mxu0 0.0
      %4115 = vmatmul.mubr.f32.gmra.mrb[0].mxu0 %v3882
      %v4116 = vpop.f32.mrb[0].mxu0
      %v4117 = vadd.f32 0.0, %v4116
      %v4118 = vpop.f32.mrb[0].mxu0
      %4119 = vmatprep.mubr.f32.mxu0 0.0
      %4120 = vmatmul.mubr.f32.gmra.mrb[0].mxu0 %v3883
      %v4121 = vpop.f32.mrb[0].mxu0
      %v4122 = vadd.f32 0.0, %v4121
      %v4123 = vpop.f32.mrb[0].mxu0
      %4124 = vmatprep.mubr.f32.mxu0 0.0
      %4125 = vmatmul.mubr.f32.gmra.mrb[0].mxu0 %v3884
      %v4126 = vpop.f32.mrb[0].mxu0
      %v4127 = vadd.f32 0.0, %v4126
      %v4128 = vpop.f32.mrb[0].mxu0
      %4129 = vmatprep.mubr.f32.mxu0 0.0
      %4130 = vmatmul.mubr.f32.gmra.mrb[0].mxu0 %v3885
      %v4131 = vpop.f32.mrb[0].mxu0
      %v4132 = vadd.f32 0.0, %v4131
      %v4133 = vpop.f32.mrb[0].mxu0
      %4134 = vmatprep.mubr.f32.mxu0 0.0
      %4135 = vmatmul.mubr.f32.gmra.mrb[0].mxu0 %v3886
      %v4136 = vpop.f32.mrb[0].mxu0
      %v4137 = vadd.f32 0.0, %v4136
      %v4138 = vpop.f32.mrb[0].mxu0
      %4139 = vmatprep.mubr.f32.mxu0 0.0
      %4140 = vmatmul.mubr.f32.gmra.mrb[0].mxu0 %v3887
      %v4141 = vpop.f32.mrb[0].mxu0
      %v4142 = vadd.f32 0.0, %v4141
      %v4143 = vpop.f32.mrb[0].mxu0
      %4144 = vmatprep.mubr.f32.mxu0 0.0
      %4145 = vmatmul.mubr.f32.gmra.mrb[0].mxu0 %v3888
      %v4146 = vpop.f32.mrb[0].mxu0
      %v4147 = vadd.f32 0.0, %v4146
      %v4148 = vpop.f32.mrb[0].mxu0
      %4149 = vmatprep.mubr.f32.mxu0 0.0
      %4150 = vmatmul.mubr.f32.gmra.mrb[0].mxu0 %v3889
      %v4151 = vpop.f32.mrb[0].mxu0
      %v4152 = vadd.f32 0.0, %v4151
      %v4153 = vpop.f32.mrb[0].mxu0
      %4154 = vmatprep.mubr.f32.mxu0 0.0
      %4155 = vmatmul.mubr.f32.gmra.mrb[0].mxu0 %v3890
      %v4156 = vpop.f32.mrb[0].mxu0
      %v4157 = vadd.f32 0.0, %v4156
      %v4158 = vpop.f32.mrb[0].mxu0
      %4159 = vmatprep.mubr.f32.mxu0 0.0
      %4160 = vmatmul.mubr.f32.gmra.mrb[0].mxu0 %v3891
      %v4161 = vpop.f32.mrb[0].mxu0
      %v4162 = vadd.f32 0.0, %v4161
      %v4163 = vpop.f32.mrb[0].mxu0
      %4164 = vmatprep.mubr.f32.mxu0 0.0
      %4165 = vmatmul.mubr.f32.gmra.mrb[0].mxu0 %v3892
      %v4166 = vpop.f32.mrb[0].mxu0
      %v4167 = vadd.f32 0.0, %v4166
      %v4168 = vpop.f32.mrb[0].mxu0
      %4169 = vmatprep.mubr.f32.mxu0 0.0
      %4170 = vmatmul.mubr.f32.gmra.mrb[0].mxu0 %v3893
      %v4171 = vpop.f32.mrb[0].mxu0
      %v4172 = vpop.f32.mrb[0].mxu0
      %4173 = vmatprep.mubr.f32.mxu0 0.0
      %4174 = vmatmul.mubr.f32.gmra.mrb[0].mxu0 %v3894
      %v4175 = vpop.f32.mrb[0].mxu0
      %v4176 = vpop.f32.mrb[0].mxu0
      %4177 = vdwg.mxu0
      %4178 = vmatprep.subr.mxu0 0.0
      %4179 = vmatpush1.msra.mxu0 %v3838
      %4180 = vmatprep.subr.mxu0 0.0
      %4181 = vmatpush1.msra.mxu0 %v3839
      %4182 = vmatprep.subr.mxu0 0.0
      %4183 = vmatpush1.msra.mxu0 %v3840
      %4184 = vmatprep.subr.mxu0 0.0
      %4185 = vmatpush1.msra.mxu0 %v3841
      %4186 = vmatprep.subr.mxu0 0.0
      %4187 = vmatpush1.msra.mxu0 %v3842
      %4188 = vmatprep.subr.mxu0 0.0
      %4189 = vmatpush1.msra.mxu0 %v3843
      %4190 = vmatprep.subr.mxu0 0.0
      %4191 = vmatpush1.msra.mxu0 %v3844
      %4192 = vmatprep.subr.mxu0 0.0
      %4193 = vmatpush1.msra.mxu0 %v3845
      %4194 = vmatprep.subr.mxu0 0.0
      %4195 = vmatpush1.msra.mxu0 %v3846
      %4196 = vmatprep.subr.mxu0 0.0
      %4197 = vmatpush1.msra.mxu0 %v3847
      %4198 = vmatprep.subr.mxu0 0.0
      %4199 = vmatpush1.msra.mxu0 %v3848
      %4200 = vmatprep.subr.mxu0 0.0
      %4201 = vmatpush1.msra.mxu0 %v3849
      %4202 = vmatprep.subr.mxu0 0.0
      %4203 = vmatpush1.msra.mxu0 %v3850
      %4204 = vmatprep.subr.mxu0 0.0
      %4205 = vmatpush1.msra.mxu0 %v3851
      %4206 = vmatprep.subr.mxu0 0.0
      %4207 = vmatpush1.msra.mxu0 %v3852
      %4208 = vmatprep.subr.mxu0 0.0
      %4209 = vmatpush1.msra.mxu0 %v3853
      %4210 = vmatprep.subr.mxu0 0.0
      %4211 = vmatpush1.msra.mxu0 0.0
      %4212 = vmatprep.subr.mxu0 0.0
      %4213 = vmatpush1.msra.mxu0 0.0
      %4214 = vmatprep.subr.mxu0 0.0
      %4215 = vmatpush1.msra.mxu0 0.0
      %4216 = vmatprep.subr.mxu0 0.0
      %4217 = vmatpush1.msra.mxu0 0.0
      %4218 = vmatprep.subr.mxu0 0.0
      %4219 = vmatpush1.msra.mxu0 0.0
      %4220 = vmatprep.subr.mxu0 0.0
      %4221 = vmatpush1.msra.mxu0 0.0
      %4222 = vmatprep.subr.mxu0 0.0
      %4223 = vmatpush1.msra.mxu0 0.0
      %4224 = vmatprep.subr.mxu0 0.0
      %4225 = vmatpush1.msra.mxu0 0.0
      %4226 = vmatprep.subr.mxu0 0.0
      %4227 = vmatpush1.msra.mxu0 0.0
      %4228 = vmatprep.subr.mxu0 0.0
      %4229 = vmatpush1.msra.mxu0 0.0
      %4230 = vmatprep.subr.mxu0 0.0
      %4231 = vmatpush1.msra.mxu0 0.0
      %4232 = vmatprep.subr.mxu0 0.0
      %4233 = vmatpush1.msra.mxu0 0.0
      %4234 = vmatprep.subr.mxu0 0.0
      %4235 = vmatpush1.msra.mxu0 0.0
      %4236 = vmatprep.subr.mxu0 0.0
      %4237 = vmatpush1.msra.mxu0 0.0
      %4238 = vmatprep.subr.mxu0 0.0
      %4239 = vmatpush1.msra.mxu0 0.0
      %4240 = vmatprep.subr.mxu0 0.0
      %4241 = vmatpush1.msra.mxu0 0.0
      %4242 = vmatprep.mubr.f32.mxu0 0.0
      %4243 = vmatmul.mubr.f32.gmra.mrb[0].mxu0 %v3797
      %v4244 = vpop.f32.mrb[0].mxu0
      %v4245 = vpop.f32.mrb[0].mxu0
      %4246 = vmatprep.mubr.f32.mxu0 0.0
      %4247 = vmatmul.mubr.f32.gmra.mrb[0].mxu0 %v3798
      %v4248 = vpop.f32.mrb[0].mxu0
      %v4249 = vpop.f32.mrb[0].mxu0
      %4250 = vmatprep.mubr.f32.mxu0 0.0
      %4251 = vmatmul.mubr.f32.gmra.mrb[0].mxu0 %v3799
      %v4252 = vpop.f32.mrb[0].mxu0
      %v4253 = vadd.f32 %v3987, %v4252
      %v4254 = vpop.f32.mrb[0].mxu0
      %4255 = vmatprep.mubr.f32.mxu0 0.0
      %4256 = vmatmul.mubr.f32.gmra.mrb[0].mxu0 %v3800
      %v4257 = vpop.f32.mrb[0].mxu0
      %v4258 = vadd.f32 %v3992, %v4257
      %v4259 = vpop.f32.mrb[0].mxu0
      %4260 = vmatprep.mubr.f32.mxu0 0.0
      %4261 = vmatmul.mubr.f32.gmra.mrb[0].mxu0 %v3801
      %v4262 = vpop.f32.mrb[0].mxu0
      %v4263 = vadd.f32 %v3997, %v4262
      %v4264 = vpop.f32.mrb[0].mxu0
      %4265 = vmatprep.mubr.f32.mxu0 0.0
      %4266 = vmatmul.mubr.f32.gmra.mrb[0].mxu0 %v3802
      %v4267 = vpop.f32.mrb[0].mxu0
      %v4268 = vadd.f32 %v4002, %v4267
      %v4269 = vpop.f32.mrb[0].mxu0
      %4270 = vmatprep.mubr.f32.mxu0 0.0
      %4271 = vmatmul.mubr.f32.gmra.mrb[0].mxu0 %v3803
      %v4272 = vpop.f32.mrb[0].mxu0
      %v4273 = vadd.f32 %v4007, %v4272
      %v4274 = vpop.f32.mrb[0].mxu0
      %4275 = vmatprep.mubr.f32.mxu0 0.0
      %4276 = vmatmul.mubr.f32.gmra.mrb[0].mxu0 %v3804
      %v4277 = vpop.f32.mrb[0].mxu0
      %v4278 = vadd.f32 %v4012, %v4277
      %v4279 = vpop.f32.mrb[0].mxu0
      %4280 = vmatprep.mubr.f32.mxu0 0.0
      %4281 = vmatmul.mubr.f32.gmra.mrb[0].mxu0 %v3805
      %v4282 = vpop.f32.mrb[0].mxu0
      %v4283 = vadd.f32 %v4017, %v4282
      %v4284 = vpop.f32.mrb[0].mxu0
      %4285 = vmatprep.mubr.f32.mxu0 0.0
      %4286 = vmatmul.mubr.f32.gmra.mrb[0].mxu0 %v3806
      %v4287 = vpop.f32.mrb[0].mxu0
      %v4288 = vadd.f32 %v4022, %v4287
      %v4289 = vpop.f32.mrb[0].mxu0
      %4290 = vmatprep.mubr.f32.mxu0 0.0
      %4291 = vmatmul.mubr.f32.gmra.mrb[0].mxu0 %v3807
      %v4292 = vpop.f32.mrb[0].mxu0
      %v4293 = vadd.f32 %v4027, %v4292
      %v4294 = vpop.f32.mrb[0].mxu0
      %4295 = vmatprep.mubr.f32.mxu0 0.0
      %4296 = vmatmul.mubr.f32.gmra.mrb[0].mxu0 %v3808
      %v4297 = vpop.f32.mrb[0].mxu0
      %v4298 = vadd.f32 %v4032, %v4297
      %v4299 = vpop.f32.mrb[0].mxu0
      %4300 = vmatprep.mubr.f32.mxu0 0.0
      %4301 = vmatmul.mubr.f32.gmra.mrb[0].mxu0 %v3809
      %v4302 = vpop.f32.mrb[0].mxu0
      %v4303 = vadd.f32 %v4037, %v4302
      %v4304 = vpop.f32.mrb[0].mxu0
      %4305 = vmatprep.mubr.f32.mxu0 0.0
      %4306 = vmatmul.mubr.f32.gmra.mrb[0].mxu0 %v3810
      %v4307 = vpop.f32.mrb[0].mxu0
      %v4308 = vadd.f32 %v4042, %v4307
      %v4309 = vpop.f32.mrb[0].mxu0
      %4310 = vmatprep.mubr.f32.mxu0 0.0
      %4311 = vmatmul.mubr.f32.gmra.mrb[0].mxu0 %v3811
      %v4312 = vpop.f32.mrb[0].mxu0
      %v4313 = vadd.f32 %v4047, %v4312
      %v4314 = vpop.f32.mrb[0].mxu0
      %4315 = vmatprep.mubr.f32.mxu0 0.0
      %4316 = vmatmul.mubr.f32.gmra.mrb[0].mxu0 %v3812
      %v4317 = vpop.f32.mrb[0].mxu0
      %v4318 = vadd.f32 %v4052, %v4317
      %v4319 = vpop.f32.mrb[0].mxu0
      %4320 = vmatprep.mubr.f32.mxu0 0.0
      %4321 = vmatmul.mubr.f32.gmra.mrb[0].mxu0 %v3813
      %v4322 = vpop.f32.mrb[0].mxu0
      %v4323 = vadd.f32 %v4057, %v4322
      %v4324 = vpop.f32.mrb[0].mxu0
      %4325 = vmatprep.mubr.f32.mxu0 0.0
      %4326 = vmatmul.mubr.f32.gmra.mrb[0].mxu0 %v3814
      %v4327 = vpop.f32.mrb[0].mxu0
      %v4328 = vadd.f32 %v4062, %v4327
      %v4329 = vpop.f32.mrb[0].mxu0
      %4330 = vmatprep.mubr.f32.mxu0 0.0
      %4331 = vmatmul.mubr.f32.gmra.mrb[0].mxu0 %v3815
      %v4332 = vpop.f32.mrb[0].mxu0
      %v4333 = vadd.f32 %v4067, %v4332
      %v4334 = vpop.f32.mrb[0].mxu0
      %4335 = vmatprep.mubr.f32.mxu0 0.0
      %4336 = vmatmul.mubr.f32.gmra.mrb[0].mxu0 %v3816
      %v4337 = vpop.f32.mrb[0].mxu0
      %v4338 = vadd.f32 %v4072, %v4337
      %v4339 = vpop.f32.mrb[0].mxu0
      %4340 = vmatprep.mubr.f32.mxu0 0.0
      %4341 = vmatmul.mubr.f32.gmra.mrb[0].mxu0 %v3817
      %v4342 = vpop.f32.mrb[0].mxu0
      %v4343 = vadd.f32 %v4077, %v4342
      %v4344 = vpop.f32.mrb[0].mxu0
      %4345 = vmatprep.mubr.f32.mxu0 0.0
      %4346 = vmatmul.mubr.f32.gmra.mrb[0].mxu0 %v3818
      %v4347 = vpop.f32.mrb[0].mxu0
      %v4348 = vadd.f32 %v4082, %v4347
      %v4349 = vpop.f32.mrb[0].mxu0
      %4350 = vmatprep.mubr.f32.mxu0 0.0
      %4351 = vmatmul.mubr.f32.gmra.mrb[0].mxu0 %v3819
      %v4352 = vpop.f32.mrb[0].mxu0
      %v4353 = vadd.f32 %v4087, %v4352
      %v4354 = vpop.f32.mrb[0].mxu0
      %4355 = vmatprep.mubr.f32.mxu0 0.0
      %4356 = vmatmul.mubr.f32.gmra.mrb[0].mxu0 %v3820
      %v4357 = vpop.f32.mrb[0].mxu0
      %v4358 = vadd.f32 %v4092, %v4357
      %v4359 = vpop.f32.mrb[0].mxu0
      %4360 = vmatprep.mubr.f32.mxu0 0.0
      %4361 = vmatmul.mubr.f32.gmra.mrb[0].mxu0 %v3821
      %v4362 = vpop.f32.mrb[0].mxu0
      %v4363 = vadd.f32 %v4097, %v4362
      %v4364 = vpop.f32.mrb[0].mxu0
      %4365 = vmatprep.mubr.f32.mxu0 0.0
      %4366 = vmatmul.mubr.f32.gmra.mrb[0].mxu0 %v3822
      %v4367 = vpop.f32.mrb[0].mxu0
      %v4368 = vadd.f32 %v4102, %v4367
      %v4369 = vpop.f32.mrb[0].mxu0
      %4370 = vmatprep.mubr.f32.mxu0 0.0
      %4371 = vmatmul.mubr.f32.gmra.mrb[0].mxu0 %v3823
      %v4372 = vpop.f32.mrb[0].mxu0
      %v4373 = vadd.f32 %v4107, %v4372
      %v4374 = vpop.f32.mrb[0].mxu0
      %4375 = vmatprep.mubr.f32.mxu0 0.0
      %4376 = vmatmul.mubr.f32.gmra.mrb[0].mxu0 %v3824
      %v4377 = vpop.f32.mrb[0].mxu0
      %v4378 = vadd.f32 %v4112, %v4377
      %v4379 = vpop.f32.mrb[0].mxu0
      %4380 = vmatprep.mubr.f32.mxu0 0.0
      %4381 = vmatmul.mubr.f32.gmra.mrb[0].mxu0 %v3825
      %v4382 = vpop.f32.mrb[0].mxu0
      %v4383 = vadd.f32 %v4117, %v4382
      %v4384 = vpop.f32.mrb[0].mxu0
      %4385 = vmatprep.mubr.f32.mxu0 0.0
      %4386 = vmatmul.mubr.f32.gmra.mrb[0].mxu0 %v3826
      %v4387 = vpop.f32.mrb[0].mxu0
      %v4388 = vadd.f32 %v4122, %v4387
      %v4389 = vpop.f32.mrb[0].mxu0
      %4390 = vmatprep.mubr.f32.mxu0 0.0
      %4391 = vmatmul.mubr.f32.gmra.mrb[0].mxu0 %v3827
      %v4392 = vpop.f32.mrb[0].mxu0
      %v4393 = vadd.f32 %v4127, %v4392
      %v4394 = vpop.f32.mrb[0].mxu0
      %4395 = vmatprep.mubr.f32.mxu0 0.0
      %4396 = vmatmul.mubr.f32.gmra.mrb[0].mxu0 %v3828
      %v4397 = vpop.f32.mrb[0].mxu0
      %v4398 = vadd.f32 %v4132, %v4397
      %v4399 = vpop.f32.mrb[0].mxu0
      %4400 = vmatprep.mubr.f32.mxu0 0.0
      %4401 = vmatmul.mubr.f32.gmra.mrb[0].mxu0 %v3829
      %v4402 = vpop.f32.mrb[0].mxu0
      %v4403 = vadd.f32 %v4137, %v4402
      %v4404 = vpop.f32.mrb[0].mxu0
      %4405 = vmatprep.mubr.f32.mxu0 0.0
      %4406 = vmatmul.mubr.f32.gmra.mrb[0].mxu0 %v3830
      %v4407 = vpop.f32.mrb[0].mxu0
      %v4408 = vadd.f32 %v4142, %v4407
      %v4409 = vpop.f32.mrb[0].mxu0
      %4410 = vmatprep.mubr.f32.mxu0 0.0
      %4411 = vmatmul.mubr.f32.gmra.mrb[0].mxu0 %v3831
      %v4412 = vpop.f32.mrb[0].mxu0
      %v4413 = vadd.f32 %v4147, %v4412
      %v4414 = vpop.f32.mrb[0].mxu0
      %4415 = vmatprep.mubr.f32.mxu0 0.0
      %4416 = vmatmul.mubr.f32.gmra.mrb[0].mxu0 %v3832
      %v4417 = vpop.f32.mrb[0].mxu0
      %v4418 = vadd.f32 %v4152, %v4417
      %v4419 = vpop.f32.mrb[0].mxu0
      %4420 = vmatprep.mubr.f32.mxu0 0.0
      %4421 = vmatmul.mubr.f32.gmra.mrb[0].mxu0 %v3833
      %v4422 = vpop.f32.mrb[0].mxu0
      %v4423 = vadd.f32 %v4157, %v4422
      %v4424 = vpop.f32.mrb[0].mxu0
      %4425 = vmatprep.mubr.f32.mxu0 0.0
      %4426 = vmatmul.mubr.f32.gmra.mrb[0].mxu0 %v3834
      %v4427 = vpop.f32.mrb[0].mxu0
      %v4428 = vadd.f32 %v4162, %v4427
      %v4429 = vpop.f32.mrb[0].mxu0
      %4430 = vmatprep.mubr.f32.mxu0 0.0
      %4431 = vmatmul.mubr.f32.gmra.mrb[0].mxu0 %v3835
      %v4432 = vpop.f32.mrb[0].mxu0
      %v4433 = vadd.f32 %v4167, %v4432
      %v4434 = vpop.f32.mrb[0].mxu0
      %4435 = vmatprep.mubr.f32.mxu0 0.0
      %4436 = vmatmul.mubr.f32.gmra.mrb[0].mxu0 %v3836
      %v4437 = vpop.f32.mrb[0].mxu0
      %v4438 = vpop.f32.mrb[0].mxu0
      %4439 = vmatprep.mubr.f32.mxu0 0.0
      %4440 = vmatmul.mubr.f32.gmra.mrb[0].mxu0 %v3837
      %v4441 = vpop.f32.mrb[0].mxu0
      %v4442 = vpop.f32.mrb[0].mxu0
      %4443 = vdwg.mxu0
      %v4444 = vld [vmem:[#allocation3 + $0x2] sm:$0xff]
      %v4445 = vld [vmem:[#allocation3 + $0xa] sm:$0xff]
      %v4446 = vld [vmem:[#allocation3 + $0x12] sm:$0xff]
      %v4447 = vld [vmem:[#allocation3 + $0x1a] sm:$0xff]
      %v4448 = vld [vmem:[#allocation3 + $0x22] sm:$0xff]
      %v4449 = vld [vmem:[#allocation3 + $0x2a] sm:$0xff]
      %v4450 = vld [vmem:[#allocation3 + $0x32] sm:$0xff]
      %v4451 = vld [vmem:[#allocation3 + $0x3a] sm:$0xff]
      %v4452 = vld [vmem:[#allocation3 + $0x42] sm:$0xff]
      %v4453 = vld [vmem:[#allocation3 + $0x4a] sm:$0xff]
      %v4454 = vld [vmem:[#allocation3 + $0x52] sm:$0xff]
      %v4455 = vld [vmem:[#allocation3 + $0x5a] sm:$0xff]
      %v4456 = vld [vmem:[#allocation3 + $0x62] sm:$0xff]
      %v4457 = vld [vmem:[#allocation3 + $0x6a] sm:$0xff]
      %v4458 = vld [vmem:[#allocation3 + $0x72] sm:$0xff]
      %v4459 = vld [vmem:[#allocation3 + $0x7a] sm:$0xff]
      %v4460 = vld [vmem:[#allocation3 + $0x82] sm:$0xff]
      %v4461 = vld [vmem:[#allocation3 + $0x8a] sm:$0xff]
      %v4462 = vld [vmem:[#allocation3 + $0x92] sm:$0xff]
      %v4463 = vld [vmem:[#allocation3 + $0x9a] sm:$0xff]
      %v4464 = vld [vmem:[#allocation3 + $0xa2] sm:$0xff]
      %v4465 = vld [vmem:[#allocation3 + $0xaa] sm:$0xff]
      %v4466 = vld [vmem:[#allocation3 + $0xb2] sm:$0xff]
      %v4467 = vld [vmem:[#allocation3 + $0xba] sm:$0xff]
      %v4468 = vld [vmem:[#allocation3 + $0xc2] sm:$0xff]
      %v4469 = vld [vmem:[#allocation3 + $0xca] sm:$0xff]
      %v4470 = vld [vmem:[#allocation3 + $0xd2] sm:$0xff]
      %v4471 = vld [vmem:[#allocation3 + $0xda] sm:$0xff]
      %v4472 = vld [vmem:[#allocation3 + $0xe2] sm:$0xff]
      %v4473 = vld [vmem:[#allocation3 + $0xea] sm:$0xff]
      %v4474 = vld [vmem:[#allocation3 + $0xf2] sm:$0xff]
      %v4475 = vld [vmem:[#allocation3 + $0xfa] sm:$0xff]
      %v4476 = vld [vmem:[#allocation3 + $0x102] sm:$0xff]
      %v4477 = vld [vmem:[#allocation3 + $0x10a] sm:$0xff]
      %v4478 = vld [vmem:[#allocation3 + $0x112] sm:$0xff]
      %v4479 = vld [vmem:[#allocation3 + $0x11a] sm:$0xff]
      %v4480 = vld [vmem:[#allocation3 + $0x122] sm:$0xff]
      %v4481 = vld [vmem:[#allocation3 + $0x12a] sm:$0xff]
      %v4482 = vld [vmem:[#allocation3 + $0x132] sm:$0xff]
      %v4483 = vld [vmem:[#allocation3 + $0x13a] sm:$0xff]
      %v4484 = vld [vmem:[#allocation3 + $0x142] sm:$0xf]
      %s4485 = scalar_lea.vmem %s4, 256
      %v4486 = vld [vmem:[%s4485] sm:$0xff]
      %v4487 = vld [vmem:[%s4485 + $0x8] sm:$0xff]
      %v4488 = vld [vmem:[%s4485 + $0x10] sm:$0xff]
      %v4489 = vld [vmem:[%s4485 + $0x18] sm:$0xff]
      %v4490 = vld [vmem:[%s4485 + $0x20] sm:$0xff]
      %v4491 = vld [vmem:[%s4485 + $0x28] sm:$0xff]
      %v4492 = vld [vmem:[%s4485 + $0x30] sm:$0xff]
      %v4493 = vld [vmem:[%s4485 + $0x38] sm:$0xff]
      %v4494 = vld [vmem:[%s4485 + $0x40] sm:$0xff]
      %v4495 = vld [vmem:[%s4485 + $0x48] sm:$0xff]
      %v4496 = vld [vmem:[%s4485 + $0x50] sm:$0xff]
      %v4497 = vld [vmem:[%s4485 + $0x58] sm:$0xff]
      %v4498 = vld [vmem:[%s4485 + $0x60] sm:$0xff]
      %v4499 = vld [vmem:[%s4485 + $0x68] sm:$0xff]
      %v4500 = vld [vmem:[%s4485 + $0x70] sm:$0xff]
      %v4501 = vld [vmem:[%s4485 + $0x78] sm:$0xff]
      %4502 = vmatprep.subr.mxu0 0.0
      %4503 = vmatpush1.msra.mxu0 %v4486
      %4504 = vmatprep.subr.mxu0 0.0
      %4505 = vmatpush1.msra.mxu0 %v4487
      %4506 = vmatprep.subr.mxu0 0.0
      %4507 = vmatpush1.msra.mxu0 %v4488
      %4508 = vmatprep.subr.mxu0 0.0
      %4509 = vmatpush1.msra.mxu0 %v4489
      %4510 = vmatprep.subr.mxu0 0.0
      %4511 = vmatpush1.msra.mxu0 %v4490
      %4512 = vmatprep.subr.mxu0 0.0
      %4513 = vmatpush1.msra.mxu0 %v4491
      %4514 = vmatprep.subr.mxu0 0.0
      %4515 = vmatpush1.msra.mxu0 %v4492
      %4516 = vmatprep.subr.mxu0 0.0
      %4517 = vmatpush1.msra.mxu0 %v4493
      %4518 = vmatprep.subr.mxu0 0.0
      %4519 = vmatpush1.msra.mxu0 %v4494
      %4520 = vmatprep.subr.mxu0 0.0
      %4521 = vmatpush1.msra.mxu0 %v4495
      %4522 = vmatprep.subr.mxu0 0.0
      %4523 = vmatpush1.msra.mxu0 %v4496
      %4524 = vmatprep.subr.mxu0 0.0
      %4525 = vmatpush1.msra.mxu0 %v4497
      %4526 = vmatprep.subr.mxu0 0.0
      %4527 = vmatpush1.msra.mxu0 %v4498
      %4528 = vmatprep.subr.mxu0 0.0
      %4529 = vmatpush1.msra.mxu0 %v4499
      %4530 = vmatprep.subr.mxu0 0.0
      %4531 = vmatpush1.msra.mxu0 %v4500
      %4532 = vmatprep.subr.mxu0 0.0
      %4533 = vmatpush1.msra.mxu0 %v4501
      %4534 = vmatprep.subr.mxu0 0.0
      %4535 = vmatpush1.msra.mxu0 0.0
      %4536 = vmatprep.subr.mxu0 0.0
      %4537 = vmatpush1.msra.mxu0 0.0
      %4538 = vmatprep.subr.mxu0 0.0
      %4539 = vmatpush1.msra.mxu0 0.0
      %4540 = vmatprep.subr.mxu0 0.0
      %4541 = vmatpush1.msra.mxu0 0.0
      %4542 = vmatprep.subr.mxu0 0.0
      %4543 = vmatpush1.msra.mxu0 0.0
      %4544 = vmatprep.subr.mxu0 0.0
      %4545 = vmatpush1.msra.mxu0 0.0
      %4546 = vmatprep.subr.mxu0 0.0
      %4547 = vmatpush1.msra.mxu0 0.0
      %4548 = vmatprep.subr.mxu0 0.0
      %4549 = vmatpush1.msra.mxu0 0.0
      %4550 = vmatprep.subr.mxu0 0.0
      %4551 = vmatpush1.msra.mxu0 0.0
      %4552 = vmatprep.subr.mxu0 0.0
      %4553 = vmatpush1.msra.mxu0 0.0
      %4554 = vmatprep.subr.mxu0 0.0
      %4555 = vmatpush1.msra.mxu0 0.0
      %4556 = vmatprep.subr.mxu0 0.0
      %4557 = vmatpush1.msra.mxu0 0.0
      %4558 = vmatprep.subr.mxu0 0.0
      %4559 = vmatpush1.msra.mxu0 0.0
      %4560 = vmatprep.subr.mxu0 0.0
      %4561 = vmatpush1.msra.mxu0 0.0
      %4562 = vmatprep.subr.mxu0 0.0
      %4563 = vmatpush1.msra.mxu0 0.0
      %4564 = vmatprep.subr.mxu0 0.0
      %4565 = vmatpush1.msra.mxu0 0.0
      %4566 = vmatprep.mubr.f32.mxu0 0.0
      %4567 = vmatmul.mubr.f32.gmra.mrb[0].mxu0 %v4444
      %v4568 = vpop.f32.mrb[0].mxu0
      %v4569 = vpop.f32.mrb[0].mxu0
      %4570 = vmatprep.mubr.f32.mxu0 0.0
      %4571 = vmatmul.mubr.f32.gmra.mrb[0].mxu0 %v4445
      %v4572 = vpop.f32.mrb[0].mxu0
      %v4573 = vpop.f32.mrb[0].mxu0
      %4574 = vmatprep.mubr.f32.mxu0 0.0
      %4575 = vmatmul.mubr.f32.gmra.mrb[0].mxu0 %v4446
      %v4576 = vpop.f32.mrb[0].mxu0
      %v4577 = vadd.f32 0.0, %v4576
      %v4578 = vpop.f32.mrb[0].mxu0
      %4579 = vmatprep.mubr.f32.mxu0 0.0
      %4580 = vmatmul.mubr.f32.gmra.mrb[0].mxu0 %v4447
      %v4581 = vpop.f32.mrb[0].mxu0
      %v4582 = vadd.f32 0.0, %v4581
      %v4583 = vpop.f32.mrb[0].mxu0
      %4584 = vmatprep.mubr.f32.mxu0 0.0
      %4585 = vmatmul.mubr.f32.gmra.mrb[0].mxu0 %v4448
      %v4586 = vpop.f32.mrb[0].mxu0
      %v4587 = vadd.f32 0.0, %v4586
      %v4588 = vpop.f32.mrb[0].mxu0
      %4589 = vmatprep.mubr.f32.mxu0 0.0
      %4590 = vmatmul.mubr.f32.gmra.mrb[0].mxu0 %v4449
      %v4591 = vpop.f32.mrb[0].mxu0
      %v4592 = vadd.f32 0.0, %v4591
      %v4593 = vpop.f32.mrb[0].mxu0
      %4594 = vmatprep.mubr.f32.mxu0 0.0
      %4595 = vmatmul.mubr.f32.gmra.mrb[0].mxu0 %v4450
      %v4596 = vpop.f32.mrb[0].mxu0
      %v4597 = vadd.f32 0.0, %v4596
      %v4598 = vpop.f32.mrb[0].mxu0
      %4599 = vmatprep.mubr.f32.mxu0 0.0
      %4600 = vmatmul.mubr.f32.gmra.mrb[0].mxu0 %v4451
      %v4601 = vpop.f32.mrb[0].mxu0
      %v4602 = vadd.f32 0.0, %v4601
      %v4603 = vpop.f32.mrb[0].mxu0
      %4604 = vmatprep.mubr.f32.mxu0 0.0
      %4605 = vmatmul.mubr.f32.gmra.mrb[0].mxu0 %v4452
      %v4606 = vpop.f32.mrb[0].mxu0
      %v4607 = vadd.f32 0.0, %v4606
      %v4608 = vpop.f32.mrb[0].mxu0
      %4609 = vmatprep.mubr.f32.mxu0 0.0
      %4610 = vmatmul.mubr.f32.gmra.mrb[0].mxu0 %v4453
      %v4611 = vpop.f32.mrb[0].mxu0
      %v4612 = vadd.f32 0.0, %v4611
      %v4613 = vpop.f32.mrb[0].mxu0
      %4614 = vmatprep.mubr.f32.mxu0 0.0
      %4615 = vmatmul.mubr.f32.gmra.mrb[0].mxu0 %v4454
      %v4616 = vpop.f32.mrb[0].mxu0
      %v4617 = vadd.f32 0.0, %v4616
      %v4618 = vpop.f32.mrb[0].mxu0
      %4619 = vmatprep.mubr.f32.mxu0 0.0
      %4620 = vmatmul.mubr.f32.gmra.mrb[0].mxu0 %v4455
      %v4621 = vpop.f32.mrb[0].mxu0
      %v4622 = vadd.f32 0.0, %v4621
      %v4623 = vpop.f32.mrb[0].mxu0
      %4624 = vmatprep.mubr.f32.mxu0 0.0
      %4625 = vmatmul.mubr.f32.gmra.mrb[0].mxu0 %v4456
      %v4626 = vpop.f32.mrb[0].mxu0
      %v4627 = vadd.f32 0.0, %v4626
      %v4628 = vpop.f32.mrb[0].mxu0
      %4629 = vmatprep.mubr.f32.mxu0 0.0
      %4630 = vmatmul.mubr.f32.gmra.mrb[0].mxu0 %v4457
      %v4631 = vpop.f32.mrb[0].mxu0
      %v4632 = vadd.f32 0.0, %v4631
      %v4633 = vpop.f32.mrb[0].mxu0
      %4634 = vmatprep.mubr.f32.mxu0 0.0
      %4635 = vmatmul.mubr.f32.gmra.mrb[0].mxu0 %v4458
      %v4636 = vpop.f32.mrb[0].mxu0
      %v4637 = vadd.f32 0.0, %v4636
      %v4638 = vpop.f32.mrb[0].mxu0
      %4639 = vmatprep.mubr.f32.mxu0 0.0
      %4640 = vmatmul.mubr.f32.gmra.mrb[0].mxu0 %v4459
      %v4641 = vpop.f32.mrb[0].mxu0
      %v4642 = vadd.f32 0.0, %v4641
      %v4643 = vpop.f32.mrb[0].mxu0
      %4644 = vmatprep.mubr.f32.mxu0 0.0
      %4645 = vmatmul.mubr.f32.gmra.mrb[0].mxu0 %v4460
      %v4646 = vpop.f32.mrb[0].mxu0
      %v4647 = vadd.f32 0.0, %v4646
      %v4648 = vpop.f32.mrb[0].mxu0
      %4649 = vmatprep.mubr.f32.mxu0 0.0
      %4650 = vmatmul.mubr.f32.gmra.mrb[0].mxu0 %v4461
      %v4651 = vpop.f32.mrb[0].mxu0
      %v4652 = vadd.f32 0.0, %v4651
      %v4653 = vpop.f32.mrb[0].mxu0
      %4654 = vmatprep.mubr.f32.mxu0 0.0
      %4655 = vmatmul.mubr.f32.gmra.mrb[0].mxu0 %v4462
      %v4656 = vpop.f32.mrb[0].mxu0
      %v4657 = vadd.f32 0.0, %v4656
      %v4658 = vpop.f32.mrb[0].mxu0
      %4659 = vmatprep.mubr.f32.mxu0 0.0
      %4660 = vmatmul.mubr.f32.gmra.mrb[0].mxu0 %v4463
      %v4661 = vpop.f32.mrb[0].mxu0
      %v4662 = vadd.f32 0.0, %v4661
      %v4663 = vpop.f32.mrb[0].mxu0
      %4664 = vmatprep.mubr.f32.mxu0 0.0
      %4665 = vmatmul.mubr.f32.gmra.mrb[0].mxu0 %v4464
      %v4666 = vpop.f32.mrb[0].mxu0
      %v4667 = vadd.f32 0.0, %v4666
      %v4668 = vpop.f32.mrb[0].mxu0
      %4669 = vmatprep.mubr.f32.mxu0 0.0
      %4670 = vmatmul.mubr.f32.gmra.mrb[0].mxu0 %v4465
      %v4671 = vpop.f32.mrb[0].mxu0
      %v4672 = vadd.f32 0.0, %v4671
      %v4673 = vpop.f32.mrb[0].mxu0
      %4674 = vmatprep.mubr.f32.mxu0 0.0
      %4675 = vmatmul.mubr.f32.gmra.mrb[0].mxu0 %v4466
      %v4676 = vpop.f32.mrb[0].mxu0
      %v4677 = vadd.f32 0.0, %v4676
      %v4678 = vpop.f32.mrb[0].mxu0
      %4679 = vmatprep.mubr.f32.mxu0 0.0
      %4680 = vmatmul.mubr.f32.gmra.mrb[0].mxu0 %v4467
      %v4681 = vpop.f32.mrb[0].mxu0
      %v4682 = vadd.f32 0.0, %v4681
      %v4683 = vpop.f32.mrb[0].mxu0
      %4684 = vmatprep.mubr.f32.mxu0 0.0
      %4685 = vmatmul.mubr.f32.gmra.mrb[0].mxu0 %v4468
      %v4686 = vpop.f32.mrb[0].mxu0
      %v4687 = vadd.f32 0.0, %v4686
      %v4688 = vpop.f32.mrb[0].mxu0
      %4689 = vmatprep.mubr.f32.mxu0 0.0
      %4690 = vmatmul.mubr.f32.gmra.mrb[0].mxu0 %v4469
      %v4691 = vpop.f32.mrb[0].mxu0
      %v4692 = vadd.f32 0.0, %v4691
      %v4693 = vpop.f32.mrb[0].mxu0
      %4694 = vmatprep.mubr.f32.mxu0 0.0
      %4695 = vmatmul.mubr.f32.gmra.mrb[0].mxu0 %v4470
      %v4696 = vpop.f32.mrb[0].mxu0
      %v4697 = vadd.f32 0.0, %v4696
      %v4698 = vpop.f32.mrb[0].mxu0
      %4699 = vmatprep.mubr.f32.mxu0 0.0
      %4700 = vmatmul.mubr.f32.gmra.mrb[0].mxu0 %v4471
      %v4701 = vpop.f32.mrb[0].mxu0
      %v4702 = vadd.f32 0.0, %v4701
      %v4703 = vpop.f32.mrb[0].mxu0
      %4704 = vmatprep.mubr.f32.mxu0 0.0
      %4705 = vmatmul.mubr.f32.gmra.mrb[0].mxu0 %v4472
      %v4706 = vpop.f32.mrb[0].mxu0
      %v4707 = vadd.f32 0.0, %v4706
      %v4708 = vpop.f32.mrb[0].mxu0
      %4709 = vmatprep.mubr.f32.mxu0 0.0
      %4710 = vmatmul.mubr.f32.gmra.mrb[0].mxu0 %v4473
      %v4711 = vpop.f32.mrb[0].mxu0
      %v4712 = vadd.f32 0.0, %v4711
      %v4713 = vpop.f32.mrb[0].mxu0
      %4714 = vmatprep.mubr.f32.mxu0 0.0
      %4715 = vmatmul.mubr.f32.gmra.mrb[0].mxu0 %v4474
      %v4716 = vpop.f32.mrb[0].mxu0
      %v4717 = vadd.f32 0.0, %v4716
      %v4718 = vpop.f32.mrb[0].mxu0
      %4719 = vmatprep.mubr.f32.mxu0 0.0
      %4720 = vmatmul.mubr.f32.gmra.mrb[0].mxu0 %v4475
      %v4721 = vpop.f32.mrb[0].mxu0
      %v4722 = vadd.f32 0.0, %v4721
      %v4723 = vpop.f32.mrb[0].mxu0
      %4724 = vmatprep.mubr.f32.mxu0 0.0
      %4725 = vmatmul.mubr.f32.gmra.mrb[0].mxu0 %v4476
      %v4726 = vpop.f32.mrb[0].mxu0
      %v4727 = vadd.f32 0.0, %v4726
      %v4728 = vpop.f32.mrb[0].mxu0
      %4729 = vmatprep.mubr.f32.mxu0 0.0
      %4730 = vmatmul.mubr.f32.gmra.mrb[0].mxu0 %v4477
      %v4731 = vpop.f32.mrb[0].mxu0
      %v4732 = vadd.f32 0.0, %v4731
      %v4733 = vpop.f32.mrb[0].mxu0
      %4734 = vmatprep.mubr.f32.mxu0 0.0
      %4735 = vmatmul.mubr.f32.gmra.mrb[0].mxu0 %v4478
      %v4736 = vpop.f32.mrb[0].mxu0
      %v4737 = vadd.f32 0.0, %v4736
      %v4738 = vpop.f32.mrb[0].mxu0
      %4739 = vmatprep.mubr.f32.mxu0 0.0
      %4740 = vmatmul.mubr.f32.gmra.mrb[0].mxu0 %v4479
      %v4741 = vpop.f32.mrb[0].mxu0
      %v4742 = vadd.f32 0.0, %v4741
      %v4743 = vpop.f32.mrb[0].mxu0
      %4744 = vmatprep.mubr.f32.mxu0 0.0
      %4745 = vmatmul.mubr.f32.gmra.mrb[0].mxu0 %v4480
      %v4746 = vpop.f32.mrb[0].mxu0
      %v4747 = vadd.f32 0.0, %v4746
      %v4748 = vpop.f32.mrb[0].mxu0
      %4749 = vmatprep.mubr.f32.mxu0 0.0
      %4750 = vmatmul.mubr.f32.gmra.mrb[0].mxu0 %v4481
      %v4751 = vpop.f32.mrb[0].mxu0
      %v4752 = vadd.f32 0.0, %v4751
      %v4753 = vpop.f32.mrb[0].mxu0
      %4754 = vmatprep.mubr.f32.mxu0 0.0
      %4755 = vmatmul.mubr.f32.gmra.mrb[0].mxu0 %v4482
      %v4756 = vpop.f32.mrb[0].mxu0
      %v4757 = vadd.f32 0.0, %v4756
      %v4758 = vpop.f32.mrb[0].mxu0
      %4759 = vmatprep.mubr.f32.mxu0 0.0
      %4760 = vmatmul.mubr.f32.gmra.mrb[0].mxu0 %v4483
      %v4761 = vpop.f32.mrb[0].mxu0
      %v4762 = vpop.f32.mrb[0].mxu0
      %4763 = vmatprep.mubr.f32.mxu0 0.0
      %4764 = vmatmul.mubr.f32.gmra.mrb[0].mxu0 %v4484
      %v4765 = vpop.f32.mrb[0].mxu0
      %v4766 = vpop.f32.mrb[0].mxu0
      %4767 = vdwg.mxu0
      %v4768 = vadd.f32 %v4253, %v4577
      %v4769 = vadd.f32 %v4258, %v4582
      %v4770 = vadd.f32 %v4263, %v4587
      %v4771 = vadd.f32 %v4268, %v4592
      %v4772 = vadd.f32 %v4273, %v4597
      %v4773 = vadd.f32 %v4278, %v4602
      %v4774 = vadd.f32 %v4283, %v4607
      %v4775 = vadd.f32 %v4288, %v4612
      %v4776 = vadd.f32 %v4293, %v4617
      %v4777 = vadd.f32 %v4298, %v4622
      %v4778 = vadd.f32 %v4303, %v4627
      %v4779 = vadd.f32 %v4308, %v4632
      %v4780 = vadd.f32 %v4313, %v4637
      %v4781 = vadd.f32 %v4318, %v4642
      %v4782 = vadd.f32 %v4323, %v4647
      %v4783 = vadd.f32 %v4328, %v4652
      %v4784 = vadd.f32 %v4333, %v4657
      %v4785 = vadd.f32 %v4338, %v4662
      %v4786 = vadd.f32 %v4343, %v4667
      %v4787 = vadd.f32 %v4348, %v4672
      %v4788 = vadd.f32 %v4353, %v4677
      %v4789 = vadd.f32 %v4358, %v4682
      %v4790 = vadd.f32 %v4363, %v4687
      %v4791 = vadd.f32 %v4368, %v4692
      %v4792 = vadd.f32 %v4373, %v4697
      %v4793 = vadd.f32 %v4378, %v4702
      %v4794 = vadd.f32 %v4383, %v4707
      %v4795 = vadd.f32 %v4388, %v4712
      %v4796 = vadd.f32 %v4393, %v4717
      %v4797 = vadd.f32 %v4398, %v4722
      %v4798 = vadd.f32 %v4403, %v4727
      %v4799 = vadd.f32 %v4408, %v4732
      %v4800 = vadd.f32 %v4413, %v4737
      %v4801 = vadd.f32 %v4418, %v4742
      %v4802 = vadd.f32 %v4423, %v4747
      %v4803 = vadd.f32 %v4428, %v4752
      %v4804 = vadd.f32 %v4433, %v4757
      %v4805 = vld [vmem:[#allocation3 + $0x12] sm:$0xff]
      %v4806 = vld [vmem:[#allocation3 + $0x1a] sm:$0xff]
      %v4807 = vld [vmem:[#allocation3 + $0x22] sm:$0xff]
      %v4808 = vld [vmem:[#allocation3 + $0x2a] sm:$0xff]
      %v4809 = vld [vmem:[#allocation3 + $0x32] sm:$0xff]
      %v4810 = vld [vmem:[#allocation3 + $0x3a] sm:$0xff]
      %v4811 = vld [vmem:[#allocation3 + $0x42] sm:$0xff]
      %v4812 = vld [vmem:[#allocation3 + $0x4a] sm:$0xff]
      %v4813 = vld [vmem:[#allocation3 + $0x52] sm:$0xff]
      %v4814 = vld [vmem:[#allocation3 + $0x5a] sm:$0xff]
      %v4815 = vld [vmem:[#allocation3 + $0x62] sm:$0xff]
      %v4816 = vld [vmem:[#allocation3 + $0x6a] sm:$0xff]
      %v4817 = vld [vmem:[#allocation3 + $0x72] sm:$0xff]
      %v4818 = vld [vmem:[#allocation3 + $0x7a] sm:$0xff]
      %v4819 = vld [vmem:[#allocation3 + $0x82] sm:$0xff]
      %v4820 = vld [vmem:[#allocation3 + $0x8a] sm:$0xff]
      %v4821 = vld [vmem:[#allocation3 + $0x92] sm:$0xff]
      %v4822 = vld [vmem:[#allocation3 + $0x9a] sm:$0xff]
      %v4823 = vld [vmem:[#allocation3 + $0xa2] sm:$0xff]
      %v4824 = vld [vmem:[#allocation3 + $0xaa] sm:$0xff]
      %v4825 = vld [vmem:[#allocation3 + $0xb2] sm:$0xff]
      %v4826 = vld [vmem:[#allocation3 + $0xba] sm:$0xff]
      %v4827 = vld [vmem:[#allocation3 + $0xc2] sm:$0xff]
      %v4828 = vld [vmem:[#allocation3 + $0xca] sm:$0xff]
      %v4829 = vld [vmem:[#allocation3 + $0xd2] sm:$0xff]
      %v4830 = vld [vmem:[#allocation3 + $0xda] sm:$0xff]
      %v4831 = vld [vmem:[#allocation3 + $0xe2] sm:$0xff]
      %v4832 = vld [vmem:[#allocation3 + $0xea] sm:$0xff]
      %v4833 = vld [vmem:[#allocation3 + $0xf2] sm:$0xff]
      %v4834 = vld [vmem:[#allocation3 + $0xfa] sm:$0xff]
      %v4835 = vld [vmem:[#allocation3 + $0x102] sm:$0xff]
      %v4836 = vld [vmem:[#allocation3 + $0x10a] sm:$0xff]
      %v4837 = vld [vmem:[#allocation3 + $0x112] sm:$0xff]
      %v4838 = vld [vmem:[#allocation3 + $0x11a] sm:$0xff]
      %v4839 = vld [vmem:[#allocation3 + $0x122] sm:$0xff]
      %v4840 = vld [vmem:[#allocation3 + $0x12a] sm:$0xff]
      %v4841 = vld [vmem:[#allocation3 + $0x132] sm:$0xff]
      %v4842 = vld [vmem:[#allocation3 + $0x13a] sm:$0xff]
      %v4843 = vld [vmem:[#allocation3 + $0x142] sm:$0xff]
      %v4844 = vld [vmem:[#allocation3 + $0x14a] sm:$0xff]
      %v4845 = vld [vmem:[#allocation3 + $0x152] sm:$0xf]
      %s4846 = scalar_lea.vmem %s4, 384
      %v4847 = vld [vmem:[%s4846] sm:$0xff]
      %v4848 = vld [vmem:[%s4846 + $0x8] sm:$0xff]
      %v4849 = vld [vmem:[%s4846 + $0x10] sm:$0xff]
      %v4850 = vld [vmem:[%s4846 + $0x18] sm:$0xff]
      %v4851 = vld [vmem:[%s4846 + $0x20] sm:$0xff]
      %v4852 = vld [vmem:[%s4846 + $0x28] sm:$0xff]
      %v4853 = vld [vmem:[%s4846 + $0x30] sm:$0xff]
      %v4854 = vld [vmem:[%s4846 + $0x38] sm:$0xff]
      %v4855 = vld [vmem:[%s4846 + $0x40] sm:$0xff]
      %v4856 = vld [vmem:[%s4846 + $0x48] sm:$0xff]
      %v4857 = vld [vmem:[%s4846 + $0x50] sm:$0xff]
      %v4858 = vld [vmem:[%s4846 + $0x58] sm:$0xff]
      %v4859 = vld [vmem:[%s4846 + $0x60] sm:$0xff]
      %v4860 = vld [vmem:[%s4846 + $0x68] sm:$0xff]
      %v4861 = vld [vmem:[%s4846 + $0x70] sm:$0xff]
      %v4862 = vld [vmem:[%s4846 + $0x78] sm:$0xff]
      %4863 = vmatprep.subr.mxu0 0.0
      %4864 = vmatpush1.msra.mxu0 %v4847
      %4865 = vmatprep.subr.mxu0 0.0
      %4866 = vmatpush1.msra.mxu0 %v4848
      %4867 = vmatprep.subr.mxu0 0.0
      %4868 = vmatpush1.msra.mxu0 %v4849
      %4869 = vmatprep.subr.mxu0 0.0
      %4870 = vmatpush1.msra.mxu0 %v4850
      %4871 = vmatprep.subr.mxu0 0.0
      %4872 = vmatpush1.msra.mxu0 %v4851
      %4873 = vmatprep.subr.mxu0 0.0
      %4874 = vmatpush1.msra.mxu0 %v4852
      %4875 = vmatprep.subr.mxu0 0.0
      %4876 = vmatpush1.msra.mxu0 %v4853
      %4877 = vmatprep.subr.mxu0 0.0
      %4878 = vmatpush1.msra.mxu0 %v4854
      %4879 = vmatprep.subr.mxu0 0.0
      %4880 = vmatpush1.msra.mxu0 %v4855
      %4881 = vmatprep.subr.mxu0 0.0
      %4882 = vmatpush1.msra.mxu0 %v4856
      %4883 = vmatprep.subr.mxu0 0.0
      %4884 = vmatpush1.msra.mxu0 %v4857
      %4885 = vmatprep.subr.mxu0 0.0
      %4886 = vmatpush1.msra.mxu0 %v4858
      %4887 = vmatprep.subr.mxu0 0.0
      %4888 = vmatpush1.msra.mxu0 %v4859
      %4889 = vmatprep.subr.mxu0 0.0
      %4890 = vmatpush1.msra.mxu0 %v4860
      %4891 = vmatprep.subr.mxu0 0.0
      %4892 = vmatpush1.msra.mxu0 %v4861
      %4893 = vmatprep.subr.mxu0 0.0
      %4894 = vmatpush1.msra.mxu0 %v4862
      %4895 = vmatprep.subr.mxu0 0.0
      %4896 = vmatpush1.msra.mxu0 0.0
      %4897 = vmatprep.subr.mxu0 0.0
      %4898 = vmatpush1.msra.mxu0 0.0
      %4899 = vmatprep.subr.mxu0 0.0
      %4900 = vmatpush1.msra.mxu0 0.0
      %4901 = vmatprep.subr.mxu0 0.0
      %4902 = vmatpush1.msra.mxu0 0.0
      %4903 = vmatprep.subr.mxu0 0.0
      %4904 = vmatpush1.msra.mxu0 0.0
      %4905 = vmatprep.subr.mxu0 0.0
      %4906 = vmatpush1.msra.mxu0 0.0
      %4907 = vmatprep.subr.mxu0 0.0
      %4908 = vmatpush1.msra.mxu0 0.0
      %4909 = vmatprep.subr.mxu0 0.0
      %4910 = vmatpush1.msra.mxu0 0.0
      %4911 = vmatprep.subr.mxu0 0.0
      %4912 = vmatpush1.msra.mxu0 0.0
      %4913 = vmatprep.subr.mxu0 0.0
      %4914 = vmatpush1.msra.mxu0 0.0
      %4915 = vmatprep.subr.mxu0 0.0
      %4916 = vmatpush1.msra.mxu0 0.0
      %4917 = vmatprep.subr.mxu0 0.0
      %4918 = vmatpush1.msra.mxu0 0.0
      %4919 = vmatprep.subr.mxu0 0.0
      %4920 = vmatpush1.msra.mxu0 0.0
      %4921 = vmatprep.subr.mxu0 0.0
      %4922 = vmatpush1.msra.mxu0 0.0
      %4923 = vmatprep.subr.mxu0 0.0
      %4924 = vmatpush1.msra.mxu0 0.0
      %4925 = vmatprep.subr.mxu0 0.0
      %4926 = vmatpush1.msra.mxu0 0.0
      %4927 = vmatprep.mubr.f32.mxu0 0.0
      %4928 = vmatmul.mubr.f32.gmra.mrb[0].mxu0 %v4805
      %v4929 = vpop.f32.mrb[0].mxu0
      %v4930 = vpop.f32.mrb[0].mxu0
      %4931 = vmatprep.mubr.f32.mxu0 0.0
      %4932 = vmatmul.mubr.f32.gmra.mrb[0].mxu0 %v4806
      %v4933 = vpop.f32.mrb[0].mxu0
      %v4934 = vpop.f32.mrb[0].mxu0
      %4935 = vmatprep.mubr.f32.mxu0 0.0
      %4936 = vmatmul.mubr.f32.gmra.mrb[0].mxu0 %v4807
      %v4937 = vpop.f32.mrb[0].mxu0
      %v4938 = vadd.f32 0.0, %v4937
      %v4939 = vpop.f32.mrb[0].mxu0
      %4940 = vmatprep.mubr.f32.mxu0 0.0
      %4941 = vmatmul.mubr.f32.gmra.mrb[0].mxu0 %v4808
      %v4942 = vpop.f32.mrb[0].mxu0
      %v4943 = vadd.f32 0.0, %v4942
      %v4944 = vpop.f32.mrb[0].mxu0
      %4945 = vmatprep.mubr.f32.mxu0 0.0
      %4946 = vmatmul.mubr.f32.gmra.mrb[0].mxu0 %v4809
      %v4947 = vpop.f32.mrb[0].mxu0
      %v4948 = vadd.f32 0.0, %v4947
      %v4949 = vpop.f32.mrb[0].mxu0
      %4950 = vmatprep.mubr.f32.mxu0 0.0
      %4951 = vmatmul.mubr.f32.gmra.mrb[0].mxu0 %v4810
      %v4952 = vpop.f32.mrb[0].mxu0
      %v4953 = vadd.f32 0.0, %v4952
      %v4954 = vpop.f32.mrb[0].mxu0
      %4955 = vmatprep.mubr.f32.mxu0 0.0
      %4956 = vmatmul.mubr.f32.gmra.mrb[0].mxu0 %v4811
      %v4957 = vpop.f32.mrb[0].mxu0
      %v4958 = vadd.f32 0.0, %v4957
      %v4959 = vpop.f32.mrb[0].mxu0
      %4960 = vmatprep.mubr.f32.mxu0 0.0
      %4961 = vmatmul.mubr.f32.gmra.mrb[0].mxu0 %v4812
      %v4962 = vpop.f32.mrb[0].mxu0
      %v4963 = vadd.f32 0.0, %v4962
      %v4964 = vpop.f32.mrb[0].mxu0
      %4965 = vmatprep.mubr.f32.mxu0 0.0
      %4966 = vmatmul.mubr.f32.gmra.mrb[0].mxu0 %v4813
      %v4967 = vpop.f32.mrb[0].mxu0
      %v4968 = vadd.f32 0.0, %v4967
      %v4969 = vpop.f32.mrb[0].mxu0
      %4970 = vmatprep.mubr.f32.mxu0 0.0
      %4971 = vmatmul.mubr.f32.gmra.mrb[0].mxu0 %v4814
      %v4972 = vpop.f32.mrb[0].mxu0
      %v4973 = vadd.f32 0.0, %v4972
      %v4974 = vpop.f32.mrb[0].mxu0
      %4975 = vmatprep.mubr.f32.mxu0 0.0
      %4976 = vmatmul.mubr.f32.gmra.mrb[0].mxu0 %v4815
      %v4977 = vpop.f32.mrb[0].mxu0
      %v4978 = vadd.f32 0.0, %v4977
      %v4979 = vpop.f32.mrb[0].mxu0
      %4980 = vmatprep.mubr.f32.mxu0 0.0
      %4981 = vmatmul.mubr.f32.gmra.mrb[0].mxu0 %v4816
      %v4982 = vpop.f32.mrb[0].mxu0
      %v4983 = vadd.f32 0.0, %v4982
      %v4984 = vpop.f32.mrb[0].mxu0
      %4985 = vmatprep.mubr.f32.mxu0 0.0
      %4986 = vmatmul.mubr.f32.gmra.mrb[0].mxu0 %v4817
      %v4987 = vpop.f32.mrb[0].mxu0
      %v4988 = vadd.f32 0.0, %v4987
      %v4989 = vpop.f32.mrb[0].mxu0
      %4990 = vmatprep.mubr.f32.mxu0 0.0
      %4991 = vmatmul.mubr.f32.gmra.mrb[0].mxu0 %v4818
      %v4992 = vpop.f32.mrb[0].mxu0
      %v4993 = vadd.f32 0.0, %v4992
      %v4994 = vpop.f32.mrb[0].mxu0
      %4995 = vmatprep.mubr.f32.mxu0 0.0
      %4996 = vmatmul.mubr.f32.gmra.mrb[0].mxu0 %v4819
      %v4997 = vpop.f32.mrb[0].mxu0
      %v4998 = vadd.f32 0.0, %v4997
      %v4999 = vpop.f32.mrb[0].mxu0
      %5000 = vmatprep.mubr.f32.mxu0 0.0
      %5001 = vmatmul.mubr.f32.gmra.mrb[0].mxu0 %v4820
      %v5002 = vpop.f32.mrb[0].mxu0
      %v5003 = vadd.f32 0.0, %v5002
      %v5004 = vpop.f32.mrb[0].mxu0
      %5005 = vmatprep.mubr.f32.mxu0 0.0
      %5006 = vmatmul.mubr.f32.gmra.mrb[0].mxu0 %v4821
      %v5007 = vpop.f32.mrb[0].mxu0
      %v5008 = vadd.f32 0.0, %v5007
      %v5009 = vpop.f32.mrb[0].mxu0
      %5010 = vmatprep.mubr.f32.mxu0 0.0
      %5011 = vmatmul.mubr.f32.gmra.mrb[0].mxu0 %v4822
      %v5012 = vpop.f32.mrb[0].mxu0
      %v5013 = vadd.f32 0.0, %v5012
      %v5014 = vpop.f32.mrb[0].mxu0
      %5015 = vmatprep.mubr.f32.mxu0 0.0
      %5016 = vmatmul.mubr.f32.gmra.mrb[0].mxu0 %v4823
      %v5017 = vpop.f32.mrb[0].mxu0
      %v5018 = vadd.f32 0.0, %v5017
      %v5019 = vpop.f32.mrb[0].mxu0
      %5020 = vmatprep.mubr.f32.mxu0 0.0
      %5021 = vmatmul.mubr.f32.gmra.mrb[0].mxu0 %v4824
      %v5022 = vpop.f32.mrb[0].mxu0
      %v5023 = vadd.f32 0.0, %v5022
      %v5024 = vpop.f32.mrb[0].mxu0
      %5025 = vmatprep.mubr.f32.mxu0 0.0
      %5026 = vmatmul.mubr.f32.gmra.mrb[0].mxu0 %v4825
      %v5027 = vpop.f32.mrb[0].mxu0
      %v5028 = vadd.f32 0.0, %v5027
      %v5029 = vpop.f32.mrb[0].mxu0
      %5030 = vmatprep.mubr.f32.mxu0 0.0
      %5031 = vmatmul.mubr.f32.gmra.mrb[0].mxu0 %v4826
      %v5032 = vpop.f32.mrb[0].mxu0
      %v5033 = vadd.f32 0.0, %v5032
      %v5034 = vpop.f32.mrb[0].mxu0
      %5035 = vmatprep.mubr.f32.mxu0 0.0
      %5036 = vmatmul.mubr.f32.gmra.mrb[0].mxu0 %v4827
      %v5037 = vpop.f32.mrb[0].mxu0
      %v5038 = vadd.f32 0.0, %v5037
      %v5039 = vpop.f32.mrb[0].mxu0
      %5040 = vmatprep.mubr.f32.mxu0 0.0
      %5041 = vmatmul.mubr.f32.gmra.mrb[0].mxu0 %v4828
      %v5042 = vpop.f32.mrb[0].mxu0
      %v5043 = vadd.f32 0.0, %v5042
      %v5044 = vpop.f32.mrb[0].mxu0
      %5045 = vmatprep.mubr.f32.mxu0 0.0
      %5046 = vmatmul.mubr.f32.gmra.mrb[0].mxu0 %v4829
      %v5047 = vpop.f32.mrb[0].mxu0
      %v5048 = vadd.f32 0.0, %v5047
      %v5049 = vpop.f32.mrb[0].mxu0
      %5050 = vmatprep.mubr.f32.mxu0 0.0
      %5051 = vmatmul.mubr.f32.gmra.mrb[0].mxu0 %v4830
      %v5052 = vpop.f32.mrb[0].mxu0
      %v5053 = vadd.f32 0.0, %v5052
      %v5054 = vpop.f32.mrb[0].mxu0
      %5055 = vmatprep.mubr.f32.mxu0 0.0
      %5056 = vmatmul.mubr.f32.gmra.mrb[0].mxu0 %v4831
      %v5057 = vpop.f32.mrb[0].mxu0
      %v5058 = vadd.f32 0.0, %v5057
      %v5059 = vpop.f32.mrb[0].mxu0
      %5060 = vmatprep.mubr.f32.mxu0 0.0
      %5061 = vmatmul.mubr.f32.gmra.mrb[0].mxu0 %v4832
      %v5062 = vpop.f32.mrb[0].mxu0
      %v5063 = vadd.f32 0.0, %v5062
      %v5064 = vpop.f32.mrb[0].mxu0
      %5065 = vmatprep.mubr.f32.mxu0 0.0
      %5066 = vmatmul.mubr.f32.gmra.mrb[0].mxu0 %v4833
      %v5067 = vpop.f32.mrb[0].mxu0
      %v5068 = vadd.f32 0.0, %v5067
      %v5069 = vpop.f32.mrb[0].mxu0
      %5070 = vmatprep.mubr.f32.mxu0 0.0
      %5071 = vmatmul.mubr.f32.gmra.mrb[0].mxu0 %v4834
      %v5072 = vpop.f32.mrb[0].mxu0
      %v5073 = vadd.f32 0.0, %v5072
      %v5074 = vpop.f32.mrb[0].mxu0
      %5075 = vmatprep.mubr.f32.mxu0 0.0
      %5076 = vmatmul.mubr.f32.gmra.mrb[0].mxu0 %v4835
      %v5077 = vpop.f32.mrb[0].mxu0
      %v5078 = vadd.f32 0.0, %v5077
      %v5079 = vpop.f32.mrb[0].mxu0
      %5080 = vmatprep.mubr.f32.mxu0 0.0
      %5081 = vmatmul.mubr.f32.gmra.mrb[0].mxu0 %v4836
      %v5082 = vpop.f32.mrb[0].mxu0
      %v5083 = vadd.f32 0.0, %v5082
      %v5084 = vpop.f32.mrb[0].mxu0
      %5085 = vmatprep.mubr.f32.mxu0 0.0
      %5086 = vmatmul.mubr.f32.gmra.mrb[0].mxu0 %v4837
      %v5087 = vpop.f32.mrb[0].mxu0
      %v5088 = vadd.f32 0.0, %v5087
      %v5089 = vpop.f32.mrb[0].mxu0
      %5090 = vmatprep.mubr.f32.mxu0 0.0
      %5091 = vmatmul.mubr.f32.gmra.mrb[0].mxu0 %v4838
      %v5092 = vpop.f32.mrb[0].mxu0
      %v5093 = vadd.f32 0.0, %v5092
      %v5094 = vpop.f32.mrb[0].mxu0
      %5095 = vmatprep.mubr.f32.mxu0 0.0
      %5096 = vmatmul.mubr.f32.gmra.mrb[0].mxu0 %v4839
      %v5097 = vpop.f32.mrb[0].mxu0
      %v5098 = vadd.f32 0.0, %v5097
      %v5099 = vpop.f32.mrb[0].mxu0
      %5100 = vmatprep.mubr.f32.mxu0 0.0
      %5101 = vmatmul.mubr.f32.gmra.mrb[0].mxu0 %v4840
      %v5102 = vpop.f32.mrb[0].mxu0
      %v5103 = vadd.f32 0.0, %v5102
      %v5104 = vpop.f32.mrb[0].mxu0
      %5105 = vmatprep.mubr.f32.mxu0 0.0
      %5106 = vmatmul.mubr.f32.gmra.mrb[0].mxu0 %v4841
      %v5107 = vpop.f32.mrb[0].mxu0
      %v5108 = vadd.f32 0.0, %v5107
      %v5109 = vpop.f32.mrb[0].mxu0
      %5110 = vmatprep.mubr.f32.mxu0 0.0
      %5111 = vmatmul.mubr.f32.gmra.mrb[0].mxu0 %v4842
      %v5112 = vpop.f32.mrb[0].mxu0
      %v5113 = vadd.f32 0.0, %v5112
      %v5114 = vpop.f32.mrb[0].mxu0
      %5115 = vmatprep.mubr.f32.mxu0 0.0
      %5116 = vmatmul.mubr.f32.gmra.mrb[0].mxu0 %v4843
      %v5117 = vpop.f32.mrb[0].mxu0
      %v5118 = vadd.f32 0.0, %v5117
      %v5119 = vpop.f32.mrb[0].mxu0
      %5120 = vmatprep.mubr.f32.mxu0 0.0
      %5121 = vmatmul.mubr.f32.gmra.mrb[0].mxu0 %v4844
      %v5122 = vpop.f32.mrb[0].mxu0
      %v5123 = vpop.f32.mrb[0].mxu0
      %5124 = vmatprep.mubr.f32.mxu0 0.0
      %5125 = vmatmul.mubr.f32.gmra.mrb[0].mxu0 %v4845
      %v5126 = vpop.f32.mrb[0].mxu0
      %v5127 = vpop.f32.mrb[0].mxu0
      %5128 = vdwg.mxu0
      %v5129 = vadd.f32 %v4768, %v4938
      %v5130 = vadd.f32 %v4769, %v4943
      %v5131 = vadd.f32 %v4770, %v4948
      %v5132 = vadd.f32 %v4771, %v4953
      %v5133 = vadd.f32 %v4772, %v4958
      %v5134 = vadd.f32 %v4773, %v4963
      %v5135 = vadd.f32 %v4774, %v4968
      %v5136 = vadd.f32 %v4775, %v4973
      %v5137 = vadd.f32 %v4776, %v4978
      %v5138 = vadd.f32 %v4777, %v4983
      %v5139 = vadd.f32 %v4778, %v4988
      %v5140 = vadd.f32 %v4779, %v4993
      %v5141 = vadd.f32 %v4780, %v4998
      %v5142 = vadd.f32 %v4781, %v5003
      %v5143 = vadd.f32 %v4782, %v5008
      %v5144 = vadd.f32 %v4783, %v5013
      %v5145 = vadd.f32 %v4784, %v5018
      %v5146 = vadd.f32 %v4785, %v5023
      %v5147 = vadd.f32 %v4786, %v5028
      %v5148 = vadd.f32 %v4787, %v5033
      %v5149 = vadd.f32 %v4788, %v5038
      %v5150 = vadd.f32 %v4789, %v5043
      %v5151 = vadd.f32 %v4790, %v5048
      %v5152 = vadd.f32 %v4791, %v5053
      %v5153 = vadd.f32 %v4792, %v5058
      %v5154 = vadd.f32 %v4793, %v5063
      %v5155 = vadd.f32 %v4794, %v5068
      %v5156 = vadd.f32 %v4795, %v5073
      %v5157 = vadd.f32 %v4796, %v5078
      %v5158 = vadd.f32 %v4797, %v5083
      %v5159 = vadd.f32 %v4798, %v5088
      %v5160 = vadd.f32 %v4799, %v5093
      %v5161 = vadd.f32 %v4800, %v5098
      %v5162 = vadd.f32 %v4801, %v5103
      %v5163 = vadd.f32 %v4802, %v5108
      %v5164 = vadd.f32 %v4803, %v5113
      %v5165 = vadd.f32 %v4804, %v5118
      %v5166 = vld [vmem:[#allocation3 + $0x13] sm:$0xff]
      %v5167 = vld [vmem:[#allocation3 + $0x1b] sm:$0xff]
      %v5168 = vld [vmem:[#allocation3 + $0x23] sm:$0xff]
      %v5169 = vld [vmem:[#allocation3 + $0x2b] sm:$0xff]
      %v5170 = vld [vmem:[#allocation3 + $0x33] sm:$0xff]
      %v5171 = vld [vmem:[#allocation3 + $0x3b] sm:$0xff]
      %v5172 = vld [vmem:[#allocation3 + $0x43] sm:$0xff]
      %v5173 = vld [vmem:[#allocation3 + $0x4b] sm:$0xff]
      %v5174 = vld [vmem:[#allocation3 + $0x53] sm:$0xff]
      %v5175 = vld [vmem:[#allocation3 + $0x5b] sm:$0xff]
      %v5176 = vld [vmem:[#allocation3 + $0x63] sm:$0xff]
      %v5177 = vld [vmem:[#allocation3 + $0x6b] sm:$0xff]
      %v5178 = vld [vmem:[#allocation3 + $0x73] sm:$0xff]
      %v5179 = vld [vmem:[#allocation3 + $0x7b] sm:$0xff]
      %v5180 = vld [vmem:[#allocation3 + $0x83] sm:$0xff]
      %v5181 = vld [vmem:[#allocation3 + $0x8b] sm:$0xff]
      %v5182 = vld [vmem:[#allocation3 + $0x93] sm:$0xff]
      %v5183 = vld [vmem:[#allocation3 + $0x9b] sm:$0xff]
      %v5184 = vld [vmem:[#allocation3 + $0xa3] sm:$0xff]
      %v5185 = vld [vmem:[#allocation3 + $0xab] sm:$0xff]
      %v5186 = vld [vmem:[#allocation3 + $0xb3] sm:$0xff]
      %v5187 = vld [vmem:[#allocation3 + $0xbb] sm:$0xff]
      %v5188 = vld [vmem:[#allocation3 + $0xc3] sm:$0xff]
      %v5189 = vld [vmem:[#allocation3 + $0xcb] sm:$0xff]
      %v5190 = vld [vmem:[#allocation3 + $0xd3] sm:$0xff]
      %v5191 = vld [vmem:[#allocation3 + $0xdb] sm:$0xff]
      %v5192 = vld [vmem:[#allocation3 + $0xe3] sm:$0xff]
      %v5193 = vld [vmem:[#allocation3 + $0xeb] sm:$0xff]
      %v5194 = vld [vmem:[#allocation3 + $0xf3] sm:$0xff]
      %v5195 = vld [vmem:[#allocation3 + $0xfb] sm:$0xff]
      %v5196 = vld [vmem:[#allocation3 + $0x103] sm:$0xff]
      %v5197 = vld [vmem:[#allocation3 + $0x10b] sm:$0xff]
      %v5198 = vld [vmem:[#allocation3 + $0x113] sm:$0xff]
      %v5199 = vld [vmem:[#allocation3 + $0x11b] sm:$0xff]
      %v5200 = vld [vmem:[#allocation3 + $0x123] sm:$0xff]
      %v5201 = vld [vmem:[#allocation3 + $0x12b] sm:$0xff]
      %v5202 = vld [vmem:[#allocation3 + $0x133] sm:$0xff]
      %v5203 = vld [vmem:[#allocation3 + $0x13b] sm:$0xff]
      %v5204 = vld [vmem:[#allocation3 + $0x143] sm:$0xff]
      %v5205 = vld [vmem:[#allocation3 + $0x14b] sm:$0xff]
      %v5206 = vld [vmem:[#allocation3 + $0x153] sm:$0xf]
      %s5207 = scalar_lea.vmem %s4, 512
      %v5208 = vld [vmem:[%s5207] sm:$0xff]
      %v5209 = vld [vmem:[%s5207 + $0x8] sm:$0xff]
      %v5210 = vld [vmem:[%s5207 + $0x10] sm:$0xff]
      %v5211 = vld [vmem:[%s5207 + $0x18] sm:$0xff]
      %v5212 = vld [vmem:[%s5207 + $0x20] sm:$0xff]
      %v5213 = vld [vmem:[%s5207 + $0x28] sm:$0xff]
      %v5214 = vld [vmem:[%s5207 + $0x30] sm:$0xff]
      %v5215 = vld [vmem:[%s5207 + $0x38] sm:$0xff]
      %v5216 = vld [vmem:[%s5207 + $0x40] sm:$0xff]
      %v5217 = vld [vmem:[%s5207 + $0x48] sm:$0xff]
      %v5218 = vld [vmem:[%s5207 + $0x50] sm:$0xff]
      %v5219 = vld [vmem:[%s5207 + $0x58] sm:$0xff]
      %v5220 = vld [vmem:[%s5207 + $0x60] sm:$0xff]
      %v5221 = vld [vmem:[%s5207 + $0x68] sm:$0xff]
      %v5222 = vld [vmem:[%s5207 + $0x70] sm:$0xff]
      %v5223 = vld [vmem:[%s5207 + $0x78] sm:$0xff]
      %5224 = vmatprep.subr.mxu0 0.0
      %5225 = vmatpush1.msra.mxu0 %v5208
      %5226 = vmatprep.subr.mxu0 0.0
      %5227 = vmatpush1.msra.mxu0 %v5209
      %5228 = vmatprep.subr.mxu0 0.0
      %5229 = vmatpush1.msra.mxu0 %v5210
      %5230 = vmatprep.subr.mxu0 0.0
      %5231 = vmatpush1.msra.mxu0 %v5211
      %5232 = vmatprep.subr.mxu0 0.0
      %5233 = vmatpush1.msra.mxu0 %v5212
      %5234 = vmatprep.subr.mxu0 0.0
      %5235 = vmatpush1.msra.mxu0 %v5213
      %5236 = vmatprep.subr.mxu0 0.0
      %5237 = vmatpush1.msra.mxu0 %v5214
      %5238 = vmatprep.subr.mxu0 0.0
      %5239 = vmatpush1.msra.mxu0 %v5215
      %5240 = vmatprep.subr.mxu0 0.0
      %5241 = vmatpush1.msra.mxu0 %v5216
      %5242 = vmatprep.subr.mxu0 0.0
      %5243 = vmatpush1.msra.mxu0 %v5217
      %5244 = vmatprep.subr.mxu0 0.0
      %5245 = vmatpush1.msra.mxu0 %v5218
      %5246 = vmatprep.subr.mxu0 0.0
      %5247 = vmatpush1.msra.mxu0 %v5219
      %5248 = vmatprep.subr.mxu0 0.0
      %5249 = vmatpush1.msra.mxu0 %v5220
      %5250 = vmatprep.subr.mxu0 0.0
      %5251 = vmatpush1.msra.mxu0 %v5221
      %5252 = vmatprep.subr.mxu0 0.0
      %5253 = vmatpush1.msra.mxu0 %v5222
      %5254 = vmatprep.subr.mxu0 0.0
      %5255 = vmatpush1.msra.mxu0 %v5223
      %5256 = vmatprep.subr.mxu0 0.0
      %5257 = vmatpush1.msra.mxu0 0.0
      %5258 = vmatprep.subr.mxu0 0.0
      %5259 = vmatpush1.msra.mxu0 0.0
      %5260 = vmatprep.subr.mxu0 0.0
      %5261 = vmatpush1.msra.mxu0 0.0
      %5262 = vmatprep.subr.mxu0 0.0
      %5263 = vmatpush1.msra.mxu0 0.0
      %5264 = vmatprep.subr.mxu0 0.0
      %5265 = vmatpush1.msra.mxu0 0.0
      %5266 = vmatprep.subr.mxu0 0.0
      %5267 = vmatpush1.msra.mxu0 0.0
      %5268 = vmatprep.subr.mxu0 0.0
      %5269 = vmatpush1.msra.mxu0 0.0
      %5270 = vmatprep.subr.mxu0 0.0
      %5271 = vmatpush1.msra.mxu0 0.0
      %5272 = vmatprep.subr.mxu0 0.0
      %5273 = vmatpush1.msra.mxu0 0.0
      %5274 = vmatprep.subr.mxu0 0.0
      %5275 = vmatpush1.msra.mxu0 0.0
      %5276 = vmatprep.subr.mxu0 0.0
      %5277 = vmatpush1.msra.mxu0 0.0
      %5278 = vmatprep.subr.mxu0 0.0
      %5279 = vmatpush1.msra.mxu0 0.0
      %5280 = vmatprep.subr.mxu0 0.0
      %5281 = vmatpush1.msra.mxu0 0.0
      %5282 = vmatprep.subr.mxu0 0.0
      %5283 = vmatpush1.msra.mxu0 0.0
      %5284 = vmatprep.subr.mxu0 0.0
      %5285 = vmatpush1.msra.mxu0 0.0
      %5286 = vmatprep.subr.mxu0 0.0
      %5287 = vmatpush1.msra.mxu0 0.0
      %5288 = vmatprep.mubr.f32.mxu0 0.0
      %5289 = vmatmul.mubr.f32.gmra.mrb[0].mxu0 %v5166
      %v5290 = vpop.f32.mrb[0].mxu0
      %v5291 = vpop.f32.mrb[0].mxu0
      %5292 = vmatprep.mubr.f32.mxu0 0.0
      %5293 = vmatmul.mubr.f32.gmra.mrb[0].mxu0 %v5167
      %v5294 = vpop.f32.mrb[0].mxu0
      %v5295 = vpop.f32.mrb[0].mxu0
      %5296 = vmatprep.mubr.f32.mxu0 0.0
      %5297 = vmatmul.mubr.f32.gmra.mrb[0].mxu0 %v5168
      %v5298 = vpop.f32.mrb[0].mxu0
      %v5299 = vadd.f32 0.0, %v5298
      %v5300 = vpop.f32.mrb[0].mxu0
      %5301 = vmatprep.mubr.f32.mxu0 0.0
      %5302 = vmatmul.mubr.f32.gmra.mrb[0].mxu0 %v5169
      %v5303 = vpop.f32.mrb[0].mxu0
      %v5304 = vadd.f32 0.0, %v5303
      %v5305 = vpop.f32.mrb[0].mxu0
      %5306 = vmatprep.mubr.f32.mxu0 0.0
      %5307 = vmatmul.mubr.f32.gmra.mrb[0].mxu0 %v5170
      %v5308 = vpop.f32.mrb[0].mxu0
      %v5309 = vadd.f32 0.0, %v5308
      %v5310 = vpop.f32.mrb[0].mxu0
      %5311 = vmatprep.mubr.f32.mxu0 0.0
      %5312 = vmatmul.mubr.f32.gmra.mrb[0].mxu0 %v5171
      %v5313 = vpop.f32.mrb[0].mxu0
      %v5314 = vadd.f32 0.0, %v5313
      %v5315 = vpop.f32.mrb[0].mxu0
      %5316 = vmatprep.mubr.f32.mxu0 0.0
      %5317 = vmatmul.mubr.f32.gmra.mrb[0].mxu0 %v5172
      %v5318 = vpop.f32.mrb[0].mxu0
      %v5319 = vadd.f32 0.0, %v5318
      %v5320 = vpop.f32.mrb[0].mxu0
      %5321 = vmatprep.mubr.f32.mxu0 0.0
      %5322 = vmatmul.mubr.f32.gmra.mrb[0].mxu0 %v5173
      %v5323 = vpop.f32.mrb[0].mxu0
      %v5324 = vadd.f32 0.0, %v5323
      %v5325 = vpop.f32.mrb[0].mxu0
      %5326 = vmatprep.mubr.f32.mxu0 0.0
      %5327 = vmatmul.mubr.f32.gmra.mrb[0].mxu0 %v5174
      %v5328 = vpop.f32.mrb[0].mxu0
      %v5329 = vadd.f32 0.0, %v5328
      %v5330 = vpop.f32.mrb[0].mxu0
      %5331 = vmatprep.mubr.f32.mxu0 0.0
      %5332 = vmatmul.mubr.f32.gmra.mrb[0].mxu0 %v5175
      %v5333 = vpop.f32.mrb[0].mxu0
      %v5334 = vadd.f32 0.0, %v5333
      %v5335 = vpop.f32.mrb[0].mxu0
      %5336 = vmatprep.mubr.f32.mxu0 0.0
      %5337 = vmatmul.mubr.f32.gmra.mrb[0].mxu0 %v5176
      %v5338 = vpop.f32.mrb[0].mxu0
      %v5339 = vadd.f32 0.0, %v5338
      %v5340 = vpop.f32.mrb[0].mxu0
      %5341 = vmatprep.mubr.f32.mxu0 0.0
      %5342 = vmatmul.mubr.f32.gmra.mrb[0].mxu0 %v5177
      %v5343 = vpop.f32.mrb[0].mxu0
      %v5344 = vadd.f32 0.0, %v5343
      %v5345 = vpop.f32.mrb[0].mxu0
      %5346 = vmatprep.mubr.f32.mxu0 0.0
      %5347 = vmatmul.mubr.f32.gmra.mrb[0].mxu0 %v5178
      %v5348 = vpop.f32.mrb[0].mxu0
      %v5349 = vadd.f32 0.0, %v5348
      %v5350 = vpop.f32.mrb[0].mxu0
      %5351 = vmatprep.mubr.f32.mxu0 0.0
      %5352 = vmatmul.mubr.f32.gmra.mrb[0].mxu0 %v5179
      %v5353 = vpop.f32.mrb[0].mxu0
      %v5354 = vadd.f32 0.0, %v5353
      %v5355 = vpop.f32.mrb[0].mxu0
      %5356 = vmatprep.mubr.f32.mxu0 0.0
      %5357 = vmatmul.mubr.f32.gmra.mrb[0].mxu0 %v5180
      %v5358 = vpop.f32.mrb[0].mxu0
      %v5359 = vadd.f32 0.0, %v5358
      %v5360 = vpop.f32.mrb[0].mxu0
      %5361 = vmatprep.mubr.f32.mxu0 0.0
      %5362 = vmatmul.mubr.f32.gmra.mrb[0].mxu0 %v5181
      %v5363 = vpop.f32.mrb[0].mxu0
      %v5364 = vadd.f32 0.0, %v5363
      %v5365 = vpop.f32.mrb[0].mxu0
      %5366 = vmatprep.mubr.f32.mxu0 0.0
      %5367 = vmatmul.mubr.f32.gmra.mrb[0].mxu0 %v5182
      %v5368 = vpop.f32.mrb[0].mxu0
      %v5369 = vadd.f32 0.0, %v5368
      %v5370 = vpop.f32.mrb[0].mxu0
      %5371 = vmatprep.mubr.f32.mxu0 0.0
      %5372 = vmatmul.mubr.f32.gmra.mrb[0].mxu0 %v5183
      %v5373 = vpop.f32.mrb[0].mxu0
      %v5374 = vadd.f32 0.0, %v5373
      %v5375 = vpop.f32.mrb[0].mxu0
      %5376 = vmatprep.mubr.f32.mxu0 0.0
      %5377 = vmatmul.mubr.f32.gmra.mrb[0].mxu0 %v5184
      %v5378 = vpop.f32.mrb[0].mxu0
      %v5379 = vadd.f32 0.0, %v5378
      %v5380 = vpop.f32.mrb[0].mxu0
      %5381 = vmatprep.mubr.f32.mxu0 0.0
      %5382 = vmatmul.mubr.f32.gmra.mrb[0].mxu0 %v5185
      %v5383 = vpop.f32.mrb[0].mxu0
      %v5384 = vadd.f32 0.0, %v5383
      %v5385 = vpop.f32.mrb[0].mxu0
      %5386 = vmatprep.mubr.f32.mxu0 0.0
      %5387 = vmatmul.mubr.f32.gmra.mrb[0].mxu0 %v5186
      %v5388 = vpop.f32.mrb[0].mxu0
      %v5389 = vadd.f32 0.0, %v5388
      %v5390 = vpop.f32.mrb[0].mxu0
      %5391 = vmatprep.mubr.f32.mxu0 0.0
      %5392 = vmatmul.mubr.f32.gmra.mrb[0].mxu0 %v5187
      %v5393 = vpop.f32.mrb[0].mxu0
      %v5394 = vadd.f32 0.0, %v5393
      %v5395 = vpop.f32.mrb[0].mxu0
      %5396 = vmatprep.mubr.f32.mxu0 0.0
      %5397 = vmatmul.mubr.f32.gmra.mrb[0].mxu0 %v5188
      %v5398 = vpop.f32.mrb[0].mxu0
      %v5399 = vadd.f32 0.0, %v5398
      %v5400 = vpop.f32.mrb[0].mxu0
      %5401 = vmatprep.mubr.f32.mxu0 0.0
      %5402 = vmatmul.mubr.f32.gmra.mrb[0].mxu0 %v5189
      %v5403 = vpop.f32.mrb[0].mxu0
      %v5404 = vadd.f32 0.0, %v5403
      %v5405 = vpop.f32.mrb[0].mxu0
      %5406 = vmatprep.mubr.f32.mxu0 0.0
      %5407 = vmatmul.mubr.f32.gmra.mrb[0].mxu0 %v5190
      %v5408 = vpop.f32.mrb[0].mxu0
      %v5409 = vadd.f32 0.0, %v5408
      %v5410 = vpop.f32.mrb[0].mxu0
      %5411 = vmatprep.mubr.f32.mxu0 0.0
      %5412 = vmatmul.mubr.f32.gmra.mrb[0].mxu0 %v5191
      %v5413 = vpop.f32.mrb[0].mxu0
      %v5414 = vadd.f32 0.0, %v5413
      %v5415 = vpop.f32.mrb[0].mxu0
      %5416 = vmatprep.mubr.f32.mxu0 0.0
      %5417 = vmatmul.mubr.f32.gmra.mrb[0].mxu0 %v5192
      %v5418 = vpop.f32.mrb[0].mxu0
      %v5419 = vadd.f32 0.0, %v5418
      %v5420 = vpop.f32.mrb[0].mxu0
      %5421 = vmatprep.mubr.f32.mxu0 0.0
      %5422 = vmatmul.mubr.f32.gmra.mrb[0].mxu0 %v5193
      %v5423 = vpop.f32.mrb[0].mxu0
      %v5424 = vadd.f32 0.0, %v5423
      %v5425 = vpop.f32.mrb[0].mxu0
      %5426 = vmatprep.mubr.f32.mxu0 0.0
      %5427 = vmatmul.mubr.f32.gmra.mrb[0].mxu0 %v5194
      %v5428 = vpop.f32.mrb[0].mxu0
      %v5429 = vadd.f32 0.0, %v5428
      %v5430 = vpop.f32.mrb[0].mxu0
      %5431 = vmatprep.mubr.f32.mxu0 0.0
      %5432 = vmatmul.mubr.f32.gmra.mrb[0].mxu0 %v5195
      %v5433 = vpop.f32.mrb[0].mxu0
      %v5434 = vadd.f32 0.0, %v5433
      %v5435 = vpop.f32.mrb[0].mxu0
      %5436 = vmatprep.mubr.f32.mxu0 0.0
      %5437 = vmatmul.mubr.f32.gmra.mrb[0].mxu0 %v5196
      %v5438 = vpop.f32.mrb[0].mxu0
      %v5439 = vadd.f32 0.0, %v5438
      %v5440 = vpop.f32.mrb[0].mxu0
      %5441 = vmatprep.mubr.f32.mxu0 0.0
      %5442 = vmatmul.mubr.f32.gmra.mrb[0].mxu0 %v5197
      %v5443 = vpop.f32.mrb[0].mxu0
      %v5444 = vadd.f32 0.0, %v5443
      %v5445 = vpop.f32.mrb[0].mxu0
      %5446 = vmatprep.mubr.f32.mxu0 0.0
      %5447 = vmatmul.mubr.f32.gmra.mrb[0].mxu0 %v5198
      %v5448 = vpop.f32.mrb[0].mxu0
      %v5449 = vadd.f32 0.0, %v5448
      %v5450 = vpop.f32.mrb[0].mxu0
      %5451 = vmatprep.mubr.f32.mxu0 0.0
      %5452 = vmatmul.mubr.f32.gmra.mrb[0].mxu0 %v5199
      %v5453 = vpop.f32.mrb[0].mxu0
      %v5454 = vadd.f32 0.0, %v5453
      %v5455 = vpop.f32.mrb[0].mxu0
      %5456 = vmatprep.mubr.f32.mxu0 0.0
      %5457 = vmatmul.mubr.f32.gmra.mrb[0].mxu0 %v5200
      %v5458 = vpop.f32.mrb[0].mxu0
      %v5459 = vadd.f32 0.0, %v5458
      %v5460 = vpop.f32.mrb[0].mxu0
      %5461 = vmatprep.mubr.f32.mxu0 0.0
      %5462 = vmatmul.mubr.f32.gmra.mrb[0].mxu0 %v5201
      %v5463 = vpop.f32.mrb[0].mxu0
      %v5464 = vadd.f32 0.0, %v5463
      %v5465 = vpop.f32.mrb[0].mxu0
      %5466 = vmatprep.mubr.f32.mxu0 0.0
      %5467 = vmatmul.mubr.f32.gmra.mrb[0].mxu0 %v5202
      %v5468 = vpop.f32.mrb[0].mxu0
      %v5469 = vadd.f32 0.0, %v5468
      %v5470 = vpop.f32.mrb[0].mxu0
      %5471 = vmatprep.mubr.f32.mxu0 0.0
      %5472 = vmatmul.mubr.f32.gmra.mrb[0].mxu0 %v5203
      %v5473 = vpop.f32.mrb[0].mxu0
      %v5474 = vadd.f32 0.0, %v5473
      %v5475 = vpop.f32.mrb[0].mxu0
      %5476 = vmatprep.mubr.f32.mxu0 0.0
      %5477 = vmatmul.mubr.f32.gmra.mrb[0].mxu0 %v5204
      %v5478 = vpop.f32.mrb[0].mxu0
      %v5479 = vadd.f32 0.0, %v5478
      %v5480 = vpop.f32.mrb[0].mxu0
      %5481 = vmatprep.mubr.f32.mxu0 0.0
      %5482 = vmatmul.mubr.f32.gmra.mrb[0].mxu0 %v5205
      %v5483 = vpop.f32.mrb[0].mxu0
      %v5484 = vpop.f32.mrb[0].mxu0
      %5485 = vmatprep.mubr.f32.mxu0 0.0
      %5486 = vmatmul.mubr.f32.gmra.mrb[0].mxu0 %v5206
      %v5487 = vpop.f32.mrb[0].mxu0
      %v5488 = vpop.f32.mrb[0].mxu0
      %5489 = vdwg.mxu0
      %v5490 = vadd.f32 %v5129, %v5299
      %v5491 = vadd.f32 %v5130, %v5304
      %v5492 = vadd.f32 %v5131, %v5309
      %v5493 = vadd.f32 %v5132, %v5314
      %v5494 = vadd.f32 %v5133, %v5319
      %v5495 = vadd.f32 %v5134, %v5324
      %v5496 = vadd.f32 %v5135, %v5329
      %v5497 = vadd.f32 %v5136, %v5334
      %v5498 = vadd.f32 %v5137, %v5339
      %v5499 = vadd.f32 %v5138, %v5344
      %v5500 = vadd.f32 %v5139, %v5349
      %v5501 = vadd.f32 %v5140, %v5354
      %v5502 = vadd.f32 %v5141, %v5359
      %v5503 = vadd.f32 %v5142, %v5364
      %v5504 = vadd.f32 %v5143, %v5369
      %v5505 = vadd.f32 %v5144, %v5374
      %v5506 = vadd.f32 %v5145, %v5379
      %v5507 = vadd.f32 %v5146, %v5384
      %v5508 = vadd.f32 %v5147, %v5389
      %v5509 = vadd.f32 %v5148, %v5394
      %v5510 = vadd.f32 %v5149, %v5399
      %v5511 = vadd.f32 %v5150, %v5404
      %v5512 = vadd.f32 %v5151, %v5409
      %v5513 = vadd.f32 %v5152, %v5414
      %v5514 = vadd.f32 %v5153, %v5419
      %v5515 = vadd.f32 %v5154, %v5424
      %v5516 = vadd.f32 %v5155, %v5429
      %v5517 = vadd.f32 %v5156, %v5434
      %v5518 = vadd.f32 %v5157, %v5439
      %v5519 = vadd.f32 %v5158, %v5444
      %v5520 = vadd.f32 %v5159, %v5449
      %v5521 = vadd.f32 %v5160, %v5454
      %v5522 = vadd.f32 %v5161, %v5459
      %v5523 = vadd.f32 %v5162, %v5464
      %v5524 = vadd.f32 %v5163, %v5469
      %v5525 = vadd.f32 %v5164, %v5474
      %v5526 = vadd.f32 %v5165, %v5479
      %v5527 = vld [vmem:[#allocation3 + $0x14] sm:$0xff]
      %v5528 = vld [vmem:[#allocation3 + $0x1c] sm:$0xff]
      %v5529 = vld [vmem:[#allocation3 + $0x24] sm:$0xff]
      %v5530 = vld [vmem:[#allocation3 + $0x2c] sm:$0xff]
      %v5531 = vld [vmem:[#allocation3 + $0x34] sm:$0xff]
      %v5532 = vld [vmem:[#allocation3 + $0x3c] sm:$0xff]
      %v5533 = vld [vmem:[#allocation3 + $0x44] sm:$0xff]
      %v5534 = vld [vmem:[#allocation3 + $0x4c] sm:$0xff]
      %v5535 = vld [vmem:[#allocation3 + $0x54] sm:$0xff]
      %v5536 = vld [vmem:[#allocation3 + $0x5c] sm:$0xff]
      %v5537 = vld [vmem:[#allocation3 + $0x64] sm:$0xff]
      %v5538 = vld [vmem:[#allocation3 + $0x6c] sm:$0xff]
      %v5539 = vld [vmem:[#allocation3 + $0x74] sm:$0xff]
      %v5540 = vld [vmem:[#allocation3 + $0x7c] sm:$0xff]
      %v5541 = vld [vmem:[#allocation3 + $0x84] sm:$0xff]
      %v5542 = vld [vmem:[#allocation3 + $0x8c] sm:$0xff]
      %v5543 = vld [vmem:[#allocation3 + $0x94] sm:$0xff]
      %v5544 = vld [vmem:[#allocation3 + $0x9c] sm:$0xff]
      %v5545 = vld [vmem:[#allocation3 + $0xa4] sm:$0xff]
      %v5546 = vld [vmem:[#allocation3 + $0xac] sm:$0xff]
      %v5547 = vld [vmem:[#allocation3 + $0xb4] sm:$0xff]
      %v5548 = vld [vmem:[#allocation3 + $0xbc] sm:$0xff]
      %v5549 = vld [vmem:[#allocation3 + $0xc4] sm:$0xff]
      %v5550 = vld [vmem:[#allocation3 + $0xcc] sm:$0xff]
      %v5551 = vld [vmem:[#allocation3 + $0xd4] sm:$0xff]
      %v5552 = vld [vmem:[#allocation3 + $0xdc] sm:$0xff]
      %v5553 = vld [vmem:[#allocation3 + $0xe4] sm:$0xff]
      %v5554 = vld [vmem:[#allocation3 + $0xec] sm:$0xff]
      %v5555 = vld [vmem:[#allocation3 + $0xf4] sm:$0xff]
      %v5556 = vld [vmem:[#allocation3 + $0xfc] sm:$0xff]
      %v5557 = vld [vmem:[#allocation3 + $0x104] sm:$0xff]
      %v5558 = vld [vmem:[#allocation3 + $0x10c] sm:$0xff]
      %v5559 = vld [vmem:[#allocation3 + $0x114] sm:$0xff]
      %v5560 = vld [vmem:[#allocation3 + $0x11c] sm:$0xff]
      %v5561 = vld [vmem:[#allocation3 + $0x124] sm:$0xff]
      %v5562 = vld [vmem:[#allocation3 + $0x12c] sm:$0xff]
      %v5563 = vld [vmem:[#allocation3 + $0x134] sm:$0xff]
      %v5564 = vld [vmem:[#allocation3 + $0x13c] sm:$0xff]
      %v5565 = vld [vmem:[#allocation3 + $0x144] sm:$0xff]
      %v5566 = vld [vmem:[#allocation3 + $0x14c] sm:$0xff]
      %v5567 = vld [vmem:[#allocation3 + $0x154] sm:$0xf]
      %s5568 = scalar_lea.vmem %s4, 640
      %v5569 = vld [vmem:[%s5568] sm:$0xff]
      %v5570 = vld [vmem:[%s5568 + $0x8] sm:$0xff]
      %v5571 = vld [vmem:[%s5568 + $0x10] sm:$0xff]
      %v5572 = vld [vmem:[%s5568 + $0x18] sm:$0xff]
      %v5573 = vld [vmem:[%s5568 + $0x20] sm:$0xff]
      %v5574 = vld [vmem:[%s5568 + $0x28] sm:$0xff]
      %v5575 = vld [vmem:[%s5568 + $0x30] sm:$0xff]
      %v5576 = vld [vmem:[%s5568 + $0x38] sm:$0xff]
      %v5577 = vld [vmem:[%s5568 + $0x40] sm:$0xff]
      %v5578 = vld [vmem:[%s5568 + $0x48] sm:$0xff]
      %v5579 = vld [vmem:[%s5568 + $0x50] sm:$0xff]
      %v5580 = vld [vmem:[%s5568 + $0x58] sm:$0xff]
      %v5581 = vld [vmem:[%s5568 + $0x60] sm:$0xff]
      %v5582 = vld [vmem:[%s5568 + $0x68] sm:$0xff]
      %v5583 = vld [vmem:[%s5568 + $0x70] sm:$0xff]
      %v5584 = vld [vmem:[%s5568 + $0x78] sm:$0xff]
      %5585 = vmatprep.subr.mxu0 0.0
      %5586 = vmatpush1.msra.mxu0 %v5569
      %5587 = vmatprep.subr.mxu0 0.0
      %5588 = vmatpush1.msra.mxu0 %v5570
      %5589 = vmatprep.subr.mxu0 0.0
      %5590 = vmatpush1.msra.mxu0 %v5571
      %5591 = vmatprep.subr.mxu0 0.0
      %5592 = vmatpush1.msra.mxu0 %v5572
      %5593 = vmatprep.subr.mxu0 0.0
      %5594 = vmatpush1.msra.mxu0 %v5573
      %5595 = vmatprep.subr.mxu0 0.0
      %5596 = vmatpush1.msra.mxu0 %v5574
      %5597 = vmatprep.subr.mxu0 0.0
      %5598 = vmatpush1.msra.mxu0 %v5575
      %5599 = vmatprep.subr.mxu0 0.0
      %5600 = vmatpush1.msra.mxu0 %v5576
      %5601 = vmatprep.subr.mxu0 0.0
      %5602 = vmatpush1.msra.mxu0 %v5577
      %5603 = vmatprep.subr.mxu0 0.0
      %5604 = vmatpush1.msra.mxu0 %v5578
      %5605 = vmatprep.subr.mxu0 0.0
      %5606 = vmatpush1.msra.mxu0 %v5579
      %5607 = vmatprep.subr.mxu0 0.0
      %5608 = vmatpush1.msra.mxu0 %v5580
      %5609 = vmatprep.subr.mxu0 0.0
      %5610 = vmatpush1.msra.mxu0 %v5581
      %5611 = vmatprep.subr.mxu0 0.0
      %5612 = vmatpush1.msra.mxu0 %v5582
      %5613 = vmatprep.subr.mxu0 0.0
      %5614 = vmatpush1.msra.mxu0 %v5583
      %5615 = vmatprep.subr.mxu0 0.0
      %5616 = vmatpush1.msra.mxu0 %v5584
      %5617 = vmatprep.subr.mxu0 0.0
      %5618 = vmatpush1.msra.mxu0 0.0
      %5619 = vmatprep.subr.mxu0 0.0
      %5620 = vmatpush1.msra.mxu0 0.0
      %5621 = vmatprep.subr.mxu0 0.0
      %5622 = vmatpush1.msra.mxu0 0.0
      %5623 = vmatprep.subr.mxu0 0.0
      %5624 = vmatpush1.msra.mxu0 0.0
      %5625 = vmatprep.subr.mxu0 0.0
      %5626 = vmatpush1.msra.mxu0 0.0
      %5627 = vmatprep.subr.mxu0 0.0
      %5628 = vmatpush1.msra.mxu0 0.0
      %5629 = vmatprep.subr.mxu0 0.0
      %5630 = vmatpush1.msra.mxu0 0.0
      %5631 = vmatprep.subr.mxu0 0.0
      %5632 = vmatpush1.msra.mxu0 0.0
      %5633 = vmatprep.subr.mxu0 0.0
      %5634 = vmatpush1.msra.mxu0 0.0
      %5635 = vmatprep.subr.mxu0 0.0
      %5636 = vmatpush1.msra.mxu0 0.0
      %5637 = vmatprep.subr.mxu0 0.0
      %5638 = vmatpush1.msra.mxu0 0.0
      %5639 = vmatprep.subr.mxu0 0.0
      %5640 = vmatpush1.msra.mxu0 0.0
      %5641 = vmatprep.subr.mxu0 0.0
      %5642 = vmatpush1.msra.mxu0 0.0
      %5643 = vmatprep.subr.mxu0 0.0
      %5644 = vmatpush1.msra.mxu0 0.0
      %5645 = vmatprep.subr.mxu0 0.0
      %5646 = vmatpush1.msra.mxu0 0.0
      %5647 = vmatprep.subr.mxu0 0.0
      %5648 = vmatpush1.msra.mxu0 0.0
      %5649 = vmatprep.mubr.f32.mxu0 0.0
      %5650 = vmatmul.mubr.f32.gmra.mrb[0].mxu0 %v5527
      %v5651 = vpop.f32.mrb[0].mxu0
      %v5652 = vpop.f32.mrb[0].mxu0
      %5653 = vmatprep.mubr.f32.mxu0 0.0
      %5654 = vmatmul.mubr.f32.gmra.mrb[0].mxu0 %v5528
      %v5655 = vpop.f32.mrb[0].mxu0
      %v5656 = vpop.f32.mrb[0].mxu0
      %5657 = vmatprep.mubr.f32.mxu0 0.0
      %5658 = vmatmul.mubr.f32.gmra.mrb[0].mxu0 %v5529
      %v5659 = vpop.f32.mrb[0].mxu0
      %v5660 = vadd.f32 0.0, %v5659
      %v5661 = vpop.f32.mrb[0].mxu0
      %5662 = vmatprep.mubr.f32.mxu0 0.0
      %5663 = vmatmul.mubr.f32.gmra.mrb[0].mxu0 %v5530
      %v5664 = vpop.f32.mrb[0].mxu0
      %v5665 = vadd.f32 0.0, %v5664
      %v5666 = vpop.f32.mrb[0].mxu0
      %5667 = vmatprep.mubr.f32.mxu0 0.0
      %5668 = vmatmul.mubr.f32.gmra.mrb[0].mxu0 %v5531
      %v5669 = vpop.f32.mrb[0].mxu0
      %v5670 = vadd.f32 0.0, %v5669
      %v5671 = vpop.f32.mrb[0].mxu0
      %5672 = vmatprep.mubr.f32.mxu0 0.0
      %5673 = vmatmul.mubr.f32.gmra.mrb[0].mxu0 %v5532
      %v5674 = vpop.f32.mrb[0].mxu0
      %v5675 = vadd.f32 0.0, %v5674
      %v5676 = vpop.f32.mrb[0].mxu0
      %5677 = vmatprep.mubr.f32.mxu0 0.0
      %5678 = vmatmul.mubr.f32.gmra.mrb[0].mxu0 %v5533
      %v5679 = vpop.f32.mrb[0].mxu0
      %v5680 = vadd.f32 0.0, %v5679
      %v5681 = vpop.f32.mrb[0].mxu0
      %5682 = vmatprep.mubr.f32.mxu0 0.0
      %5683 = vmatmul.mubr.f32.gmra.mrb[0].mxu0 %v5534
      %v5684 = vpop.f32.mrb[0].mxu0
      %v5685 = vadd.f32 0.0, %v5684
      %v5686 = vpop.f32.mrb[0].mxu0
      %5687 = vmatprep.mubr.f32.mxu0 0.0
      %5688 = vmatmul.mubr.f32.gmra.mrb[0].mxu0 %v5535
      %v5689 = vpop.f32.mrb[0].mxu0
      %v5690 = vadd.f32 0.0, %v5689
      %v5691 = vpop.f32.mrb[0].mxu0
      %5692 = vmatprep.mubr.f32.mxu0 0.0
      %5693 = vmatmul.mubr.f32.gmra.mrb[0].mxu0 %v5536
      %v5694 = vpop.f32.mrb[0].mxu0
      %v5695 = vadd.f32 0.0, %v5694
      %v5696 = vpop.f32.mrb[0].mxu0
      %5697 = vmatprep.mubr.f32.mxu0 0.0
      %5698 = vmatmul.mubr.f32.gmra.mrb[0].mxu0 %v5537
      %v5699 = vpop.f32.mrb[0].mxu0
      %v5700 = vadd.f32 0.0, %v5699
      %v5701 = vpop.f32.mrb[0].mxu0
      %5702 = vmatprep.mubr.f32.mxu0 0.0
      %5703 = vmatmul.mubr.f32.gmra.mrb[0].mxu0 %v5538
      %v5704 = vpop.f32.mrb[0].mxu0
      %v5705 = vadd.f32 0.0, %v5704
      %v5706 = vpop.f32.mrb[0].mxu0
      %5707 = vmatprep.mubr.f32.mxu0 0.0
      %5708 = vmatmul.mubr.f32.gmra.mrb[0].mxu0 %v5539
      %v5709 = vpop.f32.mrb[0].mxu0
      %v5710 = vadd.f32 0.0, %v5709
      %v5711 = vpop.f32.mrb[0].mxu0
      %5712 = vmatprep.mubr.f32.mxu0 0.0
      %5713 = vmatmul.mubr.f32.gmra.mrb[0].mxu0 %v5540
      %v5714 = vpop.f32.mrb[0].mxu0
      %v5715 = vadd.f32 0.0, %v5714
      %v5716 = vpop.f32.mrb[0].mxu0
      %5717 = vmatprep.mubr.f32.mxu0 0.0
      %5718 = vmatmul.mubr.f32.gmra.mrb[0].mxu0 %v5541
      %v5719 = vpop.f32.mrb[0].mxu0
      %v5720 = vadd.f32 0.0, %v5719
      %v5721 = vpop.f32.mrb[0].mxu0
      %5722 = vmatprep.mubr.f32.mxu0 0.0
      %5723 = vmatmul.mubr.f32.gmra.mrb[0].mxu0 %v5542
      %v5724 = vpop.f32.mrb[0].mxu0
      %v5725 = vadd.f32 0.0, %v5724
      %v5726 = vpop.f32.mrb[0].mxu0
      %5727 = vmatprep.mubr.f32.mxu0 0.0
      %5728 = vmatmul.mubr.f32.gmra.mrb[0].mxu0 %v5543
      %v5729 = vpop.f32.mrb[0].mxu0
      %v5730 = vadd.f32 0.0, %v5729
      %v5731 = vpop.f32.mrb[0].mxu0
      %5732 = vmatprep.mubr.f32.mxu0 0.0
      %5733 = vmatmul.mubr.f32.gmra.mrb[0].mxu0 %v5544
      %v5734 = vpop.f32.mrb[0].mxu0
      %v5735 = vadd.f32 0.0, %v5734
      %v5736 = vpop.f32.mrb[0].mxu0
      %5737 = vmatprep.mubr.f32.mxu0 0.0
      %5738 = vmatmul.mubr.f32.gmra.mrb[0].mxu0 %v5545
      %v5739 = vpop.f32.mrb[0].mxu0
      %v5740 = vadd.f32 0.0, %v5739
      %v5741 = vpop.f32.mrb[0].mxu0
      %5742 = vmatprep.mubr.f32.mxu0 0.0
      %5743 = vmatmul.mubr.f32.gmra.mrb[0].mxu0 %v5546
      %v5744 = vpop.f32.mrb[0].mxu0
      %v5745 = vadd.f32 0.0, %v5744
      %v5746 = vpop.f32.mrb[0].mxu0
      %5747 = vmatprep.mubr.f32.mxu0 0.0
      %5748 = vmatmul.mubr.f32.gmra.mrb[0].mxu0 %v5547
      %v5749 = vpop.f32.mrb[0].mxu0
      %v5750 = vadd.f32 0.0, %v5749
      %v5751 = vpop.f32.mrb[0].mxu0
      %5752 = vmatprep.mubr.f32.mxu0 0.0
      %5753 = vmatmul.mubr.f32.gmra.mrb[0].mxu0 %v5548
      %v5754 = vpop.f32.mrb[0].mxu0
      %v5755 = vadd.f32 0.0, %v5754
      %v5756 = vpop.f32.mrb[0].mxu0
      %5757 = vmatprep.mubr.f32.mxu0 0.0
      %5758 = vmatmul.mubr.f32.gmra.mrb[0].mxu0 %v5549
      %v5759 = vpop.f32.mrb[0].mxu0
      %v5760 = vadd.f32 0.0, %v5759
      %v5761 = vpop.f32.mrb[0].mxu0
      %5762 = vmatprep.mubr.f32.mxu0 0.0
      %5763 = vmatmul.mubr.f32.gmra.mrb[0].mxu0 %v5550
      %v5764 = vpop.f32.mrb[0].mxu0
      %v5765 = vadd.f32 0.0, %v5764
      %v5766 = vpop.f32.mrb[0].mxu0
      %5767 = vmatprep.mubr.f32.mxu0 0.0
      %5768 = vmatmul.mubr.f32.gmra.mrb[0].mxu0 %v5551
      %v5769 = vpop.f32.mrb[0].mxu0
      %v5770 = vadd.f32 0.0, %v5769
      %v5771 = vpop.f32.mrb[0].mxu0
      %5772 = vmatprep.mubr.f32.mxu0 0.0
      %5773 = vmatmul.mubr.f32.gmra.mrb[0].mxu0 %v5552
      %v5774 = vpop.f32.mrb[0].mxu0
      %v5775 = vadd.f32 0.0, %v5774
      %v5776 = vpop.f32.mrb[0].mxu0
      %5777 = vmatprep.mubr.f32.mxu0 0.0
      %5778 = vmatmul.mubr.f32.gmra.mrb[0].mxu0 %v5553
      %v5779 = vpop.f32.mrb[0].mxu0
      %v5780 = vadd.f32 0.0, %v5779
      %v5781 = vpop.f32.mrb[0].mxu0
      %5782 = vmatprep.mubr.f32.mxu0 0.0
      %5783 = vmatmul.mubr.f32.gmra.mrb[0].mxu0 %v5554
      %v5784 = vpop.f32.mrb[0].mxu0
      %v5785 = vadd.f32 0.0, %v5784
      %v5786 = vpop.f32.mrb[0].mxu0
      %5787 = vmatprep.mubr.f32.mxu0 0.0
      %5788 = vmatmul.mubr.f32.gmra.mrb[0].mxu0 %v5555
      %v5789 = vpop.f32.mrb[0].mxu0
      %v5790 = vadd.f32 0.0, %v5789
      %v5791 = vpop.f32.mrb[0].mxu0
      %5792 = vmatprep.mubr.f32.mxu0 0.0
      %5793 = vmatmul.mubr.f32.gmra.mrb[0].mxu0 %v5556
      %v5794 = vpop.f32.mrb[0].mxu0
      %v5795 = vadd.f32 0.0, %v5794
      %v5796 = vpop.f32.mrb[0].mxu0
      %5797 = vmatprep.mubr.f32.mxu0 0.0
      %5798 = vmatmul.mubr.f32.gmra.mrb[0].mxu0 %v5557
      %v5799 = vpop.f32.mrb[0].mxu0
      %v5800 = vadd.f32 0.0, %v5799
      %v5801 = vpop.f32.mrb[0].mxu0
      %5802 = vmatprep.mubr.f32.mxu0 0.0
      %5803 = vmatmul.mubr.f32.gmra.mrb[0].mxu0 %v5558
      %v5804 = vpop.f32.mrb[0].mxu0
      %v5805 = vadd.f32 0.0, %v5804
      %v5806 = vpop.f32.mrb[0].mxu0
      %5807 = vmatprep.mubr.f32.mxu0 0.0
      %5808 = vmatmul.mubr.f32.gmra.mrb[0].mxu0 %v5559
      %v5809 = vpop.f32.mrb[0].mxu0
      %v5810 = vadd.f32 0.0, %v5809
      %v5811 = vpop.f32.mrb[0].mxu0
      %5812 = vmatprep.mubr.f32.mxu0 0.0
      %5813 = vmatmul.mubr.f32.gmra.mrb[0].mxu0 %v5560
      %v5814 = vpop.f32.mrb[0].mxu0
      %v5815 = vadd.f32 0.0, %v5814
      %v5816 = vpop.f32.mrb[0].mxu0
      %5817 = vmatprep.mubr.f32.mxu0 0.0
      %5818 = vmatmul.mubr.f32.gmra.mrb[0].mxu0 %v5561
      %v5819 = vpop.f32.mrb[0].mxu0
      %v5820 = vadd.f32 0.0, %v5819
      %v5821 = vpop.f32.mrb[0].mxu0
      %5822 = vmatprep.mubr.f32.mxu0 0.0
      %5823 = vmatmul.mubr.f32.gmra.mrb[0].mxu0 %v5562
      %v5824 = vpop.f32.mrb[0].mxu0
      %v5825 = vadd.f32 0.0, %v5824
      %v5826 = vpop.f32.mrb[0].mxu0
      %5827 = vmatprep.mubr.f32.mxu0 0.0
      %5828 = vmatmul.mubr.f32.gmra.mrb[0].mxu0 %v5563
      %v5829 = vpop.f32.mrb[0].mxu0
      %v5830 = vadd.f32 0.0, %v5829
      %v5831 = vpop.f32.mrb[0].mxu0
      %5832 = vmatprep.mubr.f32.mxu0 0.0
      %5833 = vmatmul.mubr.f32.gmra.mrb[0].mxu0 %v5564
      %v5834 = vpop.f32.mrb[0].mxu0
      %v5835 = vadd.f32 0.0, %v5834
      %v5836 = vpop.f32.mrb[0].mxu0
      %5837 = vmatprep.mubr.f32.mxu0 0.0
      %5838 = vmatmul.mubr.f32.gmra.mrb[0].mxu0 %v5565
      %v5839 = vpop.f32.mrb[0].mxu0
      %v5840 = vadd.f32 0.0, %v5839
      %v5841 = vpop.f32.mrb[0].mxu0
      %5842 = vmatprep.mubr.f32.mxu0 0.0
      %5843 = vmatmul.mubr.f32.gmra.mrb[0].mxu0 %v5566
      %v5844 = vpop.f32.mrb[0].mxu0
      %v5845 = vpop.f32.mrb[0].mxu0
      %5846 = vmatprep.mubr.f32.mxu0 0.0
      %5847 = vmatmul.mubr.f32.gmra.mrb[0].mxu0 %v5567
      %v5848 = vpop.f32.mrb[0].mxu0
      %v5849 = vpop.f32.mrb[0].mxu0
      %5850 = vdwg.mxu0
      %v5851 = vadd.f32 %v5490, %v5660
      %v5852 = vadd.f32 %v5491, %v5665
      %v5853 = vadd.f32 %v5492, %v5670
      %v5854 = vadd.f32 %v5493, %v5675
      %v5855 = vadd.f32 %v5494, %v5680
      %v5856 = vadd.f32 %v5495, %v5685
      %v5857 = vadd.f32 %v5496, %v5690
      %v5858 = vadd.f32 %v5497, %v5695
      %v5859 = vadd.f32 %v5498, %v5700
      %v5860 = vadd.f32 %v5499, %v5705
      %v5861 = vadd.f32 %v5500, %v5710
      %v5862 = vadd.f32 %v5501, %v5715
      %v5863 = vadd.f32 %v5502, %v5720
      %v5864 = vadd.f32 %v5503, %v5725
      %v5865 = vadd.f32 %v5504, %v5730
      %v5866 = vadd.f32 %v5505, %v5735
      %v5867 = vadd.f32 %v5506, %v5740
      %v5868 = vadd.f32 %v5507, %v5745
      %v5869 = vadd.f32 %v5508, %v5750
      %v5870 = vadd.f32 %v5509, %v5755
      %v5871 = vadd.f32 %v5510, %v5760
      %v5872 = vadd.f32 %v5511, %v5765
      %v5873 = vadd.f32 %v5512, %v5770
      %v5874 = vadd.f32 %v5513, %v5775
      %v5875 = vadd.f32 %v5514, %v5780
      %v5876 = vadd.f32 %v5515, %v5785
      %v5877 = vadd.f32 %v5516, %v5790
      %v5878 = vadd.f32 %v5517, %v5795
      %v5879 = vadd.f32 %v5518, %v5800
      %v5880 = vadd.f32 %v5519, %v5805
      %v5881 = vadd.f32 %v5520, %v5810
      %v5882 = vadd.f32 %v5521, %v5815
      %v5883 = vadd.f32 %v5522, %v5820
      %v5884 = vadd.f32 %v5523, %v5825
      %v5885 = vadd.f32 %v5524, %v5830
      %v5886 = vadd.f32 %v5525, %v5835
      %v5887 = vadd.f32 %v5526, %v5840
      %v5888 = vld [vmem:[#allocation3 + $0x24] sm:$0xff]
      %v5889 = vld [vmem:[#allocation3 + $0x2c] sm:$0xff]
      %v5890 = vld [vmem:[#allocation3 + $0x34] sm:$0xff]
      %v5891 = vld [vmem:[#allocation3 + $0x3c] sm:$0xff]
      %v5892 = vld [vmem:[#allocation3 + $0x44] sm:$0xff]
      %v5893 = vld [vmem:[#allocation3 + $0x4c] sm:$0xff]
      %v5894 = vld [vmem:[#allocation3 + $0x54] sm:$0xff]
      %v5895 = vld [vmem:[#allocation3 + $0x5c] sm:$0xff]
      %v5896 = vld [vmem:[#allocation3 + $0x64] sm:$0xff]
      %v5897 = vld [vmem:[#allocation3 + $0x6c] sm:$0xff]
      %v5898 = vld [vmem:[#allocation3 + $0x74] sm:$0xff]
      %v5899 = vld [vmem:[#allocation3 + $0x7c] sm:$0xff]
      %v5900 = vld [vmem:[#allocation3 + $0x84] sm:$0xff]
      %v5901 = vld [vmem:[#allocation3 + $0x8c] sm:$0xff]
      %v5902 = vld [vmem:[#allocation3 + $0x94] sm:$0xff]
      %v5903 = vld [vmem:[#allocation3 + $0x9c] sm:$0xff]
      %v5904 = vld [vmem:[#allocation3 + $0xa4] sm:$0xff]
      %v5905 = vld [vmem:[#allocation3 + $0xac] sm:$0xff]
      %v5906 = vld [vmem:[#allocation3 + $0xb4] sm:$0xff]
      %v5907 = vld [vmem:[#allocation3 + $0xbc] sm:$0xff]
      %v5908 = vld [vmem:[#allocation3 + $0xc4] sm:$0xff]
      %v5909 = vld [vmem:[#allocation3 + $0xcc] sm:$0xff]
      %v5910 = vld [vmem:[#allocation3 + $0xd4] sm:$0xff]
      %v5911 = vld [vmem:[#allocation3 + $0xdc] sm:$0xff]
      %v5912 = vld [vmem:[#allocation3 + $0xe4] sm:$0xff]
      %v5913 = vld [vmem:[#allocation3 + $0xec] sm:$0xff]
      %v5914 = vld [vmem:[#allocation3 + $0xf4] sm:$0xff]
      %v5915 = vld [vmem:[#allocation3 + $0xfc] sm:$0xff]
      %v5916 = vld [vmem:[#allocation3 + $0x104] sm:$0xff]
      %v5917 = vld [vmem:[#allocation3 + $0x10c] sm:$0xff]
      %v5918 = vld [vmem:[#allocation3 + $0x114] sm:$0xff]
      %v5919 = vld [vmem:[#allocation3 + $0x11c] sm:$0xff]
      %v5920 = vld [vmem:[#allocation3 + $0x124] sm:$0xff]
      %v5921 = vld [vmem:[#allocation3 + $0x12c] sm:$0xff]
      %v5922 = vld [vmem:[#allocation3 + $0x134] sm:$0xff]
      %v5923 = vld [vmem:[#allocation3 + $0x13c] sm:$0xff]
      %v5924 = vld [vmem:[#allocation3 + $0x144] sm:$0xff]
      %v5925 = vld [vmem:[#allocation3 + $0x14c] sm:$0xff]
      %v5926 = vld [vmem:[#allocation3 + $0x154] sm:$0xff]
      %v5927 = vld [vmem:[#allocation3 + $0x15c] sm:$0xff]
      %v5928 = vld [vmem:[#allocation3 + $0x164] sm:$0xf]
      %s5929 = scalar_lea.vmem %s4, 768
      %v5930 = vld [vmem:[%s5929] sm:$0xff]
      %v5931 = vld [vmem:[%s5929 + $0x8] sm:$0xff]
      %v5932 = vld [vmem:[%s5929 + $0x10] sm:$0xff]
      %v5933 = vld [vmem:[%s5929 + $0x18] sm:$0xff]
      %v5934 = vld [vmem:[%s5929 + $0x20] sm:$0xff]
      %v5935 = vld [vmem:[%s5929 + $0x28] sm:$0xff]
      %v5936 = vld [vmem:[%s5929 + $0x30] sm:$0xff]
      %v5937 = vld [vmem:[%s5929 + $0x38] sm:$0xff]
      %v5938 = vld [vmem:[%s5929 + $0x40] sm:$0xff]
      %v5939 = vld [vmem:[%s5929 + $0x48] sm:$0xff]
      %v5940 = vld [vmem:[%s5929 + $0x50] sm:$0xff]
      %v5941 = vld [vmem:[%s5929 + $0x58] sm:$0xff]
      %v5942 = vld [vmem:[%s5929 + $0x60] sm:$0xff]
      %v5943 = vld [vmem:[%s5929 + $0x68] sm:$0xff]
      %v5944 = vld [vmem:[%s5929 + $0x70] sm:$0xff]
      %v5945 = vld [vmem:[%s5929 + $0x78] sm:$0xff]
      %5946 = vmatprep.subr.mxu0 0.0
      %5947 = vmatpush1.msra.mxu0 %v5930
      %5948 = vmatprep.subr.mxu0 0.0
      %5949 = vmatpush1.msra.mxu0 %v5931
      %5950 = vmatprep.subr.mxu0 0.0
      %5951 = vmatpush1.msra.mxu0 %v5932
      %5952 = vmatprep.subr.mxu0 0.0
      %5953 = vmatpush1.msra.mxu0 %v5933
      %5954 = vmatprep.subr.mxu0 0.0
      %5955 = vmatpush1.msra.mxu0 %v5934
      %5956 = vmatprep.subr.mxu0 0.0
      %5957 = vmatpush1.msra.mxu0 %v5935
      %5958 = vmatprep.subr.mxu0 0.0
      %5959 = vmatpush1.msra.mxu0 %v5936
      %5960 = vmatprep.subr.mxu0 0.0
      %5961 = vmatpush1.msra.mxu0 %v5937
      %5962 = vmatprep.subr.mxu0 0.0
      %5963 = vmatpush1.msra.mxu0 %v5938
      %5964 = vmatprep.subr.mxu0 0.0
      %5965 = vmatpush1.msra.mxu0 %v5939
      %5966 = vmatprep.subr.mxu0 0.0
      %5967 = vmatpush1.msra.mxu0 %v5940
      %5968 = vmatprep.subr.mxu0 0.0
      %5969 = vmatpush1.msra.mxu0 %v5941
      %5970 = vmatprep.subr.mxu0 0.0
      %5971 = vmatpush1.msra.mxu0 %v5942
      %5972 = vmatprep.subr.mxu0 0.0
      %5973 = vmatpush1.msra.mxu0 %v5943
      %5974 = vmatprep.subr.mxu0 0.0
      %5975 = vmatpush1.msra.mxu0 %v5944
      %5976 = vmatprep.subr.mxu0 0.0
      %5977 = vmatpush1.msra.mxu0 %v5945
      %5978 = vmatprep.subr.mxu0 0.0
      %5979 = vmatpush1.msra.mxu0 0.0
      %5980 = vmatprep.subr.mxu0 0.0
      %5981 = vmatpush1.msra.mxu0 0.0
      %5982 = vmatprep.subr.mxu0 0.0
      %5983 = vmatpush1.msra.mxu0 0.0
      %5984 = vmatprep.subr.mxu0 0.0
      %5985 = vmatpush1.msra.mxu0 0.0
      %5986 = vmatprep.subr.mxu0 0.0
      %5987 = vmatpush1.msra.mxu0 0.0
      %5988 = vmatprep.subr.mxu0 0.0
      %5989 = vmatpush1.msra.mxu0 0.0
      %5990 = vmatprep.subr.mxu0 0.0
      %5991 = vmatpush1.msra.mxu0 0.0
      %5992 = vmatprep.subr.mxu0 0.0
      %5993 = vmatpush1.msra.mxu0 0.0
      %5994 = vmatprep.subr.mxu0 0.0
      %5995 = vmatpush1.msra.mxu0 0.0
      %5996 = vmatprep.subr.mxu0 0.0
      %5997 = vmatpush1.msra.mxu0 0.0
      %5998 = vmatprep.subr.mxu0 0.0
      %5999 = vmatpush1.msra.mxu0 0.0
      %6000 = vmatprep.subr.mxu0 0.0
      %6001 = vmatpush1.msra.mxu0 0.0
      %6002 = vmatprep.subr.mxu0 0.0
      %6003 = vmatpush1.msra.mxu0 0.0
      %6004 = vmatprep.subr.mxu0 0.0
      %6005 = vmatpush1.msra.mxu0 0.0
      %6006 = vmatprep.subr.mxu0 0.0
      %6007 = vmatpush1.msra.mxu0 0.0
      %6008 = vmatprep.subr.mxu0 0.0
      %6009 = vmatpush1.msra.mxu0 0.0
      %6010 = vmatprep.mubr.f32.mxu0 0.0
      %6011 = vmatmul.mubr.f32.gmra.mrb[0].mxu0 %v5888
      %v6012 = vpop.f32.mrb[0].mxu0
      %v6013 = vpop.f32.mrb[0].mxu0
      %6014 = vmatprep.mubr.f32.mxu0 0.0
      %6015 = vmatmul.mubr.f32.gmra.mrb[0].mxu0 %v5889
      %v6016 = vpop.f32.mrb[0].mxu0
      %v6017 = vpop.f32.mrb[0].mxu0
      %6018 = vmatprep.mubr.f32.mxu0 0.0
      %6019 = vmatmul.mubr.f32.gmra.mrb[0].mxu0 %v5890
      %v6020 = vpop.f32.mrb[0].mxu0
      %v6021 = vadd.f32 0.0, %v6020
      %v6022 = vpop.f32.mrb[0].mxu0
      %6023 = vmatprep.mubr.f32.mxu0 0.0
      %6024 = vmatmul.mubr.f32.gmra.mrb[0].mxu0 %v5891
      %v6025 = vpop.f32.mrb[0].mxu0
      %v6026 = vadd.f32 0.0, %v6025
      %v6027 = vpop.f32.mrb[0].mxu0
      %6028 = vmatprep.mubr.f32.mxu0 0.0
      %6029 = vmatmul.mubr.f32.gmra.mrb[0].mxu0 %v5892
      %v6030 = vpop.f32.mrb[0].mxu0
      %v6031 = vadd.f32 0.0, %v6030
      %v6032 = vpop.f32.mrb[0].mxu0
      %6033 = vmatprep.mubr.f32.mxu0 0.0
      %6034 = vmatmul.mubr.f32.gmra.mrb[0].mxu0 %v5893
      %v6035 = vpop.f32.mrb[0].mxu0
      %v6036 = vadd.f32 0.0, %v6035
      %v6037 = vpop.f32.mrb[0].mxu0
      %6038 = vmatprep.mubr.f32.mxu0 0.0
      %6039 = vmatmul.mubr.f32.gmra.mrb[0].mxu0 %v5894
      %v6040 = vpop.f32.mrb[0].mxu0
      %v6041 = vadd.f32 0.0, %v6040
      %v6042 = vpop.f32.mrb[0].mxu0
      %6043 = vmatprep.mubr.f32.mxu0 0.0
      %6044 = vmatmul.mubr.f32.gmra.mrb[0].mxu0 %v5895
      %v6045 = vpop.f32.mrb[0].mxu0
      %v6046 = vadd.f32 0.0, %v6045
      %v6047 = vpop.f32.mrb[0].mxu0
      %6048 = vmatprep.mubr.f32.mxu0 0.0
      %6049 = vmatmul.mubr.f32.gmra.mrb[0].mxu0 %v5896
      %v6050 = vpop.f32.mrb[0].mxu0
      %v6051 = vadd.f32 0.0, %v6050
      %v6052 = vpop.f32.mrb[0].mxu0
      %6053 = vmatprep.mubr.f32.mxu0 0.0
      %6054 = vmatmul.mubr.f32.gmra.mrb[0].mxu0 %v5897
      %v6055 = vpop.f32.mrb[0].mxu0
      %v6056 = vadd.f32 0.0, %v6055
      %v6057 = vpop.f32.mrb[0].mxu0
      %6058 = vmatprep.mubr.f32.mxu0 0.0
      %6059 = vmatmul.mubr.f32.gmra.mrb[0].mxu0 %v5898
      %v6060 = vpop.f32.mrb[0].mxu0
      %v6061 = vadd.f32 0.0, %v6060
      %v6062 = vpop.f32.mrb[0].mxu0
      %6063 = vmatprep.mubr.f32.mxu0 0.0
      %6064 = vmatmul.mubr.f32.gmra.mrb[0].mxu0 %v5899
      %v6065 = vpop.f32.mrb[0].mxu0
      %v6066 = vadd.f32 0.0, %v6065
      %v6067 = vpop.f32.mrb[0].mxu0
      %6068 = vmatprep.mubr.f32.mxu0 0.0
      %6069 = vmatmul.mubr.f32.gmra.mrb[0].mxu0 %v5900
      %v6070 = vpop.f32.mrb[0].mxu0
      %v6071 = vadd.f32 0.0, %v6070
      %v6072 = vpop.f32.mrb[0].mxu0
      %6073 = vmatprep.mubr.f32.mxu0 0.0
      %6074 = vmatmul.mubr.f32.gmra.mrb[0].mxu0 %v5901
      %v6075 = vpop.f32.mrb[0].mxu0
      %v6076 = vadd.f32 0.0, %v6075
      %v6077 = vpop.f32.mrb[0].mxu0
      %6078 = vmatprep.mubr.f32.mxu0 0.0
      %6079 = vmatmul.mubr.f32.gmra.mrb[0].mxu0 %v5902
      %v6080 = vpop.f32.mrb[0].mxu0
      %v6081 = vadd.f32 0.0, %v6080
      %v6082 = vpop.f32.mrb[0].mxu0
      %6083 = vmatprep.mubr.f32.mxu0 0.0
      %6084 = vmatmul.mubr.f32.gmra.mrb[0].mxu0 %v5903
      %v6085 = vpop.f32.mrb[0].mxu0
      %v6086 = vadd.f32 0.0, %v6085
      %v6087 = vpop.f32.mrb[0].mxu0
      %6088 = vmatprep.mubr.f32.mxu0 0.0
      %6089 = vmatmul.mubr.f32.gmra.mrb[0].mxu0 %v5904
      %v6090 = vpop.f32.mrb[0].mxu0
      %v6091 = vadd.f32 0.0, %v6090
      %v6092 = vpop.f32.mrb[0].mxu0
      %6093 = vmatprep.mubr.f32.mxu0 0.0
      %6094 = vmatmul.mubr.f32.gmra.mrb[0].mxu0 %v5905
      %v6095 = vpop.f32.mrb[0].mxu0
      %v6096 = vadd.f32 0.0, %v6095
      %v6097 = vpop.f32.mrb[0].mxu0
      %6098 = vmatprep.mubr.f32.mxu0 0.0
      %6099 = vmatmul.mubr.f32.gmra.mrb[0].mxu0 %v5906
      %v6100 = vpop.f32.mrb[0].mxu0
      %v6101 = vadd.f32 0.0, %v6100
      %v6102 = vpop.f32.mrb[0].mxu0
      %6103 = vmatprep.mubr.f32.mxu0 0.0
      %6104 = vmatmul.mubr.f32.gmra.mrb[0].mxu0 %v5907
      %v6105 = vpop.f32.mrb[0].mxu0
      %v6106 = vadd.f32 0.0, %v6105
      %v6107 = vpop.f32.mrb[0].mxu0
      %6108 = vmatprep.mubr.f32.mxu0 0.0
      %6109 = vmatmul.mubr.f32.gmra.mrb[0].mxu0 %v5908
      %v6110 = vpop.f32.mrb[0].mxu0
      %v6111 = vadd.f32 0.0, %v6110
      %v6112 = vpop.f32.mrb[0].mxu0
      %6113 = vmatprep.mubr.f32.mxu0 0.0
      %6114 = vmatmul.mubr.f32.gmra.mrb[0].mxu0 %v5909
      %v6115 = vpop.f32.mrb[0].mxu0
      %v6116 = vadd.f32 0.0, %v6115
      %v6117 = vpop.f32.mrb[0].mxu0
      %6118 = vmatprep.mubr.f32.mxu0 0.0
      %6119 = vmatmul.mubr.f32.gmra.mrb[0].mxu0 %v5910
      %v6120 = vpop.f32.mrb[0].mxu0
      %v6121 = vadd.f32 0.0, %v6120
      %v6122 = vpop.f32.mrb[0].mxu0
      %6123 = vmatprep.mubr.f32.mxu0 0.0
      %6124 = vmatmul.mubr.f32.gmra.mrb[0].mxu0 %v5911
      %v6125 = vpop.f32.mrb[0].mxu0
      %v6126 = vadd.f32 0.0, %v6125
      %v6127 = vpop.f32.mrb[0].mxu0
      %6128 = vmatprep.mubr.f32.mxu0 0.0
      %6129 = vmatmul.mubr.f32.gmra.mrb[0].mxu0 %v5912
      %v6130 = vpop.f32.mrb[0].mxu0
      %v6131 = vadd.f32 0.0, %v6130
      %v6132 = vpop.f32.mrb[0].mxu0
      %6133 = vmatprep.mubr.f32.mxu0 0.0
      %6134 = vmatmul.mubr.f32.gmra.mrb[0].mxu0 %v5913
      %v6135 = vpop.f32.mrb[0].mxu0
      %v6136 = vadd.f32 0.0, %v6135
      %v6137 = vpop.f32.mrb[0].mxu0
      %6138 = vmatprep.mubr.f32.mxu0 0.0
      %6139 = vmatmul.mubr.f32.gmra.mrb[0].mxu0 %v5914
      %v6140 = vpop.f32.mrb[0].mxu0
      %v6141 = vadd.f32 0.0, %v6140
      %v6142 = vpop.f32.mrb[0].mxu0
      %6143 = vmatprep.mubr.f32.mxu0 0.0
      %6144 = vmatmul.mubr.f32.gmra.mrb[0].mxu0 %v5915
      %v6145 = vpop.f32.mrb[0].mxu0
      %v6146 = vadd.f32 0.0, %v6145
      %v6147 = vpop.f32.mrb[0].mxu0
      %6148 = vmatprep.mubr.f32.mxu0 0.0
      %6149 = vmatmul.mubr.f32.gmra.mrb[0].mxu0 %v5916
      %v6150 = vpop.f32.mrb[0].mxu0
      %v6151 = vadd.f32 0.0, %v6150
      %v6152 = vpop.f32.mrb[0].mxu0
      %6153 = vmatprep.mubr.f32.mxu0 0.0
      %6154 = vmatmul.mubr.f32.gmra.mrb[0].mxu0 %v5917
      %v6155 = vpop.f32.mrb[0].mxu0
      %v6156 = vadd.f32 0.0, %v6155
      %v6157 = vpop.f32.mrb[0].mxu0
      %6158 = vmatprep.mubr.f32.mxu0 0.0
      %6159 = vmatmul.mubr.f32.gmra.mrb[0].mxu0 %v5918
      %v6160 = vpop.f32.mrb[0].mxu0
      %v6161 = vadd.f32 0.0, %v6160
      %v6162 = vpop.f32.mrb[0].mxu0
      %6163 = vmatprep.mubr.f32.mxu0 0.0
      %6164 = vmatmul.mubr.f32.gmra.mrb[0].mxu0 %v5919
      %v6165 = vpop.f32.mrb[0].mxu0
      %v6166 = vadd.f32 0.0, %v6165
      %v6167 = vpop.f32.mrb[0].mxu0
      %6168 = vmatprep.mubr.f32.mxu0 0.0
      %6169 = vmatmul.mubr.f32.gmra.mrb[0].mxu0 %v5920
      %v6170 = vpop.f32.mrb[0].mxu0
      %v6171 = vadd.f32 0.0, %v6170
      %v6172 = vpop.f32.mrb[0].mxu0
      %6173 = vmatprep.mubr.f32.mxu0 0.0
      %6174 = vmatmul.mubr.f32.gmra.mrb[0].mxu0 %v5921
      %v6175 = vpop.f32.mrb[0].mxu0
      %v6176 = vadd.f32 0.0, %v6175
      %v6177 = vpop.f32.mrb[0].mxu0
      %6178 = vmatprep.mubr.f32.mxu0 0.0
      %6179 = vmatmul.mubr.f32.gmra.mrb[0].mxu0 %v5922
      %v6180 = vpop.f32.mrb[0].mxu0
      %v6181 = vadd.f32 0.0, %v6180
      %v6182 = vpop.f32.mrb[0].mxu0
      %6183 = vmatprep.mubr.f32.mxu0 0.0
      %6184 = vmatmul.mubr.f32.gmra.mrb[0].mxu0 %v5923
      %v6185 = vpop.f32.mrb[0].mxu0
      %v6186 = vadd.f32 0.0, %v6185
      %v6187 = vpop.f32.mrb[0].mxu0
      %6188 = vmatprep.mubr.f32.mxu0 0.0
      %6189 = vmatmul.mubr.f32.gmra.mrb[0].mxu0 %v5924
      %v6190 = vpop.f32.mrb[0].mxu0
      %v6191 = vadd.f32 0.0, %v6190
      %v6192 = vpop.f32.mrb[0].mxu0
      %6193 = vmatprep.mubr.f32.mxu0 0.0
      %6194 = vmatmul.mubr.f32.gmra.mrb[0].mxu0 %v5925
      %v6195 = vpop.f32.mrb[0].mxu0
      %v6196 = vadd.f32 0.0, %v6195
      %v6197 = vpop.f32.mrb[0].mxu0
      %6198 = vmatprep.mubr.f32.mxu0 0.0
      %6199 = vmatmul.mubr.f32.gmra.mrb[0].mxu0 %v5926
      %v6200 = vpop.f32.mrb[0].mxu0
      %v6201 = vadd.f32 0.0, %v6200
      %v6202 = vpop.f32.mrb[0].mxu0
      %6203 = vmatprep.mubr.f32.mxu0 0.0
      %6204 = vmatmul.mubr.f32.gmra.mrb[0].mxu0 %v5927
      %v6205 = vpop.f32.mrb[0].mxu0
      %v6206 = vpop.f32.mrb[0].mxu0
      %6207 = vmatprep.mubr.f32.mxu0 0.0
      %6208 = vmatmul.mubr.f32.gmra.mrb[0].mxu0 %v5928
      %v6209 = vpop.f32.mrb[0].mxu0
      %v6210 = vpop.f32.mrb[0].mxu0
      %6211 = vdwg.mxu0
      %v6212 = vadd.f32 %v5851, %v6021
      %v6213 = vadd.f32 %v5852, %v6026
      %v6214 = vadd.f32 %v5853, %v6031
      %v6215 = vadd.f32 %v5854, %v6036
      %v6216 = vadd.f32 %v5855, %v6041
      %v6217 = vadd.f32 %v5856, %v6046
      %v6218 = vadd.f32 %v5857, %v6051
      %v6219 = vadd.f32 %v5858, %v6056
      %v6220 = vadd.f32 %v5859, %v6061
      %v6221 = vadd.f32 %v5860, %v6066
      %v6222 = vadd.f32 %v5861, %v6071
      %v6223 = vadd.f32 %v5862, %v6076
      %v6224 = vadd.f32 %v5863, %v6081
      %v6225 = vadd.f32 %v5864, %v6086
      %v6226 = vadd.f32 %v5865, %v6091
      %v6227 = vadd.f32 %v5866, %v6096
      %v6228 = vadd.f32 %v5867, %v6101
      %v6229 = vadd.f32 %v5868, %v6106
      %v6230 = vadd.f32 %v5869, %v6111
      %v6231 = vadd.f32 %v5870, %v6116
      %v6232 = vadd.f32 %v5871, %v6121
      %v6233 = vadd.f32 %v5872, %v6126
      %v6234 = vadd.f32 %v5873, %v6131
      %v6235 = vadd.f32 %v5874, %v6136
      %v6236 = vadd.f32 %v5875, %v6141
      %v6237 = vadd.f32 %v5876, %v6146
      %v6238 = vadd.f32 %v5877, %v6151
      %v6239 = vadd.f32 %v5878, %v6156
      %v6240 = vadd.f32 %v5879, %v6161
      %v6241 = vadd.f32 %v5880, %v6166
      %v6242 = vadd.f32 %v5881, %v6171
      %v6243 = vadd.f32 %v5882, %v6176
      %v6244 = vadd.f32 %v5883, %v6181
      %v6245 = vadd.f32 %v5884, %v6186
      %v6246 = vadd.f32 %v5885, %v6191
      %v6247 = vadd.f32 %v5886, %v6196
      %v6248 = vadd.f32 %v5887, %v6201
      %v6249 = vld [vmem:[#allocation3 + $0x25] sm:$0xff]
      %v6250 = vld [vmem:[#allocation3 + $0x2d] sm:$0xff]
      %v6251 = vld [vmem:[#allocation3 + $0x35] sm:$0xff]
      %v6252 = vld [vmem:[#allocation3 + $0x3d] sm:$0xff]
      %v6253 = vld [vmem:[#allocation3 + $0x45] sm:$0xff]
      %v6254 = vld [vmem:[#allocation3 + $0x4d] sm:$0xff]
      %v6255 = vld [vmem:[#allocation3 + $0x55] sm:$0xff]
      %v6256 = vld [vmem:[#allocation3 + $0x5d] sm:$0xff]
      %v6257 = vld [vmem:[#allocation3 + $0x65] sm:$0xff]
      %v6258 = vld [vmem:[#allocation3 + $0x6d] sm:$0xff]
      %v6259 = vld [vmem:[#allocation3 + $0x75] sm:$0xff]
      %v6260 = vld [vmem:[#allocation3 + $0x7d] sm:$0xff]
      %v6261 = vld [vmem:[#allocation3 + $0x85] sm:$0xff]
      %v6262 = vld [vmem:[#allocation3 + $0x8d] sm:$0xff]
      %v6263 = vld [vmem:[#allocation3 + $0x95] sm:$0xff]
      %v6264 = vld [vmem:[#allocation3 + $0x9d] sm:$0xff]
      %v6265 = vld [vmem:[#allocation3 + $0xa5] sm:$0xff]
      %v6266 = vld [vmem:[#allocation3 + $0xad] sm:$0xff]
      %v6267 = vld [vmem:[#allocation3 + $0xb5] sm:$0xff]
      %v6268 = vld [vmem:[#allocation3 + $0xbd] sm:$0xff]
      %v6269 = vld [vmem:[#allocation3 + $0xc5] sm:$0xff]
      %v6270 = vld [vmem:[#allocation3 + $0xcd] sm:$0xff]
      %v6271 = vld [vmem:[#allocation3 + $0xd5] sm:$0xff]
      %v6272 = vld [vmem:[#allocation3 + $0xdd] sm:$0xff]
      %v6273 = vld [vmem:[#allocation3 + $0xe5] sm:$0xff]
      %v6274 = vld [vmem:[#allocation3 + $0xed] sm:$0xff]
      %v6275 = vld [vmem:[#allocation3 + $0xf5] sm:$0xff]
      %v6276 = vld [vmem:[#allocation3 + $0xfd] sm:$0xff]
      %v6277 = vld [vmem:[#allocation3 + $0x105] sm:$0xff]
      %v6278 = vld [vmem:[#allocation3 + $0x10d] sm:$0xff]
      %v6279 = vld [vmem:[#allocation3 + $0x115] sm:$0xff]
      %v6280 = vld [vmem:[#allocation3 + $0x11d] sm:$0xff]
      %v6281 = vld [vmem:[#allocation3 + $0x125] sm:$0xff]
      %v6282 = vld [vmem:[#allocation3 + $0x12d] sm:$0xff]
      %v6283 = vld [vmem:[#allocation3 + $0x135] sm:$0xff]
      %v6284 = vld [vmem:[#allocation3 + $0x13d] sm:$0xff]
      %v6285 = vld [vmem:[#allocation3 + $0x145] sm:$0xff]
      %v6286 = vld [vmem:[#allocation3 + $0x14d] sm:$0xff]
      %v6287 = vld [vmem:[#allocation3 + $0x155] sm:$0xff]
      %v6288 = vld [vmem:[#allocation3 + $0x15d] sm:$0xff]
      %v6289 = vld [vmem:[#allocation3 + $0x165] sm:$0xf]
      %s6290 = scalar_lea.vmem %s4, 896
      %v6291 = vld [vmem:[%s6290] sm:$0xff]
      %v6292 = vld [vmem:[%s6290 + $0x8] sm:$0xff]
      %v6293 = vld [vmem:[%s6290 + $0x10] sm:$0xff]
      %v6294 = vld [vmem:[%s6290 + $0x18] sm:$0xff]
      %v6295 = vld [vmem:[%s6290 + $0x20] sm:$0xff]
      %v6296 = vld [vmem:[%s6290 + $0x28] sm:$0xff]
      %v6297 = vld [vmem:[%s6290 + $0x30] sm:$0xff]
      %v6298 = vld [vmem:[%s6290 + $0x38] sm:$0xff]
      %v6299 = vld [vmem:[%s6290 + $0x40] sm:$0xff]
      %v6300 = vld [vmem:[%s6290 + $0x48] sm:$0xff]
      %v6301 = vld [vmem:[%s6290 + $0x50] sm:$0xff]
      %v6302 = vld [vmem:[%s6290 + $0x58] sm:$0xff]
      %v6303 = vld [vmem:[%s6290 + $0x60] sm:$0xff]
      %v6304 = vld [vmem:[%s6290 + $0x68] sm:$0xff]
      %v6305 = vld [vmem:[%s6290 + $0x70] sm:$0xff]
      %v6306 = vld [vmem:[%s6290 + $0x78] sm:$0xff]
      %6307 = vmatprep.subr.mxu0 0.0
      %6308 = vmatpush1.msra.mxu0 %v6291
      %6309 = vmatprep.subr.mxu0 0.0
      %6310 = vmatpush1.msra.mxu0 %v6292
      %6311 = vmatprep.subr.mxu0 0.0
      %6312 = vmatpush1.msra.mxu0 %v6293
      %6313 = vmatprep.subr.mxu0 0.0
      %6314 = vmatpush1.msra.mxu0 %v6294
      %6315 = vmatprep.subr.mxu0 0.0
      %6316 = vmatpush1.msra.mxu0 %v6295
      %6317 = vmatprep.subr.mxu0 0.0
      %6318 = vmatpush1.msra.mxu0 %v6296
      %6319 = vmatprep.subr.mxu0 0.0
      %6320 = vmatpush1.msra.mxu0 %v6297
      %6321 = vmatprep.subr.mxu0 0.0
      %6322 = vmatpush1.msra.mxu0 %v6298
      %6323 = vmatprep.subr.mxu0 0.0
      %6324 = vmatpush1.msra.mxu0 %v6299
      %6325 = vmatprep.subr.mxu0 0.0
      %6326 = vmatpush1.msra.mxu0 %v6300
      %6327 = vmatprep.subr.mxu0 0.0
      %6328 = vmatpush1.msra.mxu0 %v6301
      %6329 = vmatprep.subr.mxu0 0.0
      %6330 = vmatpush1.msra.mxu0 %v6302
      %6331 = vmatprep.subr.mxu0 0.0
      %6332 = vmatpush1.msra.mxu0 %v6303
      %6333 = vmatprep.subr.mxu0 0.0
      %6334 = vmatpush1.msra.mxu0 %v6304
      %6335 = vmatprep.subr.mxu0 0.0
      %6336 = vmatpush1.msra.mxu0 %v6305
      %6337 = vmatprep.subr.mxu0 0.0
      %6338 = vmatpush1.msra.mxu0 %v6306
      %6339 = vmatprep.subr.mxu0 0.0
      %6340 = vmatpush1.msra.mxu0 0.0
      %6341 = vmatprep.subr.mxu0 0.0
      %6342 = vmatpush1.msra.mxu0 0.0
      %6343 = vmatprep.subr.mxu0 0.0
      %6344 = vmatpush1.msra.mxu0 0.0
      %6345 = vmatprep.subr.mxu0 0.0
      %6346 = vmatpush1.msra.mxu0 0.0
      %6347 = vmatprep.subr.mxu0 0.0
      %6348 = vmatpush1.msra.mxu0 0.0
      %6349 = vmatprep.subr.mxu0 0.0
      %6350 = vmatpush1.msra.mxu0 0.0
      %6351 = vmatprep.subr.mxu0 0.0
      %6352 = vmatpush1.msra.mxu0 0.0
      %6353 = vmatprep.subr.mxu0 0.0
      %6354 = vmatpush1.msra.mxu0 0.0
      %6355 = vmatprep.subr.mxu0 0.0
      %6356 = vmatpush1.msra.mxu0 0.0
      %6357 = vmatprep.subr.mxu0 0.0
      %6358 = vmatpush1.msra.mxu0 0.0
      %6359 = vmatprep.subr.mxu0 0.0
      %6360 = vmatpush1.msra.mxu0 0.0
      %6361 = vmatprep.subr.mxu0 0.0
      %6362 = vmatpush1.msra.mxu0 0.0
      %6363 = vmatprep.subr.mxu0 0.0
      %6364 = vmatpush1.msra.mxu0 0.0
      %6365 = vmatprep.subr.mxu0 0.0
      %6366 = vmatpush1.msra.mxu0 0.0
      %6367 = vmatprep.subr.mxu0 0.0
      %6368 = vmatpush1.msra.mxu0 0.0
      %6369 = vmatprep.subr.mxu0 0.0
      %6370 = vmatpush1.msra.mxu0 0.0
      %6371 = vmatprep.mubr.f32.mxu0 0.0
      %6372 = vmatmul.mubr.f32.gmra.mrb[0].mxu0 %v6249
      %v6373 = vpop.f32.mrb[0].mxu0
      %v6374 = vpop.f32.mrb[0].mxu0
      %6375 = vmatprep.mubr.f32.mxu0 0.0
      %6376 = vmatmul.mubr.f32.gmra.mrb[0].mxu0 %v6250
      %v6377 = vpop.f32.mrb[0].mxu0
      %v6378 = vpop.f32.mrb[0].mxu0
      %6379 = vmatprep.mubr.f32.mxu0 0.0
      %6380 = vmatmul.mubr.f32.gmra.mrb[0].mxu0 %v6251
      %v6381 = vpop.f32.mrb[0].mxu0
      %v6382 = vadd.f32 0.0, %v6381
      %v6383 = vpop.f32.mrb[0].mxu0
      %6384 = vmatprep.mubr.f32.mxu0 0.0
      %6385 = vmatmul.mubr.f32.gmra.mrb[0].mxu0 %v6252
      %v6386 = vpop.f32.mrb[0].mxu0
      %v6387 = vadd.f32 0.0, %v6386
      %v6388 = vpop.f32.mrb[0].mxu0
      %6389 = vmatprep.mubr.f32.mxu0 0.0
      %6390 = vmatmul.mubr.f32.gmra.mrb[0].mxu0 %v6253
      %v6391 = vpop.f32.mrb[0].mxu0
      %v6392 = vadd.f32 0.0, %v6391
      %v6393 = vpop.f32.mrb[0].mxu0
      %6394 = vmatprep.mubr.f32.mxu0 0.0
      %6395 = vmatmul.mubr.f32.gmra.mrb[0].mxu0 %v6254
      %v6396 = vpop.f32.mrb[0].mxu0
      %v6397 = vadd.f32 0.0, %v6396
      %v6398 = vpop.f32.mrb[0].mxu0
      %6399 = vmatprep.mubr.f32.mxu0 0.0
      %6400 = vmatmul.mubr.f32.gmra.mrb[0].mxu0 %v6255
      %v6401 = vpop.f32.mrb[0].mxu0
      %v6402 = vadd.f32 0.0, %v6401
      %v6403 = vpop.f32.mrb[0].mxu0
      %6404 = vmatprep.mubr.f32.mxu0 0.0
      %6405 = vmatmul.mubr.f32.gmra.mrb[0].mxu0 %v6256
      %v6406 = vpop.f32.mrb[0].mxu0
      %v6407 = vadd.f32 0.0, %v6406
      %v6408 = vpop.f32.mrb[0].mxu0
      %6409 = vmatprep.mubr.f32.mxu0 0.0
      %6410 = vmatmul.mubr.f32.gmra.mrb[0].mxu0 %v6257
      %v6411 = vpop.f32.mrb[0].mxu0
      %v6412 = vadd.f32 0.0, %v6411
      %v6413 = vpop.f32.mrb[0].mxu0
      %6414 = vmatprep.mubr.f32.mxu0 0.0
      %6415 = vmatmul.mubr.f32.gmra.mrb[0].mxu0 %v6258
      %v6416 = vpop.f32.mrb[0].mxu0
      %v6417 = vadd.f32 0.0, %v6416
      %v6418 = vpop.f32.mrb[0].mxu0
      %6419 = vmatprep.mubr.f32.mxu0 0.0
      %6420 = vmatmul.mubr.f32.gmra.mrb[0].mxu0 %v6259
      %v6421 = vpop.f32.mrb[0].mxu0
      %v6422 = vadd.f32 0.0, %v6421
      %v6423 = vpop.f32.mrb[0].mxu0
      %6424 = vmatprep.mubr.f32.mxu0 0.0
      %6425 = vmatmul.mubr.f32.gmra.mrb[0].mxu0 %v6260
      %v6426 = vpop.f32.mrb[0].mxu0
      %v6427 = vadd.f32 0.0, %v6426
      %v6428 = vpop.f32.mrb[0].mxu0
      %6429 = vmatprep.mubr.f32.mxu0 0.0
      %6430 = vmatmul.mubr.f32.gmra.mrb[0].mxu0 %v6261
      %v6431 = vpop.f32.mrb[0].mxu0
      %v6432 = vadd.f32 0.0, %v6431
      %v6433 = vpop.f32.mrb[0].mxu0
      %6434 = vmatprep.mubr.f32.mxu0 0.0
      %6435 = vmatmul.mubr.f32.gmra.mrb[0].mxu0 %v6262
      %v6436 = vpop.f32.mrb[0].mxu0
      %v6437 = vadd.f32 0.0, %v6436
      %v6438 = vpop.f32.mrb[0].mxu0
      %6439 = vmatprep.mubr.f32.mxu0 0.0
      %6440 = vmatmul.mubr.f32.gmra.mrb[0].mxu0 %v6263
      %v6441 = vpop.f32.mrb[0].mxu0
      %v6442 = vadd.f32 0.0, %v6441
      %v6443 = vpop.f32.mrb[0].mxu0
      %6444 = vmatprep.mubr.f32.mxu0 0.0
      %6445 = vmatmul.mubr.f32.gmra.mrb[0].mxu0 %v6264
      %v6446 = vpop.f32.mrb[0].mxu0
      %v6447 = vadd.f32 0.0, %v6446
      %v6448 = vpop.f32.mrb[0].mxu0
      %6449 = vmatprep.mubr.f32.mxu0 0.0
      %6450 = vmatmul.mubr.f32.gmra.mrb[0].mxu0 %v6265
      %v6451 = vpop.f32.mrb[0].mxu0
      %v6452 = vadd.f32 0.0, %v6451
      %v6453 = vpop.f32.mrb[0].mxu0
      %6454 = vmatprep.mubr.f32.mxu0 0.0
      %6455 = vmatmul.mubr.f32.gmra.mrb[0].mxu0 %v6266
      %v6456 = vpop.f32.mrb[0].mxu0
      %v6457 = vadd.f32 0.0, %v6456
      %v6458 = vpop.f32.mrb[0].mxu0
      %6459 = vmatprep.mubr.f32.mxu0 0.0
      %6460 = vmatmul.mubr.f32.gmra.mrb[0].mxu0 %v6267
      %v6461 = vpop.f32.mrb[0].mxu0
      %v6462 = vadd.f32 0.0, %v6461
      %v6463 = vpop.f32.mrb[0].mxu0
      %6464 = vmatprep.mubr.f32.mxu0 0.0
      %6465 = vmatmul.mubr.f32.gmra.mrb[0].mxu0 %v6268
      %v6466 = vpop.f32.mrb[0].mxu0
      %v6467 = vadd.f32 0.0, %v6466
      %v6468 = vpop.f32.mrb[0].mxu0
      %6469 = vmatprep.mubr.f32.mxu0 0.0
      %6470 = vmatmul.mubr.f32.gmra.mrb[0].mxu0 %v6269
      %v6471 = vpop.f32.mrb[0].mxu0
      %v6472 = vadd.f32 0.0, %v6471
      %v6473 = vpop.f32.mrb[0].mxu0
      %6474 = vmatprep.mubr.f32.mxu0 0.0
      %6475 = vmatmul.mubr.f32.gmra.mrb[0].mxu0 %v6270
      %v6476 = vpop.f32.mrb[0].mxu0
      %v6477 = vadd.f32 0.0, %v6476
      %v6478 = vpop.f32.mrb[0].mxu0
      %6479 = vmatprep.mubr.f32.mxu0 0.0
      %6480 = vmatmul.mubr.f32.gmra.mrb[0].mxu0 %v6271
      %v6481 = vpop.f32.mrb[0].mxu0
      %v6482 = vadd.f32 0.0, %v6481
      %v6483 = vpop.f32.mrb[0].mxu0
      %6484 = vmatprep.mubr.f32.mxu0 0.0
      %6485 = vmatmul.mubr.f32.gmra.mrb[0].mxu0 %v6272
      %v6486 = vpop.f32.mrb[0].mxu0
      %v6487 = vadd.f32 0.0, %v6486
      %v6488 = vpop.f32.mrb[0].mxu0
      %6489 = vmatprep.mubr.f32.mxu0 0.0
      %6490 = vmatmul.mubr.f32.gmra.mrb[0].mxu0 %v6273
      %v6491 = vpop.f32.mrb[0].mxu0
      %v6492 = vadd.f32 0.0, %v6491
      %v6493 = vpop.f32.mrb[0].mxu0
      %6494 = vmatprep.mubr.f32.mxu0 0.0
      %6495 = vmatmul.mubr.f32.gmra.mrb[0].mxu0 %v6274
      %v6496 = vpop.f32.mrb[0].mxu0
      %v6497 = vadd.f32 0.0, %v6496
      %v6498 = vpop.f32.mrb[0].mxu0
      %6499 = vmatprep.mubr.f32.mxu0 0.0
      %6500 = vmatmul.mubr.f32.gmra.mrb[0].mxu0 %v6275
      %v6501 = vpop.f32.mrb[0].mxu0
      %v6502 = vadd.f32 0.0, %v6501
      %v6503 = vpop.f32.mrb[0].mxu0
      %6504 = vmatprep.mubr.f32.mxu0 0.0
      %6505 = vmatmul.mubr.f32.gmra.mrb[0].mxu0 %v6276
      %v6506 = vpop.f32.mrb[0].mxu0
      %v6507 = vadd.f32 0.0, %v6506
      %v6508 = vpop.f32.mrb[0].mxu0
      %6509 = vmatprep.mubr.f32.mxu0 0.0
      %6510 = vmatmul.mubr.f32.gmra.mrb[0].mxu0 %v6277
      %v6511 = vpop.f32.mrb[0].mxu0
      %v6512 = vadd.f32 0.0, %v6511
      %v6513 = vpop.f32.mrb[0].mxu0
      %6514 = vmatprep.mubr.f32.mxu0 0.0
      %6515 = vmatmul.mubr.f32.gmra.mrb[0].mxu0 %v6278
      %v6516 = vpop.f32.mrb[0].mxu0
      %v6517 = vadd.f32 0.0, %v6516
      %v6518 = vpop.f32.mrb[0].mxu0
      %6519 = vmatprep.mubr.f32.mxu0 0.0
      %6520 = vmatmul.mubr.f32.gmra.mrb[0].mxu0 %v6279
      %v6521 = vpop.f32.mrb[0].mxu0
      %v6522 = vadd.f32 0.0, %v6521
      %v6523 = vpop.f32.mrb[0].mxu0
      %6524 = vmatprep.mubr.f32.mxu0 0.0
      %6525 = vmatmul.mubr.f32.gmra.mrb[0].mxu0 %v6280
      %v6526 = vpop.f32.mrb[0].mxu0
      %v6527 = vadd.f32 0.0, %v6526
      %v6528 = vpop.f32.mrb[0].mxu0
      %6529 = vmatprep.mubr.f32.mxu0 0.0
      %6530 = vmatmul.mubr.f32.gmra.mrb[0].mxu0 %v6281
      %v6531 = vpop.f32.mrb[0].mxu0
      %v6532 = vadd.f32 0.0, %v6531
      %v6533 = vpop.f32.mrb[0].mxu0
      %6534 = vmatprep.mubr.f32.mxu0 0.0
      %6535 = vmatmul.mubr.f32.gmra.mrb[0].mxu0 %v6282
      %v6536 = vpop.f32.mrb[0].mxu0
      %v6537 = vadd.f32 0.0, %v6536
      %v6538 = vpop.f32.mrb[0].mxu0
      %6539 = vmatprep.mubr.f32.mxu0 0.0
      %6540 = vmatmul.mubr.f32.gmra.mrb[0].mxu0 %v6283
      %v6541 = vpop.f32.mrb[0].mxu0
      %v6542 = vadd.f32 0.0, %v6541
      %v6543 = vpop.f32.mrb[0].mxu0
      %6544 = vmatprep.mubr.f32.mxu0 0.0
      %6545 = vmatmul.mubr.f32.gmra.mrb[0].mxu0 %v6284
      %v6546 = vpop.f32.mrb[0].mxu0
      %v6547 = vadd.f32 0.0, %v6546
      %v6548 = vpop.f32.mrb[0].mxu0
      %6549 = vmatprep.mubr.f32.mxu0 0.0
      %6550 = vmatmul.mubr.f32.gmra.mrb[0].mxu0 %v6285
      %v6551 = vpop.f32.mrb[0].mxu0
      %v6552 = vadd.f32 0.0, %v6551
      %v6553 = vpop.f32.mrb[0].mxu0
      %6554 = vmatprep.mubr.f32.mxu0 0.0
      %6555 = vmatmul.mubr.f32.gmra.mrb[0].mxu0 %v6286
      %v6556 = vpop.f32.mrb[0].mxu0
      %v6557 = vadd.f32 0.0, %v6556
      %v6558 = vpop.f32.mrb[0].mxu0
      %6559 = vmatprep.mubr.f32.mxu0 0.0
      %6560 = vmatmul.mubr.f32.gmra.mrb[0].mxu0 %v6287
      %v6561 = vpop.f32.mrb[0].mxu0
      %v6562 = vadd.f32 0.0, %v6561
      %v6563 = vpop.f32.mrb[0].mxu0
      %6564 = vmatprep.mubr.f32.mxu0 0.0
      %6565 = vmatmul.mubr.f32.gmra.mrb[0].mxu0 %v6288
      %v6566 = vpop.f32.mrb[0].mxu0
      %v6567 = vpop.f32.mrb[0].mxu0
      %6568 = vmatprep.mubr.f32.mxu0 0.0
      %6569 = vmatmul.mubr.f32.gmra.mrb[0].mxu0 %v6289
      %v6570 = vpop.f32.mrb[0].mxu0
      %v6571 = vpop.f32.mrb[0].mxu0
      %6572 = vdwg.mxu0
      %v6573 = vadd.f32 %v6212, %v6382
      %v6574 = vadd.f32 %v6213, %v6387
      %v6575 = vadd.f32 %v6214, %v6392
      %v6576 = vadd.f32 %v6215, %v6397
      %v6577 = vadd.f32 %v6216, %v6402
      %v6578 = vadd.f32 %v6217, %v6407
      %v6579 = vadd.f32 %v6218, %v6412
      %v6580 = vadd.f32 %v6219, %v6417
      %v6581 = vadd.f32 %v6220, %v6422
      %v6582 = vadd.f32 %v6221, %v6427
      %v6583 = vadd.f32 %v6222, %v6432
      %v6584 = vadd.f32 %v6223, %v6437
      %v6585 = vadd.f32 %v6224, %v6442
      %v6586 = vadd.f32 %v6225, %v6447
      %v6587 = vadd.f32 %v6226, %v6452
      %v6588 = vadd.f32 %v6227, %v6457
      %v6589 = vadd.f32 %v6228, %v6462
      %v6590 = vadd.f32 %v6229, %v6467
      %v6591 = vadd.f32 %v6230, %v6472
      %v6592 = vadd.f32 %v6231, %v6477
      %v6593 = vadd.f32 %v6232, %v6482
      %v6594 = vadd.f32 %v6233, %v6487
      %v6595 = vadd.f32 %v6234, %v6492
      %v6596 = vadd.f32 %v6235, %v6497
      %v6597 = vadd.f32 %v6236, %v6502
      %v6598 = vadd.f32 %v6237, %v6507
      %v6599 = vadd.f32 %v6238, %v6512
      %v6600 = vadd.f32 %v6239, %v6517
      %v6601 = vadd.f32 %v6240, %v6522
      %v6602 = vadd.f32 %v6241, %v6527
      %v6603 = vadd.f32 %v6242, %v6532
      %v6604 = vadd.f32 %v6243, %v6537
      %v6605 = vadd.f32 %v6244, %v6542
      %v6606 = vadd.f32 %v6245, %v6547
      %v6607 = vadd.f32 %v6246, %v6552
      %v6608 = vadd.f32 %v6247, %v6557
      %v6609 = vadd.f32 %v6248, %v6562
      %v6610 = vld [vmem:[#allocation3 + $0x26] sm:$0xff]
      %v6611 = vld [vmem:[#allocation3 + $0x2e] sm:$0xff]
      %v6612 = vld [vmem:[#allocation3 + $0x36] sm:$0xff]
      %v6613 = vld [vmem:[#allocation3 + $0x3e] sm:$0xff]
      %v6614 = vld [vmem:[#allocation3 + $0x46] sm:$0xff]
      %v6615 = vld [vmem:[#allocation3 + $0x4e] sm:$0xff]
      %v6616 = vld [vmem:[#allocation3 + $0x56] sm:$0xff]
      %v6617 = vld [vmem:[#allocation3 + $0x5e] sm:$0xff]
      %v6618 = vld [vmem:[#allocation3 + $0x66] sm:$0xff]
      %v6619 = vld [vmem:[#allocation3 + $0x6e] sm:$0xff]
      %v6620 = vld [vmem:[#allocation3 + $0x76] sm:$0xff]
      %v6621 = vld [vmem:[#allocation3 + $0x7e] sm:$0xff]
      %v6622 = vld [vmem:[#allocation3 + $0x86] sm:$0xff]
      %v6623 = vld [vmem:[#allocation3 + $0x8e] sm:$0xff]
      %v6624 = vld [vmem:[#allocation3 + $0x96] sm:$0xff]
      %v6625 = vld [vmem:[#allocation3 + $0x9e] sm:$0xff]
      %v6626 = vld [vmem:[#allocation3 + $0xa6] sm:$0xff]
      %v6627 = vld [vmem:[#allocation3 + $0xae] sm:$0xff]
      %v6628 = vld [vmem:[#allocation3 + $0xb6] sm:$0xff]
      %v6629 = vld [vmem:[#allocation3 + $0xbe] sm:$0xff]
      %v6630 = vld [vmem:[#allocation3 + $0xc6] sm:$0xff]
      %v6631 = vld [vmem:[#allocation3 + $0xce] sm:$0xff]
      %v6632 = vld [vmem:[#allocation3 + $0xd6] sm:$0xff]
      %v6633 = vld [vmem:[#allocation3 + $0xde] sm:$0xff]
      %v6634 = vld [vmem:[#allocation3 + $0xe6] sm:$0xff]
      %v6635 = vld [vmem:[#allocation3 + $0xee] sm:$0xff]
      %v6636 = vld [vmem:[#allocation3 + $0xf6] sm:$0xff]
      %v6637 = vld [vmem:[#allocation3 + $0xfe] sm:$0xff]
      %v6638 = vld [vmem:[#allocation3 + $0x106] sm:$0xff]
      %v6639 = vld [vmem:[#allocation3 + $0x10e] sm:$0xff]
      %v6640 = vld [vmem:[#allocation3 + $0x116] sm:$0xff]
      %v6641 = vld [vmem:[#allocation3 + $0x11e] sm:$0xff]
      %v6642 = vld [vmem:[#allocation3 + $0x126] sm:$0xff]
      %v6643 = vld [vmem:[#allocation3 + $0x12e] sm:$0xff]
      %v6644 = vld [vmem:[#allocation3 + $0x136] sm:$0xff]
      %v6645 = vld [vmem:[#allocation3 + $0x13e] sm:$0xff]
      %v6646 = vld [vmem:[#allocation3 + $0x146] sm:$0xff]
      %v6647 = vld [vmem:[#allocation3 + $0x14e] sm:$0xff]
      %v6648 = vld [vmem:[#allocation3 + $0x156] sm:$0xff]
      %v6649 = vld [vmem:[#allocation3 + $0x15e] sm:$0xff]
      %v6650 = vld [vmem:[#allocation3 + $0x166] sm:$0xf]
      %s6651 = scalar_lea.vmem %s4, 1024
      %v6652 = vld [vmem:[%s6651] sm:$0xff]
      %v6653 = vld [vmem:[%s6651 + $0x8] sm:$0xff]
      %v6654 = vld [vmem:[%s6651 + $0x10] sm:$0xff]
      %v6655 = vld [vmem:[%s6651 + $0x18] sm:$0xff]
      %v6656 = vld [vmem:[%s6651 + $0x20] sm:$0xff]
      %v6657 = vld [vmem:[%s6651 + $0x28] sm:$0xff]
      %v6658 = vld [vmem:[%s6651 + $0x30] sm:$0xff]
      %v6659 = vld [vmem:[%s6651 + $0x38] sm:$0xff]
      %v6660 = vld [vmem:[%s6651 + $0x40] sm:$0xff]
      %v6661 = vld [vmem:[%s6651 + $0x48] sm:$0xff]
      %v6662 = vld [vmem:[%s6651 + $0x50] sm:$0xff]
      %v6663 = vld [vmem:[%s6651 + $0x58] sm:$0xff]
      %v6664 = vld [vmem:[%s6651 + $0x60] sm:$0xff]
      %v6665 = vld [vmem:[%s6651 + $0x68] sm:$0xff]
      %v6666 = vld [vmem:[%s6651 + $0x70] sm:$0xff]
      %v6667 = vld [vmem:[%s6651 + $0x78] sm:$0xff]
      %6668 = vmatprep.subr.mxu0 0.0
      %6669 = vmatpush1.msra.mxu0 %v6652
      %6670 = vmatprep.subr.mxu0 0.0
      %6671 = vmatpush1.msra.mxu0 %v6653
      %6672 = vmatprep.subr.mxu0 0.0
      %6673 = vmatpush1.msra.mxu0 %v6654
      %6674 = vmatprep.subr.mxu0 0.0
      %6675 = vmatpush1.msra.mxu0 %v6655
      %6676 = vmatprep.subr.mxu0 0.0
      %6677 = vmatpush1.msra.mxu0 %v6656
      %6678 = vmatprep.subr.mxu0 0.0
      %6679 = vmatpush1.msra.mxu0 %v6657
      %6680 = vmatprep.subr.mxu0 0.0
      %6681 = vmatpush1.msra.mxu0 %v6658
      %6682 = vmatprep.subr.mxu0 0.0
      %6683 = vmatpush1.msra.mxu0 %v6659
      %6684 = vmatprep.subr.mxu0 0.0
      %6685 = vmatpush1.msra.mxu0 %v6660
      %6686 = vmatprep.subr.mxu0 0.0
      %6687 = vmatpush1.msra.mxu0 %v6661
      %6688 = vmatprep.subr.mxu0 0.0
      %6689 = vmatpush1.msra.mxu0 %v6662
      %6690 = vmatprep.subr.mxu0 0.0
      %6691 = vmatpush1.msra.mxu0 %v6663
      %6692 = vmatprep.subr.mxu0 0.0
      %6693 = vmatpush1.msra.mxu0 %v6664
      %6694 = vmatprep.subr.mxu0 0.0
      %6695 = vmatpush1.msra.mxu0 %v6665
      %6696 = vmatprep.subr.mxu0 0.0
      %6697 = vmatpush1.msra.mxu0 %v6666
      %6698 = vmatprep.subr.mxu0 0.0
      %6699 = vmatpush1.msra.mxu0 %v6667
      %6700 = vmatprep.subr.mxu0 0.0
      %6701 = vmatpush1.msra.mxu0 0.0
      %6702 = vmatprep.subr.mxu0 0.0
      %6703 = vmatpush1.msra.mxu0 0.0
      %6704 = vmatprep.subr.mxu0 0.0
      %6705 = vmatpush1.msra.mxu0 0.0
      %6706 = vmatprep.subr.mxu0 0.0
      %6707 = vmatpush1.msra.mxu0 0.0
      %6708 = vmatprep.subr.mxu0 0.0
      %6709 = vmatpush1.msra.mxu0 0.0
      %6710 = vmatprep.subr.mxu0 0.0
      %6711 = vmatpush1.msra.mxu0 0.0
      %6712 = vmatprep.subr.mxu0 0.0
      %6713 = vmatpush1.msra.mxu0 0.0
      %6714 = vmatprep.subr.mxu0 0.0
      %6715 = vmatpush1.msra.mxu0 0.0
      %6716 = vmatprep.subr.mxu0 0.0
      %6717 = vmatpush1.msra.mxu0 0.0
      %6718 = vmatprep.subr.mxu0 0.0
      %6719 = vmatpush1.msra.mxu0 0.0
      %6720 = vmatprep.subr.mxu0 0.0
      %6721 = vmatpush1.msra.mxu0 0.0
      %6722 = vmatprep.subr.mxu0 0.0
      %6723 = vmatpush1.msra.mxu0 0.0
      %6724 = vmatprep.subr.mxu0 0.0
      %6725 = vmatpush1.msra.mxu0 0.0
      %6726 = vmatprep.subr.mxu0 0.0
      %6727 = vmatpush1.msra.mxu0 0.0
      %6728 = vmatprep.subr.mxu0 0.0
      %6729 = vmatpush1.msra.mxu0 0.0
      %6730 = vmatprep.subr.mxu0 0.0
      %6731 = vmatpush1.msra.mxu0 0.0
      %6732 = vmatprep.mubr.f32.mxu0 0.0
      %6733 = vmatmul.mubr.f32.gmra.mrb[0].mxu0 %v6610
      %v6734 = vpop.f32.mrb[0].mxu0
      %v6735 = vpop.f32.mrb[0].mxu0
      %6736 = vmatprep.mubr.f32.mxu0 0.0
      %6737 = vmatmul.mubr.f32.gmra.mrb[0].mxu0 %v6611
      %v6738 = vpop.f32.mrb[0].mxu0
      %v6739 = vpop.f32.mrb[0].mxu0
      %6740 = vmatprep.mubr.f32.mxu0 0.0
      %6741 = vmatmul.mubr.f32.gmra.mrb[0].mxu0 %v6612
      %v6742 = vpop.f32.mrb[0].mxu0
      %v6743 = vadd.f32 0.0, %v6742
      %v6744 = vpop.f32.mrb[0].mxu0
      %6745 = vmatprep.mubr.f32.mxu0 0.0
      %6746 = vmatmul.mubr.f32.gmra.mrb[0].mxu0 %v6613
      %v6747 = vpop.f32.mrb[0].mxu0
      %v6748 = vadd.f32 0.0, %v6747
      %v6749 = vpop.f32.mrb[0].mxu0
      %6750 = vmatprep.mubr.f32.mxu0 0.0
      %6751 = vmatmul.mubr.f32.gmra.mrb[0].mxu0 %v6614
      %v6752 = vpop.f32.mrb[0].mxu0
      %v6753 = vadd.f32 0.0, %v6752
      %v6754 = vpop.f32.mrb[0].mxu0
      %6755 = vmatprep.mubr.f32.mxu0 0.0
      %6756 = vmatmul.mubr.f32.gmra.mrb[0].mxu0 %v6615
      %v6757 = vpop.f32.mrb[0].mxu0
      %v6758 = vadd.f32 0.0, %v6757
      %v6759 = vpop.f32.mrb[0].mxu0
      %6760 = vmatprep.mubr.f32.mxu0 0.0
      %6761 = vmatmul.mubr.f32.gmra.mrb[0].mxu0 %v6616
      %v6762 = vpop.f32.mrb[0].mxu0
      %v6763 = vadd.f32 0.0, %v6762
      %v6764 = vpop.f32.mrb[0].mxu0
      %6765 = vmatprep.mubr.f32.mxu0 0.0
      %6766 = vmatmul.mubr.f32.gmra.mrb[0].mxu0 %v6617
      %v6767 = vpop.f32.mrb[0].mxu0
      %v6768 = vadd.f32 0.0, %v6767
      %v6769 = vpop.f32.mrb[0].mxu0
      %6770 = vmatprep.mubr.f32.mxu0 0.0
      %6771 = vmatmul.mubr.f32.gmra.mrb[0].mxu0 %v6618
      %v6772 = vpop.f32.mrb[0].mxu0
      %v6773 = vadd.f32 0.0, %v6772
      %v6774 = vpop.f32.mrb[0].mxu0
      %6775 = vmatprep.mubr.f32.mxu0 0.0
      %6776 = vmatmul.mubr.f32.gmra.mrb[0].mxu0 %v6619
      %v6777 = vpop.f32.mrb[0].mxu0
      %v6778 = vadd.f32 0.0, %v6777
      %v6779 = vpop.f32.mrb[0].mxu0
      %6780 = vmatprep.mubr.f32.mxu0 0.0
      %6781 = vmatmul.mubr.f32.gmra.mrb[0].mxu0 %v6620
      %v6782 = vpop.f32.mrb[0].mxu0
      %v6783 = vadd.f32 0.0, %v6782
      %v6784 = vpop.f32.mrb[0].mxu0
      %6785 = vmatprep.mubr.f32.mxu0 0.0
      %6786 = vmatmul.mubr.f32.gmra.mrb[0].mxu0 %v6621
      %v6787 = vpop.f32.mrb[0].mxu0
      %v6788 = vadd.f32 0.0, %v6787
      %v6789 = vpop.f32.mrb[0].mxu0
      %6790 = vmatprep.mubr.f32.mxu0 0.0
      %6791 = vmatmul.mubr.f32.gmra.mrb[0].mxu0 %v6622
      %v6792 = vpop.f32.mrb[0].mxu0
      %v6793 = vadd.f32 0.0, %v6792
      %v6794 = vpop.f32.mrb[0].mxu0
      %6795 = vmatprep.mubr.f32.mxu0 0.0
      %6796 = vmatmul.mubr.f32.gmra.mrb[0].mxu0 %v6623
      %v6797 = vpop.f32.mrb[0].mxu0
      %v6798 = vadd.f32 0.0, %v6797
      %v6799 = vpop.f32.mrb[0].mxu0
      %6800 = vmatprep.mubr.f32.mxu0 0.0
      %6801 = vmatmul.mubr.f32.gmra.mrb[0].mxu0 %v6624
      %v6802 = vpop.f32.mrb[0].mxu0
      %v6803 = vadd.f32 0.0, %v6802
      %v6804 = vpop.f32.mrb[0].mxu0
      %6805 = vmatprep.mubr.f32.mxu0 0.0
      %6806 = vmatmul.mubr.f32.gmra.mrb[0].mxu0 %v6625
      %v6807 = vpop.f32.mrb[0].mxu0
      %v6808 = vadd.f32 0.0, %v6807
      %v6809 = vpop.f32.mrb[0].mxu0
      %6810 = vmatprep.mubr.f32.mxu0 0.0
      %6811 = vmatmul.mubr.f32.gmra.mrb[0].mxu0 %v6626
      %v6812 = vpop.f32.mrb[0].mxu0
      %v6813 = vadd.f32 0.0, %v6812
      %v6814 = vpop.f32.mrb[0].mxu0
      %6815 = vmatprep.mubr.f32.mxu0 0.0
      %6816 = vmatmul.mubr.f32.gmra.mrb[0].mxu0 %v6627
      %v6817 = vpop.f32.mrb[0].mxu0
      %v6818 = vadd.f32 0.0, %v6817
      %v6819 = vpop.f32.mrb[0].mxu0
      %6820 = vmatprep.mubr.f32.mxu0 0.0
      %6821 = vmatmul.mubr.f32.gmra.mrb[0].mxu0 %v6628
      %v6822 = vpop.f32.mrb[0].mxu0
      %v6823 = vadd.f32 0.0, %v6822
      %v6824 = vpop.f32.mrb[0].mxu0
      %6825 = vmatprep.mubr.f32.mxu0 0.0
      %6826 = vmatmul.mubr.f32.gmra.mrb[0].mxu0 %v6629
      %v6827 = vpop.f32.mrb[0].mxu0
      %v6828 = vadd.f32 0.0, %v6827
      %v6829 = vpop.f32.mrb[0].mxu0
      %6830 = vmatprep.mubr.f32.mxu0 0.0
      %6831 = vmatmul.mubr.f32.gmra.mrb[0].mxu0 %v6630
      %v6832 = vpop.f32.mrb[0].mxu0
      %v6833 = vadd.f32 0.0, %v6832
      %v6834 = vpop.f32.mrb[0].mxu0
      %6835 = vmatprep.mubr.f32.mxu0 0.0
      %6836 = vmatmul.mubr.f32.gmra.mrb[0].mxu0 %v6631
      %v6837 = vpop.f32.mrb[0].mxu0
      %v6838 = vadd.f32 0.0, %v6837
      %v6839 = vpop.f32.mrb[0].mxu0
      %6840 = vmatprep.mubr.f32.mxu0 0.0
      %6841 = vmatmul.mubr.f32.gmra.mrb[0].mxu0 %v6632
      %v6842 = vpop.f32.mrb[0].mxu0
      %v6843 = vadd.f32 0.0, %v6842
      %v6844 = vpop.f32.mrb[0].mxu0
      %6845 = vmatprep.mubr.f32.mxu0 0.0
      %6846 = vmatmul.mubr.f32.gmra.mrb[0].mxu0 %v6633
      %v6847 = vpop.f32.mrb[0].mxu0
      %v6848 = vadd.f32 0.0, %v6847
      %v6849 = vpop.f32.mrb[0].mxu0
      %6850 = vmatprep.mubr.f32.mxu0 0.0
      %6851 = vmatmul.mubr.f32.gmra.mrb[0].mxu0 %v6634
      %v6852 = vpop.f32.mrb[0].mxu0
      %v6853 = vadd.f32 0.0, %v6852
      %v6854 = vpop.f32.mrb[0].mxu0
      %6855 = vmatprep.mubr.f32.mxu0 0.0
      %6856 = vmatmul.mubr.f32.gmra.mrb[0].mxu0 %v6635
      %v6857 = vpop.f32.mrb[0].mxu0
      %v6858 = vadd.f32 0.0, %v6857
      %v6859 = vpop.f32.mrb[0].mxu0
      %6860 = vmatprep.mubr.f32.mxu0 0.0
      %6861 = vmatmul.mubr.f32.gmra.mrb[0].mxu0 %v6636
      %v6862 = vpop.f32.mrb[0].mxu0
      %v6863 = vadd.f32 0.0, %v6862
      %v6864 = vpop.f32.mrb[0].mxu0
      %6865 = vmatprep.mubr.f32.mxu0 0.0
      %6866 = vmatmul.mubr.f32.gmra.mrb[0].mxu0 %v6637
      %v6867 = vpop.f32.mrb[0].mxu0
      %v6868 = vadd.f32 0.0, %v6867
      %v6869 = vpop.f32.mrb[0].mxu0
      %6870 = vmatprep.mubr.f32.mxu0 0.0
      %6871 = vmatmul.mubr.f32.gmra.mrb[0].mxu0 %v6638
      %v6872 = vpop.f32.mrb[0].mxu0
      %v6873 = vadd.f32 0.0, %v6872
      %v6874 = vpop.f32.mrb[0].mxu0
      %6875 = vmatprep.mubr.f32.mxu0 0.0
      %6876 = vmatmul.mubr.f32.gmra.mrb[0].mxu0 %v6639
      %v6877 = vpop.f32.mrb[0].mxu0
      %v6878 = vadd.f32 0.0, %v6877
      %v6879 = vpop.f32.mrb[0].mxu0
      %6880 = vmatprep.mubr.f32.mxu0 0.0
      %6881 = vmatmul.mubr.f32.gmra.mrb[0].mxu0 %v6640
      %v6882 = vpop.f32.mrb[0].mxu0
      %v6883 = vadd.f32 0.0, %v6882
      %v6884 = vpop.f32.mrb[0].mxu0
      %6885 = vmatprep.mubr.f32.mxu0 0.0
      %6886 = vmatmul.mubr.f32.gmra.mrb[0].mxu0 %v6641
      %v6887 = vpop.f32.mrb[0].mxu0
      %v6888 = vadd.f32 0.0, %v6887
      %v6889 = vpop.f32.mrb[0].mxu0
      %6890 = vmatprep.mubr.f32.mxu0 0.0
      %6891 = vmatmul.mubr.f32.gmra.mrb[0].mxu0 %v6642
      %v6892 = vpop.f32.mrb[0].mxu0
      %v6893 = vadd.f32 0.0, %v6892
      %v6894 = vpop.f32.mrb[0].mxu0
      %6895 = vmatprep.mubr.f32.mxu0 0.0
      %6896 = vmatmul.mubr.f32.gmra.mrb[0].mxu0 %v6643
      %v6897 = vpop.f32.mrb[0].mxu0
      %v6898 = vadd.f32 0.0, %v6897
      %v6899 = vpop.f32.mrb[0].mxu0
      %6900 = vmatprep.mubr.f32.mxu0 0.0
      %6901 = vmatmul.mubr.f32.gmra.mrb[0].mxu0 %v6644
      %v6902 = vpop.f32.mrb[0].mxu0
      %v6903 = vadd.f32 0.0, %v6902
      %v6904 = vpop.f32.mrb[0].mxu0
      %6905 = vmatprep.mubr.f32.mxu0 0.0
      %6906 = vmatmul.mubr.f32.gmra.mrb[0].mxu0 %v6645
      %v6907 = vpop.f32.mrb[0].mxu0
      %v6908 = vadd.f32 0.0, %v6907
      %v6909 = vpop.f32.mrb[0].mxu0
      %6910 = vmatprep.mubr.f32.mxu0 0.0
      %6911 = vmatmul.mubr.f32.gmra.mrb[0].mxu0 %v6646
      %v6912 = vpop.f32.mrb[0].mxu0
      %v6913 = vadd.f32 0.0, %v6912
      %v6914 = vpop.f32.mrb[0].mxu0
      %6915 = vmatprep.mubr.f32.mxu0 0.0
      %6916 = vmatmul.mubr.f32.gmra.mrb[0].mxu0 %v6647
      %v6917 = vpop.f32.mrb[0].mxu0
      %v6918 = vadd.f32 0.0, %v6917
      %v6919 = vpop.f32.mrb[0].mxu0
      %6920 = vmatprep.mubr.f32.mxu0 0.0
      %6921 = vmatmul.mubr.f32.gmra.mrb[0].mxu0 %v6648
      %v6922 = vpop.f32.mrb[0].mxu0
      %v6923 = vadd.f32 0.0, %v6922
      %v6924 = vpop.f32.mrb[0].mxu0
      %6925 = vmatprep.mubr.f32.mxu0 0.0
      %6926 = vmatmul.mubr.f32.gmra.mrb[0].mxu0 %v6649
      %v6927 = vpop.f32.mrb[0].mxu0
      %v6928 = vpop.f32.mrb[0].mxu0
      %6929 = vmatprep.mubr.f32.mxu0 0.0
      %6930 = vmatmul.mubr.f32.gmra.mrb[0].mxu0 %v6650
      %v6931 = vpop.f32.mrb[0].mxu0
      %v6932 = vpop.f32.mrb[0].mxu0
      %6933 = vdwg.mxu0
      %v6934 = vadd.f32 %v6573, %v6743
      %v6935 = vadd.f32 %v6574, %v6748
      %v6936 = vadd.f32 %v6575, %v6753
      %v6937 = vadd.f32 %v6576, %v6758
      %v6938 = vadd.f32 %v6577, %v6763
      %v6939 = vadd.f32 %v6578, %v6768
      %v6940 = vadd.f32 %v6579, %v6773
      %v6941 = vadd.f32 %v6580, %v6778
      %v6942 = vadd.f32 %v6581, %v6783
      %v6943 = vadd.f32 %v6582, %v6788
      %v6944 = vadd.f32 %v6583, %v6793
      %v6945 = vadd.f32 %v6584, %v6798
      %v6946 = vadd.f32 %v6585, %v6803
      %v6947 = vadd.f32 %v6586, %v6808
      %v6948 = vadd.f32 %v6587, %v6813
      %v6949 = vadd.f32 %v6588, %v6818
      %v6950 = vadd.f32 %v6589, %v6823
      %v6951 = vadd.f32 %v6590, %v6828
      %v6952 = vadd.f32 %v6591, %v6833
      %v6953 = vadd.f32 %v6592, %v6838
      %v6954 = vadd.f32 %v6593, %v6843
      %v6955 = vadd.f32 %v6594, %v6848
      %v6956 = vadd.f32 %v6595, %v6853
      %v6957 = vadd.f32 %v6596, %v6858
      %v6958 = vadd.f32 %v6597, %v6863
      %v6959 = vadd.f32 %v6598, %v6868
      %v6960 = vadd.f32 %v6599, %v6873
      %v6961 = vadd.f32 %v6600, %v6878
      %v6962 = vadd.f32 %v6601, %v6883
      %v6963 = vadd.f32 %v6602, %v6888
      %v6964 = vadd.f32 %v6603, %v6893
      %v6965 = vadd.f32 %v6604, %v6898
      %v6966 = vadd.f32 %v6605, %v6903
      %v6967 = vadd.f32 %v6606, %v6908
      %v6968 = vadd.f32 %v6607, %v6913
      %v6969 = vadd.f32 %v6608, %v6918
      %v6970 = vadd.f32 %v6609, %v6923
      %v6971 = vld [vmem:[%s5] sm:$0x1]
      %v6973 = vlaneseq
      %v6974 = vshrl.u32 %v6973, 7
      %v6975 = vsub.s32 0, %v6974
      %v6976 = vrot.slane %v6971, %v6975
      %v6978 = vmul.f32 %v6934, %v6976
      %v6979 = vmul.f32 %v6935, %v6976
      %v6980 = vmul.f32 %v6936, %v6976
      %v6981 = vmul.f32 %v6937, %v6976
      %v6982 = vmul.f32 %v6938, %v6976
      %v6983 = vmul.f32 %v6939, %v6976
      %v6984 = vmul.f32 %v6940, %v6976
      %v6985 = vmul.f32 %v6941, %v6976
      %v6986 = vmul.f32 %v6942, %v6976
      %v6987 = vmul.f32 %v6943, %v6976
      %v6988 = vmul.f32 %v6944, %v6976
      %v6989 = vmul.f32 %v6945, %v6976
      %v6990 = vmul.f32 %v6946, %v6976
      %v6991 = vmul.f32 %v6947, %v6976
      %v6992 = vmul.f32 %v6948, %v6976
      %v6993 = vmul.f32 %v6949, %v6976
      %v6994 = vmul.f32 %v6950, %v6976
      %v6995 = vmul.f32 %v6951, %v6976
      %v6996 = vmul.f32 %v6952, %v6976
      %v6997 = vmul.f32 %v6953, %v6976
      %v6998 = vmul.f32 %v6954, %v6976
      %v6999 = vmul.f32 %v6955, %v6976
      %v7000 = vmul.f32 %v6956, %v6976
      %v7001 = vmul.f32 %v6957, %v6976
      %v7002 = vmul.f32 %v6958, %v6976
      %v7003 = vmul.f32 %v6959, %v6976
      %v7004 = vmul.f32 %v6960, %v6976
      %v7005 = vmul.f32 %v6961, %v6976
      %v7006 = vmul.f32 %v6962, %v6976
      %v7007 = vmul.f32 %v6963, %v6976
      %v7008 = vmul.f32 %v6964, %v6976
      %v7009 = vmul.f32 %v6965, %v6976
      %v7010 = vmul.f32 %v6966, %v6976
      %v7011 = vmul.f32 %v6967, %v6976
      %v7012 = vmul.f32 %v6968, %v6976
      %v7013 = vmul.f32 %v6969, %v6976
      %v7014 = vmul.f32 %v6970, %v6976
      %v7015 = vld [vmem:[%s6] sm:$0x1]
      %v7017 = vlaneseq
      %v7018 = vshrl.u32 %v7017, 7
      %v7019 = vsub.s32 0, %v7018
      %v7020 = vrot.slane %v7015, %v7019
      %v7022 = vadd.f32 %v6978, %v7020
      %v7023 = vadd.f32 %v6979, %v7020
      %v7024 = vadd.f32 %v6980, %v7020
      %v7025 = vadd.f32 %v6981, %v7020
      %v7026 = vadd.f32 %v6982, %v7020
      %v7027 = vadd.f32 %v6983, %v7020
      %v7028 = vadd.f32 %v6984, %v7020
      %v7029 = vadd.f32 %v6985, %v7020
      %v7030 = vadd.f32 %v6986, %v7020
      %v7031 = vadd.f32 %v6987, %v7020
      %v7032 = vadd.f32 %v6988, %v7020
      %v7033 = vadd.f32 %v6989, %v7020
      %v7034 = vadd.f32 %v6990, %v7020
      %v7035 = vadd.f32 %v6991, %v7020
      %v7036 = vadd.f32 %v6992, %v7020
      %v7037 = vadd.f32 %v6993, %v7020
      %v7038 = vadd.f32 %v6994, %v7020
      %v7039 = vadd.f32 %v6995, %v7020
      %v7040 = vadd.f32 %v6996, %v7020
      %v7041 = vadd.f32 %v6997, %v7020
      %v7042 = vadd.f32 %v6998, %v7020
      %v7043 = vadd.f32 %v6999, %v7020
      %v7044 = vadd.f32 %v7000, %v7020
      %v7045 = vadd.f32 %v7001, %v7020
      %v7046 = vadd.f32 %v7002, %v7020
      %v7047 = vadd.f32 %v7003, %v7020
      %v7048 = vadd.f32 %v7004, %v7020
      %v7049 = vadd.f32 %v7005, %v7020
      %v7050 = vadd.f32 %v7006, %v7020
      %v7051 = vadd.f32 %v7007, %v7020
      %v7052 = vadd.f32 %v7008, %v7020
      %v7053 = vadd.f32 %v7009, %v7020
      %v7054 = vadd.f32 %v7010, %v7020
      %v7055 = vadd.f32 %v7011, %v7020
      %v7056 = vadd.f32 %v7012, %v7020
      %v7057 = vadd.f32 %v7013, %v7020
      %v7058 = vadd.f32 %v7014, %v7020
      %v7059 = vmax.f32 %v7022, 0.0
      %v7060 = vmax.f32 %v7023, 0.0
      %v7061 = vmax.f32 %v7024, 0.0
      %v7062 = vmax.f32 %v7025, 0.0
      %v7063 = vmax.f32 %v7026, 0.0
      %v7064 = vmax.f32 %v7027, 0.0
      %v7065 = vmax.f32 %v7028, 0.0
      %v7066 = vmax.f32 %v7029, 0.0
      %v7067 = vmax.f32 %v7030, 0.0
      %v7068 = vmax.f32 %v7031, 0.0
      %v7069 = vmax.f32 %v7032, 0.0
      %v7070 = vmax.f32 %v7033, 0.0
      %v7071 = vmax.f32 %v7034, 0.0
      %v7072 = vmax.f32 %v7035, 0.0
      %v7073 = vmax.f32 %v7036, 0.0
      %v7074 = vmax.f32 %v7037, 0.0
      %v7075 = vmax.f32 %v7038, 0.0
      %v7076 = vmax.f32 %v7039, 0.0
      %v7077 = vmax.f32 %v7040, 0.0
      %v7078 = vmax.f32 %v7041, 0.0
      %v7079 = vmax.f32 %v7042, 0.0
      %v7080 = vmax.f32 %v7043, 0.0
      %v7081 = vmax.f32 %v7044, 0.0
      %v7082 = vmax.f32 %v7045, 0.0
      %v7083 = vmax.f32 %v7046, 0.0
      %v7084 = vmax.f32 %v7047, 0.0
      %v7085 = vmax.f32 %v7048, 0.0
      %v7086 = vmax.f32 %v7049, 0.0
      %v7087 = vmax.f32 %v7050, 0.0
      %v7088 = vmax.f32 %v7051, 0.0
      %v7089 = vmax.f32 %v7052, 0.0
      %v7090 = vmax.f32 %v7053, 0.0
      %v7091 = vmax.f32 %v7054, 0.0
      %v7092 = vmax.f32 %v7055, 0.0
      %v7093 = vmax.f32 %v7056, 0.0
      %v7094 = vmax.f32 %v7057, 0.0
      %v7095 = vmax.f32 %v7058, 0.0
      %7096 = vst [vmem:[%s278 - $0x3] sm:$0xf8] %v7059
      %7097 = vst [vmem:[%s278 + $0x5] sm:$0xff] %v7060
      %7098 = vst [vmem:[%s278 + $0xd] sm:$0x7] %v7061
      %s7099 = scalar_lea.vmem %s278, 16
      %7100 = vst [vmem:[%s7099 - $0x5] sm:$0xe0] %v7061
      %7101 = vst [vmem:[%s7099 + $0x3] sm:$0xff] %v7062
      %7102 = vst [vmem:[%s7099 + $0xb] sm:$0x1f] %v7063
      %s7103 = scalar_lea.vmem %s278, 32
      %7104 = vst [vmem:[%s7103 - $0x7] sm:$0x80] %v7063
      %7105 = vst [vmem:[%s7103 + $0x1] sm:$0xff] %v7064
      %7106 = vst [vmem:[%s7103 + $0x9] sm:$0x7f] %v7065
      %s7107 = scalar_lea.vmem %s278, 48
      %7108 = vst [vmem:[%s7107 - $0x1] sm:$0xfe] %v7066
      %7109 = vst [vmem:[%s7107 + $0x7] sm:$0xff] %v7067
      %7110 = vst [vmem:[%s7107 + $0xf] sm:$0x1] %v7068
      %s7111 = scalar_lea.vmem %s278, 64
      %7112 = vst [vmem:[%s7111 - $0x3] sm:$0xf8] %v7068
      %7113 = vst [vmem:[%s7111 + $0x5] sm:$0xff] %v7069
      %7114 = vst [vmem:[%s7111 + $0xd] sm:$0x7] %v7070
      %s7115 = scalar_lea.vmem %s278, 80
      %7116 = vst [vmem:[%s7115 - $0x5] sm:$0xe0] %v7070
      %7117 = vst [vmem:[%s7115 + $0x3] sm:$0xff] %v7071
      %7118 = vst [vmem:[%s7115 + $0xb] sm:$0x1f] %v7072
      %s7119 = scalar_lea.vmem %s278, 96
      %7120 = vst [vmem:[%s7119 - $0x7] sm:$0x80] %v7072
      %7121 = vst [vmem:[%s7119 + $0x1] sm:$0xff] %v7073
      %7122 = vst [vmem:[%s7119 + $0x9] sm:$0x7f] %v7074
      %s7123 = scalar_lea.vmem %s278, 112
      %7124 = vst [vmem:[%s7123 - $0x1] sm:$0xfe] %v7075
      %7125 = vst [vmem:[%s7123 + $0x7] sm:$0xff] %v7076
      %7126 = vst [vmem:[%s7123 + $0xf] sm:$0x1] %v7077
      %s7127 = scalar_lea.vmem %s278, 128
      %7128 = vst [vmem:[%s7127 - $0x3] sm:$0xf8] %v7077
      %7129 = vst [vmem:[%s7127 + $0x5] sm:$0xff] %v7078
      %7130 = vst [vmem:[%s7127 + $0xd] sm:$0x7] %v7079
      %s7131 = scalar_lea.vmem %s278, 144
      %7132 = vst [vmem:[%s7131 - $0x5] sm:$0xe0] %v7079
      %7133 = vst [vmem:[%s7131 + $0x3] sm:$0xff] %v7080
      %7134 = vst [vmem:[%s7131 + $0xb] sm:$0x1f] %v7081
      %s7135 = scalar_lea.vmem %s278, 160
      %7136 = vst [vmem:[%s7135 - $0x7] sm:$0x80] %v7081
      %7137 = vst [vmem:[%s7135 + $0x1] sm:$0xff] %v7082
      %7138 = vst [vmem:[%s7135 + $0x9] sm:$0x7f] %v7083
      %s7139 = scalar_lea.vmem %s278, 176
      %7140 = vst [vmem:[%s7139 - $0x1] sm:$0xfe] %v7084
      %7141 = vst [vmem:[%s7139 + $0x7] sm:$0xff] %v7085
      %7142 = vst [vmem:[%s7139 + $0xf] sm:$0x1] %v7086
      %s7143 = scalar_lea.vmem %s278, 192
      %7144 = vst [vmem:[%s7143 - $0x3] sm:$0xf8] %v7086
      %7145 = vst [vmem:[%s7143 + $0x5] sm:$0xff] %v7087
      %7146 = vst [vmem:[%s7143 + $0xd] sm:$0x7] %v7088
      %s7147 = scalar_lea.vmem %s278, 208
      %7148 = vst [vmem:[%s7147 - $0x5] sm:$0xe0] %v7088
      %7149 = vst [vmem:[%s7147 + $0x3] sm:$0xff] %v7089
      %7150 = vst [vmem:[%s7147 + $0xb] sm:$0x1f] %v7090
      %s7151 = scalar_lea.vmem %s278, 224
      %7152 = vst [vmem:[%s7151 - $0x7] sm:$0x80] %v7090
      %7153 = vst [vmem:[%s7151 + $0x1] sm:$0xff] %v7091
      %7154 = vst [vmem:[%s7151 + $0x9] sm:$0x7f] %v7092
      %s7155 = scalar_lea.vmem %s278, 240
      %7156 = vst [vmem:[%s7155 - $0x1] sm:$0xfe] %v7093
      %7157 = vst [vmem:[%s7155 + $0x7] sm:$0xff] %v7094
      %7158 = vst [vmem:[%s7155 + $0xf] sm:$0x1] %v7095
      %p7159 = scmp.lt.s32.totalorder %s18, 1
      %s7160 = scalar_select %p7159, %s18, 1
      %s7161 = smul.addr %s7160, 32
      %s7162 = smul.addr %s7161, 8
      %s7163 = scalar_lea.vmem %s7, %s7162
      // Predicated region
      $region49: #{conv2_module_forward.1} parent=47 // pred_check
        %p7164 = pneg %p188
      $region50: #{conv2_module_forward.1} parent=47 // pred_check_branch
        %7166 = sbr.rel (%p7164) target = $region52
      $region51: #{conv2_module_forward.1} parent=47 // pred_region
        _
      $region52: #{conv2_module_forward.1} parent=47 // pred_fallthru
        _
    $region48: #{conv2_module_forward.1} parent=5 // pred_fallthru
      _
    %p7167 = scmp.le.s32.totalorder 2, %s13
    // Predicated region
    $region53: #{conv2_module_forward.1} parent=5 // pred_check
      %p7168 = pneg %p7167
    $region54: #{conv2_module_forward.1} parent=5 // pred_check_branch
      %7170 = sbr.rel (%p7168) target = $region56
    $region55: #{conv2_module_forward.1} parent=5 // pred_region
      %s7171 = ssub.s32 %s13, 2
      // Predicated region
      $region57: #{conv2_module_forward.1} parent=55 // pred_check
        %p7172 = pneg %p194
      $region58: #{conv2_module_forward.1} parent=55 // pred_check_branch
        %7174 = sbr.rel (%p7172) target = $region60
      $region59: #{conv2_module_forward.1} parent=55 // pred_region
        %p7175 = scmp.lt.s32.totalorder %s19, 1
        %s7176 = scalar_select %p7175, %s19, 1
        %s7177 = smul.addr %s7176, 32
        %s7178 = smul.addr %s7177, 8
        %s7179 = scalar_lea.vmem %s7, %s7178
      $region60: #{conv2_module_forward.1} parent=55 // pred_fallthru
        _
    $region56: #{conv2_module_forward.1} parent=5 // pred_fallthru
      _
  $region6: #{conv2_module_forward.1} parent=0 // loop_footer
    %s17 = sadd.s32 1, %s13
  $region7: #{conv2_module_forward.1} parent=0 // loop_footer_branch
    %12 = sbr.rel target = $region3
  $region8: #{conv2_module_forward.1} parent=0 // loop_exit
    _

</llo_original>
